<compile_context>
chip_gen: v7x
topology: tpu7x:2x2x1
jax: 0.10.0
libtpu: 0.0.40
codegen_flags: <defaults>
</compile_context>

<pallas_src>
import jax
import jax.numpy as jnp
from jax.experimental import pallas as pl
from jax.experimental.pallas import tpu as pltpu


# ----------------------------------------------------------------------------
# Parameter init (PyTorch nn.Linear-style) and packing for the fused kernel
# ----------------------------------------------------------------------------
def init_raw_params(key, dim_x, dim_S):
    """Deterministic PyTorch-nn.Linear-style init (uniform +-1/sqrt(fan_in))."""
    d_in = dim_x + 1
    keys = jax.random.split(key, 14)

    def lin(k, n_in, n_out):
        bound = 1.0 / float(n_in) ** 0.5
        kw, kb = jax.random.split(k)
        W = jax.random.uniform(kw, (n_in, n_out), jnp.float32, -bound, bound)
        b = jax.random.uniform(kb, (n_out,), jnp.float32, -bound, bound)
        return W, b

    w0, b0 = lin(keys[0], d_in, dim_S)
    gates, ki = [], 1
    for _ in range(3):                       # DGM1, DGM2, DGM3
        layer_gates = []
        for _g in range(4):                  # gates Z, G, R, H
            layer_gates.append(lin(keys[ki], d_in + dim_S, dim_S))
            ki += 1
        gates.append(layer_gates)
    wo, bo = lin(keys[13], dim_S, 1)
    return {"w0": w0, "b0": b0, "gates": gates, "wo": wo, "bo": bo}


def pack_params(raw, dim_x, dim_S):
    """Repack raw (in, out) Linear weights into fused, transposed kernel weights."""
    d_in = dim_x + 1
    wt_rows, wx_rows, b_rows = [], [], []    # t-column, x-columns, bias

    def add_tx_part(W_txpart, b):            # W_txpart: (d_in, dim_S)
        WT = W_txpart.T                      # (dim_S, d_in)
        wt_rows.append(WT[:, :1])            # (dim_S, 1)
        wx_rows.append(WT[:, 1:])            # (dim_S, dim_x)
        b_rows.append(b.reshape(dim_S, 1))

    # Row order of the fused pre-activation slab P:
    #   [input layer | L0: Z,G,R,H | L1: Z,G,R,H | L2: Z,G,R,H]
    add_tx_part(raw["w0"], raw["b0"])
    wzgr, wh = [], []
    for l in range(3):
        ws_T = []
        for g in range(4):
            W, b = raw["gates"][l][g]        # W: (d_in + dim_S, dim_S)
            add_tx_part(W[:d_in], b)         # tx part of cat([tx, S]) @ W
            ws_T.append(W[d_in:].T)          # S  part, transposed: (dim_S, dim_S)
        wzgr.append(jnp.concatenate(ws_T[:3], axis=0))   # (3*dim_S, dim_S)
        wh.append(ws_T[3])                                # (dim_S, dim_S)

    return {
        "wt": jnp.concatenate(wt_rows, axis=0),   # (13*dim_S, 1)
        "wx": jnp.concatenate(wx_rows, axis=0),   # (13*dim_S, dim_x)
        "b": jnp.concatenate(b_rows, axis=0),     # (13*dim_S, 1)
        "wzgr": jnp.stack(wzgr),                  # (3, 3*dim_S, dim_S)
        "wh": jnp.stack(wh),                      # (3, dim_S, dim_S)
        "wo": raw["wo"].T,                        # (1, dim_S)
        "bo": raw["bo"].reshape(1, 1),            # (1, 1)
    }


# ----------------------------------------------------------------------------
# Pallas kernel + wrapper
# ----------------------------------------------------------------------------
def _pick_tile_b(B, cap=2048):
    """Largest multiple-of-128 divisor of B (<= cap); keep grid >= 2 if possible."""
    if B % 128 != 0:
        return B                                   # tiny/ragged batch: one tile
    best = 128
    for tb in range(128, min(B, cap) + 1, 128):
        if B % tb == 0:
            best = tb
    if best == B and B // 128 >= 2 and (B // 2) % 128 == 0:
        best = B // 2                              # give both v7x TCs work
    return best


def net_dgm_forward(t, x, params, *, tile_b=None):
    B = t.shape[0]
    dim_x = x.shape[1]
    dim_S = params["wo"].shape[1]

    # Feature-major inputs (batch on the lane axis). (B,1)->(1,B) is a free
    # contiguous relabel; the (dim_x, B) transpose of x is a tiny 3-row slab.
    tT = jnp.reshape(t.astype(jnp.float32), (1, B))
    xT = jnp.transpose(x.astype(jnp.float32))      # (dim_x, B)

    if tile_b is None:
        tile_b = _pick_tile_b(B)
    assert B % tile_b == 0, (B, tile_b)
    grid = (B // tile_b,)

    def full(a):                                   # whole-array, grid-invariant
        nd = a.ndim
        return pl.BlockSpec(a.shape, lambda i, _nd=nd: (0,) * _nd)

    def kernel(tT_ref, xT_ref, wt_ref, wx_ref, b_ref,
               wzgr_ref, wh_ref, wo_ref, bo_ref, out_ref):
        f32 = jnp.float32
        tT_blk = tT_ref[...]                       # (1, tb)
        xT_blk = xT_ref[...]                       # (dim_x, tb)

        # All 13 tx-side projections at once, biases folded in:  (13*dim_S, tb)
        P = (jnp.dot(wx_ref[...], xT_blk, preferred_element_type=f32)
             + wt_ref[...] * tT_blk                # (13S,1)*(1,tb) broadcast
             + b_ref[...])                         # (13S,1) broadcast over lanes

        S = jnp.tanh(P[:dim_S])                    # input layer  (dim_S, tb)

        for l in range(3):                         # DGM1..DGM3 (static unroll)
            base = dim_S * (1 + 4 * l)
            # fused Z/G/R S-projection: (3*dim_S, dim_S) @ (dim_S, tb)
            zgr = jnp.dot(wzgr_ref[l], S, preferred_element_type=f32)
            Z = jnp.tanh(P[base:base + dim_S] + zgr[:dim_S])
            G = jnp.tanh(P[base + dim_S:base + 2 * dim_S]
                         + zgr[dim_S:2 * dim_S])
            R = jnp.tanh(P[base + 2 * dim_S:base + 3 * dim_S]
                         + zgr[2 * dim_S:])
            H = jnp.tanh(P[base + 3 * dim_S:base + 4 * dim_S]
                         + jnp.dot(wh_ref[l], S * R,
                                   preferred_element_type=f32))
            S = (1.0 - G) * H + Z * S

        # output layer: (1, dim_S) @ (dim_S, tb) -> lane-dense (1, tb) store
        out_ref[...] = (jnp.dot(wo_ref[...], S, preferred_element_type=f32)
                        + bo_ref[...])

    out = pl.pallas_call(
        kernel,
        out_shape=jax.ShapeDtypeStruct((1, B), jnp.float32),
        grid=grid,
        in_specs=[
            pl.BlockSpec((1, tile_b), lambda i: (0, i)),        # tT
            pl.BlockSpec((dim_x, tile_b), lambda i: (0, i)),    # xT
            full(params["wt"]), full(params["wx"]), full(params["b"]),
            full(params["wzgr"]), full(params["wh"]),
            full(params["wo"]), full(params["bo"]),
        ],
        out_specs=pl.BlockSpec((1, tile_b), lambda i: (0, i)),
        compiler_params=pltpu.CompilerParams(
            dimension_semantics=("parallel",),
            vmem_limit_bytes=32 * 1024 * 1024),
    )(tT, xT, params["wt"], params["wx"], params["b"],
      params["wzgr"], params["wh"], params["wo"], params["bo"])

    return out.reshape(B, 1)                       # (1,B)->(B,1) is contiguous


# ----------------------------------------------------------------------------
# Pure-JAX reference of the PyTorch forward (for validation)
# ----------------------------------------------------------------------------
def net_dgm_reference(t, x, raw):
    tx = jnp.concatenate([t, x], axis=1)
    S = jnp.tanh(tx @ raw["w0"] + raw["b0"])
    for l in range(3):
        (Wz, bz), (Wg, bg), (Wr, br), (Wh, bh) = raw["gates"][l]
        xS = jnp.concatenate([tx, S], axis=1)
        Z = jnp.tanh(xS @ Wz + bz)
        G = jnp.tanh(xS @ Wg + bg)
        R = jnp.tanh(xS @ Wr + br)
        H = jnp.tanh(jnp.concatenate([tx, S * R], axis=1) @ Wh + bh)
        S = (1.0 - G) * H + Z * S
    return S @ raw["wo"] + raw["bo"]


if __name__ == "__main__":
    jax.config.update("jax_default_matmul_precision", "highest")

    dim_x, dim_S = 3, 32
    batch = 256                                    # -> tile_b=128, grid=(2,)

    key = jax.random.PRNGKey(0)
    k_t, k_x, k_p = jax.random.split(key, 3)
    t = jax.random.normal(k_t, (batch, 1), jnp.float32)
    x = jax.random.normal(k_x, (batch, dim_x), jnp.float32)

    raw = init_raw_params(k_p, dim_x, dim_S)
    params = pack_params(raw, dim_x, dim_S)

    out = net_dgm_forward(t, x, params)
    out = jax.block_until_ready(out)

    ref = net_dgm_reference(t, x, raw)
    assert out.shape == (batch, 1)
    assert jnp.allclose(out, ref, atol=1e-4, rtol=1e-4)

    print("KERNEL_OK")
</pallas_src>

<mosaic_0001>
module attributes {stable_mosaic.version = 11 : i64} {
  func.func @kernel(%arg0: i32, %arg1: memref<1x128xf32, #tpu.memory_space<vmem>>, %arg2: memref<3x128xf32, #tpu.memory_space<vmem>>, %arg3: memref<416x1xf32, #tpu.memory_space<vmem>>, %arg4: memref<416x3xf32, #tpu.memory_space<vmem>>, %arg5: memref<416x1xf32, #tpu.memory_space<vmem>>, %arg6: memref<3x96x32xf32, #tpu.memory_space<vmem>>, %arg7: memref<3x32x32xf32, #tpu.memory_space<vmem>>, %arg8: memref<1x32xf32, #tpu.memory_space<vmem>>, %arg9: memref<1x1xf32, #tpu.memory_space<vmem>>, %arg10: memref<1x128xf32, #tpu.memory_space<vmem>>) attributes {dimension_semantics = [#tpu.dimension_semantics<parallel>], iteration_bounds = array<i64: 2>, scalar_prefetch = 0 : i64, scratch_operands = 0 : i64, tpu.core_type = #tpu.core_type<tc>, window_params = [{transform_indices = @transform_0, window_bounds = array<i64: 1, 128>}, {transform_indices = @transform_1, window_bounds = array<i64: 3, 128>}, {pipeline_mode = #tpu.pipeline_mode<synchronous>, transform_indices = @transform_2, window_bounds = array<i64: 416, 1>}, {pipeline_mode = #tpu.pipeline_mode<synchronous>, transform_indices = @transform_3, window_bounds = array<i64: 416, 3>}, {pipeline_mode = #tpu.pipeline_mode<synchronous>, transform_indices = @transform_4, window_bounds = array<i64: 416, 1>}, {pipeline_mode = #tpu.pipeline_mode<synchronous>, transform_indices = @transform_5, window_bounds = array<i64: 3, 96, 32>}, {pipeline_mode = #tpu.pipeline_mode<synchronous>, transform_indices = @transform_6, window_bounds = array<i64: 3, 32, 32>}, {pipeline_mode = #tpu.pipeline_mode<synchronous>, transform_indices = @transform_7, window_bounds = array<i64: 1, 32>}, {pipeline_mode = #tpu.pipeline_mode<synchronous>, transform_indices = @transform_8, window_bounds = array<i64: 1, 1>}, {transform_indices = @transform_9, window_bounds = array<i64: 1, 128>}]} {
    %c0 = arith.constant 0 : index
    %c0_0 = arith.constant 0 : index
    %0 = vector.load %arg1[%c0, %c0_0] : memref<1x128xf32, #tpu.memory_space<vmem>>, vector<1x128xf32>
    %c0_1 = arith.constant 0 : index
    %c0_2 = arith.constant 0 : index
    %1 = vector.load %arg2[%c0_1, %c0_2] : memref<3x128xf32, #tpu.memory_space<vmem>>, vector<3x128xf32>
    %c0_3 = arith.constant 0 : index
    %c0_4 = arith.constant 0 : index
    %2 = vector.load %arg4[%c0_3, %c0_4] : memref<416x3xf32, #tpu.memory_space<vmem>>, vector<416x3xf32>
    %cst = arith.constant dense<0.000000e+00> : vector<416x128xf32>
    %3 = tpu.matmul %2, %1, %cst {dimension_numbers = #tpu.dot_dimension_numbers<[1], [0], [0], [1], [0, 0, 1, 1], [], []>, precision = #tpu.contract_precision<fp32>} : vector<416x3xf32>, vector<3x128xf32>, vector<416x128xf32> -> vector<416x128xf32>
    %c0_5 = arith.constant 0 : index
    %c0_6 = arith.constant 0 : index
    %4 = vector.load %arg3[%c0_5, %c0_6] : memref<416x1xf32, #tpu.memory_space<vmem>>, vector<416x1xf32>
    %5 = vector.broadcast %4 : vector<416x1xf32> to vector<416x128xf32>
    %6 = vector.broadcast %0 : vector<1x128xf32> to vector<416x128xf32>
    %7 = arith.mulf %5, %6 : vector<416x128xf32>
    %8 = arith.addf %3, %7 : vector<416x128xf32>
    %c0_7 = arith.constant 0 : index
    %c0_8 = arith.constant 0 : index
    %9 = vector.load %arg5[%c0_7, %c0_8] : memref<416x1xf32, #tpu.memory_space<vmem>>, vector<416x1xf32>
    %10 = vector.broadcast %9 : vector<416x1xf32> to vector<416x128xf32>
    %11 = arith.addf %8, %10 : vector<416x128xf32>
    %12 = vector.extract_strided_slice %11 {offsets = [0, 0], sizes = [32, 128], strides = [1, 1]} : vector<416x128xf32> to vector<32x128xf32>
    %13 = math.tanh %12 : vector<32x128xf32>
    %c0_9 = arith.constant 0 : index
    %c0_10 = arith.constant 0 : index
    %c0_11 = arith.constant 0 : index
    %14 = vector.load %arg6[%c0_9, %c0_10, %c0_11] : memref<3x96x32xf32, #tpu.memory_space<vmem>>, vector<1x96x32xf32>
    %15 = vector.shape_cast %14 : vector<1x96x32xf32> to vector<96x32xf32>
    %cst_12 = arith.constant dense<0.000000e+00> : vector<96x128xf32>
    %16 = tpu.matmul %15, %13, %cst_12 {dimension_numbers = #tpu.dot_dimension_numbers<[1], [0], [0], [1], [0, 0, 1, 1], [], []>, precision = #tpu.contract_precision<fp32>} : vector<96x32xf32>, vector<32x128xf32>, vector<96x128xf32> -> vector<96x128xf32>
    %17 = vector.extract_strided_slice %11 {offsets = [32, 0], sizes = [32, 128], strides = [1, 1]} : vector<416x128xf32> to vector<32x128xf32>
    %18 = vector.extract_strided_slice %16 {offsets = [0, 0], sizes = [32, 128], strides = [1, 1]} : vector<96x128xf32> to vector<32x128xf32>
    %19 = arith.addf %17, %18 : vector<32x128xf32>
    %20 = math.tanh %19 : vector<32x128xf32>
    %21 = vector.extract_strided_slice %11 {offsets = [64, 0], sizes = [32, 128], strides = [1, 1]} : vector<416x128xf32> to vector<32x128xf32>
    %22 = vector.extract_strided_slice %16 {offsets = [32, 0], sizes = [32, 128], strides = [1, 1]} : vector<96x128xf32> to vector<32x128xf32>
    %23 = arith.addf %21, %22 : vector<32x128xf32>
    %24 = math.tanh %23 : vector<32x128xf32>
    %25 = vector.extract_strided_slice %11 {offsets = [96, 0], sizes = [32, 128], strides = [1, 1]} : vector<416x128xf32> to vector<32x128xf32>
    %26 = vector.extract_strided_slice %16 {offsets = [64, 0], sizes = [32, 128], strides = [1, 1]} : vector<96x128xf32> to vector<32x128xf32>
    %27 = arith.addf %25, %26 : vector<32x128xf32>
    %28 = math.tanh %27 : vector<32x128xf32>
    %29 = vector.extract_strided_slice %11 {offsets = [128, 0], sizes = [32, 128], strides = [1, 1]} : vector<416x128xf32> to vector<32x128xf32>
    %c0_13 = arith.constant 0 : index
    %c0_14 = arith.constant 0 : index
    %c0_15 = arith.constant 0 : index
    %30 = vector.load %arg7[%c0_13, %c0_14, %c0_15] : memref<3x32x32xf32, #tpu.memory_space<vmem>>, vector<1x32x32xf32>
    %31 = vector.shape_cast %30 : vector<1x32x32xf32> to vector<32x32xf32>
    %32 = arith.mulf %13, %28 : vector<32x128xf32>
    %cst_16 = arith.constant dense<0.000000e+00> : vector<32x128xf32>
    %33 = tpu.matmul %31, %32, %cst_16 {dimension_numbers = #tpu.dot_dimension_numbers<[1], [0], [0], [1], [0, 0, 1, 1], [], []>, precision = #tpu.contract_precision<fp32>} : vector<32x32xf32>, vector<32x128xf32>, vector<32x128xf32> -> vector<32x128xf32>
    %34 = arith.addf %29, %33 : vector<32x128xf32>
    %35 = math.tanh %34 : vector<32x128xf32>
    %cst_17 = arith.constant 1.000000e+00 : f32
    %36 = vector.broadcast %cst_17 : f32 to vector<32x128xf32>
    %37 = arith.subf %36, %24 : vector<32x128xf32>
    %38 = arith.mulf %37, %35 : vector<32x128xf32>
    %39 = arith.mulf %20, %13 : vector<32x128xf32>
    %40 = arith.addf %38, %39 : vector<32x128xf32>
    %c1 = arith.constant 1 : index
    %c0_18 = arith.constant 0 : index
    %c0_19 = arith.constant 0 : index
    %41 = vector.load %arg6[%c1, %c0_18, %c0_19] : memref<3x96x32xf32, #tpu.memory_space<vmem>>, vector<1x96x32xf32>
    %42 = vector.shape_cast %41 : vector<1x96x32xf32> to vector<96x32xf32>
    %cst_20 = arith.constant dense<0.000000e+00> : vector<96x128xf32>
    %43 = tpu.matmul %42, %40, %cst_20 {dimension_numbers = #tpu.dot_dimension_numbers<[1], [0], [0], [1], [0, 0, 1, 1], [], []>, precision = #tpu.contract_precision<fp32>} : vector<96x32xf32>, vector<32x128xf32>, vector<96x128xf32> -> vector<96x128xf32>
    %44 = vector.extract_strided_slice %11 {offsets = [160, 0], sizes = [32, 128], strides = [1, 1]} : vector<416x128xf32> to vector<32x128xf32>
    %45 = vector.extract_strided_slice %43 {offsets = [0, 0], sizes = [32, 128], strides = [1, 1]} : vector<96x128xf32> to vector<32x128xf32>
    %46 = arith.addf %44, %45 : vector<32x128xf32>
    %47 = math.tanh %46 : vector<32x128xf32>
    %48 = vector.extract_strided_slice %11 {offsets = [192, 0], sizes = [32, 128], strides = [1, 1]} : vector<416x128xf32> to vector<32x128xf32>
    %49 = vector.extract_strided_slice %43 {offsets = [32, 0], sizes = [32, 128], strides = [1, 1]} : vector<96x128xf32> to vector<32x128xf32>
    %50 = arith.addf %48, %49 : vector<32x128xf32>
    %51 = math.tanh %50 : vector<32x128xf32>
    %52 = vector.extract_strided_slice %11 {offsets = [224, 0], sizes = [32, 128], strides = [1, 1]} : vector<416x128xf32> to vector<32x128xf32>
    %53 = vector.extract_strided_slice %43 {offsets = [64, 0], sizes = [32, 128], strides = [1, 1]} : vector<96x128xf32> to vector<32x128xf32>
    %54 = arith.addf %52, %53 : vector<32x128xf32>
    %55 = math.tanh %54 : vector<32x128xf32>
    %56 = vector.extract_strided_slice %11 {offsets = [256, 0], sizes = [32, 128], strides = [1, 1]} : vector<416x128xf32> to vector<32x128xf32>
    %c1_21 = arith.constant 1 : index
    %c0_22 = arith.constant 0 : index
    %c0_23 = arith.constant 0 : index
    %57 = vector.load %arg7[%c1_21, %c0_22, %c0_23] : memref<3x32x32xf32, #tpu.memory_space<vmem>>, vector<1x32x32xf32>
    %58 = vector.shape_cast %57 : vector<1x32x32xf32> to vector<32x32xf32>
    %59 = arith.mulf %40, %55 : vector<32x128xf32>
    %cst_24 = arith.constant dense<0.000000e+00> : vector<32x128xf32>
    %60 = tpu.matmul %58, %59, %cst_24 {dimension_numbers = #tpu.dot_dimension_numbers<[1], [0], [0], [1], [0, 0, 1, 1], [], []>, precision = #tpu.contract_precision<fp32>} : vector<32x32xf32>, vector<32x128xf32>, vector<32x128xf32> -> vector<32x128xf32>
    %61 = arith.addf %56, %60 : vector<32x128xf32>
    %62 = math.tanh %61 : vector<32x128xf32>
    %cst_25 = arith.constant 1.000000e+00 : f32
    %63 = vector.broadcast %cst_25 : f32 to vector<32x128xf32>
    %64 = arith.subf %63, %51 : vector<32x128xf32>
    %65 = arith.mulf %64, %62 : vector<32x128xf32>
    %66 = arith.mulf %47, %40 : vector<32x128xf32>
    %67 = arith.addf %65, %66 : vector<32x128xf32>
    %c2 = arith.constant 2 : index
    %c0_26 = arith.constant 0 : index
    %c0_27 = arith.constant 0 : index
    %68 = vector.load %arg6[%c2, %c0_26, %c0_27] : memref<3x96x32xf32, #tpu.memory_space<vmem>>, vector<1x96x32xf32>
    %69 = vector.shape_cast %68 : vector<1x96x32xf32> to vector<96x32xf32>
    %cst_28 = arith.constant dense<0.000000e+00> : vector<96x128xf32>
    %70 = tpu.matmul %69, %67, %cst_28 {dimension_numbers = #tpu.dot_dimension_numbers<[1], [0], [0], [1], [0, 0, 1, 1], [], []>, precision = #tpu.contract_precision<fp32>} : vector<96x32xf32>, vector<32x128xf32>, vector<96x128xf32> -> vector<96x128xf32>
    %71 = vector.extract_strided_slice %11 {offsets = [288, 0], sizes = [32, 128], strides = [1, 1]} : vector<416x128xf32> to vector<32x128xf32>
    %72 = vector.extract_strided_slice %70 {offsets = [0, 0], sizes = [32, 128], strides = [1, 1]} : vector<96x128xf32> to vector<32x128xf32>
    %73 = arith.addf %71, %72 : vector<32x128xf32>
    %74 = math.tanh %73 : vector<32x128xf32>
    %75 = vector.extract_strided_slice %11 {offsets = [320, 0], sizes = [32, 128], strides = [1, 1]} : vector<416x128xf32> to vector<32x128xf32>
    %76 = vector.extract_strided_slice %70 {offsets = [32, 0], sizes = [32, 128], strides = [1, 1]} : vector<96x128xf32> to vector<32x128xf32>
    %77 = arith.addf %75, %76 : vector<32x128xf32>
    %78 = math.tanh %77 : vector<32x128xf32>
    %79 = vector.extract_strided_slice %11 {offsets = [352, 0], sizes = [32, 128], strides = [1, 1]} : vector<416x128xf32> to vector<32x128xf32>
    %80 = vector.extract_strided_slice %70 {offsets = [64, 0], sizes = [32, 128], strides = [1, 1]} : vector<96x128xf32> to vector<32x128xf32>
    %81 = arith.addf %79, %80 : vector<32x128xf32>
    %82 = math.tanh %81 : vector<32x128xf32>
    %83 = vector.extract_strided_slice %11 {offsets = [384, 0], sizes = [32, 128], strides = [1, 1]} : vector<416x128xf32> to vector<32x128xf32>
    %c2_29 = arith.constant 2 : index
    %c0_30 = arith.constant 0 : index
    %c0_31 = arith.constant 0 : index
    %84 = vector.load %arg7[%c2_29, %c0_30, %c0_31] : memref<3x32x32xf32, #tpu.memory_space<vmem>>, vector<1x32x32xf32>
    %85 = vector.shape_cast %84 : vector<1x32x32xf32> to vector<32x32xf32>
    %86 = arith.mulf %67, %82 : vector<32x128xf32>
    %cst_32 = arith.constant dense<0.000000e+00> : vector<32x128xf32>
    %87 = tpu.matmul %85, %86, %cst_32 {dimension_numbers = #tpu.dot_dimension_numbers<[1], [0], [0], [1], [0, 0, 1, 1], [], []>, precision = #tpu.contract_precision<fp32>} : vector<32x32xf32>, vector<32x128xf32>, vector<32x128xf32> -> vector<32x128xf32>
    %88 = arith.addf %83, %87 : vector<32x128xf32>
    %89 = math.tanh %88 : vector<32x128xf32>
    %cst_33 = arith.constant 1.000000e+00 : f32
    %90 = vector.broadcast %cst_33 : f32 to vector<32x128xf32>
    %91 = arith.subf %90, %78 : vector<32x128xf32>
    %92 = arith.mulf %91, %89 : vector<32x128xf32>
    %93 = arith.mulf %74, %67 : vector<32x128xf32>
    %94 = arith.addf %92, %93 : vector<32x128xf32>
    %c0_34 = arith.constant 0 : index
    %c0_35 = arith.constant 0 : index
    %95 = vector.load %arg8[%c0_34, %c0_35] : memref<1x32xf32, #tpu.memory_space<vmem>>, vector<1x32xf32>
    %cst_36 = arith.constant dense<0.000000e+00> : vector<1x128xf32>
    %96 = tpu.matmul %95, %94, %cst_36 {dimension_numbers = #tpu.dot_dimension_numbers<[1], [0], [0], [1], [0, 0, 1, 1], [], []>, precision = #tpu.contract_precision<fp32>} : vector<1x32xf32>, vector<32x128xf32>, vector<1x128xf32> -> vector<1x128xf32>
    %c0_37 = arith.constant 0 : index
    %c0_38 = arith.constant 0 : index
    %97 = vector.load %arg9[%c0_37, %c0_38] : memref<1x1xf32, #tpu.memory_space<vmem>>, vector<1x1xf32>
    %98 = vector.broadcast %97 : vector<1x1xf32> to vector<1x128xf32>
    %99 = arith.addf %96, %98 : vector<1x128xf32>
    %c0_39 = arith.constant 0 : index
    %c0_40 = arith.constant 0 : index
    %100 = vector.load %arg10[%c0_39, %c0_40] : memref<1x128xf32, #tpu.memory_space<vmem>>, vector<1x128xf32>
    tpu.vector_store %arg10[%c0_39, %c0_40], %99 {strides = array<i32>} : memref<1x128xf32, #tpu.memory_space<vmem>>, vector<1x128xf32>,
    return
  }
  func.func @transform_0(%arg0: i32) -> (i32, i32) {
    %c0_i32 = arith.constant 0 : i32
    %c0_i32_0 = arith.constant 0 : i32
    return %c0_i32, %arg0 : i32, i32
  }
  func.func @transform_1(%arg0: i32) -> (i32, i32) {
    %c0_i32 = arith.constant 0 : i32
    %c0_i32_0 = arith.constant 0 : i32
    return %c0_i32, %arg0 : i32, i32
  }
  func.func @transform_2(%arg0: i32) -> (i32, i32) {
    %c0_i32 = arith.constant 0 : i32
    %c0_i32_0 = arith.constant 0 : i32
    %c0_i32_1 = arith.constant 0 : i32
    return %c0_i32, %c0_i32_0 : i32, i32
  }
  func.func @transform_3(%arg0: i32) -> (i32, i32) {
    %c0_i32 = arith.constant 0 : i32
    %c0_i32_0 = arith.constant 0 : i32
    %c0_i32_1 = arith.constant 0 : i32
    return %c0_i32, %c0_i32_0 : i32, i32
  }
  func.func @transform_4(%arg0: i32) -> (i32, i32) {
    %c0_i32 = arith.constant 0 : i32
    %c0_i32_0 = arith.constant 0 : i32
    %c0_i32_1 = arith.constant 0 : i32
    return %c0_i32, %c0_i32_0 : i32, i32
  }
  func.func @transform_5(%arg0: i32) -> (i32, i32, i32) {
    %c0_i32 = arith.constant 0 : i32
    %c0_i32_0 = arith.constant 0 : i32
    %c0_i32_1 = arith.constant 0 : i32
    %c0_i32_2 = arith.constant 0 : i32
    return %c0_i32, %c0_i32_0, %c0_i32_1 : i32, i32, i32
  }
  func.func @transform_6(%arg0: i32) -> (i32, i32, i32) {
    %c0_i32 = arith.constant 0 : i32
    %c0_i32_0 = arith.constant 0 : i32
    %c0_i32_1 = arith.constant 0 : i32
    %c0_i32_2 = arith.constant 0 : i32
    return %c0_i32, %c0_i32_0, %c0_i32_1 : i32, i32, i32
  }
  func.func @transform_7(%arg0: i32) -> (i32, i32) {
    %c0_i32 = arith.constant 0 : i32
    %c0_i32_0 = arith.constant 0 : i32
    %c0_i32_1 = arith.constant 0 : i32
    return %c0_i32, %c0_i32_0 : i32, i32
  }
  func.func @transform_8(%arg0: i32) -> (i32, i32) {
    %c0_i32 = arith.constant 0 : i32
    %c0_i32_0 = arith.constant 0 : i32
    %c0_i32_1 = arith.constant 0 : i32
    return %c0_i32, %c0_i32_0 : i32, i32
  }
  func.func @transform_9(%arg0: i32) -> (i32, i32) {
    %c0_i32 = arith.constant 0 : i32
    %c0_i32_0 = arith.constant 0 : i32
    return %c0_i32, %arg0 : i32, i32
  }
}

</mosaic_0001>

<llo_original>
// kernel: tpu_custom_call.1
$region0: #{tpu_custom_call.1}
  #allocation0 [shape = 'u32[]', space=smem, size = 0x4, offset = 0x4, fixed_abs, tag = 'smem constant byte address 0x4 - core index']
  #allocation1 [shape = 'u32[144,128]{1,0:T(1,128)}', space=vmem, size = 0x12000, scoped, tag = 'internal scratch']
  #allocation2 [shape = 'f32[1,1]{1,0:T(1,128)S(1)}', space=vmem, size = 0x200, scoped, tag = 'scoped memory for tpu_custom_call.1']
  %s0 = inlined_call_operand.vmem [shape: f32[1,256], index: 0, kind: input, shape index: {}]
  %s1 = inlined_call_operand.vmem [shape: f32[3,256], index: 1, kind: input, shape index: {}]
  %s2 = inlined_call_operand.vmem [shape: f32[416,1], index: 2, kind: input, shape index: {}]
  %s3 = inlined_call_operand.vmem [shape: f32[416,3], index: 3, kind: input, shape index: {}]
  %s4 = inlined_call_operand.vmem [shape: f32[416,1], index: 4, kind: input, shape index: {}]
  %s5 = inlined_call_operand.vmem [shape: f32[3,96,32], index: 5, kind: input, shape index: {}]
  %s6 = inlined_call_operand.vmem [shape: f32[3,32,32], index: 6, kind: input, shape index: {}]
  %s7 = inlined_call_operand.vmem [shape: f32[1,32], index: 7, kind: input, shape index: {}]
  %s8 = inlined_call_operand.<no memory space> [shape: f32[1,1], index: 8, kind: input, shape index: {}]
  %s9 = inlined_call_operand.hbm [shape: f32[1,256], index: 9, kind: output, shape index: {}]
  %s10 = sld [smem:[#allocation0]]
  $region69: #{tpu_custom_call.1} parent=0
    _
  %s12 = ssub.s32 1, %s10
  %s13 = scalar_select 0, %s12, %s10
  %v14 = vstv %s8
  %15 = vst [vmem:[#allocation2] sm:$0x1] %v14
  $region1: #{tpu_custom_call.1} parent=0
    #allocation3 [shape = 'u8[1024]{0}', space=vmem, size = 0x400, scoped, tag = 'output window, operand 0']
    #allocation4 [shape = 's32[2]{0}', space=sflag, size = 0x8, scoped, tag = 'scoped memory for tpu_custom_call.1']
    %16 = vsyncpa [#allocation4], 0
    %s17 = scalar_lea.sflag [#allocation4], 1
    %18 = vsyncpa %s17, 0
    loop: start=0, step=1, limit=4
    $region2: #{tpu_custom_call.1} parent=1 // loop_pre_header
      _
    $region3: #{tpu_custom_call.1} parent=1 // loop_header
      %s20 = sphi 0, %s24
      %p21 = scmp.ge.s32.totalorder %s20, 4
      %s30 = sphi 0, %s32
      %s33 = sphi 0, %s30
      %s34 = sphi 0, %s33
      %s50 = sphi 0, %s34
      %s56 = sphi 0, %s58
      %s59 = sphi 0, %s56
      %s60 = sphi 0, %s59
      %s76 = sphi 0, %s60
      %s80 = sphi 0, %s80
      %s82 = sphi 0, %s80
      %s83 = sphi 0, %s82
      %s97 = sphi 0, %s83
      %s101 = sphi 0, %s101
      %s103 = sphi 0, %s101
      %s104 = sphi 0, %s103
      %s118 = sphi 0, %s104
      %s122 = sphi 0, %s122
      %s124 = sphi 0, %s122
      %s125 = sphi 0, %s124
      %s139 = sphi 0, %s125
      %s143 = sphi 0, %s143
      %s145 = sphi 0, %s143
      %s146 = sphi 0, %s145
      %s160 = sphi 0, %s146
      %s164 = sphi 0, %s164
      %s166 = sphi 0, %s164
      %s167 = sphi 0, %s166
      %s181 = sphi 0, %s167
      %s185 = sphi 0, %s185
      %s187 = sphi 0, %s185
      %s188 = sphi 0, %s187
      %s202 = sphi 0, %s188
      %s206 = sphi 0, %s206
      %s208 = sphi 0, %s206
      %s209 = sphi 0, %s208
      %s223 = sphi 0, %s209
      %s229 = sphi 0, %s231
      %s232 = sphi 0, %s229
      %s233 = sphi 0, %s232
      %s249 = sphi 0, %s233
    $region4: #{tpu_custom_call.1} parent=1 // loop_header_branch
      %23 = sbr.rel (%p21) target = $region8
    $region5: #{tpu_custom_call.1} parent=1 // loop_body
      %s25 = ssub.s32 %s20, 1
      %s26 = ssub.s32 %s20, 2
      %s27 = sadd.s32 %s20, 1
      %s28 = ssub.s32 %s20, %s27
      %p29 = scmp.eq.s32.totalorder %s28, 0
      %s31 = sadd.s32 %s30, 1
      %s32 = scalar_select %p29, %s30, %s31
      %p35 = pneg %p29
      %p36 = scmp.eq.s32.totalorder %s20, 1
      %p37 = por %p35, %p36
      %p38 = scmp.ne.s32.totalorder %s30, %s33
      %p39 = scmp.eq.s32.totalorder %s20, 0
      %p40 = por %p38, %p39
      %p41 = scmp.ne.s32.totalorder %s30, %s33
      %p42 = scmp.eq.s32.totalorder %s25, 1
      %p43 = por %p41, %p42
      %p44 = scmp.ne.s32.totalorder %s33, %s34
      %p45 = scmp.eq.s32.totalorder %s25, 0
      %p46 = por %p44, %p45
      %p47 = scmp.ne.s32.totalorder %s33, %s34
      %p48 = scmp.eq.s32.totalorder %s26, 1
      %p49 = por %p47, %p48
      %p51 = scmp.ne.s32.totalorder %s34, %s50
      %p52 = scmp.eq.s32.totalorder %s26, 0
      %p53 = por %p51, %p52
      %s54 = ssub.s32 %s20, %s27
      %p55 = scmp.eq.s32.totalorder %s54, 0
      %s57 = sadd.s32 %s56, 1
      %s58 = scalar_select %p55, %s56, %s57
      %p61 = pneg %p55
      %p62 = scmp.eq.s32.totalorder %s20, 1
      %p63 = por %p61, %p62
      %p64 = scmp.ne.s32.totalorder %s56, %s59
      %p65 = scmp.eq.s32.totalorder %s20, 0
      %p66 = por %p64, %p65
      %p67 = scmp.ne.s32.totalorder %s56, %s59
      %p68 = scmp.eq.s32.totalorder %s25, 1
      %p69 = por %p67, %p68
      %p70 = scmp.ne.s32.totalorder %s59, %s60
      %p71 = scmp.eq.s32.totalorder %s25, 0
      %p72 = por %p70, %p71
      %p73 = scmp.ne.s32.totalorder %s59, %s60
      %p74 = scmp.eq.s32.totalorder %s26, 1
      %p75 = por %p73, %p74
      %p77 = scmp.ne.s32.totalorder %s60, %s76
      %p78 = scmp.eq.s32.totalorder %s26, 0
      %p79 = por %p77, %p78
      %s81 = sadd.s32 %s80, 1
      %p84 = scmp.eq.s32.totalorder %s20, 1
      %p85 = scmp.ne.s32.totalorder %s80, %s82
      %p86 = scmp.eq.s32.totalorder %s20, 0
      %p87 = por %p85, %p86
      %p88 = scmp.ne.s32.totalorder %s80, %s82
      %p89 = scmp.eq.s32.totalorder %s25, 1
      %p90 = por %p88, %p89
      %p91 = scmp.ne.s32.totalorder %s82, %s83
      %p92 = scmp.eq.s32.totalorder %s25, 0
      %p93 = por %p91, %p92
      %p94 = scmp.ne.s32.totalorder %s82, %s83
      %p95 = scmp.eq.s32.totalorder %s26, 1
      %p96 = por %p94, %p95
      %p98 = scmp.ne.s32.totalorder %s83, %s97
      %p99 = scmp.eq.s32.totalorder %s26, 0
      %p100 = por %p98, %p99
      %s102 = sadd.s32 %s101, 1
      %p105 = scmp.eq.s32.totalorder %s20, 1
      %p106 = scmp.ne.s32.totalorder %s101, %s103
      %p107 = scmp.eq.s32.totalorder %s20, 0
      %p108 = por %p106, %p107
      %p109 = scmp.ne.s32.totalorder %s101, %s103
      %p110 = scmp.eq.s32.totalorder %s25, 1
      %p111 = por %p109, %p110
      %p112 = scmp.ne.s32.totalorder %s103, %s104
      %p113 = scmp.eq.s32.totalorder %s25, 0
      %p114 = por %p112, %p113
      %p115 = scmp.ne.s32.totalorder %s103, %s104
      %p116 = scmp.eq.s32.totalorder %s26, 1
      %p117 = por %p115, %p116
      %p119 = scmp.ne.s32.totalorder %s104, %s118
      %p120 = scmp.eq.s32.totalorder %s26, 0
      %p121 = por %p119, %p120
      %s123 = sadd.s32 %s122, 1
      %p126 = scmp.eq.s32.totalorder %s20, 1
      %p127 = scmp.ne.s32.totalorder %s122, %s124
      %p128 = scmp.eq.s32.totalorder %s20, 0
      %p129 = por %p127, %p128
      %p130 = scmp.ne.s32.totalorder %s122, %s124
      %p131 = scmp.eq.s32.totalorder %s25, 1
      %p132 = por %p130, %p131
      %p133 = scmp.ne.s32.totalorder %s124, %s125
      %p134 = scmp.eq.s32.totalorder %s25, 0
      %p135 = por %p133, %p134
      %p136 = scmp.ne.s32.totalorder %s124, %s125
      %p137 = scmp.eq.s32.totalorder %s26, 1
      %p138 = por %p136, %p137
      %p140 = scmp.ne.s32.totalorder %s125, %s139
      %p141 = scmp.eq.s32.totalorder %s26, 0
      %p142 = por %p140, %p141
      %s144 = sadd.s32 %s143, 1
      %p147 = scmp.eq.s32.totalorder %s20, 1
      %p148 = scmp.ne.s32.totalorder %s143, %s145
      %p149 = scmp.eq.s32.totalorder %s20, 0
      %p150 = por %p148, %p149
      %p151 = scmp.ne.s32.totalorder %s143, %s145
      %p152 = scmp.eq.s32.totalorder %s25, 1
      %p153 = por %p151, %p152
      %p154 = scmp.ne.s32.totalorder %s145, %s146
      %p155 = scmp.eq.s32.totalorder %s25, 0
      %p156 = por %p154, %p155
      %p157 = scmp.ne.s32.totalorder %s145, %s146
      %p158 = scmp.eq.s32.totalorder %s26, 1
      %p159 = por %p157, %p158
      %p161 = scmp.ne.s32.totalorder %s146, %s160
      %p162 = scmp.eq.s32.totalorder %s26, 0
      %p163 = por %p161, %p162
      %s165 = sadd.s32 %s164, 1
      %p168 = scmp.eq.s32.totalorder %s20, 1
      %p169 = scmp.ne.s32.totalorder %s164, %s166
      %p170 = scmp.eq.s32.totalorder %s20, 0
      %p171 = por %p169, %p170
      %p172 = scmp.ne.s32.totalorder %s164, %s166
      %p173 = scmp.eq.s32.totalorder %s25, 1
      %p174 = por %p172, %p173
      %p175 = scmp.ne.s32.totalorder %s166, %s167
      %p176 = scmp.eq.s32.totalorder %s25, 0
      %p177 = por %p175, %p176
      %p178 = scmp.ne.s32.totalorder %s166, %s167
      %p179 = scmp.eq.s32.totalorder %s26, 1
      %p180 = por %p178, %p179
      %p182 = scmp.ne.s32.totalorder %s167, %s181
      %p183 = scmp.eq.s32.totalorder %s26, 0
      %p184 = por %p182, %p183
      %s186 = sadd.s32 %s185, 1
      %p189 = scmp.eq.s32.totalorder %s20, 1
      %p190 = scmp.ne.s32.totalorder %s185, %s187
      %p191 = scmp.eq.s32.totalorder %s20, 0
      %p192 = por %p190, %p191
      %p193 = scmp.ne.s32.totalorder %s185, %s187
      %p194 = scmp.eq.s32.totalorder %s25, 1
      %p195 = por %p193, %p194
      %p196 = scmp.ne.s32.totalorder %s187, %s188
      %p197 = scmp.eq.s32.totalorder %s25, 0
      %p198 = por %p196, %p197
      %p199 = scmp.ne.s32.totalorder %s187, %s188
      %p200 = scmp.eq.s32.totalorder %s26, 1
      %p201 = por %p199, %p200
      %p203 = scmp.ne.s32.totalorder %s188, %s202
      %p204 = scmp.eq.s32.totalorder %s26, 0
      %p205 = por %p203, %p204
      %s207 = sadd.s32 %s206, 1
      %p210 = scmp.eq.s32.totalorder %s20, 1
      %p211 = scmp.ne.s32.totalorder %s206, %s208
      %p212 = scmp.eq.s32.totalorder %s20, 0
      %p213 = por %p211, %p212
      %p214 = scmp.ne.s32.totalorder %s206, %s208
      %p215 = scmp.eq.s32.totalorder %s25, 1
      %p216 = por %p214, %p215
      %p217 = scmp.ne.s32.totalorder %s208, %s209
      %p218 = scmp.eq.s32.totalorder %s25, 0
      %p219 = por %p217, %p218
      %p220 = scmp.ne.s32.totalorder %s208, %s209
      %p221 = scmp.eq.s32.totalorder %s26, 1
      %p222 = por %p220, %p221
      %p224 = scmp.ne.s32.totalorder %s209, %s223
      %p225 = scmp.eq.s32.totalorder %s26, 0
      %p226 = por %p224, %p225
      %s227 = ssub.s32 %s20, %s27
      %p228 = scmp.eq.s32.totalorder %s227, 0
      %s230 = sadd.s32 %s229, 1
      %s231 = scalar_select %p228, %s229, %s230
      %p234 = pneg %p228
      %p235 = scmp.eq.s32.totalorder %s20, 1
      %p236 = por %p234, %p235
      %p237 = scmp.ne.s32.totalorder %s229, %s232
      %p238 = scmp.eq.s32.totalorder %s20, 0
      %p239 = por %p237, %p238
      %p240 = scmp.ne.s32.totalorder %s229, %s232
      %p241 = scmp.eq.s32.totalorder %s25, 1
      %p242 = por %p240, %p241
      %p243 = scmp.ne.s32.totalorder %s232, %s233
      %p244 = scmp.eq.s32.totalorder %s25, 0
      %p245 = por %p243, %p244
      %p246 = scmp.ne.s32.totalorder %s232, %s233
      %p247 = scmp.eq.s32.totalorder %s26, 1
      %p248 = por %p246, %p247
      %p250 = scmp.ne.s32.totalorder %s233, %s249
      %p251 = scmp.eq.s32.totalorder %s26, 0
      %p252 = por %p250, %p251
      %p253 = scmp.le.s32.totalorder 1, %s20
      %p254 = scmp.lt.s32.totalorder %s20, 3
      %p255 = pnand %p253, %p254
      %p256 = pneg %p255
      // Predicated region
      $region9: #{tpu_custom_call.1} parent=5 // pred_check
        _
      $region10: #{tpu_custom_call.1} parent=5 // pred_check_branch
        %258 = sbr.rel (%p255) target = $region12
      $region11: #{tpu_custom_call.1} parent=5 // pred_region
        %s259 = ssub.s32 %s20, 1
        // Predicated region
        $region13: #{tpu_custom_call.1} parent=11 // pred_check
          %p260 = pneg %p93
        $region14: #{tpu_custom_call.1} parent=11 // pred_check_branch
          %262 = sbr.rel (%p260) target = $region16
        $region15: #{tpu_custom_call.1} parent=11 // pred_region
          _
        $region16: #{tpu_custom_call.1} parent=11 // pred_fallthru
          _
        // Predicated region
        $region17: #{tpu_custom_call.1} parent=11 // pred_check
          %p263 = pneg %p114
        $region18: #{tpu_custom_call.1} parent=11 // pred_check_branch
          %265 = sbr.rel (%p263) target = $region20
        $region19: #{tpu_custom_call.1} parent=11 // pred_region
          _
        $region20: #{tpu_custom_call.1} parent=11 // pred_fallthru
          _
        // Predicated region
        $region21: #{tpu_custom_call.1} parent=11 // pred_check
          %p266 = pneg %p135
        $region22: #{tpu_custom_call.1} parent=11 // pred_check_branch
          %268 = sbr.rel (%p266) target = $region24
        $region23: #{tpu_custom_call.1} parent=11 // pred_region
          _
        $region24: #{tpu_custom_call.1} parent=11 // pred_fallthru
          _
        // Predicated region
        $region25: #{tpu_custom_call.1} parent=11 // pred_check
          %p269 = pneg %p156
        $region26: #{tpu_custom_call.1} parent=11 // pred_check_branch
          %271 = sbr.rel (%p269) target = $region28
        $region27: #{tpu_custom_call.1} parent=11 // pred_region
          _
        $region28: #{tpu_custom_call.1} parent=11 // pred_fallthru
          _
        // Predicated region
        $region29: #{tpu_custom_call.1} parent=11 // pred_check
          %p272 = pneg %p177
        $region30: #{tpu_custom_call.1} parent=11 // pred_check_branch
          %274 = sbr.rel (%p272) target = $region32
        $region31: #{tpu_custom_call.1} parent=11 // pred_region
          _
        $region32: #{tpu_custom_call.1} parent=11 // pred_fallthru
          _
        // Predicated region
        $region33: #{tpu_custom_call.1} parent=11 // pred_check
          %p275 = pneg %p198
        $region34: #{tpu_custom_call.1} parent=11 // pred_check_branch
          %277 = sbr.rel (%p275) target = $region36
        $region35: #{tpu_custom_call.1} parent=11 // pred_region
          _
        $region36: #{tpu_custom_call.1} parent=11 // pred_fallthru
          _
        // Predicated region
        $region37: #{tpu_custom_call.1} parent=11 // pred_check
          %p278 = pneg %p219
        $region38: #{tpu_custom_call.1} parent=11 // pred_check_branch
          %280 = sbr.rel (%p278) target = $region40
        $region39: #{tpu_custom_call.1} parent=11 // pred_region
          _
        $region40: #{tpu_custom_call.1} parent=11 // pred_fallthru
          _
      $region12: #{tpu_custom_call.1} parent=5 // pred_fallthru
        _
      %p281 = scmp.lt.s32.totalorder %s20, 2
      // Predicated region
      $region41: #{tpu_custom_call.1} parent=5 // pred_check
        %p282 = pneg %p281
      $region42: #{tpu_custom_call.1} parent=5 // pred_check_branch
        %284 = sbr.rel (%p282) target = $region44
      $region43: #{tpu_custom_call.1} parent=5 // pred_region
        // Predicated region
        $region45: #{tpu_custom_call.1} parent=43 // pred_check
          %p285 = pneg %p40
        $region46: #{tpu_custom_call.1} parent=43 // pred_check_branch
          %287 = sbr.rel (%p285) target = $region48
        $region47: #{tpu_custom_call.1} parent=43 // pred_region
          %p288 = scmp.lt.s32.totalorder %s20, 1
          %s289 = scalar_select %p288, %s20, 1
          %s290 = scalar_lea.vmem %s0, %s289
        $region48: #{tpu_custom_call.1} parent=43 // pred_fallthru
          _
        // Predicated region
        $region49: #{tpu_custom_call.1} parent=43 // pred_check
          %p291 = pneg %p66
        $region50: #{tpu_custom_call.1} parent=43 // pred_check_branch
          %293 = sbr.rel (%p291) target = $region52
        $region51: #{tpu_custom_call.1} parent=43 // pred_region
          %p294 = scmp.lt.s32.totalorder %s20, 1
          %s295 = scalar_select %p294, %s20, 1
          %s296 = smul.addr %s295, 4
          %s297 = scalar_lea.vmem %s1, %s296
        $region52: #{tpu_custom_call.1} parent=43 // pred_fallthru
          _
      $region44: #{tpu_custom_call.1} parent=5 // pred_fallthru
        _
      %p298 = scmp.le.s32.totalorder 1, %s20
      %p299 = scmp.lt.s32.totalorder %s20, 3
      %p300 = pnand %p298, %p299
      %p301 = pneg %p300
      // Predicated region
      $region53: #{tpu_custom_call.1} parent=5 // pred_check
        _
      $region54: #{tpu_custom_call.1} parent=5 // pred_check_branch
        %303 = sbr.rel (%p300) target = $region56
      $region55: #{tpu_custom_call.1} parent=5 // pred_region
        %s304 = ssub.s32 %s20, 1
        %p305 = scmp.lt.s32.totalorder %s25, 1
        %s306 = scalar_select %p305, %s25, 1
        %s307 = scalar_lea.vmem %s0, %s306
        %p308 = pneg %p46
        %p309 = pneg %p43
        %p310 = scmp.lt.s32.totalorder %s25, 1
        %s311 = scalar_select %p310, %s25, 1
        %s312 = smul.addr %s311, 4
        %s313 = scalar_lea.vmem %s1, %s312
        %p314 = pneg %p72
        %p315 = pneg %p69
        %p316 = pneg %p93
        %p317 = pneg %p90
        %p318 = pneg %p114
        %p319 = pneg %p111
        %p320 = pneg %p135
        %p321 = pneg %p132
        %p322 = pneg %p156
        %p323 = pneg %p153
        %p324 = pneg %p177
        %p325 = pneg %p174
        %p326 = pneg %p198
        %p327 = pneg %p195
        %p328 = pneg %p219
        %p329 = pneg %p216
        %p330 = pneg %p245
        %p331 = pneg %p242
        %s332 = sand.u32 %s232, 1
        %s333 = scalar_lea.sflag [#allocation4], %s332
        %s334 = sand.u32 %s232, 1
        %s335 = scalar_lea.vmem [#allocation3], %s334
        %p336 = scmp.lt.s32.totalorder %s25, 1
        %s337 = scalar_select %p336, %s25, 1
        %s338 = scalar_lea.vmem %s0, %s337
        %p339 = scmp.lt.s32.totalorder %s25, 1
        %s340 = scalar_select %p339, %s25, 1
        %s341 = smul.addr %s340, 4
        %s342 = scalar_lea.vmem %s1, %s341
        %v343 = vld [vmem:[%s338] sm:$0x1]
        %v344 = vld [vmem:[%s342] sm:$0x7]
        %v345 = vld [vmem:[%s3] sm:$0xff]
        %v346 = vld [vmem:[%s3 + $0x8] sm:$0xff]
        %v347 = vld [vmem:[%s3 + $0x10] sm:$0xff]
        %v348 = vld [vmem:[%s3 + $0x18] sm:$0xff]
        %v349 = vld [vmem:[%s3 + $0x20] sm:$0xff]
        %v350 = vld [vmem:[%s3 + $0x28] sm:$0xff]
        %v351 = vld [vmem:[%s3 + $0x30] sm:$0xff]
        %v352 = vld [vmem:[%s3 + $0x38] sm:$0xff]
        %v353 = vld [vmem:[%s3 + $0x40] sm:$0xff]
        %v354 = vld [vmem:[%s3 + $0x48] sm:$0xff]
        %v355 = vld [vmem:[%s3 + $0x50] sm:$0xff]
        %v356 = vld [vmem:[%s3 + $0x58] sm:$0xff]
        %v357 = vld [vmem:[%s3 + $0x60] sm:$0xff]
        %v358 = vld [vmem:[%s3 + $0x68] sm:$0xff]
        %v359 = vld [vmem:[%s3 + $0x70] sm:$0xff]
        %v360 = vld [vmem:[%s3 + $0x78] sm:$0xff]
        %v361 = vld [vmem:[%s3 + $0x80] sm:$0xff]
        %v362 = vld [vmem:[%s3 + $0x88] sm:$0xff]
        %v363 = vld [vmem:[%s3 + $0x90] sm:$0xff]
        %v364 = vld [vmem:[%s3 + $0x98] sm:$0xff]
        %v365 = vld [vmem:[%s3 + $0xa0] sm:$0xff]
        %v366 = vld [vmem:[%s3 + $0xa8] sm:$0xff]
        %v367 = vld [vmem:[%s3 + $0xb0] sm:$0xff]
        %v368 = vld [vmem:[%s3 + $0xb8] sm:$0xff]
        %v369 = vld [vmem:[%s3 + $0xc0] sm:$0xff]
        %v370 = vld [vmem:[%s3 + $0xc8] sm:$0xff]
        %v371 = vld [vmem:[%s3 + $0xd0] sm:$0xff]
        %v372 = vld [vmem:[%s3 + $0xd8] sm:$0xff]
        %v373 = vld [vmem:[%s3 + $0xe0] sm:$0xff]
        %v374 = vld [vmem:[%s3 + $0xe8] sm:$0xff]
        %v375 = vld [vmem:[%s3 + $0xf0] sm:$0xff]
        %v376 = vld [vmem:[%s3 + $0xf8] sm:$0xff]
        %v377 = vld [vmem:[%s3 + $0x100] sm:$0xff]
        %v378 = vld [vmem:[%s3 + $0x108] sm:$0xff]
        %v379 = vld [vmem:[%s3 + $0x110] sm:$0xff]
        %v380 = vld [vmem:[%s3 + $0x118] sm:$0xff]
        %v381 = vld [vmem:[%s3 + $0x120] sm:$0xff]
        %v382 = vld [vmem:[%s3 + $0x128] sm:$0xff]
        %v383 = vld [vmem:[%s3 + $0x130] sm:$0xff]
        %v384 = vld [vmem:[%s3 + $0x138] sm:$0xff]
        %v385 = vld [vmem:[%s3 + $0x140] sm:$0xff]
        %v386 = vld [vmem:[%s3 + $0x148] sm:$0xff]
        %v387 = vld [vmem:[%s3 + $0x150] sm:$0xff]
        %v388 = vld [vmem:[%s3 + $0x158] sm:$0xff]
        %v389 = vld [vmem:[%s3 + $0x160] sm:$0xff]
        %v390 = vld [vmem:[%s3 + $0x168] sm:$0xff]
        %v391 = vld [vmem:[%s3 + $0x170] sm:$0xff]
        %v392 = vld [vmem:[%s3 + $0x178] sm:$0xff]
        %v393 = vld [vmem:[%s3 + $0x180] sm:$0xff]
        %v394 = vld [vmem:[%s3 + $0x188] sm:$0xff]
        %v395 = vld [vmem:[%s3 + $0x190] sm:$0xff]
        %v396 = vld [vmem:[%s3 + $0x198] sm:$0xff]
        %v397 = vld [vmem:[%s2] sm:$0xff]
        %v398 = vld [vmem:[%s2 + $0x8] sm:$0xff]
        %v399 = vld [vmem:[%s2 + $0x10] sm:$0xff]
        %v400 = vld [vmem:[%s2 + $0x18] sm:$0xff]
        %v401 = vld [vmem:[%s2 + $0x20] sm:$0xff]
        %v402 = vld [vmem:[%s2 + $0x28] sm:$0xff]
        %v403 = vld [vmem:[%s2 + $0x30] sm:$0xff]
        %v404 = vld [vmem:[%s2 + $0x38] sm:$0xff]
        %v405 = vld [vmem:[%s2 + $0x40] sm:$0xff]
        %v406 = vld [vmem:[%s2 + $0x48] sm:$0xff]
        %v407 = vld [vmem:[%s2 + $0x50] sm:$0xff]
        %v408 = vld [vmem:[%s2 + $0x58] sm:$0xff]
        %v409 = vld [vmem:[%s2 + $0x60] sm:$0xff]
        %v410 = vld [vmem:[%s2 + $0x68] sm:$0xff]
        %v411 = vld [vmem:[%s2 + $0x70] sm:$0xff]
        %v412 = vld [vmem:[%s2 + $0x78] sm:$0xff]
        %v413 = vld [vmem:[%s2 + $0x80] sm:$0xff]
        %v414 = vld [vmem:[%s2 + $0x88] sm:$0xff]
        %v415 = vld [vmem:[%s2 + $0x90] sm:$0xff]
        %v416 = vld [vmem:[%s2 + $0x98] sm:$0xff]
        %v417 = vld [vmem:[%s2 + $0xa0] sm:$0xff]
        %v418 = vld [vmem:[%s2 + $0xa8] sm:$0xff]
        %v419 = vld [vmem:[%s2 + $0xb0] sm:$0xff]
        %v420 = vld [vmem:[%s2 + $0xb8] sm:$0xff]
        %v421 = vld [vmem:[%s2 + $0xc0] sm:$0xff]
        %v422 = vld [vmem:[%s2 + $0xc8] sm:$0xff]
        %v423 = vld [vmem:[%s2 + $0xd0] sm:$0xff]
        %v424 = vld [vmem:[%s2 + $0xd8] sm:$0xff]
        %v425 = vld [vmem:[%s2 + $0xe0] sm:$0xff]
        %v426 = vld [vmem:[%s2 + $0xe8] sm:$0xff]
        %v427 = vld [vmem:[%s2 + $0xf0] sm:$0xff]
        %v428 = vld [vmem:[%s2 + $0xf8] sm:$0xff]
        %v429 = vld [vmem:[%s2 + $0x100] sm:$0xff]
        %v430 = vld [vmem:[%s2 + $0x108] sm:$0xff]
        %v431 = vld [vmem:[%s2 + $0x110] sm:$0xff]
        %v432 = vld [vmem:[%s2 + $0x118] sm:$0xff]
        %v433 = vld [vmem:[%s2 + $0x120] sm:$0xff]
        %v434 = vld [vmem:[%s2 + $0x128] sm:$0xff]
        %v435 = vld [vmem:[%s2 + $0x130] sm:$0xff]
        %v436 = vld [vmem:[%s2 + $0x138] sm:$0xff]
        %v437 = vld [vmem:[%s2 + $0x140] sm:$0xff]
        %v438 = vld [vmem:[%s2 + $0x148] sm:$0xff]
        %v439 = vld [vmem:[%s2 + $0x150] sm:$0xff]
        %v440 = vld [vmem:[%s2 + $0x158] sm:$0xff]
        %v441 = vld [vmem:[%s2 + $0x160] sm:$0xff]
        %v442 = vld [vmem:[%s2 + $0x168] sm:$0xff]
        %v443 = vld [vmem:[%s2 + $0x170] sm:$0xff]
        %v444 = vld [vmem:[%s2 + $0x178] sm:$0xff]
        %v445 = vld [vmem:[%s2 + $0x180] sm:$0xff]
        %v446 = vld [vmem:[%s2 + $0x188] sm:$0xff]
        %v447 = vld [vmem:[%s2 + $0x190] sm:$0xff]
        %v448 = vld [vmem:[%s2 + $0x198] sm:$0xff]
        %450 = vset.pattern.permute.xlu0 0
        %451 = vperm.xlu0 %450, %v397
        %v452 = vpop.permute.xlu0 %451
        %455 = vset.pattern.permute.xlu0 0
        %456 = vperm.xlu0 %455, %v398
        %v457 = vpop.permute.xlu0 %456
        %460 = vset.pattern.permute.xlu0 0
        %461 = vperm.xlu0 %460, %v399
        %v462 = vpop.permute.xlu0 %461
        %465 = vset.pattern.permute.xlu0 0
        %466 = vperm.xlu0 %465, %v400
        %v467 = vpop.permute.xlu0 %466
        %470 = vset.pattern.permute.xlu0 0
        %471 = vperm.xlu0 %470, %v401
        %v472 = vpop.permute.xlu0 %471
        %475 = vset.pattern.permute.xlu0 0
        %476 = vperm.xlu0 %475, %v402
        %v477 = vpop.permute.xlu0 %476
        %480 = vset.pattern.permute.xlu0 0
        %481 = vperm.xlu0 %480, %v403
        %v482 = vpop.permute.xlu0 %481
        %485 = vset.pattern.permute.xlu0 0
        %486 = vperm.xlu0 %485, %v404
        %v487 = vpop.permute.xlu0 %486
        %490 = vset.pattern.permute.xlu0 0
        %491 = vperm.xlu0 %490, %v405
        %v492 = vpop.permute.xlu0 %491
        %495 = vset.pattern.permute.xlu0 0
        %496 = vperm.xlu0 %495, %v406
        %v497 = vpop.permute.xlu0 %496
        %500 = vset.pattern.permute.xlu0 0
        %501 = vperm.xlu0 %500, %v407
        %v502 = vpop.permute.xlu0 %501
        %505 = vset.pattern.permute.xlu0 0
        %506 = vperm.xlu0 %505, %v408
        %v507 = vpop.permute.xlu0 %506
        %510 = vset.pattern.permute.xlu0 0
        %511 = vperm.xlu0 %510, %v409
        %v512 = vpop.permute.xlu0 %511
        %515 = vset.pattern.permute.xlu0 0
        %516 = vperm.xlu0 %515, %v410
        %v517 = vpop.permute.xlu0 %516
        %520 = vset.pattern.permute.xlu0 0
        %521 = vperm.xlu0 %520, %v411
        %v522 = vpop.permute.xlu0 %521
        %525 = vset.pattern.permute.xlu0 0
        %526 = vperm.xlu0 %525, %v412
        %v527 = vpop.permute.xlu0 %526
        %530 = vset.pattern.permute.xlu0 0
        %531 = vperm.xlu0 %530, %v413
        %v532 = vpop.permute.xlu0 %531
        %535 = vset.pattern.permute.xlu0 0
        %536 = vperm.xlu0 %535, %v414
        %v537 = vpop.permute.xlu0 %536
        %540 = vset.pattern.permute.xlu0 0
        %541 = vperm.xlu0 %540, %v415
        %v542 = vpop.permute.xlu0 %541
        %545 = vset.pattern.permute.xlu0 0
        %546 = vperm.xlu0 %545, %v416
        %v547 = vpop.permute.xlu0 %546
        %550 = vset.pattern.permute.xlu0 0
        %551 = vperm.xlu0 %550, %v417
        %v552 = vpop.permute.xlu0 %551
        %555 = vset.pattern.permute.xlu0 0
        %556 = vperm.xlu0 %555, %v418
        %v557 = vpop.permute.xlu0 %556
        %560 = vset.pattern.permute.xlu0 0
        %561 = vperm.xlu0 %560, %v419
        %v562 = vpop.permute.xlu0 %561
        %565 = vset.pattern.permute.xlu0 0
        %566 = vperm.xlu0 %565, %v420
        %v567 = vpop.permute.xlu0 %566
        %570 = vset.pattern.permute.xlu0 0
        %571 = vperm.xlu0 %570, %v421
        %v572 = vpop.permute.xlu0 %571
        %575 = vset.pattern.permute.xlu0 0
        %576 = vperm.xlu0 %575, %v422
        %v577 = vpop.permute.xlu0 %576
        %580 = vset.pattern.permute.xlu0 0
        %581 = vperm.xlu0 %580, %v423
        %v582 = vpop.permute.xlu0 %581
        %585 = vset.pattern.permute.xlu0 0
        %586 = vperm.xlu0 %585, %v424
        %v587 = vpop.permute.xlu0 %586
        %590 = vset.pattern.permute.xlu0 0
        %591 = vperm.xlu0 %590, %v425
        %v592 = vpop.permute.xlu0 %591
        %595 = vset.pattern.permute.xlu0 0
        %596 = vperm.xlu0 %595, %v426
        %v597 = vpop.permute.xlu0 %596
        %600 = vset.pattern.permute.xlu0 0
        %601 = vperm.xlu0 %600, %v427
        %v602 = vpop.permute.xlu0 %601
        %605 = vset.pattern.permute.xlu0 0
        %606 = vperm.xlu0 %605, %v428
        %v607 = vpop.permute.xlu0 %606
        %610 = vset.pattern.permute.xlu0 0
        %611 = vperm.xlu0 %610, %v429
        %v612 = vpop.permute.xlu0 %611
        %615 = vset.pattern.permute.xlu0 0
        %616 = vperm.xlu0 %615, %v430
        %v617 = vpop.permute.xlu0 %616
        %620 = vset.pattern.permute.xlu0 0
        %621 = vperm.xlu0 %620, %v431
        %v622 = vpop.permute.xlu0 %621
        %625 = vset.pattern.permute.xlu0 0
        %626 = vperm.xlu0 %625, %v432
        %v627 = vpop.permute.xlu0 %626
        %630 = vset.pattern.permute.xlu0 0
        %631 = vperm.xlu0 %630, %v433
        %v632 = vpop.permute.xlu0 %631
        %635 = vset.pattern.permute.xlu0 0
        %636 = vperm.xlu0 %635, %v434
        %v637 = vpop.permute.xlu0 %636
        %640 = vset.pattern.permute.xlu0 0
        %641 = vperm.xlu0 %640, %v435
        %v642 = vpop.permute.xlu0 %641
        %645 = vset.pattern.permute.xlu0 0
        %646 = vperm.xlu0 %645, %v436
        %v647 = vpop.permute.xlu0 %646
        %650 = vset.pattern.permute.xlu0 0
        %651 = vperm.xlu0 %650, %v437
        %v652 = vpop.permute.xlu0 %651
        %655 = vset.pattern.permute.xlu0 0
        %656 = vperm.xlu0 %655, %v438
        %v657 = vpop.permute.xlu0 %656
        %660 = vset.pattern.permute.xlu0 0
        %661 = vperm.xlu0 %660, %v439
        %v662 = vpop.permute.xlu0 %661
        %665 = vset.pattern.permute.xlu0 0
        %666 = vperm.xlu0 %665, %v440
        %v667 = vpop.permute.xlu0 %666
        %670 = vset.pattern.permute.xlu0 0
        %671 = vperm.xlu0 %670, %v441
        %v672 = vpop.permute.xlu0 %671
        %675 = vset.pattern.permute.xlu0 0
        %676 = vperm.xlu0 %675, %v442
        %v677 = vpop.permute.xlu0 %676
        %680 = vset.pattern.permute.xlu0 0
        %681 = vperm.xlu0 %680, %v443
        %v682 = vpop.permute.xlu0 %681
        %685 = vset.pattern.permute.xlu0 0
        %686 = vperm.xlu0 %685, %v444
        %v687 = vpop.permute.xlu0 %686
        %690 = vset.pattern.permute.xlu0 0
        %691 = vperm.xlu0 %690, %v445
        %v692 = vpop.permute.xlu0 %691
        %695 = vset.pattern.permute.xlu0 0
        %696 = vperm.xlu0 %695, %v446
        %v697 = vpop.permute.xlu0 %696
        %700 = vset.pattern.permute.xlu0 0
        %701 = vperm.xlu0 %700, %v447
        %v702 = vpop.permute.xlu0 %701
        %705 = vset.pattern.permute.xlu0 0
        %706 = vperm.xlu0 %705, %v448
        %v707 = vpop.permute.xlu0 %706
        %v710 = vlaneseq
        %v711 = vshrl.u32 %v710, 7
        %v712 = vsub.s32 0, %v711
        %v713 = vrot.slane %v343, %v712
        %v715 = vmul.f32 %v452, %v713
        %v716 = vmul.f32 %v457, %v713
        %v717 = vmul.f32 %v462, %v713
        %v718 = vmul.f32 %v467, %v713
        %v719 = vmul.f32 %v472, %v713
        %v720 = vmul.f32 %v477, %v713
        %v721 = vmul.f32 %v482, %v713
        %v722 = vmul.f32 %v487, %v713
        %v723 = vmul.f32 %v492, %v713
        %v724 = vmul.f32 %v497, %v713
        %v725 = vmul.f32 %v502, %v713
        %v726 = vmul.f32 %v507, %v713
        %v727 = vmul.f32 %v512, %v713
        %v728 = vmul.f32 %v517, %v713
        %v729 = vmul.f32 %v522, %v713
        %v730 = vmul.f32 %v527, %v713
        %v731 = vmul.f32 %v532, %v713
        %v732 = vmul.f32 %v537, %v713
        %v733 = vmul.f32 %v542, %v713
        %v734 = vmul.f32 %v547, %v713
        %v735 = vmul.f32 %v552, %v713
        %v736 = vmul.f32 %v557, %v713
        %v737 = vmul.f32 %v562, %v713
        %v738 = vmul.f32 %v567, %v713
        %v739 = vmul.f32 %v572, %v713
        %v740 = vmul.f32 %v577, %v713
        %v741 = vmul.f32 %v582, %v713
        %v742 = vmul.f32 %v587, %v713
        %v743 = vmul.f32 %v592, %v713
        %v744 = vmul.f32 %v597, %v713
        %v745 = vmul.f32 %v602, %v713
        %v746 = vmul.f32 %v607, %v713
        %v747 = vmul.f32 %v612, %v713
        %v748 = vmul.f32 %v617, %v713
        %v749 = vmul.f32 %v622, %v713
        %v750 = vmul.f32 %v627, %v713
        %v751 = vmul.f32 %v632, %v713
        %v752 = vmul.f32 %v637, %v713
        %v753 = vmul.f32 %v642, %v713
        %v754 = vmul.f32 %v647, %v713
        %v755 = vmul.f32 %v652, %v713
        %v756 = vmul.f32 %v657, %v713
        %v757 = vmul.f32 %v662, %v713
        %v758 = vmul.f32 %v667, %v713
        %v759 = vmul.f32 %v672, %v713
        %v760 = vmul.f32 %v677, %v713
        %v761 = vmul.f32 %v682, %v713
        %v762 = vmul.f32 %v687, %v713
        %v763 = vmul.f32 %v692, %v713
        %v764 = vmul.f32 %v697, %v713
        %v765 = vmul.f32 %v702, %v713
        %v766 = vmul.f32 %v707, %v713
        %vm767 = vcmask 23552
        %v769 = vsel %vm767, %v345, 0
        %v772 = vsel %vm767, %v346, 0
        %v775 = vsel %vm767, %v347, 0
        %v778 = vsel %vm767, %v348, 0
        %v781 = vsel %vm767, %v349, 0
        %v784 = vsel %vm767, %v350, 0
        %v787 = vsel %vm767, %v351, 0
        %v790 = vsel %vm767, %v352, 0
        %v793 = vsel %vm767, %v353, 0
        %v796 = vsel %vm767, %v354, 0
        %v799 = vsel %vm767, %v355, 0
        %v802 = vsel %vm767, %v356, 0
        %v805 = vsel %vm767, %v357, 0
        %v808 = vsel %vm767, %v358, 0
        %v811 = vsel %vm767, %v359, 0
        %v814 = vsel %vm767, %v360, 0
        %v817 = vsel %vm767, %v361, 0
        %v820 = vsel %vm767, %v362, 0
        %v823 = vsel %vm767, %v363, 0
        %v826 = vsel %vm767, %v364, 0
        %v829 = vsel %vm767, %v365, 0
        %v832 = vsel %vm767, %v366, 0
        %v835 = vsel %vm767, %v367, 0
        %v838 = vsel %vm767, %v368, 0
        %v841 = vsel %vm767, %v369, 0
        %v844 = vsel %vm767, %v370, 0
        %v847 = vsel %vm767, %v371, 0
        %v850 = vsel %vm767, %v372, 0
        %v853 = vsel %vm767, %v373, 0
        %v856 = vsel %vm767, %v374, 0
        %v859 = vsel %vm767, %v375, 0
        %v862 = vsel %vm767, %v376, 0
        %v865 = vsel %vm767, %v377, 0
        %v868 = vsel %vm767, %v378, 0
        %v871 = vsel %vm767, %v379, 0
        %v874 = vsel %vm767, %v380, 0
        %v877 = vsel %vm767, %v381, 0
        %v880 = vsel %vm767, %v382, 0
        %v883 = vsel %vm767, %v383, 0
        %v886 = vsel %vm767, %v384, 0
        %v889 = vsel %vm767, %v385, 0
        %v892 = vsel %vm767, %v386, 0
        %v895 = vsel %vm767, %v387, 0
        %v898 = vsel %vm767, %v388, 0
        %v901 = vsel %vm767, %v389, 0
        %v904 = vsel %vm767, %v390, 0
        %v907 = vsel %vm767, %v391, 0
        %v910 = vsel %vm767, %v392, 0
        %v913 = vsel %vm767, %v393, 0
        %v916 = vsel %vm767, %v394, 0
        %v919 = vsel %vm767, %v395, 0
        %v922 = vsel %vm767, %v396, 0
        %vm924 = vcmask 1042432
        %v926 = vsel %vm924, %v344, 0
        %928 = vmatprep.subr.mxu0 0.0
        %v929 = vand.u32 %v926, 4294901760
        %930 = vmatpush1.msra.mxu0 %v929
        %931 = vmatprep.subr.mxu0 0.0
        %932 = vmatpush1.msra.mxu0 0.0
        %933 = vmatprep.subr.mxu0 0.0
        %934 = vmatpush1.msra.mxu0 0.0
        %935 = vmatprep.subr.mxu0 0.0
        %936 = vmatpush1.msra.mxu0 0.0
        %937 = vmatprep.subr.mxu0 0.0
        %938 = vmatpush1.msra.mxu0 0.0
        %939 = vmatprep.subr.mxu0 0.0
        %940 = vmatpush1.msra.mxu0 0.0
        %941 = vmatprep.subr.mxu0 0.0
        %942 = vmatpush1.msra.mxu0 0.0
        %943 = vmatprep.subr.mxu0 0.0
        %944 = vmatpush1.msra.mxu0 0.0
        %945 = vmatprep.subr.mxu0 0.0
        %946 = vmatpush1.msra.mxu0 0.0
        %947 = vmatprep.subr.mxu0 0.0
        %948 = vmatpush1.msra.mxu0 0.0
        %949 = vmatprep.subr.mxu0 0.0
        %950 = vmatpush1.msra.mxu0 0.0
        %951 = vmatprep.subr.mxu0 0.0
        %952 = vmatpush1.msra.mxu0 0.0
        %953 = vmatprep.subr.mxu0 0.0
        %954 = vmatpush1.msra.mxu0 0.0
        %955 = vmatprep.subr.mxu0 0.0
        %956 = vmatpush1.msra.mxu0 0.0
        %957 = vmatprep.subr.mxu0 0.0
        %958 = vmatpush1.msra.mxu0 0.0
        %959 = vmatprep.subr.mxu0 0.0
        %960 = vmatpush1.msra.mxu0 0.0
        %961 = vmatprep.subr.mxu0 0.0
        %962 = vmatpush1.msra.mxu0 0.0
        %963 = vmatprep.subr.mxu0 0.0
        %964 = vmatpush1.msra.mxu0 0.0
        %965 = vmatprep.subr.mxu0 0.0
        %966 = vmatpush1.msra.mxu0 0.0
        %967 = vmatprep.subr.mxu0 0.0
        %968 = vmatpush1.msra.mxu0 0.0
        %969 = vmatprep.subr.mxu0 0.0
        %970 = vmatpush1.msra.mxu0 0.0
        %971 = vmatprep.subr.mxu0 0.0
        %972 = vmatpush1.msra.mxu0 0.0
        %973 = vmatprep.subr.mxu0 0.0
        %974 = vmatpush1.msra.mxu0 0.0
        %975 = vmatprep.subr.mxu0 0.0
        %976 = vmatpush1.msra.mxu0 0.0
        %977 = vmatprep.subr.mxu0 0.0
        %978 = vmatpush1.msra.mxu0 0.0
        %979 = vmatprep.subr.mxu0 0.0
        %980 = vmatpush1.msra.mxu0 0.0
        %981 = vmatprep.subr.mxu0 0.0
        %982 = vmatpush1.msra.mxu0 0.0
        %983 = vmatprep.subr.mxu0 0.0
        %984 = vmatpush1.msra.mxu0 0.0
        %985 = vmatprep.subr.mxu0 0.0
        %986 = vmatpush1.msra.mxu0 0.0
        %987 = vmatprep.subr.mxu0 0.0
        %988 = vmatpush1.msra.mxu0 0.0
        %989 = vmatprep.subr.mxu0 0.0
        %990 = vmatpush1.msra.mxu0 0.0
        %991 = vmatprep.subr.mxu0 0.0
        %992 = vmatpush1.msra.mxu0 0.0
        %993 = vmatprep.mubr.f32.mxu0 0.0
        %v994 = vand.u32 %v769, 4294901760
        %v995 = vsub.f32 %v769, %v994
        %v996 = vand.u32 %v995, 4294901760
        %v997 = vsub.f32 %v995, %v996
        %v998 = vand.u32 %v997, 4294901760
        %999 = vmatmul.mubr.f32.gmra.mrb[0].mxu0 %v998
        %v1000 = vpop.f32.mrb[0].mxu0
        %v1001 = vadd.f32 %v715, %v1000
        %v1002 = vpop.f32.mrb[0].mxu0
        %1003 = vmatprep.mubr.f32.mxu0 0.0
        %v1004 = vand.u32 %v772, 4294901760
        %v1005 = vsub.f32 %v772, %v1004
        %v1006 = vand.u32 %v1005, 4294901760
        %v1007 = vsub.f32 %v1005, %v1006
        %v1008 = vand.u32 %v1007, 4294901760
        %1009 = vmatmul.mubr.f32.gmra.mrb[0].mxu0 %v1008
        %v1010 = vpop.f32.mrb[0].mxu0
        %v1011 = vadd.f32 %v716, %v1010
        %v1012 = vpop.f32.mrb[0].mxu0
        %1013 = vmatprep.mubr.f32.mxu0 0.0
        %v1014 = vand.u32 %v775, 4294901760
        %v1015 = vsub.f32 %v775, %v1014
        %v1016 = vand.u32 %v1015, 4294901760
        %v1017 = vsub.f32 %v1015, %v1016
        %v1018 = vand.u32 %v1017, 4294901760
        %1019 = vmatmul.mubr.f32.gmra.mrb[0].mxu0 %v1018
        %v1020 = vpop.f32.mrb[0].mxu0
        %v1021 = vadd.f32 %v717, %v1020
        %v1022 = vpop.f32.mrb[0].mxu0
        %1023 = vmatprep.mubr.f32.mxu0 0.0
        %v1024 = vand.u32 %v778, 4294901760
        %v1025 = vsub.f32 %v778, %v1024
        %v1026 = vand.u32 %v1025, 4294901760
        %v1027 = vsub.f32 %v1025, %v1026
        %v1028 = vand.u32 %v1027, 4294901760
        %1029 = vmatmul.mubr.f32.gmra.mrb[0].mxu0 %v1028
        %v1030 = vpop.f32.mrb[0].mxu0
        %v1031 = vadd.f32 %v718, %v1030
        %v1032 = vpop.f32.mrb[0].mxu0
        %1033 = vmatprep.mubr.f32.mxu0 0.0
        %v1034 = vand.u32 %v781, 4294901760
        %v1035 = vsub.f32 %v781, %v1034
        %v1036 = vand.u32 %v1035, 4294901760
        %v1037 = vsub.f32 %v1035, %v1036
        %v1038 = vand.u32 %v1037, 4294901760
        %1039 = vmatmul.mubr.f32.gmra.mrb[0].mxu0 %v1038
        %v1040 = vpop.f32.mrb[0].mxu0
        %v1041 = vadd.f32 %v719, %v1040
        %v1042 = vpop.f32.mrb[0].mxu0
        %1043 = vmatprep.mubr.f32.mxu0 0.0
        %v1044 = vand.u32 %v784, 4294901760
        %v1045 = vsub.f32 %v784, %v1044
        %v1046 = vand.u32 %v1045, 4294901760
        %v1047 = vsub.f32 %v1045, %v1046
        %v1048 = vand.u32 %v1047, 4294901760
        %1049 = vmatmul.mubr.f32.gmra.mrb[0].mxu0 %v1048
        %v1050 = vpop.f32.mrb[0].mxu0
        %v1051 = vadd.f32 %v720, %v1050
        %v1052 = vpop.f32.mrb[0].mxu0
        %1053 = vmatprep.mubr.f32.mxu0 0.0
        %v1054 = vand.u32 %v787, 4294901760
        %v1055 = vsub.f32 %v787, %v1054
        %v1056 = vand.u32 %v1055, 4294901760
        %v1057 = vsub.f32 %v1055, %v1056
        %v1058 = vand.u32 %v1057, 4294901760
        %1059 = vmatmul.mubr.f32.gmra.mrb[0].mxu0 %v1058
        %v1060 = vpop.f32.mrb[0].mxu0
        %v1061 = vadd.f32 %v721, %v1060
        %v1062 = vpop.f32.mrb[0].mxu0
        %1063 = vmatprep.mubr.f32.mxu0 0.0
        %v1064 = vand.u32 %v790, 4294901760
        %v1065 = vsub.f32 %v790, %v1064
        %v1066 = vand.u32 %v1065, 4294901760
        %v1067 = vsub.f32 %v1065, %v1066
        %v1068 = vand.u32 %v1067, 4294901760
        %1069 = vmatmul.mubr.f32.gmra.mrb[0].mxu0 %v1068
        %v1070 = vpop.f32.mrb[0].mxu0
        %v1071 = vadd.f32 %v722, %v1070
        %v1072 = vpop.f32.mrb[0].mxu0
        %1073 = vmatprep.mubr.f32.mxu0 0.0
        %v1074 = vand.u32 %v793, 4294901760
        %v1075 = vsub.f32 %v793, %v1074
        %v1076 = vand.u32 %v1075, 4294901760
        %v1077 = vsub.f32 %v1075, %v1076
        %v1078 = vand.u32 %v1077, 4294901760
        %1079 = vmatmul.mubr.f32.gmra.mrb[0].mxu0 %v1078
        %v1080 = vpop.f32.mrb[0].mxu0
        %v1081 = vadd.f32 %v723, %v1080
        %v1082 = vpop.f32.mrb[0].mxu0
        %1083 = vmatprep.mubr.f32.mxu0 0.0
        %v1084 = vand.u32 %v796, 4294901760
        %v1085 = vsub.f32 %v796, %v1084
        %v1086 = vand.u32 %v1085, 4294901760
        %v1087 = vsub.f32 %v1085, %v1086
        %v1088 = vand.u32 %v1087, 4294901760
        %1089 = vmatmul.mubr.f32.gmra.mrb[0].mxu0 %v1088
        %v1090 = vpop.f32.mrb[0].mxu0
        %v1091 = vadd.f32 %v724, %v1090
        %v1092 = vpop.f32.mrb[0].mxu0
        %1093 = vmatprep.mubr.f32.mxu0 0.0
        %v1094 = vand.u32 %v799, 4294901760
        %v1095 = vsub.f32 %v799, %v1094
        %v1096 = vand.u32 %v1095, 4294901760
        %v1097 = vsub.f32 %v1095, %v1096
        %v1098 = vand.u32 %v1097, 4294901760
        %1099 = vmatmul.mubr.f32.gmra.mrb[0].mxu0 %v1098
        %v1100 = vpop.f32.mrb[0].mxu0
        %v1101 = vadd.f32 %v725, %v1100
        %v1102 = vpop.f32.mrb[0].mxu0
        %1103 = vmatprep.mubr.f32.mxu0 0.0
        %v1104 = vand.u32 %v802, 4294901760
        %v1105 = vsub.f32 %v802, %v1104
        %v1106 = vand.u32 %v1105, 4294901760
        %v1107 = vsub.f32 %v1105, %v1106
        %v1108 = vand.u32 %v1107, 4294901760
        %1109 = vmatmul.mubr.f32.gmra.mrb[0].mxu0 %v1108
        %v1110 = vpop.f32.mrb[0].mxu0
        %v1111 = vadd.f32 %v726, %v1110
        %v1112 = vpop.f32.mrb[0].mxu0
        %1113 = vmatprep.mubr.f32.mxu0 0.0
        %v1114 = vand.u32 %v805, 4294901760
        %v1115 = vsub.f32 %v805, %v1114
        %v1116 = vand.u32 %v1115, 4294901760
        %v1117 = vsub.f32 %v1115, %v1116
        %v1118 = vand.u32 %v1117, 4294901760
        %1119 = vmatmul.mubr.f32.gmra.mrb[0].mxu0 %v1118
        %v1120 = vpop.f32.mrb[0].mxu0
        %v1121 = vadd.f32 %v727, %v1120
        %v1122 = vpop.f32.mrb[0].mxu0
        %1123 = vmatprep.mubr.f32.mxu0 0.0
        %v1124 = vand.u32 %v808, 4294901760
        %v1125 = vsub.f32 %v808, %v1124
        %v1126 = vand.u32 %v1125, 4294901760
        %v1127 = vsub.f32 %v1125, %v1126
        %v1128 = vand.u32 %v1127, 4294901760
        %1129 = vmatmul.mubr.f32.gmra.mrb[0].mxu0 %v1128
        %v1130 = vpop.f32.mrb[0].mxu0
        %v1131 = vadd.f32 %v728, %v1130
        %v1132 = vpop.f32.mrb[0].mxu0
        %1133 = vmatprep.mubr.f32.mxu0 0.0
        %v1134 = vand.u32 %v811, 4294901760
        %v1135 = vsub.f32 %v811, %v1134
        %v1136 = vand.u32 %v1135, 4294901760
        %v1137 = vsub.f32 %v1135, %v1136
        %v1138 = vand.u32 %v1137, 4294901760
        %1139 = vmatmul.mubr.f32.gmra.mrb[0].mxu0 %v1138
        %v1140 = vpop.f32.mrb[0].mxu0
        %v1141 = vadd.f32 %v729, %v1140
        %v1142 = vpop.f32.mrb[0].mxu0
        %1143 = vmatprep.mubr.f32.mxu0 0.0
        %v1144 = vand.u32 %v814, 4294901760
        %v1145 = vsub.f32 %v814, %v1144
        %v1146 = vand.u32 %v1145, 4294901760
        %v1147 = vsub.f32 %v1145, %v1146
        %v1148 = vand.u32 %v1147, 4294901760
        %1149 = vmatmul.mubr.f32.gmra.mrb[0].mxu0 %v1148
        %v1150 = vpop.f32.mrb[0].mxu0
        %v1151 = vadd.f32 %v730, %v1150
        %v1152 = vpop.f32.mrb[0].mxu0
        %1153 = vmatprep.mubr.f32.mxu0 0.0
        %v1154 = vand.u32 %v817, 4294901760
        %v1155 = vsub.f32 %v817, %v1154
        %v1156 = vand.u32 %v1155, 4294901760
        %v1157 = vsub.f32 %v1155, %v1156
        %v1158 = vand.u32 %v1157, 4294901760
        %1159 = vmatmul.mubr.f32.gmra.mrb[0].mxu0 %v1158
        %v1160 = vpop.f32.mrb[0].mxu0
        %v1161 = vadd.f32 %v731, %v1160
        %v1162 = vpop.f32.mrb[0].mxu0
        %1163 = vmatprep.mubr.f32.mxu0 0.0
        %v1164 = vand.u32 %v820, 4294901760
        %v1165 = vsub.f32 %v820, %v1164
        %v1166 = vand.u32 %v1165, 4294901760
        %v1167 = vsub.f32 %v1165, %v1166
        %v1168 = vand.u32 %v1167, 4294901760
        %1169 = vmatmul.mubr.f32.gmra.mrb[0].mxu0 %v1168
        %v1170 = vpop.f32.mrb[0].mxu0
        %v1171 = vadd.f32 %v732, %v1170
        %v1172 = vpop.f32.mrb[0].mxu0
        %1173 = vmatprep.mubr.f32.mxu0 0.0
        %v1174 = vand.u32 %v823, 4294901760
        %v1175 = vsub.f32 %v823, %v1174
        %v1176 = vand.u32 %v1175, 4294901760
        %v1177 = vsub.f32 %v1175, %v1176
        %v1178 = vand.u32 %v1177, 4294901760
        %1179 = vmatmul.mubr.f32.gmra.mrb[0].mxu0 %v1178
        %v1180 = vpop.f32.mrb[0].mxu0
        %v1181 = vadd.f32 %v733, %v1180
        %v1182 = vpop.f32.mrb[0].mxu0
        %1183 = vmatprep.mubr.f32.mxu0 0.0
        %v1184 = vand.u32 %v826, 4294901760
        %v1185 = vsub.f32 %v826, %v1184
        %v1186 = vand.u32 %v1185, 4294901760
        %v1187 = vsub.f32 %v1185, %v1186
        %v1188 = vand.u32 %v1187, 4294901760
        %1189 = vmatmul.mubr.f32.gmra.mrb[0].mxu0 %v1188
        %v1190 = vpop.f32.mrb[0].mxu0
        %v1191 = vadd.f32 %v734, %v1190
        %v1192 = vpop.f32.mrb[0].mxu0
        %1193 = vmatprep.mubr.f32.mxu0 0.0
        %v1194 = vand.u32 %v829, 4294901760
        %v1195 = vsub.f32 %v829, %v1194
        %v1196 = vand.u32 %v1195, 4294901760
        %v1197 = vsub.f32 %v1195, %v1196
        %v1198 = vand.u32 %v1197, 4294901760
        %1199 = vmatmul.mubr.f32.gmra.mrb[0].mxu0 %v1198
        %v1200 = vpop.f32.mrb[0].mxu0
        %v1201 = vadd.f32 %v735, %v1200
        %v1202 = vpop.f32.mrb[0].mxu0
        %1203 = vmatprep.mubr.f32.mxu0 0.0
        %v1204 = vand.u32 %v832, 4294901760
        %v1205 = vsub.f32 %v832, %v1204
        %v1206 = vand.u32 %v1205, 4294901760
        %v1207 = vsub.f32 %v1205, %v1206
        %v1208 = vand.u32 %v1207, 4294901760
        %1209 = vmatmul.mubr.f32.gmra.mrb[0].mxu0 %v1208
        %v1210 = vpop.f32.mrb[0].mxu0
        %v1211 = vadd.f32 %v736, %v1210
        %v1212 = vpop.f32.mrb[0].mxu0
        %1213 = vmatprep.mubr.f32.mxu0 0.0
        %v1214 = vand.u32 %v835, 4294901760
        %v1215 = vsub.f32 %v835, %v1214
        %v1216 = vand.u32 %v1215, 4294901760
        %v1217 = vsub.f32 %v1215, %v1216
        %v1218 = vand.u32 %v1217, 4294901760
        %1219 = vmatmul.mubr.f32.gmra.mrb[0].mxu0 %v1218
        %v1220 = vpop.f32.mrb[0].mxu0
        %v1221 = vadd.f32 %v737, %v1220
        %v1222 = vpop.f32.mrb[0].mxu0
        %1223 = vmatprep.mubr.f32.mxu0 0.0
        %v1224 = vand.u32 %v838, 4294901760
        %v1225 = vsub.f32 %v838, %v1224
        %v1226 = vand.u32 %v1225, 4294901760
        %v1227 = vsub.f32 %v1225, %v1226
        %v1228 = vand.u32 %v1227, 4294901760
        %1229 = vmatmul.mubr.f32.gmra.mrb[0].mxu0 %v1228
        %v1230 = vpop.f32.mrb[0].mxu0
        %v1231 = vadd.f32 %v738, %v1230
        %v1232 = vpop.f32.mrb[0].mxu0
        %1233 = vmatprep.mubr.f32.mxu0 0.0
        %v1234 = vand.u32 %v841, 4294901760
        %v1235 = vsub.f32 %v841, %v1234
        %v1236 = vand.u32 %v1235, 4294901760
        %v1237 = vsub.f32 %v1235, %v1236
        %v1238 = vand.u32 %v1237, 4294901760
        %1239 = vmatmul.mubr.f32.gmra.mrb[0].mxu0 %v1238
        %v1240 = vpop.f32.mrb[0].mxu0
        %v1241 = vadd.f32 %v739, %v1240
        %v1242 = vpop.f32.mrb[0].mxu0
        %1243 = vmatprep.mubr.f32.mxu0 0.0
        %v1244 = vand.u32 %v844, 4294901760
        %v1245 = vsub.f32 %v844, %v1244
        %v1246 = vand.u32 %v1245, 4294901760
        %v1247 = vsub.f32 %v1245, %v1246
        %v1248 = vand.u32 %v1247, 4294901760
        %1249 = vmatmul.mubr.f32.gmra.mrb[0].mxu0 %v1248
        %v1250 = vpop.f32.mrb[0].mxu0
        %v1251 = vadd.f32 %v740, %v1250
        %v1252 = vpop.f32.mrb[0].mxu0
        %1253 = vmatprep.mubr.f32.mxu0 0.0
        %v1254 = vand.u32 %v847, 4294901760
        %v1255 = vsub.f32 %v847, %v1254
        %v1256 = vand.u32 %v1255, 4294901760
        %v1257 = vsub.f32 %v1255, %v1256
        %v1258 = vand.u32 %v1257, 4294901760
        %1259 = vmatmul.mubr.f32.gmra.mrb[0].mxu0 %v1258
        %v1260 = vpop.f32.mrb[0].mxu0
        %v1261 = vadd.f32 %v741, %v1260
        %v1262 = vpop.f32.mrb[0].mxu0
        %1263 = vmatprep.mubr.f32.mxu0 0.0
        %v1264 = vand.u32 %v850, 4294901760
        %v1265 = vsub.f32 %v850, %v1264
        %v1266 = vand.u32 %v1265, 4294901760
        %v1267 = vsub.f32 %v1265, %v1266
        %v1268 = vand.u32 %v1267, 4294901760
        %1269 = vmatmul.mubr.f32.gmra.mrb[0].mxu0 %v1268
        %v1270 = vpop.f32.mrb[0].mxu0
        %v1271 = vadd.f32 %v742, %v1270
        %v1272 = vpop.f32.mrb[0].mxu0
        %1273 = vmatprep.mubr.f32.mxu0 0.0
        %v1274 = vand.u32 %v853, 4294901760
        %v1275 = vsub.f32 %v853, %v1274
        %v1276 = vand.u32 %v1275, 4294901760
        %v1277 = vsub.f32 %v1275, %v1276
        %v1278 = vand.u32 %v1277, 4294901760
        %1279 = vmatmul.mubr.f32.gmra.mrb[0].mxu0 %v1278
        %v1280 = vpop.f32.mrb[0].mxu0
        %v1281 = vadd.f32 %v743, %v1280
        %v1282 = vpop.f32.mrb[0].mxu0
        %1283 = vmatprep.mubr.f32.mxu0 0.0
        %v1284 = vand.u32 %v856, 4294901760
        %v1285 = vsub.f32 %v856, %v1284
        %v1286 = vand.u32 %v1285, 4294901760
        %v1287 = vsub.f32 %v1285, %v1286
        %v1288 = vand.u32 %v1287, 4294901760
        %1289 = vmatmul.mubr.f32.gmra.mrb[0].mxu0 %v1288
        %v1290 = vpop.f32.mrb[0].mxu0
        %v1291 = vadd.f32 %v744, %v1290
        %v1292 = vpop.f32.mrb[0].mxu0
        %1293 = vmatprep.mubr.f32.mxu0 0.0
        %v1294 = vand.u32 %v859, 4294901760
        %v1295 = vsub.f32 %v859, %v1294
        %v1296 = vand.u32 %v1295, 4294901760
        %v1297 = vsub.f32 %v1295, %v1296
        %v1298 = vand.u32 %v1297, 4294901760
        %1299 = vmatmul.mubr.f32.gmra.mrb[0].mxu0 %v1298
        %v1300 = vpop.f32.mrb[0].mxu0
        %v1301 = vadd.f32 %v745, %v1300
        %v1302 = vpop.f32.mrb[0].mxu0
        %1303 = vmatprep.mubr.f32.mxu0 0.0
        %v1304 = vand.u32 %v862, 4294901760
        %v1305 = vsub.f32 %v862, %v1304
        %v1306 = vand.u32 %v1305, 4294901760
        %v1307 = vsub.f32 %v1305, %v1306
        %v1308 = vand.u32 %v1307, 4294901760
        %1309 = vmatmul.mubr.f32.gmra.mrb[0].mxu0 %v1308
        %v1310 = vpop.f32.mrb[0].mxu0
        %v1311 = vadd.f32 %v746, %v1310
        %v1312 = vpop.f32.mrb[0].mxu0
        %1313 = vmatprep.mubr.f32.mxu0 0.0
        %v1314 = vand.u32 %v865, 4294901760
        %v1315 = vsub.f32 %v865, %v1314
        %v1316 = vand.u32 %v1315, 4294901760
        %v1317 = vsub.f32 %v1315, %v1316
        %v1318 = vand.u32 %v1317, 4294901760
        %1319 = vmatmul.mubr.f32.gmra.mrb[0].mxu0 %v1318
        %v1320 = vpop.f32.mrb[0].mxu0
        %v1321 = vadd.f32 %v747, %v1320
        %v1322 = vpop.f32.mrb[0].mxu0
        %1323 = vmatprep.mubr.f32.mxu0 0.0
        %v1324 = vand.u32 %v868, 4294901760
        %v1325 = vsub.f32 %v868, %v1324
        %v1326 = vand.u32 %v1325, 4294901760
        %v1327 = vsub.f32 %v1325, %v1326
        %v1328 = vand.u32 %v1327, 4294901760
        %1329 = vmatmul.mubr.f32.gmra.mrb[0].mxu0 %v1328
        %v1330 = vpop.f32.mrb[0].mxu0
        %v1331 = vadd.f32 %v748, %v1330
        %v1332 = vpop.f32.mrb[0].mxu0
        %1333 = vmatprep.mubr.f32.mxu0 0.0
        %v1334 = vand.u32 %v871, 4294901760
        %v1335 = vsub.f32 %v871, %v1334
        %v1336 = vand.u32 %v1335, 4294901760
        %v1337 = vsub.f32 %v1335, %v1336
        %v1338 = vand.u32 %v1337, 4294901760
        %1339 = vmatmul.mubr.f32.gmra.mrb[0].mxu0 %v1338
        %v1340 = vpop.f32.mrb[0].mxu0
        %v1341 = vadd.f32 %v749, %v1340
        %v1342 = vpop.f32.mrb[0].mxu0
        %1343 = vmatprep.mubr.f32.mxu0 0.0
        %v1344 = vand.u32 %v874, 4294901760
        %v1345 = vsub.f32 %v874, %v1344
        %v1346 = vand.u32 %v1345, 4294901760
        %v1347 = vsub.f32 %v1345, %v1346
        %v1348 = vand.u32 %v1347, 4294901760
        %1349 = vmatmul.mubr.f32.gmra.mrb[0].mxu0 %v1348
        %v1350 = vpop.f32.mrb[0].mxu0
        %v1351 = vadd.f32 %v750, %v1350
        %v1352 = vpop.f32.mrb[0].mxu0
        %1353 = vmatprep.mubr.f32.mxu0 0.0
        %v1354 = vand.u32 %v877, 4294901760
        %v1355 = vsub.f32 %v877, %v1354
        %v1356 = vand.u32 %v1355, 4294901760
        %v1357 = vsub.f32 %v1355, %v1356
        %v1358 = vand.u32 %v1357, 4294901760
        %1359 = vmatmul.mubr.f32.gmra.mrb[0].mxu0 %v1358
        %v1360 = vpop.f32.mrb[0].mxu0
        %v1361 = vadd.f32 %v751, %v1360
        %v1362 = vpop.f32.mrb[0].mxu0
        %1363 = vmatprep.mubr.f32.mxu0 0.0
        %v1364 = vand.u32 %v880, 4294901760
        %v1365 = vsub.f32 %v880, %v1364
        %v1366 = vand.u32 %v1365, 4294901760
        %v1367 = vsub.f32 %v1365, %v1366
        %v1368 = vand.u32 %v1367, 4294901760
        %1369 = vmatmul.mubr.f32.gmra.mrb[0].mxu0 %v1368
        %v1370 = vpop.f32.mrb[0].mxu0
        %v1371 = vadd.f32 %v752, %v1370
        %v1372 = vpop.f32.mrb[0].mxu0
        %1373 = vmatprep.mubr.f32.mxu0 0.0
        %v1374 = vand.u32 %v883, 4294901760
        %v1375 = vsub.f32 %v883, %v1374
        %v1376 = vand.u32 %v1375, 4294901760
        %v1377 = vsub.f32 %v1375, %v1376
        %v1378 = vand.u32 %v1377, 4294901760
        %1379 = vmatmul.mubr.f32.gmra.mrb[0].mxu0 %v1378
        %v1380 = vpop.f32.mrb[0].mxu0
        %v1381 = vadd.f32 %v753, %v1380
        %v1382 = vpop.f32.mrb[0].mxu0
        %1383 = vmatprep.mubr.f32.mxu0 0.0
        %v1384 = vand.u32 %v886, 4294901760
        %v1385 = vsub.f32 %v886, %v1384
        %v1386 = vand.u32 %v1385, 4294901760
        %v1387 = vsub.f32 %v1385, %v1386
        %v1388 = vand.u32 %v1387, 4294901760
        %1389 = vmatmul.mubr.f32.gmra.mrb[0].mxu0 %v1388
        %v1390 = vpop.f32.mrb[0].mxu0
        %v1391 = vadd.f32 %v754, %v1390
        %v1392 = vpop.f32.mrb[0].mxu0
        %1393 = vmatprep.mubr.f32.mxu0 0.0
        %v1394 = vand.u32 %v889, 4294901760
        %v1395 = vsub.f32 %v889, %v1394
        %v1396 = vand.u32 %v1395, 4294901760
        %v1397 = vsub.f32 %v1395, %v1396
        %v1398 = vand.u32 %v1397, 4294901760
        %1399 = vmatmul.mubr.f32.gmra.mrb[0].mxu0 %v1398
        %v1400 = vpop.f32.mrb[0].mxu0
        %v1401 = vadd.f32 %v755, %v1400
        %v1402 = vpop.f32.mrb[0].mxu0
        %1403 = vmatprep.mubr.f32.mxu0 0.0
        %v1404 = vand.u32 %v892, 4294901760
        %v1405 = vsub.f32 %v892, %v1404
        %v1406 = vand.u32 %v1405, 4294901760
        %v1407 = vsub.f32 %v1405, %v1406
        %v1408 = vand.u32 %v1407, 4294901760
        %1409 = vmatmul.mubr.f32.gmra.mrb[0].mxu0 %v1408
        %v1410 = vpop.f32.mrb[0].mxu0
        %v1411 = vadd.f32 %v756, %v1410
        %v1412 = vpop.f32.mrb[0].mxu0
        %1413 = vmatprep.mubr.f32.mxu0 0.0
        %v1414 = vand.u32 %v895, 4294901760
        %v1415 = vsub.f32 %v895, %v1414
        %v1416 = vand.u32 %v1415, 4294901760
        %v1417 = vsub.f32 %v1415, %v1416
        %v1418 = vand.u32 %v1417, 4294901760
        %1419 = vmatmul.mubr.f32.gmra.mrb[0].mxu0 %v1418
        %v1420 = vpop.f32.mrb[0].mxu0
        %v1421 = vadd.f32 %v757, %v1420
        %v1422 = vpop.f32.mrb[0].mxu0
        %1423 = vmatprep.mubr.f32.mxu0 0.0
        %v1424 = vand.u32 %v898, 4294901760
        %v1425 = vsub.f32 %v898, %v1424
        %v1426 = vand.u32 %v1425, 4294901760
        %v1427 = vsub.f32 %v1425, %v1426
        %v1428 = vand.u32 %v1427, 4294901760
        %1429 = vmatmul.mubr.f32.gmra.mrb[0].mxu0 %v1428
        %v1430 = vpop.f32.mrb[0].mxu0
        %v1431 = vadd.f32 %v758, %v1430
        %v1432 = vpop.f32.mrb[0].mxu0
        %1433 = vmatprep.mubr.f32.mxu0 0.0
        %v1434 = vand.u32 %v901, 4294901760
        %v1435 = vsub.f32 %v901, %v1434
        %v1436 = vand.u32 %v1435, 4294901760
        %v1437 = vsub.f32 %v1435, %v1436
        %v1438 = vand.u32 %v1437, 4294901760
        %1439 = vmatmul.mubr.f32.gmra.mrb[0].mxu0 %v1438
        %v1440 = vpop.f32.mrb[0].mxu0
        %v1441 = vadd.f32 %v759, %v1440
        %v1442 = vpop.f32.mrb[0].mxu0
        %1443 = vmatprep.mubr.f32.mxu0 0.0
        %v1444 = vand.u32 %v904, 4294901760
        %v1445 = vsub.f32 %v904, %v1444
        %v1446 = vand.u32 %v1445, 4294901760
        %v1447 = vsub.f32 %v1445, %v1446
        %v1448 = vand.u32 %v1447, 4294901760
        %1449 = vmatmul.mubr.f32.gmra.mrb[0].mxu0 %v1448
        %v1450 = vpop.f32.mrb[0].mxu0
        %v1451 = vadd.f32 %v760, %v1450
        %v1452 = vpop.f32.mrb[0].mxu0
        %1453 = vmatprep.mubr.f32.mxu0 0.0
        %v1454 = vand.u32 %v907, 4294901760
        %v1455 = vsub.f32 %v907, %v1454
        %v1456 = vand.u32 %v1455, 4294901760
        %v1457 = vsub.f32 %v1455, %v1456
        %v1458 = vand.u32 %v1457, 4294901760
        %1459 = vmatmul.mubr.f32.gmra.mrb[0].mxu0 %v1458
        %v1460 = vpop.f32.mrb[0].mxu0
        %v1461 = vadd.f32 %v761, %v1460
        %v1462 = vpop.f32.mrb[0].mxu0
        %1463 = vmatprep.mubr.f32.mxu0 0.0
        %v1464 = vand.u32 %v910, 4294901760
        %v1465 = vsub.f32 %v910, %v1464
        %v1466 = vand.u32 %v1465, 4294901760
        %v1467 = vsub.f32 %v1465, %v1466
        %v1468 = vand.u32 %v1467, 4294901760
        %1469 = vmatmul.mubr.f32.gmra.mrb[0].mxu0 %v1468
        %v1470 = vpop.f32.mrb[0].mxu0
        %v1471 = vadd.f32 %v762, %v1470
        %v1472 = vpop.f32.mrb[0].mxu0
        %1473 = vmatprep.mubr.f32.mxu0 0.0
        %v1474 = vand.u32 %v913, 4294901760
        %v1475 = vsub.f32 %v913, %v1474
        %v1476 = vand.u32 %v1475, 4294901760
        %v1477 = vsub.f32 %v1475, %v1476
        %v1478 = vand.u32 %v1477, 4294901760
        %1479 = vmatmul.mubr.f32.gmra.mrb[0].mxu0 %v1478
        %v1480 = vpop.f32.mrb[0].mxu0
        %v1481 = vadd.f32 %v763, %v1480
        %v1482 = vpop.f32.mrb[0].mxu0
        %1483 = vmatprep.mubr.f32.mxu0 0.0
        %v1484 = vand.u32 %v916, 4294901760
        %v1485 = vsub.f32 %v916, %v1484
        %v1486 = vand.u32 %v1485, 4294901760
        %v1487 = vsub.f32 %v1485, %v1486
        %v1488 = vand.u32 %v1487, 4294901760
        %1489 = vmatmul.mubr.f32.gmra.mrb[0].mxu0 %v1488
        %v1490 = vpop.f32.mrb[0].mxu0
        %v1491 = vadd.f32 %v764, %v1490
        %v1492 = vpop.f32.mrb[0].mxu0
        %1493 = vmatprep.mubr.f32.mxu0 0.0
        %v1494 = vand.u32 %v919, 4294901760
        %v1495 = vsub.f32 %v919, %v1494
        %v1496 = vand.u32 %v1495, 4294901760
        %v1497 = vsub.f32 %v1495, %v1496
        %v1498 = vand.u32 %v1497, 4294901760
        %1499 = vmatmul.mubr.f32.gmra.mrb[0].mxu0 %v1498
        %v1500 = vpop.f32.mrb[0].mxu0
        %v1501 = vadd.f32 %v765, %v1500
        %v1502 = vpop.f32.mrb[0].mxu0
        %1503 = vmatprep.mubr.f32.mxu0 0.0
        %v1504 = vand.u32 %v922, 4294901760
        %v1505 = vsub.f32 %v922, %v1504
        %v1506 = vand.u32 %v1505, 4294901760
        %v1507 = vsub.f32 %v1505, %v1506
        %v1508 = vand.u32 %v1507, 4294901760
        %1509 = vmatmul.mubr.f32.gmra.mrb[0].mxu0 %v1508
        %v1510 = vpop.f32.mrb[0].mxu0
        %v1511 = vadd.f32 %v766, %v1510
        %v1512 = vpop.f32.mrb[0].mxu0
        %1513 = vdwg.mxu0
        %1514 = vmatprep.subr.mxu0 0.0
        %v1515 = vand.u32 %v926, 4294901760
        %v1516 = vsub.f32 %v926, %v1515
        %v1517 = vand.u32 %v1516, 4294901760
        %v1518 = vsub.f32 %v1516, %v1517
        %v1519 = vand.u32 %v1518, 4294901760
        %1520 = vmatpush1.msra.mxu0 %v1519
        %1521 = vmatprep.subr.mxu0 0.0
        %1522 = vmatpush1.msra.mxu0 0.0
        %1523 = vmatprep.subr.mxu0 0.0
        %1524 = vmatpush1.msra.mxu0 0.0
        %1525 = vmatprep.subr.mxu0 0.0
        %1526 = vmatpush1.msra.mxu0 0.0
        %1527 = vmatprep.subr.mxu0 0.0
        %1528 = vmatpush1.msra.mxu0 0.0
        %1529 = vmatprep.subr.mxu0 0.0
        %1530 = vmatpush1.msra.mxu0 0.0
        %1531 = vmatprep.subr.mxu0 0.0
        %1532 = vmatpush1.msra.mxu0 0.0
        %1533 = vmatprep.subr.mxu0 0.0
        %1534 = vmatpush1.msra.mxu0 0.0
        %1535 = vmatprep.subr.mxu0 0.0
        %1536 = vmatpush1.msra.mxu0 0.0
        %1537 = vmatprep.subr.mxu0 0.0
        %1538 = vmatpush1.msra.mxu0 0.0
        %1539 = vmatprep.subr.mxu0 0.0
        %1540 = vmatpush1.msra.mxu0 0.0
        %1541 = vmatprep.subr.mxu0 0.0
        %1542 = vmatpush1.msra.mxu0 0.0
        %1543 = vmatprep.subr.mxu0 0.0
        %1544 = vmatpush1.msra.mxu0 0.0
        %1545 = vmatprep.subr.mxu0 0.0
        %1546 = vmatpush1.msra.mxu0 0.0
        %1547 = vmatprep.subr.mxu0 0.0
        %1548 = vmatpush1.msra.mxu0 0.0
        %1549 = vmatprep.subr.mxu0 0.0
        %1550 = vmatpush1.msra.mxu0 0.0
        %1551 = vmatprep.subr.mxu0 0.0
        %1552 = vmatpush1.msra.mxu0 0.0
        %1553 = vmatprep.subr.mxu0 0.0
        %1554 = vmatpush1.msra.mxu0 0.0
        %1555 = vmatprep.subr.mxu0 0.0
        %1556 = vmatpush1.msra.mxu0 0.0
        %1557 = vmatprep.subr.mxu0 0.0
        %1558 = vmatpush1.msra.mxu0 0.0
        %1559 = vmatprep.subr.mxu0 0.0
        %1560 = vmatpush1.msra.mxu0 0.0
        %1561 = vmatprep.subr.mxu0 0.0
        %1562 = vmatpush1.msra.mxu0 0.0
        %1563 = vmatprep.subr.mxu0 0.0
        %1564 = vmatpush1.msra.mxu0 0.0
        %1565 = vmatprep.subr.mxu0 0.0
        %1566 = vmatpush1.msra.mxu0 0.0
        %1567 = vmatprep.subr.mxu0 0.0
        %1568 = vmatpush1.msra.mxu0 0.0
        %1569 = vmatprep.subr.mxu0 0.0
        %1570 = vmatpush1.msra.mxu0 0.0
        %1571 = vmatprep.subr.mxu0 0.0
        %1572 = vmatpush1.msra.mxu0 0.0
        %1573 = vmatprep.subr.mxu0 0.0
        %1574 = vmatpush1.msra.mxu0 0.0
        %1575 = vmatprep.subr.mxu0 0.0
        %1576 = vmatpush1.msra.mxu0 0.0
        %1577 = vmatprep.subr.mxu0 0.0
        %1578 = vmatpush1.msra.mxu0 0.0
        %1579 = vmatprep.subr.mxu0 0.0
        %1580 = vmatpush1.msra.mxu0 0.0
        %1581 = vmatprep.subr.mxu0 0.0
        %1582 = vmatpush1.msra.mxu0 0.0
        %1583 = vmatprep.mubr.f32.mxu0 0.0
        %v1584 = vand.u32 %v769, 4294901760
        %1585 = vmatmul.mubr.f32.gmra.mrb[0].mxu0 %v1584
        %v1586 = vpop.f32.mrb[0].mxu0
        %v1587 = vadd.f32 %v1001, %v1586
        %v1588 = vpop.f32.mrb[0].mxu0
        %1589 = vmatprep.mubr.f32.mxu0 0.0
        %v1590 = vand.u32 %v772, 4294901760
        %1591 = vmatmul.mubr.f32.gmra.mrb[0].mxu0 %v1590
        %v1592 = vpop.f32.mrb[0].mxu0
        %v1593 = vadd.f32 %v1011, %v1592
        %v1594 = vpop.f32.mrb[0].mxu0
        %1595 = vmatprep.mubr.f32.mxu0 0.0
        %v1596 = vand.u32 %v775, 4294901760
        %1597 = vmatmul.mubr.f32.gmra.mrb[0].mxu0 %v1596
        %v1598 = vpop.f32.mrb[0].mxu0
        %v1599 = vadd.f32 %v1021, %v1598
        %v1600 = vpop.f32.mrb[0].mxu0
        %1601 = vmatprep.mubr.f32.mxu0 0.0
        %v1602 = vand.u32 %v778, 4294901760
        %1603 = vmatmul.mubr.f32.gmra.mrb[0].mxu0 %v1602
        %v1604 = vpop.f32.mrb[0].mxu0
        %v1605 = vadd.f32 %v1031, %v1604
        %v1606 = vpop.f32.mrb[0].mxu0
        %1607 = vmatprep.mubr.f32.mxu0 0.0
        %v1608 = vand.u32 %v781, 4294901760
        %1609 = vmatmul.mubr.f32.gmra.mrb[0].mxu0 %v1608
        %v1610 = vpop.f32.mrb[0].mxu0
        %v1611 = vadd.f32 %v1041, %v1610
        %v1612 = vpop.f32.mrb[0].mxu0
        %1613 = vmatprep.mubr.f32.mxu0 0.0
        %v1614 = vand.u32 %v784, 4294901760
        %1615 = vmatmul.mubr.f32.gmra.mrb[0].mxu0 %v1614
        %v1616 = vpop.f32.mrb[0].mxu0
        %v1617 = vadd.f32 %v1051, %v1616
        %v1618 = vpop.f32.mrb[0].mxu0
        %1619 = vmatprep.mubr.f32.mxu0 0.0
        %v1620 = vand.u32 %v787, 4294901760
        %1621 = vmatmul.mubr.f32.gmra.mrb[0].mxu0 %v1620
        %v1622 = vpop.f32.mrb[0].mxu0
        %v1623 = vadd.f32 %v1061, %v1622
        %v1624 = vpop.f32.mrb[0].mxu0
        %1625 = vmatprep.mubr.f32.mxu0 0.0
        %v1626 = vand.u32 %v790, 4294901760
        %1627 = vmatmul.mubr.f32.gmra.mrb[0].mxu0 %v1626
        %v1628 = vpop.f32.mrb[0].mxu0
        %v1629 = vadd.f32 %v1071, %v1628
        %v1630 = vpop.f32.mrb[0].mxu0
        %1631 = vmatprep.mubr.f32.mxu0 0.0
        %v1632 = vand.u32 %v793, 4294901760
        %1633 = vmatmul.mubr.f32.gmra.mrb[0].mxu0 %v1632
        %v1634 = vpop.f32.mrb[0].mxu0
        %v1635 = vadd.f32 %v1081, %v1634
        %v1636 = vpop.f32.mrb[0].mxu0
        %1637 = vmatprep.mubr.f32.mxu0 0.0
        %v1638 = vand.u32 %v796, 4294901760
        %1639 = vmatmul.mubr.f32.gmra.mrb[0].mxu0 %v1638
        %v1640 = vpop.f32.mrb[0].mxu0
        %v1641 = vadd.f32 %v1091, %v1640
        %v1642 = vpop.f32.mrb[0].mxu0
        %1643 = vmatprep.mubr.f32.mxu0 0.0
        %v1644 = vand.u32 %v799, 4294901760
        %1645 = vmatmul.mubr.f32.gmra.mrb[0].mxu0 %v1644
        %v1646 = vpop.f32.mrb[0].mxu0
        %v1647 = vadd.f32 %v1101, %v1646
        %v1648 = vpop.f32.mrb[0].mxu0
        %1649 = vmatprep.mubr.f32.mxu0 0.0
        %v1650 = vand.u32 %v802, 4294901760
        %1651 = vmatmul.mubr.f32.gmra.mrb[0].mxu0 %v1650
        %v1652 = vpop.f32.mrb[0].mxu0
        %v1653 = vadd.f32 %v1111, %v1652
        %v1654 = vpop.f32.mrb[0].mxu0
        %1655 = vmatprep.mubr.f32.mxu0 0.0
        %v1656 = vand.u32 %v805, 4294901760
        %1657 = vmatmul.mubr.f32.gmra.mrb[0].mxu0 %v1656
        %v1658 = vpop.f32.mrb[0].mxu0
        %v1659 = vadd.f32 %v1121, %v1658
        %v1660 = vpop.f32.mrb[0].mxu0
        %1661 = vmatprep.mubr.f32.mxu0 0.0
        %v1662 = vand.u32 %v808, 4294901760
        %1663 = vmatmul.mubr.f32.gmra.mrb[0].mxu0 %v1662
        %v1664 = vpop.f32.mrb[0].mxu0
        %v1665 = vadd.f32 %v1131, %v1664
        %v1666 = vpop.f32.mrb[0].mxu0
        %1667 = vmatprep.mubr.f32.mxu0 0.0
        %v1668 = vand.u32 %v811, 4294901760
        %1669 = vmatmul.mubr.f32.gmra.mrb[0].mxu0 %v1668
        %v1670 = vpop.f32.mrb[0].mxu0
        %v1671 = vadd.f32 %v1141, %v1670
        %v1672 = vpop.f32.mrb[0].mxu0
        %1673 = vmatprep.mubr.f32.mxu0 0.0
        %v1674 = vand.u32 %v814, 4294901760
        %1675 = vmatmul.mubr.f32.gmra.mrb[0].mxu0 %v1674
        %v1676 = vpop.f32.mrb[0].mxu0
        %v1677 = vadd.f32 %v1151, %v1676
        %v1678 = vpop.f32.mrb[0].mxu0
        %1679 = vmatprep.mubr.f32.mxu0 0.0
        %v1680 = vand.u32 %v817, 4294901760
        %1681 = vmatmul.mubr.f32.gmra.mrb[0].mxu0 %v1680
        %v1682 = vpop.f32.mrb[0].mxu0
        %v1683 = vadd.f32 %v1161, %v1682
        %v1684 = vpop.f32.mrb[0].mxu0
        %1685 = vmatprep.mubr.f32.mxu0 0.0
        %v1686 = vand.u32 %v820, 4294901760
        %1687 = vmatmul.mubr.f32.gmra.mrb[0].mxu0 %v1686
        %v1688 = vpop.f32.mrb[0].mxu0
        %v1689 = vadd.f32 %v1171, %v1688
        %v1690 = vpop.f32.mrb[0].mxu0
        %1691 = vmatprep.mubr.f32.mxu0 0.0
        %v1692 = vand.u32 %v823, 4294901760
        %1693 = vmatmul.mubr.f32.gmra.mrb[0].mxu0 %v1692
        %v1694 = vpop.f32.mrb[0].mxu0
        %v1695 = vadd.f32 %v1181, %v1694
        %v1696 = vpop.f32.mrb[0].mxu0
        %1697 = vmatprep.mubr.f32.mxu0 0.0
        %v1698 = vand.u32 %v826, 4294901760
        %1699 = vmatmul.mubr.f32.gmra.mrb[0].mxu0 %v1698
        %v1700 = vpop.f32.mrb[0].mxu0
        %v1701 = vadd.f32 %v1191, %v1700
        %v1702 = vpop.f32.mrb[0].mxu0
        %1703 = vmatprep.mubr.f32.mxu0 0.0
        %v1704 = vand.u32 %v829, 4294901760
        %1705 = vmatmul.mubr.f32.gmra.mrb[0].mxu0 %v1704
        %v1706 = vpop.f32.mrb[0].mxu0
        %v1707 = vadd.f32 %v1201, %v1706
        %v1708 = vpop.f32.mrb[0].mxu0
        %1709 = vmatprep.mubr.f32.mxu0 0.0
        %v1710 = vand.u32 %v832, 4294901760
        %1711 = vmatmul.mubr.f32.gmra.mrb[0].mxu0 %v1710
        %v1712 = vpop.f32.mrb[0].mxu0
        %v1713 = vadd.f32 %v1211, %v1712
        %v1714 = vpop.f32.mrb[0].mxu0
        %1715 = vmatprep.mubr.f32.mxu0 0.0
        %v1716 = vand.u32 %v835, 4294901760
        %1717 = vmatmul.mubr.f32.gmra.mrb[0].mxu0 %v1716
        %v1718 = vpop.f32.mrb[0].mxu0
        %v1719 = vadd.f32 %v1221, %v1718
        %v1720 = vpop.f32.mrb[0].mxu0
        %1721 = vmatprep.mubr.f32.mxu0 0.0
        %v1722 = vand.u32 %v838, 4294901760
        %1723 = vmatmul.mubr.f32.gmra.mrb[0].mxu0 %v1722
        %v1724 = vpop.f32.mrb[0].mxu0
        %v1725 = vadd.f32 %v1231, %v1724
        %v1726 = vpop.f32.mrb[0].mxu0
        %1727 = vmatprep.mubr.f32.mxu0 0.0
        %v1728 = vand.u32 %v841, 4294901760
        %1729 = vmatmul.mubr.f32.gmra.mrb[0].mxu0 %v1728
        %v1730 = vpop.f32.mrb[0].mxu0
        %v1731 = vadd.f32 %v1241, %v1730
        %v1732 = vpop.f32.mrb[0].mxu0
        %1733 = vmatprep.mubr.f32.mxu0 0.0
        %v1734 = vand.u32 %v844, 4294901760
        %1735 = vmatmul.mubr.f32.gmra.mrb[0].mxu0 %v1734
        %v1736 = vpop.f32.mrb[0].mxu0
        %v1737 = vadd.f32 %v1251, %v1736
        %v1738 = vpop.f32.mrb[0].mxu0
        %1739 = vmatprep.mubr.f32.mxu0 0.0
        %v1740 = vand.u32 %v847, 4294901760
        %1741 = vmatmul.mubr.f32.gmra.mrb[0].mxu0 %v1740
        %v1742 = vpop.f32.mrb[0].mxu0
        %v1743 = vadd.f32 %v1261, %v1742
        %v1744 = vpop.f32.mrb[0].mxu0
        %1745 = vmatprep.mubr.f32.mxu0 0.0
        %v1746 = vand.u32 %v850, 4294901760
        %1747 = vmatmul.mubr.f32.gmra.mrb[0].mxu0 %v1746
        %v1748 = vpop.f32.mrb[0].mxu0
        %v1749 = vadd.f32 %v1271, %v1748
        %v1750 = vpop.f32.mrb[0].mxu0
        %1751 = vmatprep.mubr.f32.mxu0 0.0
        %v1752 = vand.u32 %v853, 4294901760
        %1753 = vmatmul.mubr.f32.gmra.mrb[0].mxu0 %v1752
        %v1754 = vpop.f32.mrb[0].mxu0
        %v1755 = vadd.f32 %v1281, %v1754
        %v1756 = vpop.f32.mrb[0].mxu0
        %1757 = vmatprep.mubr.f32.mxu0 0.0
        %v1758 = vand.u32 %v856, 4294901760
        %1759 = vmatmul.mubr.f32.gmra.mrb[0].mxu0 %v1758
        %v1760 = vpop.f32.mrb[0].mxu0
        %v1761 = vadd.f32 %v1291, %v1760
        %v1762 = vpop.f32.mrb[0].mxu0
        %1763 = vmatprep.mubr.f32.mxu0 0.0
        %v1764 = vand.u32 %v859, 4294901760
        %1765 = vmatmul.mubr.f32.gmra.mrb[0].mxu0 %v1764
        %v1766 = vpop.f32.mrb[0].mxu0
        %v1767 = vadd.f32 %v1301, %v1766
        %v1768 = vpop.f32.mrb[0].mxu0
        %1769 = vmatprep.mubr.f32.mxu0 0.0
        %v1770 = vand.u32 %v862, 4294901760
        %1771 = vmatmul.mubr.f32.gmra.mrb[0].mxu0 %v1770
        %v1772 = vpop.f32.mrb[0].mxu0
        %v1773 = vadd.f32 %v1311, %v1772
        %v1774 = vpop.f32.mrb[0].mxu0
        %1775 = vmatprep.mubr.f32.mxu0 0.0
        %v1776 = vand.u32 %v865, 4294901760
        %1777 = vmatmul.mubr.f32.gmra.mrb[0].mxu0 %v1776
        %v1778 = vpop.f32.mrb[0].mxu0
        %v1779 = vadd.f32 %v1321, %v1778
        %v1780 = vpop.f32.mrb[0].mxu0
        %1781 = vmatprep.mubr.f32.mxu0 0.0
        %v1782 = vand.u32 %v868, 4294901760
        %1783 = vmatmul.mubr.f32.gmra.mrb[0].mxu0 %v1782
        %v1784 = vpop.f32.mrb[0].mxu0
        %v1785 = vadd.f32 %v1331, %v1784
        %v1786 = vpop.f32.mrb[0].mxu0
        %1787 = vmatprep.mubr.f32.mxu0 0.0
        %v1788 = vand.u32 %v871, 4294901760
        %1789 = vmatmul.mubr.f32.gmra.mrb[0].mxu0 %v1788
        %v1790 = vpop.f32.mrb[0].mxu0
        %v1791 = vadd.f32 %v1341, %v1790
        %v1792 = vpop.f32.mrb[0].mxu0
        %1793 = vmatprep.mubr.f32.mxu0 0.0
        %v1794 = vand.u32 %v874, 4294901760
        %1795 = vmatmul.mubr.f32.gmra.mrb[0].mxu0 %v1794
        %v1796 = vpop.f32.mrb[0].mxu0
        %v1797 = vadd.f32 %v1351, %v1796
        %v1798 = vpop.f32.mrb[0].mxu0
        %1799 = vmatprep.mubr.f32.mxu0 0.0
        %v1800 = vand.u32 %v877, 4294901760
        %1801 = vmatmul.mubr.f32.gmra.mrb[0].mxu0 %v1800
        %v1802 = vpop.f32.mrb[0].mxu0
        %v1803 = vadd.f32 %v1361, %v1802
        %v1804 = vpop.f32.mrb[0].mxu0
        %1805 = vmatprep.mubr.f32.mxu0 0.0
        %v1806 = vand.u32 %v880, 4294901760
        %1807 = vmatmul.mubr.f32.gmra.mrb[0].mxu0 %v1806
        %v1808 = vpop.f32.mrb[0].mxu0
        %v1809 = vadd.f32 %v1371, %v1808
        %v1810 = vpop.f32.mrb[0].mxu0
        %1811 = vmatprep.mubr.f32.mxu0 0.0
        %v1812 = vand.u32 %v883, 4294901760
        %1813 = vmatmul.mubr.f32.gmra.mrb[0].mxu0 %v1812
        %v1814 = vpop.f32.mrb[0].mxu0
        %v1815 = vadd.f32 %v1381, %v1814
        %v1816 = vpop.f32.mrb[0].mxu0
        %1817 = vmatprep.mubr.f32.mxu0 0.0
        %v1818 = vand.u32 %v886, 4294901760
        %1819 = vmatmul.mubr.f32.gmra.mrb[0].mxu0 %v1818
        %v1820 = vpop.f32.mrb[0].mxu0
        %v1821 = vadd.f32 %v1391, %v1820
        %v1822 = vpop.f32.mrb[0].mxu0
        %1823 = vmatprep.mubr.f32.mxu0 0.0
        %v1824 = vand.u32 %v889, 4294901760
        %1825 = vmatmul.mubr.f32.gmra.mrb[0].mxu0 %v1824
        %v1826 = vpop.f32.mrb[0].mxu0
        %v1827 = vadd.f32 %v1401, %v1826
        %v1828 = vpop.f32.mrb[0].mxu0
        %1829 = vmatprep.mubr.f32.mxu0 0.0
        %v1830 = vand.u32 %v892, 4294901760
        %1831 = vmatmul.mubr.f32.gmra.mrb[0].mxu0 %v1830
        %v1832 = vpop.f32.mrb[0].mxu0
        %v1833 = vadd.f32 %v1411, %v1832
        %v1834 = vpop.f32.mrb[0].mxu0
        %1835 = vmatprep.mubr.f32.mxu0 0.0
        %v1836 = vand.u32 %v895, 4294901760
        %1837 = vmatmul.mubr.f32.gmra.mrb[0].mxu0 %v1836
        %v1838 = vpop.f32.mrb[0].mxu0
        %v1839 = vadd.f32 %v1421, %v1838
        %v1840 = vpop.f32.mrb[0].mxu0
        %1841 = vmatprep.mubr.f32.mxu0 0.0
        %v1842 = vand.u32 %v898, 4294901760
        %1843 = vmatmul.mubr.f32.gmra.mrb[0].mxu0 %v1842
        %v1844 = vpop.f32.mrb[0].mxu0
        %v1845 = vadd.f32 %v1431, %v1844
        %v1846 = vpop.f32.mrb[0].mxu0
        %1847 = vmatprep.mubr.f32.mxu0 0.0
        %v1848 = vand.u32 %v901, 4294901760
        %1849 = vmatmul.mubr.f32.gmra.mrb[0].mxu0 %v1848
        %v1850 = vpop.f32.mrb[0].mxu0
        %v1851 = vadd.f32 %v1441, %v1850
        %v1852 = vpop.f32.mrb[0].mxu0
        %1853 = vmatprep.mubr.f32.mxu0 0.0
        %v1854 = vand.u32 %v904, 4294901760
        %1855 = vmatmul.mubr.f32.gmra.mrb[0].mxu0 %v1854
        %v1856 = vpop.f32.mrb[0].mxu0
        %v1857 = vadd.f32 %v1451, %v1856
        %v1858 = vpop.f32.mrb[0].mxu0
        %1859 = vmatprep.mubr.f32.mxu0 0.0
        %v1860 = vand.u32 %v907, 4294901760
        %1861 = vmatmul.mubr.f32.gmra.mrb[0].mxu0 %v1860
        %v1862 = vpop.f32.mrb[0].mxu0
        %v1863 = vadd.f32 %v1461, %v1862
        %v1864 = vpop.f32.mrb[0].mxu0
        %1865 = vmatprep.mubr.f32.mxu0 0.0
        %v1866 = vand.u32 %v910, 4294901760
        %1867 = vmatmul.mubr.f32.gmra.mrb[0].mxu0 %v1866
        %v1868 = vpop.f32.mrb[0].mxu0
        %v1869 = vadd.f32 %v1471, %v1868
        %v1870 = vpop.f32.mrb[0].mxu0
        %1871 = vmatprep.mubr.f32.mxu0 0.0
        %v1872 = vand.u32 %v913, 4294901760
        %1873 = vmatmul.mubr.f32.gmra.mrb[0].mxu0 %v1872
        %v1874 = vpop.f32.mrb[0].mxu0
        %v1875 = vadd.f32 %v1481, %v1874
        %v1876 = vpop.f32.mrb[0].mxu0
        %1877 = vmatprep.mubr.f32.mxu0 0.0
        %v1878 = vand.u32 %v916, 4294901760
        %1879 = vmatmul.mubr.f32.gmra.mrb[0].mxu0 %v1878
        %v1880 = vpop.f32.mrb[0].mxu0
        %v1881 = vadd.f32 %v1491, %v1880
        %v1882 = vpop.f32.mrb[0].mxu0
        %1883 = vmatprep.mubr.f32.mxu0 0.0
        %v1884 = vand.u32 %v919, 4294901760
        %1885 = vmatmul.mubr.f32.gmra.mrb[0].mxu0 %v1884
        %v1886 = vpop.f32.mrb[0].mxu0
        %v1887 = vadd.f32 %v1501, %v1886
        %v1888 = vpop.f32.mrb[0].mxu0
        %1889 = vmatprep.mubr.f32.mxu0 0.0
        %v1890 = vand.u32 %v922, 4294901760
        %1891 = vmatmul.mubr.f32.gmra.mrb[0].mxu0 %v1890
        %v1892 = vpop.f32.mrb[0].mxu0
        %v1893 = vadd.f32 %v1511, %v1892
        %v1894 = vpop.f32.mrb[0].mxu0
        %1895 = vdwg.mxu0
        %1896 = vmatprep.subr.mxu0 0.0
        %v1897 = vand.u32 %v926, 4294901760
        %v1898 = vsub.f32 %v926, %v1897
        %1899 = vmatpush1.msra.mxu0 %v1898
        %1900 = vmatprep.subr.mxu0 0.0
        %1901 = vmatpush1.msra.mxu0 0.0
        %1902 = vmatprep.subr.mxu0 0.0
        %1903 = vmatpush1.msra.mxu0 0.0
        %1904 = vmatprep.subr.mxu0 0.0
        %1905 = vmatpush1.msra.mxu0 0.0
        %1906 = vmatprep.subr.mxu0 0.0
        %1907 = vmatpush1.msra.mxu0 0.0
        %1908 = vmatprep.subr.mxu0 0.0
        %1909 = vmatpush1.msra.mxu0 0.0
        %1910 = vmatprep.subr.mxu0 0.0
        %1911 = vmatpush1.msra.mxu0 0.0
        %1912 = vmatprep.subr.mxu0 0.0
        %1913 = vmatpush1.msra.mxu0 0.0
        %1914 = vmatprep.subr.mxu0 0.0
        %1915 = vmatpush1.msra.mxu0 0.0
        %1916 = vmatprep.subr.mxu0 0.0
        %1917 = vmatpush1.msra.mxu0 0.0
        %1918 = vmatprep.subr.mxu0 0.0
        %1919 = vmatpush1.msra.mxu0 0.0
        %1920 = vmatprep.subr.mxu0 0.0
        %1921 = vmatpush1.msra.mxu0 0.0
        %1922 = vmatprep.subr.mxu0 0.0
        %1923 = vmatpush1.msra.mxu0 0.0
        %1924 = vmatprep.subr.mxu0 0.0
        %1925 = vmatpush1.msra.mxu0 0.0
        %1926 = vmatprep.subr.mxu0 0.0
        %1927 = vmatpush1.msra.mxu0 0.0
        %1928 = vmatprep.subr.mxu0 0.0
        %1929 = vmatpush1.msra.mxu0 0.0
        %1930 = vmatprep.subr.mxu0 0.0
        %1931 = vmatpush1.msra.mxu0 0.0
        %1932 = vmatprep.subr.mxu0 0.0
        %1933 = vmatpush1.msra.mxu0 0.0
        %1934 = vmatprep.subr.mxu0 0.0
        %1935 = vmatpush1.msra.mxu0 0.0
        %1936 = vmatprep.subr.mxu0 0.0
        %1937 = vmatpush1.msra.mxu0 0.0
        %1938 = vmatprep.subr.mxu0 0.0
        %1939 = vmatpush1.msra.mxu0 0.0
        %1940 = vmatprep.subr.mxu0 0.0
        %1941 = vmatpush1.msra.mxu0 0.0
        %1942 = vmatprep.subr.mxu0 0.0
        %1943 = vmatpush1.msra.mxu0 0.0
        %1944 = vmatprep.subr.mxu0 0.0
        %1945 = vmatpush1.msra.mxu0 0.0
        %1946 = vmatprep.subr.mxu0 0.0
        %1947 = vmatpush1.msra.mxu0 0.0
        %1948 = vmatprep.subr.mxu0 0.0
        %1949 = vmatpush1.msra.mxu0 0.0
        %1950 = vmatprep.subr.mxu0 0.0
        %1951 = vmatpush1.msra.mxu0 0.0
        %1952 = vmatprep.subr.mxu0 0.0
        %1953 = vmatpush1.msra.mxu0 0.0
        %1954 = vmatprep.subr.mxu0 0.0
        %1955 = vmatpush1.msra.mxu0 0.0
        %1956 = vmatprep.subr.mxu0 0.0
        %1957 = vmatpush1.msra.mxu0 0.0
        %1958 = vmatprep.subr.mxu0 0.0
        %1959 = vmatpush1.msra.mxu0 0.0
        %1960 = vmatprep.subr.mxu0 0.0
        %1961 = vmatpush1.msra.mxu0 0.0
        %1962 = vmatprep.mubr.f32.mxu0 0.0
        %v1963 = vand.u32 %v769, 4294901760
        %v1964 = vsub.f32 %v769, %v1963
        %1965 = vmatmul.mubr.f32.gmra.mrb[0].mxu0 %v1964
        %v1966 = vpop.f32.mrb[0].mxu0
        %v1967 = vadd.f32 %v1587, %v1966
        %v1968 = vpop.f32.mrb[0].mxu0
        %1969 = vmatprep.mubr.f32.mxu0 0.0
        %v1970 = vand.u32 %v772, 4294901760
        %v1971 = vsub.f32 %v772, %v1970
        %1972 = vmatmul.mubr.f32.gmra.mrb[0].mxu0 %v1971
        %v1973 = vpop.f32.mrb[0].mxu0
        %v1974 = vadd.f32 %v1593, %v1973
        %v1975 = vpop.f32.mrb[0].mxu0
        %1976 = vmatprep.mubr.f32.mxu0 0.0
        %v1977 = vand.u32 %v775, 4294901760
        %v1978 = vsub.f32 %v775, %v1977
        %1979 = vmatmul.mubr.f32.gmra.mrb[0].mxu0 %v1978
        %v1980 = vpop.f32.mrb[0].mxu0
        %v1981 = vadd.f32 %v1599, %v1980
        %v1982 = vpop.f32.mrb[0].mxu0
        %1983 = vmatprep.mubr.f32.mxu0 0.0
        %v1984 = vand.u32 %v778, 4294901760
        %v1985 = vsub.f32 %v778, %v1984
        %1986 = vmatmul.mubr.f32.gmra.mrb[0].mxu0 %v1985
        %v1987 = vpop.f32.mrb[0].mxu0
        %v1988 = vadd.f32 %v1605, %v1987
        %v1989 = vpop.f32.mrb[0].mxu0
        %1990 = vmatprep.mubr.f32.mxu0 0.0
        %v1991 = vand.u32 %v781, 4294901760
        %v1992 = vsub.f32 %v781, %v1991
        %1993 = vmatmul.mubr.f32.gmra.mrb[0].mxu0 %v1992
        %v1994 = vpop.f32.mrb[0].mxu0
        %v1995 = vadd.f32 %v1611, %v1994
        %v1996 = vpop.f32.mrb[0].mxu0
        %1997 = vmatprep.mubr.f32.mxu0 0.0
        %v1998 = vand.u32 %v784, 4294901760
        %v1999 = vsub.f32 %v784, %v1998
        %2000 = vmatmul.mubr.f32.gmra.mrb[0].mxu0 %v1999
        %v2001 = vpop.f32.mrb[0].mxu0
        %v2002 = vadd.f32 %v1617, %v2001
        %v2003 = vpop.f32.mrb[0].mxu0
        %2004 = vmatprep.mubr.f32.mxu0 0.0
        %v2005 = vand.u32 %v787, 4294901760
        %v2006 = vsub.f32 %v787, %v2005
        %2007 = vmatmul.mubr.f32.gmra.mrb[0].mxu0 %v2006
        %v2008 = vpop.f32.mrb[0].mxu0
        %v2009 = vadd.f32 %v1623, %v2008
        %v2010 = vpop.f32.mrb[0].mxu0
        %2011 = vmatprep.mubr.f32.mxu0 0.0
        %v2012 = vand.u32 %v790, 4294901760
        %v2013 = vsub.f32 %v790, %v2012
        %2014 = vmatmul.mubr.f32.gmra.mrb[0].mxu0 %v2013
        %v2015 = vpop.f32.mrb[0].mxu0
        %v2016 = vadd.f32 %v1629, %v2015
        %v2017 = vpop.f32.mrb[0].mxu0
        %2018 = vmatprep.mubr.f32.mxu0 0.0
        %v2019 = vand.u32 %v793, 4294901760
        %v2020 = vsub.f32 %v793, %v2019
        %2021 = vmatmul.mubr.f32.gmra.mrb[0].mxu0 %v2020
        %v2022 = vpop.f32.mrb[0].mxu0
        %v2023 = vadd.f32 %v1635, %v2022
        %v2024 = vpop.f32.mrb[0].mxu0
        %2025 = vmatprep.mubr.f32.mxu0 0.0
        %v2026 = vand.u32 %v796, 4294901760
        %v2027 = vsub.f32 %v796, %v2026
        %2028 = vmatmul.mubr.f32.gmra.mrb[0].mxu0 %v2027
        %v2029 = vpop.f32.mrb[0].mxu0
        %v2030 = vadd.f32 %v1641, %v2029
        %v2031 = vpop.f32.mrb[0].mxu0
        %2032 = vmatprep.mubr.f32.mxu0 0.0
        %v2033 = vand.u32 %v799, 4294901760
        %v2034 = vsub.f32 %v799, %v2033
        %2035 = vmatmul.mubr.f32.gmra.mrb[0].mxu0 %v2034
        %v2036 = vpop.f32.mrb[0].mxu0
        %v2037 = vadd.f32 %v1647, %v2036
        %v2038 = vpop.f32.mrb[0].mxu0
        %2039 = vmatprep.mubr.f32.mxu0 0.0
        %v2040 = vand.u32 %v802, 4294901760
        %v2041 = vsub.f32 %v802, %v2040
        %2042 = vmatmul.mubr.f32.gmra.mrb[0].mxu0 %v2041
        %v2043 = vpop.f32.mrb[0].mxu0
        %v2044 = vadd.f32 %v1653, %v2043
        %v2045 = vpop.f32.mrb[0].mxu0
        %2046 = vmatprep.mubr.f32.mxu0 0.0
        %v2047 = vand.u32 %v805, 4294901760
        %v2048 = vsub.f32 %v805, %v2047
        %2049 = vmatmul.mubr.f32.gmra.mrb[0].mxu0 %v2048
        %v2050 = vpop.f32.mrb[0].mxu0
        %v2051 = vadd.f32 %v1659, %v2050
        %v2052 = vpop.f32.mrb[0].mxu0
        %2053 = vmatprep.mubr.f32.mxu0 0.0
        %v2054 = vand.u32 %v808, 4294901760
        %v2055 = vsub.f32 %v808, %v2054
        %2056 = vmatmul.mubr.f32.gmra.mrb[0].mxu0 %v2055
        %v2057 = vpop.f32.mrb[0].mxu0
        %v2058 = vadd.f32 %v1665, %v2057
        %v2059 = vpop.f32.mrb[0].mxu0
        %2060 = vmatprep.mubr.f32.mxu0 0.0
        %v2061 = vand.u32 %v811, 4294901760
        %v2062 = vsub.f32 %v811, %v2061
        %2063 = vmatmul.mubr.f32.gmra.mrb[0].mxu0 %v2062
        %v2064 = vpop.f32.mrb[0].mxu0
        %v2065 = vadd.f32 %v1671, %v2064
        %v2066 = vpop.f32.mrb[0].mxu0
        %2067 = vmatprep.mubr.f32.mxu0 0.0
        %v2068 = vand.u32 %v814, 4294901760
        %v2069 = vsub.f32 %v814, %v2068
        %2070 = vmatmul.mubr.f32.gmra.mrb[0].mxu0 %v2069
        %v2071 = vpop.f32.mrb[0].mxu0
        %v2072 = vadd.f32 %v1677, %v2071
        %v2073 = vpop.f32.mrb[0].mxu0
        %2074 = vmatprep.mubr.f32.mxu0 0.0
        %v2075 = vand.u32 %v817, 4294901760
        %v2076 = vsub.f32 %v817, %v2075
        %2077 = vmatmul.mubr.f32.gmra.mrb[0].mxu0 %v2076
        %v2078 = vpop.f32.mrb[0].mxu0
        %v2079 = vadd.f32 %v1683, %v2078
        %v2080 = vpop.f32.mrb[0].mxu0
        %2081 = vmatprep.mubr.f32.mxu0 0.0
        %v2082 = vand.u32 %v820, 4294901760
        %v2083 = vsub.f32 %v820, %v2082
        %2084 = vmatmul.mubr.f32.gmra.mrb[0].mxu0 %v2083
        %v2085 = vpop.f32.mrb[0].mxu0
        %v2086 = vadd.f32 %v1689, %v2085
        %v2087 = vpop.f32.mrb[0].mxu0
        %2088 = vmatprep.mubr.f32.mxu0 0.0
        %v2089 = vand.u32 %v823, 4294901760
        %v2090 = vsub.f32 %v823, %v2089
        %2091 = vmatmul.mubr.f32.gmra.mrb[0].mxu0 %v2090
        %v2092 = vpop.f32.mrb[0].mxu0
        %v2093 = vadd.f32 %v1695, %v2092
        %v2094 = vpop.f32.mrb[0].mxu0
        %2095 = vmatprep.mubr.f32.mxu0 0.0
        %v2096 = vand.u32 %v826, 4294901760
        %v2097 = vsub.f32 %v826, %v2096
        %2098 = vmatmul.mubr.f32.gmra.mrb[0].mxu0 %v2097
        %v2099 = vpop.f32.mrb[0].mxu0
        %v2100 = vadd.f32 %v1701, %v2099
        %v2101 = vpop.f32.mrb[0].mxu0
        %2102 = vmatprep.mubr.f32.mxu0 0.0
        %v2103 = vand.u32 %v829, 4294901760
        %v2104 = vsub.f32 %v829, %v2103
        %2105 = vmatmul.mubr.f32.gmra.mrb[0].mxu0 %v2104
        %v2106 = vpop.f32.mrb[0].mxu0
        %v2107 = vadd.f32 %v1707, %v2106
        %v2108 = vpop.f32.mrb[0].mxu0
        %2109 = vmatprep.mubr.f32.mxu0 0.0
        %v2110 = vand.u32 %v832, 4294901760
        %v2111 = vsub.f32 %v832, %v2110
        %2112 = vmatmul.mubr.f32.gmra.mrb[0].mxu0 %v2111
        %v2113 = vpop.f32.mrb[0].mxu0
        %v2114 = vadd.f32 %v1713, %v2113
        %v2115 = vpop.f32.mrb[0].mxu0
        %2116 = vmatprep.mubr.f32.mxu0 0.0
        %v2117 = vand.u32 %v835, 4294901760
        %v2118 = vsub.f32 %v835, %v2117
        %2119 = vmatmul.mubr.f32.gmra.mrb[0].mxu0 %v2118
        %v2120 = vpop.f32.mrb[0].mxu0
        %v2121 = vadd.f32 %v1719, %v2120
        %v2122 = vpop.f32.mrb[0].mxu0
        %2123 = vmatprep.mubr.f32.mxu0 0.0
        %v2124 = vand.u32 %v838, 4294901760
        %v2125 = vsub.f32 %v838, %v2124
        %2126 = vmatmul.mubr.f32.gmra.mrb[0].mxu0 %v2125
        %v2127 = vpop.f32.mrb[0].mxu0
        %v2128 = vadd.f32 %v1725, %v2127
        %v2129 = vpop.f32.mrb[0].mxu0
        %2130 = vmatprep.mubr.f32.mxu0 0.0
        %v2131 = vand.u32 %v841, 4294901760
        %v2132 = vsub.f32 %v841, %v2131
        %2133 = vmatmul.mubr.f32.gmra.mrb[0].mxu0 %v2132
        %v2134 = vpop.f32.mrb[0].mxu0
        %v2135 = vadd.f32 %v1731, %v2134
        %v2136 = vpop.f32.mrb[0].mxu0
        %2137 = vmatprep.mubr.f32.mxu0 0.0
        %v2138 = vand.u32 %v844, 4294901760
        %v2139 = vsub.f32 %v844, %v2138
        %2140 = vmatmul.mubr.f32.gmra.mrb[0].mxu0 %v2139
        %v2141 = vpop.f32.mrb[0].mxu0
        %v2142 = vadd.f32 %v1737, %v2141
        %v2143 = vpop.f32.mrb[0].mxu0
        %2144 = vmatprep.mubr.f32.mxu0 0.0
        %v2145 = vand.u32 %v847, 4294901760
        %v2146 = vsub.f32 %v847, %v2145
        %2147 = vmatmul.mubr.f32.gmra.mrb[0].mxu0 %v2146
        %v2148 = vpop.f32.mrb[0].mxu0
        %v2149 = vadd.f32 %v1743, %v2148
        %v2150 = vpop.f32.mrb[0].mxu0
        %2151 = vmatprep.mubr.f32.mxu0 0.0
        %v2152 = vand.u32 %v850, 4294901760
        %v2153 = vsub.f32 %v850, %v2152
        %2154 = vmatmul.mubr.f32.gmra.mrb[0].mxu0 %v2153
        %v2155 = vpop.f32.mrb[0].mxu0
        %v2156 = vadd.f32 %v1749, %v2155
        %v2157 = vpop.f32.mrb[0].mxu0
        %2158 = vmatprep.mubr.f32.mxu0 0.0
        %v2159 = vand.u32 %v853, 4294901760
        %v2160 = vsub.f32 %v853, %v2159
        %2161 = vmatmul.mubr.f32.gmra.mrb[0].mxu0 %v2160
        %v2162 = vpop.f32.mrb[0].mxu0
        %v2163 = vadd.f32 %v1755, %v2162
        %v2164 = vpop.f32.mrb[0].mxu0
        %2165 = vmatprep.mubr.f32.mxu0 0.0
        %v2166 = vand.u32 %v856, 4294901760
        %v2167 = vsub.f32 %v856, %v2166
        %2168 = vmatmul.mubr.f32.gmra.mrb[0].mxu0 %v2167
        %v2169 = vpop.f32.mrb[0].mxu0
        %v2170 = vadd.f32 %v1761, %v2169
        %v2171 = vpop.f32.mrb[0].mxu0
        %2172 = vmatprep.mubr.f32.mxu0 0.0
        %v2173 = vand.u32 %v859, 4294901760
        %v2174 = vsub.f32 %v859, %v2173
        %2175 = vmatmul.mubr.f32.gmra.mrb[0].mxu0 %v2174
        %v2176 = vpop.f32.mrb[0].mxu0
        %v2177 = vadd.f32 %v1767, %v2176
        %v2178 = vpop.f32.mrb[0].mxu0
        %2179 = vmatprep.mubr.f32.mxu0 0.0
        %v2180 = vand.u32 %v862, 4294901760
        %v2181 = vsub.f32 %v862, %v2180
        %2182 = vmatmul.mubr.f32.gmra.mrb[0].mxu0 %v2181
        %v2183 = vpop.f32.mrb[0].mxu0
        %v2184 = vadd.f32 %v1773, %v2183
        %v2185 = vpop.f32.mrb[0].mxu0
        %2186 = vmatprep.mubr.f32.mxu0 0.0
        %v2187 = vand.u32 %v865, 4294901760
        %v2188 = vsub.f32 %v865, %v2187
        %2189 = vmatmul.mubr.f32.gmra.mrb[0].mxu0 %v2188
        %v2190 = vpop.f32.mrb[0].mxu0
        %v2191 = vadd.f32 %v1779, %v2190
        %v2192 = vpop.f32.mrb[0].mxu0
        %2193 = vmatprep.mubr.f32.mxu0 0.0
        %v2194 = vand.u32 %v868, 4294901760
        %v2195 = vsub.f32 %v868, %v2194
        %2196 = vmatmul.mubr.f32.gmra.mrb[0].mxu0 %v2195
        %v2197 = vpop.f32.mrb[0].mxu0
        %v2198 = vadd.f32 %v1785, %v2197
        %v2199 = vpop.f32.mrb[0].mxu0
        %2200 = vmatprep.mubr.f32.mxu0 0.0
        %v2201 = vand.u32 %v871, 4294901760
        %v2202 = vsub.f32 %v871, %v2201
        %2203 = vmatmul.mubr.f32.gmra.mrb[0].mxu0 %v2202
        %v2204 = vpop.f32.mrb[0].mxu0
        %v2205 = vadd.f32 %v1791, %v2204
        %v2206 = vpop.f32.mrb[0].mxu0
        %2207 = vmatprep.mubr.f32.mxu0 0.0
        %v2208 = vand.u32 %v874, 4294901760
        %v2209 = vsub.f32 %v874, %v2208
        %2210 = vmatmul.mubr.f32.gmra.mrb[0].mxu0 %v2209
        %v2211 = vpop.f32.mrb[0].mxu0
        %v2212 = vadd.f32 %v1797, %v2211
        %v2213 = vpop.f32.mrb[0].mxu0
        %2214 = vmatprep.mubr.f32.mxu0 0.0
        %v2215 = vand.u32 %v877, 4294901760
        %v2216 = vsub.f32 %v877, %v2215
        %2217 = vmatmul.mubr.f32.gmra.mrb[0].mxu0 %v2216
        %v2218 = vpop.f32.mrb[0].mxu0
        %v2219 = vadd.f32 %v1803, %v2218
        %v2220 = vpop.f32.mrb[0].mxu0
        %2221 = vmatprep.mubr.f32.mxu0 0.0
        %v2222 = vand.u32 %v880, 4294901760
        %v2223 = vsub.f32 %v880, %v2222
        %2224 = vmatmul.mubr.f32.gmra.mrb[0].mxu0 %v2223
        %v2225 = vpop.f32.mrb[0].mxu0
        %v2226 = vadd.f32 %v1809, %v2225
        %v2227 = vpop.f32.mrb[0].mxu0
        %2228 = vmatprep.mubr.f32.mxu0 0.0
        %v2229 = vand.u32 %v883, 4294901760
        %v2230 = vsub.f32 %v883, %v2229
        %2231 = vmatmul.mubr.f32.gmra.mrb[0].mxu0 %v2230
        %v2232 = vpop.f32.mrb[0].mxu0
        %v2233 = vadd.f32 %v1815, %v2232
        %v2234 = vpop.f32.mrb[0].mxu0
        %2235 = vmatprep.mubr.f32.mxu0 0.0
        %v2236 = vand.u32 %v886, 4294901760
        %v2237 = vsub.f32 %v886, %v2236
        %2238 = vmatmul.mubr.f32.gmra.mrb[0].mxu0 %v2237
        %v2239 = vpop.f32.mrb[0].mxu0
        %v2240 = vadd.f32 %v1821, %v2239
        %v2241 = vpop.f32.mrb[0].mxu0
        %2242 = vmatprep.mubr.f32.mxu0 0.0
        %v2243 = vand.u32 %v889, 4294901760
        %v2244 = vsub.f32 %v889, %v2243
        %2245 = vmatmul.mubr.f32.gmra.mrb[0].mxu0 %v2244
        %v2246 = vpop.f32.mrb[0].mxu0
        %v2247 = vadd.f32 %v1827, %v2246
        %v2248 = vpop.f32.mrb[0].mxu0
        %2249 = vmatprep.mubr.f32.mxu0 0.0
        %v2250 = vand.u32 %v892, 4294901760
        %v2251 = vsub.f32 %v892, %v2250
        %2252 = vmatmul.mubr.f32.gmra.mrb[0].mxu0 %v2251
        %v2253 = vpop.f32.mrb[0].mxu0
        %v2254 = vadd.f32 %v1833, %v2253
        %v2255 = vpop.f32.mrb[0].mxu0
        %2256 = vmatprep.mubr.f32.mxu0 0.0
        %v2257 = vand.u32 %v895, 4294901760
        %v2258 = vsub.f32 %v895, %v2257
        %2259 = vmatmul.mubr.f32.gmra.mrb[0].mxu0 %v2258
        %v2260 = vpop.f32.mrb[0].mxu0
        %v2261 = vadd.f32 %v1839, %v2260
        %v2262 = vpop.f32.mrb[0].mxu0
        %2263 = vmatprep.mubr.f32.mxu0 0.0
        %v2264 = vand.u32 %v898, 4294901760
        %v2265 = vsub.f32 %v898, %v2264
        %2266 = vmatmul.mubr.f32.gmra.mrb[0].mxu0 %v2265
        %v2267 = vpop.f32.mrb[0].mxu0
        %v2268 = vadd.f32 %v1845, %v2267
        %v2269 = vpop.f32.mrb[0].mxu0
        %2270 = vmatprep.mubr.f32.mxu0 0.0
        %v2271 = vand.u32 %v901, 4294901760
        %v2272 = vsub.f32 %v901, %v2271
        %2273 = vmatmul.mubr.f32.gmra.mrb[0].mxu0 %v2272
        %v2274 = vpop.f32.mrb[0].mxu0
        %v2275 = vadd.f32 %v1851, %v2274
        %v2276 = vpop.f32.mrb[0].mxu0
        %2277 = vmatprep.mubr.f32.mxu0 0.0
        %v2278 = vand.u32 %v904, 4294901760
        %v2279 = vsub.f32 %v904, %v2278
        %2280 = vmatmul.mubr.f32.gmra.mrb[0].mxu0 %v2279
        %v2281 = vpop.f32.mrb[0].mxu0
        %v2282 = vadd.f32 %v1857, %v2281
        %v2283 = vpop.f32.mrb[0].mxu0
        %2284 = vmatprep.mubr.f32.mxu0 0.0
        %v2285 = vand.u32 %v907, 4294901760
        %v2286 = vsub.f32 %v907, %v2285
        %2287 = vmatmul.mubr.f32.gmra.mrb[0].mxu0 %v2286
        %v2288 = vpop.f32.mrb[0].mxu0
        %v2289 = vadd.f32 %v1863, %v2288
        %v2290 = vpop.f32.mrb[0].mxu0
        %2291 = vmatprep.mubr.f32.mxu0 0.0
        %v2292 = vand.u32 %v910, 4294901760
        %v2293 = vsub.f32 %v910, %v2292
        %2294 = vmatmul.mubr.f32.gmra.mrb[0].mxu0 %v2293
        %v2295 = vpop.f32.mrb[0].mxu0
        %v2296 = vadd.f32 %v1869, %v2295
        %v2297 = vpop.f32.mrb[0].mxu0
        %2298 = vmatprep.mubr.f32.mxu0 0.0
        %v2299 = vand.u32 %v913, 4294901760
        %v2300 = vsub.f32 %v913, %v2299
        %2301 = vmatmul.mubr.f32.gmra.mrb[0].mxu0 %v2300
        %v2302 = vpop.f32.mrb[0].mxu0
        %v2303 = vadd.f32 %v1875, %v2302
        %v2304 = vpop.f32.mrb[0].mxu0
        %2305 = vmatprep.mubr.f32.mxu0 0.0
        %v2306 = vand.u32 %v916, 4294901760
        %v2307 = vsub.f32 %v916, %v2306
        %2308 = vmatmul.mubr.f32.gmra.mrb[0].mxu0 %v2307
        %v2309 = vpop.f32.mrb[0].mxu0
        %v2310 = vadd.f32 %v1881, %v2309
        %v2311 = vpop.f32.mrb[0].mxu0
        %2312 = vmatprep.mubr.f32.mxu0 0.0
        %v2313 = vand.u32 %v919, 4294901760
        %v2314 = vsub.f32 %v919, %v2313
        %2315 = vmatmul.mubr.f32.gmra.mrb[0].mxu0 %v2314
        %v2316 = vpop.f32.mrb[0].mxu0
        %v2317 = vadd.f32 %v1887, %v2316
        %v2318 = vpop.f32.mrb[0].mxu0
        %2319 = vmatprep.mubr.f32.mxu0 0.0
        %v2320 = vand.u32 %v922, 4294901760
        %v2321 = vsub.f32 %v922, %v2320
        %2322 = vmatmul.mubr.f32.gmra.mrb[0].mxu0 %v2321
        %v2323 = vpop.f32.mrb[0].mxu0
        %v2324 = vadd.f32 %v1893, %v2323
        %v2325 = vpop.f32.mrb[0].mxu0
        %2326 = vdwg.mxu0
        %2327 = vmatprep.subr.mxu0 0.0
        %v2328 = vand.u32 %v926, 4294901760
        %2329 = vmatpush1.msra.mxu0 %v2328
        %2330 = vmatprep.subr.mxu0 0.0
        %2331 = vmatpush1.msra.mxu0 0.0
        %2332 = vmatprep.subr.mxu0 0.0
        %2333 = vmatpush1.msra.mxu0 0.0
        %2334 = vmatprep.subr.mxu0 0.0
        %2335 = vmatpush1.msra.mxu0 0.0
        %2336 = vmatprep.subr.mxu0 0.0
        %2337 = vmatpush1.msra.mxu0 0.0
        %2338 = vmatprep.subr.mxu0 0.0
        %2339 = vmatpush1.msra.mxu0 0.0
        %2340 = vmatprep.subr.mxu0 0.0
        %2341 = vmatpush1.msra.mxu0 0.0
        %2342 = vmatprep.subr.mxu0 0.0
        %2343 = vmatpush1.msra.mxu0 0.0
        %2344 = vmatprep.subr.mxu0 0.0
        %2345 = vmatpush1.msra.mxu0 0.0
        %2346 = vmatprep.subr.mxu0 0.0
        %2347 = vmatpush1.msra.mxu0 0.0
        %2348 = vmatprep.subr.mxu0 0.0
        %2349 = vmatpush1.msra.mxu0 0.0
        %2350 = vmatprep.subr.mxu0 0.0
        %2351 = vmatpush1.msra.mxu0 0.0
        %2352 = vmatprep.subr.mxu0 0.0
        %2353 = vmatpush1.msra.mxu0 0.0
        %2354 = vmatprep.subr.mxu0 0.0
        %2355 = vmatpush1.msra.mxu0 0.0
        %2356 = vmatprep.subr.mxu0 0.0
        %2357 = vmatpush1.msra.mxu0 0.0
        %2358 = vmatprep.subr.mxu0 0.0
        %2359 = vmatpush1.msra.mxu0 0.0
        %2360 = vmatprep.subr.mxu0 0.0
        %2361 = vmatpush1.msra.mxu0 0.0
        %2362 = vmatprep.subr.mxu0 0.0
        %2363 = vmatpush1.msra.mxu0 0.0
        %2364 = vmatprep.subr.mxu0 0.0
        %2365 = vmatpush1.msra.mxu0 0.0
        %2366 = vmatprep.subr.mxu0 0.0
        %2367 = vmatpush1.msra.mxu0 0.0
        %2368 = vmatprep.subr.mxu0 0.0
        %2369 = vmatpush1.msra.mxu0 0.0
        %2370 = vmatprep.subr.mxu0 0.0
        %2371 = vmatpush1.msra.mxu0 0.0
        %2372 = vmatprep.subr.mxu0 0.0
        %2373 = vmatpush1.msra.mxu0 0.0
        %2374 = vmatprep.subr.mxu0 0.0
        %2375 = vmatpush1.msra.mxu0 0.0
        %2376 = vmatprep.subr.mxu0 0.0
        %2377 = vmatpush1.msra.mxu0 0.0
        %2378 = vmatprep.subr.mxu0 0.0
        %2379 = vmatpush1.msra.mxu0 0.0
        %2380 = vmatprep.subr.mxu0 0.0
        %2381 = vmatpush1.msra.mxu0 0.0
        %2382 = vmatprep.subr.mxu0 0.0
        %2383 = vmatpush1.msra.mxu0 0.0
        %2384 = vmatprep.subr.mxu0 0.0
        %2385 = vmatpush1.msra.mxu0 0.0
        %2386 = vmatprep.subr.mxu0 0.0
        %2387 = vmatpush1.msra.mxu0 0.0
        %2388 = vmatprep.subr.mxu0 0.0
        %2389 = vmatpush1.msra.mxu0 0.0
        %2390 = vmatprep.subr.mxu0 0.0
        %2391 = vmatpush1.msra.mxu0 0.0
        %2392 = vmatprep.mubr.f32.mxu0 0.0
        %v2393 = vand.u32 %v769, 4294901760
        %v2394 = vsub.f32 %v769, %v2393
        %v2395 = vand.u32 %v2394, 4294901760
        %2396 = vmatmul.mubr.f32.gmra.mrb[0].mxu0 %v2395
        %v2397 = vpop.f32.mrb[0].mxu0
        %v2398 = vadd.f32 %v1967, %v2397
        %v2399 = vpop.f32.mrb[0].mxu0
        %2400 = vmatprep.mubr.f32.mxu0 0.0
        %v2401 = vand.u32 %v772, 4294901760
        %v2402 = vsub.f32 %v772, %v2401
        %v2403 = vand.u32 %v2402, 4294901760
        %2404 = vmatmul.mubr.f32.gmra.mrb[0].mxu0 %v2403
        %v2405 = vpop.f32.mrb[0].mxu0
        %v2406 = vadd.f32 %v1974, %v2405
        %v2407 = vpop.f32.mrb[0].mxu0
        %2408 = vmatprep.mubr.f32.mxu0 0.0
        %v2409 = vand.u32 %v775, 4294901760
        %v2410 = vsub.f32 %v775, %v2409
        %v2411 = vand.u32 %v2410, 4294901760
        %2412 = vmatmul.mubr.f32.gmra.mrb[0].mxu0 %v2411
        %v2413 = vpop.f32.mrb[0].mxu0
        %v2414 = vadd.f32 %v1981, %v2413
        %v2415 = vpop.f32.mrb[0].mxu0
        %2416 = vmatprep.mubr.f32.mxu0 0.0
        %v2417 = vand.u32 %v778, 4294901760
        %v2418 = vsub.f32 %v778, %v2417
        %v2419 = vand.u32 %v2418, 4294901760
        %2420 = vmatmul.mubr.f32.gmra.mrb[0].mxu0 %v2419
        %v2421 = vpop.f32.mrb[0].mxu0
        %v2422 = vadd.f32 %v1988, %v2421
        %v2423 = vpop.f32.mrb[0].mxu0
        %2424 = vmatprep.mubr.f32.mxu0 0.0
        %v2425 = vand.u32 %v781, 4294901760
        %v2426 = vsub.f32 %v781, %v2425
        %v2427 = vand.u32 %v2426, 4294901760
        %2428 = vmatmul.mubr.f32.gmra.mrb[0].mxu0 %v2427
        %v2429 = vpop.f32.mrb[0].mxu0
        %v2430 = vadd.f32 %v1995, %v2429
        %v2431 = vpop.f32.mrb[0].mxu0
        %2432 = vmatprep.mubr.f32.mxu0 0.0
        %v2433 = vand.u32 %v784, 4294901760
        %v2434 = vsub.f32 %v784, %v2433
        %v2435 = vand.u32 %v2434, 4294901760
        %2436 = vmatmul.mubr.f32.gmra.mrb[0].mxu0 %v2435
        %v2437 = vpop.f32.mrb[0].mxu0
        %v2438 = vadd.f32 %v2002, %v2437
        %v2439 = vpop.f32.mrb[0].mxu0
        %2440 = vmatprep.mubr.f32.mxu0 0.0
        %v2441 = vand.u32 %v787, 4294901760
        %v2442 = vsub.f32 %v787, %v2441
        %v2443 = vand.u32 %v2442, 4294901760
        %2444 = vmatmul.mubr.f32.gmra.mrb[0].mxu0 %v2443
        %v2445 = vpop.f32.mrb[0].mxu0
        %v2446 = vadd.f32 %v2009, %v2445
        %v2447 = vpop.f32.mrb[0].mxu0
        %2448 = vmatprep.mubr.f32.mxu0 0.0
        %v2449 = vand.u32 %v790, 4294901760
        %v2450 = vsub.f32 %v790, %v2449
        %v2451 = vand.u32 %v2450, 4294901760
        %2452 = vmatmul.mubr.f32.gmra.mrb[0].mxu0 %v2451
        %v2453 = vpop.f32.mrb[0].mxu0
        %v2454 = vadd.f32 %v2016, %v2453
        %v2455 = vpop.f32.mrb[0].mxu0
        %2456 = vmatprep.mubr.f32.mxu0 0.0
        %v2457 = vand.u32 %v793, 4294901760
        %v2458 = vsub.f32 %v793, %v2457
        %v2459 = vand.u32 %v2458, 4294901760
        %2460 = vmatmul.mubr.f32.gmra.mrb[0].mxu0 %v2459
        %v2461 = vpop.f32.mrb[0].mxu0
        %v2462 = vadd.f32 %v2023, %v2461
        %v2463 = vpop.f32.mrb[0].mxu0
        %2464 = vmatprep.mubr.f32.mxu0 0.0
        %v2465 = vand.u32 %v796, 4294901760
        %v2466 = vsub.f32 %v796, %v2465
        %v2467 = vand.u32 %v2466, 4294901760
        %2468 = vmatmul.mubr.f32.gmra.mrb[0].mxu0 %v2467
        %v2469 = vpop.f32.mrb[0].mxu0
        %v2470 = vadd.f32 %v2030, %v2469
        %v2471 = vpop.f32.mrb[0].mxu0
        %2472 = vmatprep.mubr.f32.mxu0 0.0
        %v2473 = vand.u32 %v799, 4294901760
        %v2474 = vsub.f32 %v799, %v2473
        %v2475 = vand.u32 %v2474, 4294901760
        %2476 = vmatmul.mubr.f32.gmra.mrb[0].mxu0 %v2475
        %v2477 = vpop.f32.mrb[0].mxu0
        %v2478 = vadd.f32 %v2037, %v2477
        %v2479 = vpop.f32.mrb[0].mxu0
        %2480 = vmatprep.mubr.f32.mxu0 0.0
        %v2481 = vand.u32 %v802, 4294901760
        %v2482 = vsub.f32 %v802, %v2481
        %v2483 = vand.u32 %v2482, 4294901760
        %2484 = vmatmul.mubr.f32.gmra.mrb[0].mxu0 %v2483
        %v2485 = vpop.f32.mrb[0].mxu0
        %v2486 = vadd.f32 %v2044, %v2485
        %v2487 = vpop.f32.mrb[0].mxu0
        %2488 = vmatprep.mubr.f32.mxu0 0.0
        %v2489 = vand.u32 %v805, 4294901760
        %v2490 = vsub.f32 %v805, %v2489
        %v2491 = vand.u32 %v2490, 4294901760
        %2492 = vmatmul.mubr.f32.gmra.mrb[0].mxu0 %v2491
        %v2493 = vpop.f32.mrb[0].mxu0
        %v2494 = vadd.f32 %v2051, %v2493
        %v2495 = vpop.f32.mrb[0].mxu0
        %2496 = vmatprep.mubr.f32.mxu0 0.0
        %v2497 = vand.u32 %v808, 4294901760
        %v2498 = vsub.f32 %v808, %v2497
        %v2499 = vand.u32 %v2498, 4294901760
        %2500 = vmatmul.mubr.f32.gmra.mrb[0].mxu0 %v2499
        %v2501 = vpop.f32.mrb[0].mxu0
        %v2502 = vadd.f32 %v2058, %v2501
        %v2503 = vpop.f32.mrb[0].mxu0
        %2504 = vmatprep.mubr.f32.mxu0 0.0
        %v2505 = vand.u32 %v811, 4294901760
        %v2506 = vsub.f32 %v811, %v2505
        %v2507 = vand.u32 %v2506, 4294901760
        %2508 = vmatmul.mubr.f32.gmra.mrb[0].mxu0 %v2507
        %v2509 = vpop.f32.mrb[0].mxu0
        %v2510 = vadd.f32 %v2065, %v2509
        %v2511 = vpop.f32.mrb[0].mxu0
        %2512 = vmatprep.mubr.f32.mxu0 0.0
        %v2513 = vand.u32 %v814, 4294901760
        %v2514 = vsub.f32 %v814, %v2513
        %v2515 = vand.u32 %v2514, 4294901760
        %2516 = vmatmul.mubr.f32.gmra.mrb[0].mxu0 %v2515
        %v2517 = vpop.f32.mrb[0].mxu0
        %v2518 = vadd.f32 %v2072, %v2517
        %v2519 = vpop.f32.mrb[0].mxu0
        %2520 = vmatprep.mubr.f32.mxu0 0.0
        %v2521 = vand.u32 %v817, 4294901760
        %v2522 = vsub.f32 %v817, %v2521
        %v2523 = vand.u32 %v2522, 4294901760
        %2524 = vmatmul.mubr.f32.gmra.mrb[0].mxu0 %v2523
        %v2525 = vpop.f32.mrb[0].mxu0
        %v2526 = vadd.f32 %v2079, %v2525
        %v2527 = vpop.f32.mrb[0].mxu0
        %2528 = vmatprep.mubr.f32.mxu0 0.0
        %v2529 = vand.u32 %v820, 4294901760
        %v2530 = vsub.f32 %v820, %v2529
        %v2531 = vand.u32 %v2530, 4294901760
        %2532 = vmatmul.mubr.f32.gmra.mrb[0].mxu0 %v2531
        %v2533 = vpop.f32.mrb[0].mxu0
        %v2534 = vadd.f32 %v2086, %v2533
        %v2535 = vpop.f32.mrb[0].mxu0
        %2536 = vmatprep.mubr.f32.mxu0 0.0
        %v2537 = vand.u32 %v823, 4294901760
        %v2538 = vsub.f32 %v823, %v2537
        %v2539 = vand.u32 %v2538, 4294901760
        %2540 = vmatmul.mubr.f32.gmra.mrb[0].mxu0 %v2539
        %v2541 = vpop.f32.mrb[0].mxu0
        %v2542 = vadd.f32 %v2093, %v2541
        %v2543 = vpop.f32.mrb[0].mxu0
        %2544 = vmatprep.mubr.f32.mxu0 0.0
        %v2545 = vand.u32 %v826, 4294901760
        %v2546 = vsub.f32 %v826, %v2545
        %v2547 = vand.u32 %v2546, 4294901760
        %2548 = vmatmul.mubr.f32.gmra.mrb[0].mxu0 %v2547
        %v2549 = vpop.f32.mrb[0].mxu0
        %v2550 = vadd.f32 %v2100, %v2549
        %v2551 = vpop.f32.mrb[0].mxu0
        %2552 = vmatprep.mubr.f32.mxu0 0.0
        %v2553 = vand.u32 %v829, 4294901760
        %v2554 = vsub.f32 %v829, %v2553
        %v2555 = vand.u32 %v2554, 4294901760
        %2556 = vmatmul.mubr.f32.gmra.mrb[0].mxu0 %v2555
        %v2557 = vpop.f32.mrb[0].mxu0
        %v2558 = vadd.f32 %v2107, %v2557
        %v2559 = vpop.f32.mrb[0].mxu0
        %2560 = vmatprep.mubr.f32.mxu0 0.0
        %v2561 = vand.u32 %v832, 4294901760
        %v2562 = vsub.f32 %v832, %v2561
        %v2563 = vand.u32 %v2562, 4294901760
        %2564 = vmatmul.mubr.f32.gmra.mrb[0].mxu0 %v2563
        %v2565 = vpop.f32.mrb[0].mxu0
        %v2566 = vadd.f32 %v2114, %v2565
        %v2567 = vpop.f32.mrb[0].mxu0
        %2568 = vmatprep.mubr.f32.mxu0 0.0
        %v2569 = vand.u32 %v835, 4294901760
        %v2570 = vsub.f32 %v835, %v2569
        %v2571 = vand.u32 %v2570, 4294901760
        %2572 = vmatmul.mubr.f32.gmra.mrb[0].mxu0 %v2571
        %v2573 = vpop.f32.mrb[0].mxu0
        %v2574 = vadd.f32 %v2121, %v2573
        %v2575 = vpop.f32.mrb[0].mxu0
        %2576 = vmatprep.mubr.f32.mxu0 0.0
        %v2577 = vand.u32 %v838, 4294901760
        %v2578 = vsub.f32 %v838, %v2577
        %v2579 = vand.u32 %v2578, 4294901760
        %2580 = vmatmul.mubr.f32.gmra.mrb[0].mxu0 %v2579
        %v2581 = vpop.f32.mrb[0].mxu0
        %v2582 = vadd.f32 %v2128, %v2581
        %v2583 = vpop.f32.mrb[0].mxu0
        %2584 = vmatprep.mubr.f32.mxu0 0.0
        %v2585 = vand.u32 %v841, 4294901760
        %v2586 = vsub.f32 %v841, %v2585
        %v2587 = vand.u32 %v2586, 4294901760
        %2588 = vmatmul.mubr.f32.gmra.mrb[0].mxu0 %v2587
        %v2589 = vpop.f32.mrb[0].mxu0
        %v2590 = vadd.f32 %v2135, %v2589
        %v2591 = vpop.f32.mrb[0].mxu0
        %2592 = vmatprep.mubr.f32.mxu0 0.0
        %v2593 = vand.u32 %v844, 4294901760
        %v2594 = vsub.f32 %v844, %v2593
        %v2595 = vand.u32 %v2594, 4294901760
        %2596 = vmatmul.mubr.f32.gmra.mrb[0].mxu0 %v2595
        %v2597 = vpop.f32.mrb[0].mxu0
        %v2598 = vadd.f32 %v2142, %v2597
        %v2599 = vpop.f32.mrb[0].mxu0
        %2600 = vmatprep.mubr.f32.mxu0 0.0
        %v2601 = vand.u32 %v847, 4294901760
        %v2602 = vsub.f32 %v847, %v2601
        %v2603 = vand.u32 %v2602, 4294901760
        %2604 = vmatmul.mubr.f32.gmra.mrb[0].mxu0 %v2603
        %v2605 = vpop.f32.mrb[0].mxu0
        %v2606 = vadd.f32 %v2149, %v2605
        %v2607 = vpop.f32.mrb[0].mxu0
        %2608 = vmatprep.mubr.f32.mxu0 0.0
        %v2609 = vand.u32 %v850, 4294901760
        %v2610 = vsub.f32 %v850, %v2609
        %v2611 = vand.u32 %v2610, 4294901760
        %2612 = vmatmul.mubr.f32.gmra.mrb[0].mxu0 %v2611
        %v2613 = vpop.f32.mrb[0].mxu0
        %v2614 = vadd.f32 %v2156, %v2613
        %v2615 = vpop.f32.mrb[0].mxu0
        %2616 = vmatprep.mubr.f32.mxu0 0.0
        %v2617 = vand.u32 %v853, 4294901760
        %v2618 = vsub.f32 %v853, %v2617
        %v2619 = vand.u32 %v2618, 4294901760
        %2620 = vmatmul.mubr.f32.gmra.mrb[0].mxu0 %v2619
        %v2621 = vpop.f32.mrb[0].mxu0
        %v2622 = vadd.f32 %v2163, %v2621
        %v2623 = vpop.f32.mrb[0].mxu0
        %2624 = vmatprep.mubr.f32.mxu0 0.0
        %v2625 = vand.u32 %v856, 4294901760
        %v2626 = vsub.f32 %v856, %v2625
        %v2627 = vand.u32 %v2626, 4294901760
        %2628 = vmatmul.mubr.f32.gmra.mrb[0].mxu0 %v2627
        %v2629 = vpop.f32.mrb[0].mxu0
        %v2630 = vadd.f32 %v2170, %v2629
        %v2631 = vpop.f32.mrb[0].mxu0
        %2632 = vmatprep.mubr.f32.mxu0 0.0
        %v2633 = vand.u32 %v859, 4294901760
        %v2634 = vsub.f32 %v859, %v2633
        %v2635 = vand.u32 %v2634, 4294901760
        %2636 = vmatmul.mubr.f32.gmra.mrb[0].mxu0 %v2635
        %v2637 = vpop.f32.mrb[0].mxu0
        %v2638 = vadd.f32 %v2177, %v2637
        %v2639 = vpop.f32.mrb[0].mxu0
        %2640 = vmatprep.mubr.f32.mxu0 0.0
        %v2641 = vand.u32 %v862, 4294901760
        %v2642 = vsub.f32 %v862, %v2641
        %v2643 = vand.u32 %v2642, 4294901760
        %2644 = vmatmul.mubr.f32.gmra.mrb[0].mxu0 %v2643
        %v2645 = vpop.f32.mrb[0].mxu0
        %v2646 = vadd.f32 %v2184, %v2645
        %v2647 = vpop.f32.mrb[0].mxu0
        %2648 = vmatprep.mubr.f32.mxu0 0.0
        %v2649 = vand.u32 %v865, 4294901760
        %v2650 = vsub.f32 %v865, %v2649
        %v2651 = vand.u32 %v2650, 4294901760
        %2652 = vmatmul.mubr.f32.gmra.mrb[0].mxu0 %v2651
        %v2653 = vpop.f32.mrb[0].mxu0
        %v2654 = vadd.f32 %v2191, %v2653
        %v2655 = vpop.f32.mrb[0].mxu0
        %2656 = vmatprep.mubr.f32.mxu0 0.0
        %v2657 = vand.u32 %v868, 4294901760
        %v2658 = vsub.f32 %v868, %v2657
        %v2659 = vand.u32 %v2658, 4294901760
        %2660 = vmatmul.mubr.f32.gmra.mrb[0].mxu0 %v2659
        %v2661 = vpop.f32.mrb[0].mxu0
        %v2662 = vadd.f32 %v2198, %v2661
        %v2663 = vpop.f32.mrb[0].mxu0
        %2664 = vmatprep.mubr.f32.mxu0 0.0
        %v2665 = vand.u32 %v871, 4294901760
        %v2666 = vsub.f32 %v871, %v2665
        %v2667 = vand.u32 %v2666, 4294901760
        %2668 = vmatmul.mubr.f32.gmra.mrb[0].mxu0 %v2667
        %v2669 = vpop.f32.mrb[0].mxu0
        %v2670 = vadd.f32 %v2205, %v2669
        %v2671 = vpop.f32.mrb[0].mxu0
        %2672 = vmatprep.mubr.f32.mxu0 0.0
        %v2673 = vand.u32 %v874, 4294901760
        %v2674 = vsub.f32 %v874, %v2673
        %v2675 = vand.u32 %v2674, 4294901760
        %2676 = vmatmul.mubr.f32.gmra.mrb[0].mxu0 %v2675
        %v2677 = vpop.f32.mrb[0].mxu0
        %v2678 = vadd.f32 %v2212, %v2677
        %v2679 = vpop.f32.mrb[0].mxu0
        %2680 = vmatprep.mubr.f32.mxu0 0.0
        %v2681 = vand.u32 %v877, 4294901760
        %v2682 = vsub.f32 %v877, %v2681
        %v2683 = vand.u32 %v2682, 4294901760
        %2684 = vmatmul.mubr.f32.gmra.mrb[0].mxu0 %v2683
        %v2685 = vpop.f32.mrb[0].mxu0
        %v2686 = vadd.f32 %v2219, %v2685
        %v2687 = vpop.f32.mrb[0].mxu0
        %2688 = vmatprep.mubr.f32.mxu0 0.0
        %v2689 = vand.u32 %v880, 4294901760
        %v2690 = vsub.f32 %v880, %v2689
        %v2691 = vand.u32 %v2690, 4294901760
        %2692 = vmatmul.mubr.f32.gmra.mrb[0].mxu0 %v2691
        %v2693 = vpop.f32.mrb[0].mxu0
        %v2694 = vadd.f32 %v2226, %v2693
        %v2695 = vpop.f32.mrb[0].mxu0
        %2696 = vmatprep.mubr.f32.mxu0 0.0
        %v2697 = vand.u32 %v883, 4294901760
        %v2698 = vsub.f32 %v883, %v2697
        %v2699 = vand.u32 %v2698, 4294901760
        %2700 = vmatmul.mubr.f32.gmra.mrb[0].mxu0 %v2699
        %v2701 = vpop.f32.mrb[0].mxu0
        %v2702 = vadd.f32 %v2233, %v2701
        %v2703 = vpop.f32.mrb[0].mxu0
        %2704 = vmatprep.mubr.f32.mxu0 0.0
        %v2705 = vand.u32 %v886, 4294901760
        %v2706 = vsub.f32 %v886, %v2705
        %v2707 = vand.u32 %v2706, 4294901760
        %2708 = vmatmul.mubr.f32.gmra.mrb[0].mxu0 %v2707
        %v2709 = vpop.f32.mrb[0].mxu0
        %v2710 = vadd.f32 %v2240, %v2709
        %v2711 = vpop.f32.mrb[0].mxu0
        %2712 = vmatprep.mubr.f32.mxu0 0.0
        %v2713 = vand.u32 %v889, 4294901760
        %v2714 = vsub.f32 %v889, %v2713
        %v2715 = vand.u32 %v2714, 4294901760
        %2716 = vmatmul.mubr.f32.gmra.mrb[0].mxu0 %v2715
        %v2717 = vpop.f32.mrb[0].mxu0
        %v2718 = vadd.f32 %v2247, %v2717
        %v2719 = vpop.f32.mrb[0].mxu0
        %2720 = vmatprep.mubr.f32.mxu0 0.0
        %v2721 = vand.u32 %v892, 4294901760
        %v2722 = vsub.f32 %v892, %v2721
        %v2723 = vand.u32 %v2722, 4294901760
        %2724 = vmatmul.mubr.f32.gmra.mrb[0].mxu0 %v2723
        %v2725 = vpop.f32.mrb[0].mxu0
        %v2726 = vadd.f32 %v2254, %v2725
        %v2727 = vpop.f32.mrb[0].mxu0
        %2728 = vmatprep.mubr.f32.mxu0 0.0
        %v2729 = vand.u32 %v895, 4294901760
        %v2730 = vsub.f32 %v895, %v2729
        %v2731 = vand.u32 %v2730, 4294901760
        %2732 = vmatmul.mubr.f32.gmra.mrb[0].mxu0 %v2731
        %v2733 = vpop.f32.mrb[0].mxu0
        %v2734 = vadd.f32 %v2261, %v2733
        %v2735 = vpop.f32.mrb[0].mxu0
        %2736 = vmatprep.mubr.f32.mxu0 0.0
        %v2737 = vand.u32 %v898, 4294901760
        %v2738 = vsub.f32 %v898, %v2737
        %v2739 = vand.u32 %v2738, 4294901760
        %2740 = vmatmul.mubr.f32.gmra.mrb[0].mxu0 %v2739
        %v2741 = vpop.f32.mrb[0].mxu0
        %v2742 = vadd.f32 %v2268, %v2741
        %v2743 = vpop.f32.mrb[0].mxu0
        %2744 = vmatprep.mubr.f32.mxu0 0.0
        %v2745 = vand.u32 %v901, 4294901760
        %v2746 = vsub.f32 %v901, %v2745
        %v2747 = vand.u32 %v2746, 4294901760
        %2748 = vmatmul.mubr.f32.gmra.mrb[0].mxu0 %v2747
        %v2749 = vpop.f32.mrb[0].mxu0
        %v2750 = vadd.f32 %v2275, %v2749
        %v2751 = vpop.f32.mrb[0].mxu0
        %2752 = vmatprep.mubr.f32.mxu0 0.0
        %v2753 = vand.u32 %v904, 4294901760
        %v2754 = vsub.f32 %v904, %v2753
        %v2755 = vand.u32 %v2754, 4294901760
        %2756 = vmatmul.mubr.f32.gmra.mrb[0].mxu0 %v2755
        %v2757 = vpop.f32.mrb[0].mxu0
        %v2758 = vadd.f32 %v2282, %v2757
        %v2759 = vpop.f32.mrb[0].mxu0
        %2760 = vmatprep.mubr.f32.mxu0 0.0
        %v2761 = vand.u32 %v907, 4294901760
        %v2762 = vsub.f32 %v907, %v2761
        %v2763 = vand.u32 %v2762, 4294901760
        %2764 = vmatmul.mubr.f32.gmra.mrb[0].mxu0 %v2763
        %v2765 = vpop.f32.mrb[0].mxu0
        %v2766 = vadd.f32 %v2289, %v2765
        %v2767 = vpop.f32.mrb[0].mxu0
        %2768 = vmatprep.mubr.f32.mxu0 0.0
        %v2769 = vand.u32 %v910, 4294901760
        %v2770 = vsub.f32 %v910, %v2769
        %v2771 = vand.u32 %v2770, 4294901760
        %2772 = vmatmul.mubr.f32.gmra.mrb[0].mxu0 %v2771
        %v2773 = vpop.f32.mrb[0].mxu0
        %v2774 = vadd.f32 %v2296, %v2773
        %v2775 = vpop.f32.mrb[0].mxu0
        %2776 = vmatprep.mubr.f32.mxu0 0.0
        %v2777 = vand.u32 %v913, 4294901760
        %v2778 = vsub.f32 %v913, %v2777
        %v2779 = vand.u32 %v2778, 4294901760
        %2780 = vmatmul.mubr.f32.gmra.mrb[0].mxu0 %v2779
        %v2781 = vpop.f32.mrb[0].mxu0
        %v2782 = vadd.f32 %v2303, %v2781
        %v2783 = vpop.f32.mrb[0].mxu0
        %2784 = vmatprep.mubr.f32.mxu0 0.0
        %v2785 = vand.u32 %v916, 4294901760
        %v2786 = vsub.f32 %v916, %v2785
        %v2787 = vand.u32 %v2786, 4294901760
        %2788 = vmatmul.mubr.f32.gmra.mrb[0].mxu0 %v2787
        %v2789 = vpop.f32.mrb[0].mxu0
        %v2790 = vadd.f32 %v2310, %v2789
        %v2791 = vpop.f32.mrb[0].mxu0
        %2792 = vmatprep.mubr.f32.mxu0 0.0
        %v2793 = vand.u32 %v919, 4294901760
        %v2794 = vsub.f32 %v919, %v2793
        %v2795 = vand.u32 %v2794, 4294901760
        %2796 = vmatmul.mubr.f32.gmra.mrb[0].mxu0 %v2795
        %v2797 = vpop.f32.mrb[0].mxu0
        %v2798 = vadd.f32 %v2317, %v2797
        %v2799 = vpop.f32.mrb[0].mxu0
        %2800 = vmatprep.mubr.f32.mxu0 0.0
        %v2801 = vand.u32 %v922, 4294901760
        %v2802 = vsub.f32 %v922, %v2801
        %v2803 = vand.u32 %v2802, 4294901760
        %2804 = vmatmul.mubr.f32.gmra.mrb[0].mxu0 %v2803
        %v2805 = vpop.f32.mrb[0].mxu0
        %v2806 = vadd.f32 %v2324, %v2805
        %v2807 = vpop.f32.mrb[0].mxu0
        %2808 = vdwg.mxu0
        %2809 = vmatprep.subr.mxu0 0.0
        %v2810 = vand.u32 %v926, 4294901760
        %v2811 = vsub.f32 %v926, %v2810
        %v2812 = vand.u32 %v2811, 4294901760
        %2813 = vmatpush1.msra.mxu0 %v2812
        %2814 = vmatprep.subr.mxu0 0.0
        %2815 = vmatpush1.msra.mxu0 0.0
        %2816 = vmatprep.subr.mxu0 0.0
        %2817 = vmatpush1.msra.mxu0 0.0
        %2818 = vmatprep.subr.mxu0 0.0
        %2819 = vmatpush1.msra.mxu0 0.0
        %2820 = vmatprep.subr.mxu0 0.0
        %2821 = vmatpush1.msra.mxu0 0.0
        %2822 = vmatprep.subr.mxu0 0.0
        %2823 = vmatpush1.msra.mxu0 0.0
        %2824 = vmatprep.subr.mxu0 0.0
        %2825 = vmatpush1.msra.mxu0 0.0
        %2826 = vmatprep.subr.mxu0 0.0
        %2827 = vmatpush1.msra.mxu0 0.0
        %2828 = vmatprep.subr.mxu0 0.0
        %2829 = vmatpush1.msra.mxu0 0.0
        %2830 = vmatprep.subr.mxu0 0.0
        %2831 = vmatpush1.msra.mxu0 0.0
        %2832 = vmatprep.subr.mxu0 0.0
        %2833 = vmatpush1.msra.mxu0 0.0
        %2834 = vmatprep.subr.mxu0 0.0
        %2835 = vmatpush1.msra.mxu0 0.0
        %2836 = vmatprep.subr.mxu0 0.0
        %2837 = vmatpush1.msra.mxu0 0.0
        %2838 = vmatprep.subr.mxu0 0.0
        %2839 = vmatpush1.msra.mxu0 0.0
        %2840 = vmatprep.subr.mxu0 0.0
        %2841 = vmatpush1.msra.mxu0 0.0
        %2842 = vmatprep.subr.mxu0 0.0
        %2843 = vmatpush1.msra.mxu0 0.0
        %2844 = vmatprep.subr.mxu0 0.0
        %2845 = vmatpush1.msra.mxu0 0.0
        %2846 = vmatprep.subr.mxu0 0.0
        %2847 = vmatpush1.msra.mxu0 0.0
        %2848 = vmatprep.subr.mxu0 0.0
        %2849 = vmatpush1.msra.mxu0 0.0
        %2850 = vmatprep.subr.mxu0 0.0
        %2851 = vmatpush1.msra.mxu0 0.0
        %2852 = vmatprep.subr.mxu0 0.0
        %2853 = vmatpush1.msra.mxu0 0.0
        %2854 = vmatprep.subr.mxu0 0.0
        %2855 = vmatpush1.msra.mxu0 0.0
        %2856 = vmatprep.subr.mxu0 0.0
        %2857 = vmatpush1.msra.mxu0 0.0
        %2858 = vmatprep.subr.mxu0 0.0
        %2859 = vmatpush1.msra.mxu0 0.0
        %2860 = vmatprep.subr.mxu0 0.0
        %2861 = vmatpush1.msra.mxu0 0.0
        %2862 = vmatprep.subr.mxu0 0.0
        %2863 = vmatpush1.msra.mxu0 0.0
        %2864 = vmatprep.subr.mxu0 0.0
        %2865 = vmatpush1.msra.mxu0 0.0
        %2866 = vmatprep.subr.mxu0 0.0
        %2867 = vmatpush1.msra.mxu0 0.0
        %2868 = vmatprep.subr.mxu0 0.0
        %2869 = vmatpush1.msra.mxu0 0.0
        %2870 = vmatprep.subr.mxu0 0.0
        %2871 = vmatpush1.msra.mxu0 0.0
        %2872 = vmatprep.subr.mxu0 0.0
        %2873 = vmatpush1.msra.mxu0 0.0
        %2874 = vmatprep.subr.mxu0 0.0
        %2875 = vmatpush1.msra.mxu0 0.0
        %2876 = vmatprep.mubr.f32.mxu0 0.0
        %v2877 = vand.u32 %v769, 4294901760
        %2878 = vmatmul.mubr.f32.gmra.mrb[0].mxu0 %v2877
        %v2879 = vpop.f32.mrb[0].mxu0
        %v2880 = vadd.f32 %v2398, %v2879
        %v2881 = vpop.f32.mrb[0].mxu0
        %2882 = vmatprep.mubr.f32.mxu0 0.0
        %v2883 = vand.u32 %v772, 4294901760
        %2884 = vmatmul.mubr.f32.gmra.mrb[0].mxu0 %v2883
        %v2885 = vpop.f32.mrb[0].mxu0
        %v2886 = vadd.f32 %v2406, %v2885
        %v2887 = vpop.f32.mrb[0].mxu0
        %2888 = vmatprep.mubr.f32.mxu0 0.0
        %v2889 = vand.u32 %v775, 4294901760
        %2890 = vmatmul.mubr.f32.gmra.mrb[0].mxu0 %v2889
        %v2891 = vpop.f32.mrb[0].mxu0
        %v2892 = vadd.f32 %v2414, %v2891
        %v2893 = vpop.f32.mrb[0].mxu0
        %2894 = vmatprep.mubr.f32.mxu0 0.0
        %v2895 = vand.u32 %v778, 4294901760
        %2896 = vmatmul.mubr.f32.gmra.mrb[0].mxu0 %v2895
        %v2897 = vpop.f32.mrb[0].mxu0
        %v2898 = vadd.f32 %v2422, %v2897
        %v2899 = vpop.f32.mrb[0].mxu0
        %2900 = vmatprep.mubr.f32.mxu0 0.0
        %v2901 = vand.u32 %v781, 4294901760
        %2902 = vmatmul.mubr.f32.gmra.mrb[0].mxu0 %v2901
        %v2903 = vpop.f32.mrb[0].mxu0
        %v2904 = vadd.f32 %v2430, %v2903
        %v2905 = vpop.f32.mrb[0].mxu0
        %2906 = vmatprep.mubr.f32.mxu0 0.0
        %v2907 = vand.u32 %v784, 4294901760
        %2908 = vmatmul.mubr.f32.gmra.mrb[0].mxu0 %v2907
        %v2909 = vpop.f32.mrb[0].mxu0
        %v2910 = vadd.f32 %v2438, %v2909
        %v2911 = vpop.f32.mrb[0].mxu0
        %2912 = vmatprep.mubr.f32.mxu0 0.0
        %v2913 = vand.u32 %v787, 4294901760
        %2914 = vmatmul.mubr.f32.gmra.mrb[0].mxu0 %v2913
        %v2915 = vpop.f32.mrb[0].mxu0
        %v2916 = vadd.f32 %v2446, %v2915
        %v2917 = vpop.f32.mrb[0].mxu0
        %2918 = vmatprep.mubr.f32.mxu0 0.0
        %v2919 = vand.u32 %v790, 4294901760
        %2920 = vmatmul.mubr.f32.gmra.mrb[0].mxu0 %v2919
        %v2921 = vpop.f32.mrb[0].mxu0
        %v2922 = vadd.f32 %v2454, %v2921
        %v2923 = vpop.f32.mrb[0].mxu0
        %2924 = vmatprep.mubr.f32.mxu0 0.0
        %v2925 = vand.u32 %v793, 4294901760
        %2926 = vmatmul.mubr.f32.gmra.mrb[0].mxu0 %v2925
        %v2927 = vpop.f32.mrb[0].mxu0
        %v2928 = vadd.f32 %v2462, %v2927
        %v2929 = vpop.f32.mrb[0].mxu0
        %2930 = vmatprep.mubr.f32.mxu0 0.0
        %v2931 = vand.u32 %v796, 4294901760
        %2932 = vmatmul.mubr.f32.gmra.mrb[0].mxu0 %v2931
        %v2933 = vpop.f32.mrb[0].mxu0
        %v2934 = vadd.f32 %v2470, %v2933
        %v2935 = vpop.f32.mrb[0].mxu0
        %2936 = vmatprep.mubr.f32.mxu0 0.0
        %v2937 = vand.u32 %v799, 4294901760
        %2938 = vmatmul.mubr.f32.gmra.mrb[0].mxu0 %v2937
        %v2939 = vpop.f32.mrb[0].mxu0
        %v2940 = vadd.f32 %v2478, %v2939
        %v2941 = vpop.f32.mrb[0].mxu0
        %2942 = vmatprep.mubr.f32.mxu0 0.0
        %v2943 = vand.u32 %v802, 4294901760
        %2944 = vmatmul.mubr.f32.gmra.mrb[0].mxu0 %v2943
        %v2945 = vpop.f32.mrb[0].mxu0
        %v2946 = vadd.f32 %v2486, %v2945
        %v2947 = vpop.f32.mrb[0].mxu0
        %2948 = vmatprep.mubr.f32.mxu0 0.0
        %v2949 = vand.u32 %v805, 4294901760
        %2950 = vmatmul.mubr.f32.gmra.mrb[0].mxu0 %v2949
        %v2951 = vpop.f32.mrb[0].mxu0
        %v2952 = vadd.f32 %v2494, %v2951
        %v2953 = vpop.f32.mrb[0].mxu0
        %2954 = vmatprep.mubr.f32.mxu0 0.0
        %v2955 = vand.u32 %v808, 4294901760
        %2956 = vmatmul.mubr.f32.gmra.mrb[0].mxu0 %v2955
        %v2957 = vpop.f32.mrb[0].mxu0
        %v2958 = vadd.f32 %v2502, %v2957
        %v2959 = vpop.f32.mrb[0].mxu0
        %2960 = vmatprep.mubr.f32.mxu0 0.0
        %v2961 = vand.u32 %v811, 4294901760
        %2962 = vmatmul.mubr.f32.gmra.mrb[0].mxu0 %v2961
        %v2963 = vpop.f32.mrb[0].mxu0
        %v2964 = vadd.f32 %v2510, %v2963
        %v2965 = vpop.f32.mrb[0].mxu0
        %2966 = vmatprep.mubr.f32.mxu0 0.0
        %v2967 = vand.u32 %v814, 4294901760
        %2968 = vmatmul.mubr.f32.gmra.mrb[0].mxu0 %v2967
        %v2969 = vpop.f32.mrb[0].mxu0
        %v2970 = vadd.f32 %v2518, %v2969
        %v2971 = vpop.f32.mrb[0].mxu0
        %2972 = vmatprep.mubr.f32.mxu0 0.0
        %v2973 = vand.u32 %v817, 4294901760
        %2974 = vmatmul.mubr.f32.gmra.mrb[0].mxu0 %v2973
        %v2975 = vpop.f32.mrb[0].mxu0
        %v2976 = vadd.f32 %v2526, %v2975
        %v2977 = vpop.f32.mrb[0].mxu0
        %2978 = vmatprep.mubr.f32.mxu0 0.0
        %v2979 = vand.u32 %v820, 4294901760
        %2980 = vmatmul.mubr.f32.gmra.mrb[0].mxu0 %v2979
        %v2981 = vpop.f32.mrb[0].mxu0
        %v2982 = vadd.f32 %v2534, %v2981
        %v2983 = vpop.f32.mrb[0].mxu0
        %2984 = vmatprep.mubr.f32.mxu0 0.0
        %v2985 = vand.u32 %v823, 4294901760
        %2986 = vmatmul.mubr.f32.gmra.mrb[0].mxu0 %v2985
        %v2987 = vpop.f32.mrb[0].mxu0
        %v2988 = vadd.f32 %v2542, %v2987
        %v2989 = vpop.f32.mrb[0].mxu0
        %2990 = vmatprep.mubr.f32.mxu0 0.0
        %v2991 = vand.u32 %v826, 4294901760
        %2992 = vmatmul.mubr.f32.gmra.mrb[0].mxu0 %v2991
        %v2993 = vpop.f32.mrb[0].mxu0
        %v2994 = vadd.f32 %v2550, %v2993
        %v2995 = vpop.f32.mrb[0].mxu0
        %2996 = vmatprep.mubr.f32.mxu0 0.0
        %v2997 = vand.u32 %v829, 4294901760
        %2998 = vmatmul.mubr.f32.gmra.mrb[0].mxu0 %v2997
        %v2999 = vpop.f32.mrb[0].mxu0
        %v3000 = vadd.f32 %v2558, %v2999
        %v3001 = vpop.f32.mrb[0].mxu0
        %3002 = vmatprep.mubr.f32.mxu0 0.0
        %v3003 = vand.u32 %v832, 4294901760
        %3004 = vmatmul.mubr.f32.gmra.mrb[0].mxu0 %v3003
        %v3005 = vpop.f32.mrb[0].mxu0
        %v3006 = vadd.f32 %v2566, %v3005
        %v3007 = vpop.f32.mrb[0].mxu0
        %3008 = vmatprep.mubr.f32.mxu0 0.0
        %v3009 = vand.u32 %v835, 4294901760
        %3010 = vmatmul.mubr.f32.gmra.mrb[0].mxu0 %v3009
        %v3011 = vpop.f32.mrb[0].mxu0
        %v3012 = vadd.f32 %v2574, %v3011
        %v3013 = vpop.f32.mrb[0].mxu0
        %3014 = vmatprep.mubr.f32.mxu0 0.0
        %v3015 = vand.u32 %v838, 4294901760
        %3016 = vmatmul.mubr.f32.gmra.mrb[0].mxu0 %v3015
        %v3017 = vpop.f32.mrb[0].mxu0
        %v3018 = vadd.f32 %v2582, %v3017
        %v3019 = vpop.f32.mrb[0].mxu0
        %3020 = vmatprep.mubr.f32.mxu0 0.0
        %v3021 = vand.u32 %v841, 4294901760
        %3022 = vmatmul.mubr.f32.gmra.mrb[0].mxu0 %v3021
        %v3023 = vpop.f32.mrb[0].mxu0
        %v3024 = vadd.f32 %v2590, %v3023
        %v3025 = vpop.f32.mrb[0].mxu0
        %3026 = vmatprep.mubr.f32.mxu0 0.0
        %v3027 = vand.u32 %v844, 4294901760
        %3028 = vmatmul.mubr.f32.gmra.mrb[0].mxu0 %v3027
        %v3029 = vpop.f32.mrb[0].mxu0
        %v3030 = vadd.f32 %v2598, %v3029
        %v3031 = vpop.f32.mrb[0].mxu0
        %3032 = vmatprep.mubr.f32.mxu0 0.0
        %v3033 = vand.u32 %v847, 4294901760
        %3034 = vmatmul.mubr.f32.gmra.mrb[0].mxu0 %v3033
        %v3035 = vpop.f32.mrb[0].mxu0
        %v3036 = vadd.f32 %v2606, %v3035
        %v3037 = vpop.f32.mrb[0].mxu0
        %3038 = vmatprep.mubr.f32.mxu0 0.0
        %v3039 = vand.u32 %v850, 4294901760
        %3040 = vmatmul.mubr.f32.gmra.mrb[0].mxu0 %v3039
        %v3041 = vpop.f32.mrb[0].mxu0
        %v3042 = vadd.f32 %v2614, %v3041
        %v3043 = vpop.f32.mrb[0].mxu0
        %3044 = vmatprep.mubr.f32.mxu0 0.0
        %v3045 = vand.u32 %v853, 4294901760
        %3046 = vmatmul.mubr.f32.gmra.mrb[0].mxu0 %v3045
        %v3047 = vpop.f32.mrb[0].mxu0
        %v3048 = vadd.f32 %v2622, %v3047
        %v3049 = vpop.f32.mrb[0].mxu0
        %3050 = vmatprep.mubr.f32.mxu0 0.0
        %v3051 = vand.u32 %v856, 4294901760
        %3052 = vmatmul.mubr.f32.gmra.mrb[0].mxu0 %v3051
        %v3053 = vpop.f32.mrb[0].mxu0
        %v3054 = vadd.f32 %v2630, %v3053
        %v3055 = vpop.f32.mrb[0].mxu0
        %3056 = vmatprep.mubr.f32.mxu0 0.0
        %v3057 = vand.u32 %v859, 4294901760
        %3058 = vmatmul.mubr.f32.gmra.mrb[0].mxu0 %v3057
        %v3059 = vpop.f32.mrb[0].mxu0
        %v3060 = vadd.f32 %v2638, %v3059
        %v3061 = vpop.f32.mrb[0].mxu0
        %3062 = vmatprep.mubr.f32.mxu0 0.0
        %v3063 = vand.u32 %v862, 4294901760
        %3064 = vmatmul.mubr.f32.gmra.mrb[0].mxu0 %v3063
        %v3065 = vpop.f32.mrb[0].mxu0
        %v3066 = vadd.f32 %v2646, %v3065
        %v3067 = vpop.f32.mrb[0].mxu0
        %3068 = vmatprep.mubr.f32.mxu0 0.0
        %v3069 = vand.u32 %v865, 4294901760
        %3070 = vmatmul.mubr.f32.gmra.mrb[0].mxu0 %v3069
        %v3071 = vpop.f32.mrb[0].mxu0
        %v3072 = vadd.f32 %v2654, %v3071
        %v3073 = vpop.f32.mrb[0].mxu0
        %3074 = vmatprep.mubr.f32.mxu0 0.0
        %v3075 = vand.u32 %v868, 4294901760
        %3076 = vmatmul.mubr.f32.gmra.mrb[0].mxu0 %v3075
        %v3077 = vpop.f32.mrb[0].mxu0
        %v3078 = vadd.f32 %v2662, %v3077
        %v3079 = vpop.f32.mrb[0].mxu0
        %3080 = vmatprep.mubr.f32.mxu0 0.0
        %v3081 = vand.u32 %v871, 4294901760
        %3082 = vmatmul.mubr.f32.gmra.mrb[0].mxu0 %v3081
        %v3083 = vpop.f32.mrb[0].mxu0
        %v3084 = vadd.f32 %v2670, %v3083
        %v3085 = vpop.f32.mrb[0].mxu0
        %3086 = vmatprep.mubr.f32.mxu0 0.0
        %v3087 = vand.u32 %v874, 4294901760
        %3088 = vmatmul.mubr.f32.gmra.mrb[0].mxu0 %v3087
        %v3089 = vpop.f32.mrb[0].mxu0
        %v3090 = vadd.f32 %v2678, %v3089
        %v3091 = vpop.f32.mrb[0].mxu0
        %3092 = vmatprep.mubr.f32.mxu0 0.0
        %v3093 = vand.u32 %v877, 4294901760
        %3094 = vmatmul.mubr.f32.gmra.mrb[0].mxu0 %v3093
        %v3095 = vpop.f32.mrb[0].mxu0
        %v3096 = vadd.f32 %v2686, %v3095
        %v3097 = vpop.f32.mrb[0].mxu0
        %3098 = vmatprep.mubr.f32.mxu0 0.0
        %v3099 = vand.u32 %v880, 4294901760
        %3100 = vmatmul.mubr.f32.gmra.mrb[0].mxu0 %v3099
        %v3101 = vpop.f32.mrb[0].mxu0
        %v3102 = vadd.f32 %v2694, %v3101
        %v3103 = vpop.f32.mrb[0].mxu0
        %3104 = vmatprep.mubr.f32.mxu0 0.0
        %v3105 = vand.u32 %v883, 4294901760
        %3106 = vmatmul.mubr.f32.gmra.mrb[0].mxu0 %v3105
        %v3107 = vpop.f32.mrb[0].mxu0
        %v3108 = vadd.f32 %v2702, %v3107
        %v3109 = vpop.f32.mrb[0].mxu0
        %3110 = vmatprep.mubr.f32.mxu0 0.0
        %v3111 = vand.u32 %v886, 4294901760
        %3112 = vmatmul.mubr.f32.gmra.mrb[0].mxu0 %v3111
        %v3113 = vpop.f32.mrb[0].mxu0
        %v3114 = vadd.f32 %v2710, %v3113
        %v3115 = vpop.f32.mrb[0].mxu0
        %3116 = vmatprep.mubr.f32.mxu0 0.0
        %v3117 = vand.u32 %v889, 4294901760
        %3118 = vmatmul.mubr.f32.gmra.mrb[0].mxu0 %v3117
        %v3119 = vpop.f32.mrb[0].mxu0
        %v3120 = vadd.f32 %v2718, %v3119
        %v3121 = vpop.f32.mrb[0].mxu0
        %3122 = vmatprep.mubr.f32.mxu0 0.0
        %v3123 = vand.u32 %v892, 4294901760
        %3124 = vmatmul.mubr.f32.gmra.mrb[0].mxu0 %v3123
        %v3125 = vpop.f32.mrb[0].mxu0
        %v3126 = vadd.f32 %v2726, %v3125
        %v3127 = vpop.f32.mrb[0].mxu0
        %3128 = vmatprep.mubr.f32.mxu0 0.0
        %v3129 = vand.u32 %v895, 4294901760
        %3130 = vmatmul.mubr.f32.gmra.mrb[0].mxu0 %v3129
        %v3131 = vpop.f32.mrb[0].mxu0
        %v3132 = vadd.f32 %v2734, %v3131
        %v3133 = vpop.f32.mrb[0].mxu0
        %3134 = vmatprep.mubr.f32.mxu0 0.0
        %v3135 = vand.u32 %v898, 4294901760
        %3136 = vmatmul.mubr.f32.gmra.mrb[0].mxu0 %v3135
        %v3137 = vpop.f32.mrb[0].mxu0
        %v3138 = vadd.f32 %v2742, %v3137
        %v3139 = vpop.f32.mrb[0].mxu0
        %3140 = vmatprep.mubr.f32.mxu0 0.0
        %v3141 = vand.u32 %v901, 4294901760
        %3142 = vmatmul.mubr.f32.gmra.mrb[0].mxu0 %v3141
        %v3143 = vpop.f32.mrb[0].mxu0
        %v3144 = vadd.f32 %v2750, %v3143
        %v3145 = vpop.f32.mrb[0].mxu0
        %3146 = vmatprep.mubr.f32.mxu0 0.0
        %v3147 = vand.u32 %v904, 4294901760
        %3148 = vmatmul.mubr.f32.gmra.mrb[0].mxu0 %v3147
        %v3149 = vpop.f32.mrb[0].mxu0
        %v3150 = vadd.f32 %v2758, %v3149
        %v3151 = vpop.f32.mrb[0].mxu0
        %3152 = vmatprep.mubr.f32.mxu0 0.0
        %v3153 = vand.u32 %v907, 4294901760
        %3154 = vmatmul.mubr.f32.gmra.mrb[0].mxu0 %v3153
        %v3155 = vpop.f32.mrb[0].mxu0
        %v3156 = vadd.f32 %v2766, %v3155
        %v3157 = vpop.f32.mrb[0].mxu0
        %3158 = vmatprep.mubr.f32.mxu0 0.0
        %v3159 = vand.u32 %v910, 4294901760
        %3160 = vmatmul.mubr.f32.gmra.mrb[0].mxu0 %v3159
        %v3161 = vpop.f32.mrb[0].mxu0
        %v3162 = vadd.f32 %v2774, %v3161
        %v3163 = vpop.f32.mrb[0].mxu0
        %3164 = vmatprep.mubr.f32.mxu0 0.0
        %v3165 = vand.u32 %v913, 4294901760
        %3166 = vmatmul.mubr.f32.gmra.mrb[0].mxu0 %v3165
        %v3167 = vpop.f32.mrb[0].mxu0
        %v3168 = vadd.f32 %v2782, %v3167
        %v3169 = vpop.f32.mrb[0].mxu0
        %3170 = vmatprep.mubr.f32.mxu0 0.0
        %v3171 = vand.u32 %v916, 4294901760
        %3172 = vmatmul.mubr.f32.gmra.mrb[0].mxu0 %v3171
        %v3173 = vpop.f32.mrb[0].mxu0
        %v3174 = vadd.f32 %v2790, %v3173
        %v3175 = vpop.f32.mrb[0].mxu0
        %3176 = vmatprep.mubr.f32.mxu0 0.0
        %v3177 = vand.u32 %v919, 4294901760
        %3178 = vmatmul.mubr.f32.gmra.mrb[0].mxu0 %v3177
        %v3179 = vpop.f32.mrb[0].mxu0
        %v3180 = vadd.f32 %v2798, %v3179
        %v3181 = vpop.f32.mrb[0].mxu0
        %3182 = vmatprep.mubr.f32.mxu0 0.0
        %v3183 = vand.u32 %v922, 4294901760
        %3184 = vmatmul.mubr.f32.gmra.mrb[0].mxu0 %v3183
        %v3185 = vpop.f32.mrb[0].mxu0
        %v3186 = vadd.f32 %v2806, %v3185
        %v3187 = vpop.f32.mrb[0].mxu0
        %3188 = vdwg.mxu0
        %3189 = vmatprep.subr.mxu0 0.0
        %v3190 = vand.u32 %v926, 4294901760
        %3191 = vmatpush1.msra.mxu0 %v3190
        %3192 = vmatprep.subr.mxu0 0.0
        %3193 = vmatpush1.msra.mxu0 0.0
        %3194 = vmatprep.subr.mxu0 0.0
        %3195 = vmatpush1.msra.mxu0 0.0
        %3196 = vmatprep.subr.mxu0 0.0
        %3197 = vmatpush1.msra.mxu0 0.0
        %3198 = vmatprep.subr.mxu0 0.0
        %3199 = vmatpush1.msra.mxu0 0.0
        %3200 = vmatprep.subr.mxu0 0.0
        %3201 = vmatpush1.msra.mxu0 0.0
        %3202 = vmatprep.subr.mxu0 0.0
        %3203 = vmatpush1.msra.mxu0 0.0
        %3204 = vmatprep.subr.mxu0 0.0
        %3205 = vmatpush1.msra.mxu0 0.0
        %3206 = vmatprep.subr.mxu0 0.0
        %3207 = vmatpush1.msra.mxu0 0.0
        %3208 = vmatprep.subr.mxu0 0.0
        %3209 = vmatpush1.msra.mxu0 0.0
        %3210 = vmatprep.subr.mxu0 0.0
        %3211 = vmatpush1.msra.mxu0 0.0
        %3212 = vmatprep.subr.mxu0 0.0
        %3213 = vmatpush1.msra.mxu0 0.0
        %3214 = vmatprep.subr.mxu0 0.0
        %3215 = vmatpush1.msra.mxu0 0.0
        %3216 = vmatprep.subr.mxu0 0.0
        %3217 = vmatpush1.msra.mxu0 0.0
        %3218 = vmatprep.subr.mxu0 0.0
        %3219 = vmatpush1.msra.mxu0 0.0
        %3220 = vmatprep.subr.mxu0 0.0
        %3221 = vmatpush1.msra.mxu0 0.0
        %3222 = vmatprep.subr.mxu0 0.0
        %3223 = vmatpush1.msra.mxu0 0.0
        %3224 = vmatprep.subr.mxu0 0.0
        %3225 = vmatpush1.msra.mxu0 0.0
        %3226 = vmatprep.subr.mxu0 0.0
        %3227 = vmatpush1.msra.mxu0 0.0
        %3228 = vmatprep.subr.mxu0 0.0
        %3229 = vmatpush1.msra.mxu0 0.0
        %3230 = vmatprep.subr.mxu0 0.0
        %3231 = vmatpush1.msra.mxu0 0.0
        %3232 = vmatprep.subr.mxu0 0.0
        %3233 = vmatpush1.msra.mxu0 0.0
        %3234 = vmatprep.subr.mxu0 0.0
        %3235 = vmatpush1.msra.mxu0 0.0
        %3236 = vmatprep.subr.mxu0 0.0
        %3237 = vmatpush1.msra.mxu0 0.0
        %3238 = vmatprep.subr.mxu0 0.0
        %3239 = vmatpush1.msra.mxu0 0.0
        %3240 = vmatprep.subr.mxu0 0.0
        %3241 = vmatpush1.msra.mxu0 0.0
        %3242 = vmatprep.subr.mxu0 0.0
        %3243 = vmatpush1.msra.mxu0 0.0
        %3244 = vmatprep.subr.mxu0 0.0
        %3245 = vmatpush1.msra.mxu0 0.0
        %3246 = vmatprep.subr.mxu0 0.0
        %3247 = vmatpush1.msra.mxu0 0.0
        %3248 = vmatprep.subr.mxu0 0.0
        %3249 = vmatpush1.msra.mxu0 0.0
        %3250 = vmatprep.subr.mxu0 0.0
        %3251 = vmatpush1.msra.mxu0 0.0
        %3252 = vmatprep.subr.mxu0 0.0
        %3253 = vmatpush1.msra.mxu0 0.0
        %3254 = vmatprep.mubr.f32.mxu0 0.0
        %v3255 = vand.u32 %v769, 4294901760
        %3256 = vmatmul.mubr.f32.gmra.mrb[0].mxu0 %v3255
        %v3257 = vpop.f32.mrb[0].mxu0
        %v3258 = vadd.f32 %v2880, %v3257
        %v3259 = vpop.f32.mrb[0].mxu0
        %3260 = vmatprep.mubr.f32.mxu0 0.0
        %v3261 = vand.u32 %v772, 4294901760
        %3262 = vmatmul.mubr.f32.gmra.mrb[0].mxu0 %v3261
        %v3263 = vpop.f32.mrb[0].mxu0
        %v3264 = vadd.f32 %v2886, %v3263
        %v3265 = vpop.f32.mrb[0].mxu0
        %3266 = vmatprep.mubr.f32.mxu0 0.0
        %v3267 = vand.u32 %v775, 4294901760
        %3268 = vmatmul.mubr.f32.gmra.mrb[0].mxu0 %v3267
        %v3269 = vpop.f32.mrb[0].mxu0
        %v3270 = vadd.f32 %v2892, %v3269
        %v3271 = vpop.f32.mrb[0].mxu0
        %3272 = vmatprep.mubr.f32.mxu0 0.0
        %v3273 = vand.u32 %v778, 4294901760
        %3274 = vmatmul.mubr.f32.gmra.mrb[0].mxu0 %v3273
        %v3275 = vpop.f32.mrb[0].mxu0
        %v3276 = vadd.f32 %v2898, %v3275
        %v3277 = vpop.f32.mrb[0].mxu0
        %3278 = vmatprep.mubr.f32.mxu0 0.0
        %v3279 = vand.u32 %v781, 4294901760
        %3280 = vmatmul.mubr.f32.gmra.mrb[0].mxu0 %v3279
        %v3281 = vpop.f32.mrb[0].mxu0
        %v3282 = vadd.f32 %v2904, %v3281
        %v3283 = vpop.f32.mrb[0].mxu0
        %3284 = vmatprep.mubr.f32.mxu0 0.0
        %v3285 = vand.u32 %v784, 4294901760
        %3286 = vmatmul.mubr.f32.gmra.mrb[0].mxu0 %v3285
        %v3287 = vpop.f32.mrb[0].mxu0
        %v3288 = vadd.f32 %v2910, %v3287
        %v3289 = vpop.f32.mrb[0].mxu0
        %3290 = vmatprep.mubr.f32.mxu0 0.0
        %v3291 = vand.u32 %v787, 4294901760
        %3292 = vmatmul.mubr.f32.gmra.mrb[0].mxu0 %v3291
        %v3293 = vpop.f32.mrb[0].mxu0
        %v3294 = vadd.f32 %v2916, %v3293
        %v3295 = vpop.f32.mrb[0].mxu0
        %3296 = vmatprep.mubr.f32.mxu0 0.0
        %v3297 = vand.u32 %v790, 4294901760
        %3298 = vmatmul.mubr.f32.gmra.mrb[0].mxu0 %v3297
        %v3299 = vpop.f32.mrb[0].mxu0
        %v3300 = vadd.f32 %v2922, %v3299
        %v3301 = vpop.f32.mrb[0].mxu0
        %3302 = vmatprep.mubr.f32.mxu0 0.0
        %v3303 = vand.u32 %v793, 4294901760
        %3304 = vmatmul.mubr.f32.gmra.mrb[0].mxu0 %v3303
        %v3305 = vpop.f32.mrb[0].mxu0
        %v3306 = vadd.f32 %v2928, %v3305
        %v3307 = vpop.f32.mrb[0].mxu0
        %3308 = vmatprep.mubr.f32.mxu0 0.0
        %v3309 = vand.u32 %v796, 4294901760
        %3310 = vmatmul.mubr.f32.gmra.mrb[0].mxu0 %v3309
        %v3311 = vpop.f32.mrb[0].mxu0
        %v3312 = vadd.f32 %v2934, %v3311
        %v3313 = vpop.f32.mrb[0].mxu0
        %3314 = vmatprep.mubr.f32.mxu0 0.0
        %v3315 = vand.u32 %v799, 4294901760
        %3316 = vmatmul.mubr.f32.gmra.mrb[0].mxu0 %v3315
        %v3317 = vpop.f32.mrb[0].mxu0
        %v3318 = vadd.f32 %v2940, %v3317
        %v3319 = vpop.f32.mrb[0].mxu0
        %3320 = vmatprep.mubr.f32.mxu0 0.0
        %v3321 = vand.u32 %v802, 4294901760
        %3322 = vmatmul.mubr.f32.gmra.mrb[0].mxu0 %v3321
        %v3323 = vpop.f32.mrb[0].mxu0
        %v3324 = vadd.f32 %v2946, %v3323
        %v3325 = vpop.f32.mrb[0].mxu0
        %3326 = vmatprep.mubr.f32.mxu0 0.0
        %v3327 = vand.u32 %v805, 4294901760
        %3328 = vmatmul.mubr.f32.gmra.mrb[0].mxu0 %v3327
        %v3329 = vpop.f32.mrb[0].mxu0
        %v3330 = vadd.f32 %v2952, %v3329
        %v3331 = vpop.f32.mrb[0].mxu0
        %3332 = vmatprep.mubr.f32.mxu0 0.0
        %v3333 = vand.u32 %v808, 4294901760
        %3334 = vmatmul.mubr.f32.gmra.mrb[0].mxu0 %v3333
        %v3335 = vpop.f32.mrb[0].mxu0
        %v3336 = vadd.f32 %v2958, %v3335
        %v3337 = vpop.f32.mrb[0].mxu0
        %3338 = vmatprep.mubr.f32.mxu0 0.0
        %v3339 = vand.u32 %v811, 4294901760
        %3340 = vmatmul.mubr.f32.gmra.mrb[0].mxu0 %v3339
        %v3341 = vpop.f32.mrb[0].mxu0
        %v3342 = vadd.f32 %v2964, %v3341
        %v3343 = vpop.f32.mrb[0].mxu0
        %3344 = vmatprep.mubr.f32.mxu0 0.0
        %v3345 = vand.u32 %v814, 4294901760
        %3346 = vmatmul.mubr.f32.gmra.mrb[0].mxu0 %v3345
        %v3347 = vpop.f32.mrb[0].mxu0
        %v3348 = vadd.f32 %v2970, %v3347
        %v3349 = vpop.f32.mrb[0].mxu0
        %3350 = vmatprep.mubr.f32.mxu0 0.0
        %v3351 = vand.u32 %v817, 4294901760
        %3352 = vmatmul.mubr.f32.gmra.mrb[0].mxu0 %v3351
        %v3353 = vpop.f32.mrb[0].mxu0
        %v3354 = vadd.f32 %v2976, %v3353
        %v3355 = vpop.f32.mrb[0].mxu0
        %3356 = vmatprep.mubr.f32.mxu0 0.0
        %v3357 = vand.u32 %v820, 4294901760
        %3358 = vmatmul.mubr.f32.gmra.mrb[0].mxu0 %v3357
        %v3359 = vpop.f32.mrb[0].mxu0
        %v3360 = vadd.f32 %v2982, %v3359
        %v3361 = vpop.f32.mrb[0].mxu0
        %3362 = vmatprep.mubr.f32.mxu0 0.0
        %v3363 = vand.u32 %v823, 4294901760
        %3364 = vmatmul.mubr.f32.gmra.mrb[0].mxu0 %v3363
        %v3365 = vpop.f32.mrb[0].mxu0
        %v3366 = vadd.f32 %v2988, %v3365
        %v3367 = vpop.f32.mrb[0].mxu0
        %3368 = vmatprep.mubr.f32.mxu0 0.0
        %v3369 = vand.u32 %v826, 4294901760
        %3370 = vmatmul.mubr.f32.gmra.mrb[0].mxu0 %v3369
        %v3371 = vpop.f32.mrb[0].mxu0
        %v3372 = vadd.f32 %v2994, %v3371
        %v3373 = vpop.f32.mrb[0].mxu0
        %3374 = vmatprep.mubr.f32.mxu0 0.0
        %v3375 = vand.u32 %v829, 4294901760
        %3376 = vmatmul.mubr.f32.gmra.mrb[0].mxu0 %v3375
        %v3377 = vpop.f32.mrb[0].mxu0
        %v3378 = vadd.f32 %v3000, %v3377
        %v3379 = vpop.f32.mrb[0].mxu0
        %3380 = vmatprep.mubr.f32.mxu0 0.0
        %v3381 = vand.u32 %v832, 4294901760
        %3382 = vmatmul.mubr.f32.gmra.mrb[0].mxu0 %v3381
        %v3383 = vpop.f32.mrb[0].mxu0
        %v3384 = vadd.f32 %v3006, %v3383
        %v3385 = vpop.f32.mrb[0].mxu0
        %3386 = vmatprep.mubr.f32.mxu0 0.0
        %v3387 = vand.u32 %v835, 4294901760
        %3388 = vmatmul.mubr.f32.gmra.mrb[0].mxu0 %v3387
        %v3389 = vpop.f32.mrb[0].mxu0
        %v3390 = vadd.f32 %v3012, %v3389
        %v3391 = vpop.f32.mrb[0].mxu0
        %3392 = vmatprep.mubr.f32.mxu0 0.0
        %v3393 = vand.u32 %v838, 4294901760
        %3394 = vmatmul.mubr.f32.gmra.mrb[0].mxu0 %v3393
        %v3395 = vpop.f32.mrb[0].mxu0
        %v3396 = vadd.f32 %v3018, %v3395
        %v3397 = vpop.f32.mrb[0].mxu0
        %3398 = vmatprep.mubr.f32.mxu0 0.0
        %v3399 = vand.u32 %v841, 4294901760
        %3400 = vmatmul.mubr.f32.gmra.mrb[0].mxu0 %v3399
        %v3401 = vpop.f32.mrb[0].mxu0
        %v3402 = vadd.f32 %v3024, %v3401
        %v3403 = vpop.f32.mrb[0].mxu0
        %3404 = vmatprep.mubr.f32.mxu0 0.0
        %v3405 = vand.u32 %v844, 4294901760
        %3406 = vmatmul.mubr.f32.gmra.mrb[0].mxu0 %v3405
        %v3407 = vpop.f32.mrb[0].mxu0
        %v3408 = vadd.f32 %v3030, %v3407
        %v3409 = vpop.f32.mrb[0].mxu0
        %3410 = vmatprep.mubr.f32.mxu0 0.0
        %v3411 = vand.u32 %v847, 4294901760
        %3412 = vmatmul.mubr.f32.gmra.mrb[0].mxu0 %v3411
        %v3413 = vpop.f32.mrb[0].mxu0
        %v3414 = vadd.f32 %v3036, %v3413
        %v3415 = vpop.f32.mrb[0].mxu0
        %3416 = vmatprep.mubr.f32.mxu0 0.0
        %v3417 = vand.u32 %v850, 4294901760
        %3418 = vmatmul.mubr.f32.gmra.mrb[0].mxu0 %v3417
        %v3419 = vpop.f32.mrb[0].mxu0
        %v3420 = vadd.f32 %v3042, %v3419
        %v3421 = vpop.f32.mrb[0].mxu0
        %3422 = vmatprep.mubr.f32.mxu0 0.0
        %v3423 = vand.u32 %v853, 4294901760
        %3424 = vmatmul.mubr.f32.gmra.mrb[0].mxu0 %v3423
        %v3425 = vpop.f32.mrb[0].mxu0
        %v3426 = vadd.f32 %v3048, %v3425
        %v3427 = vpop.f32.mrb[0].mxu0
        %3428 = vmatprep.mubr.f32.mxu0 0.0
        %v3429 = vand.u32 %v856, 4294901760
        %3430 = vmatmul.mubr.f32.gmra.mrb[0].mxu0 %v3429
        %v3431 = vpop.f32.mrb[0].mxu0
        %v3432 = vadd.f32 %v3054, %v3431
        %v3433 = vpop.f32.mrb[0].mxu0
        %3434 = vmatprep.mubr.f32.mxu0 0.0
        %v3435 = vand.u32 %v859, 4294901760
        %3436 = vmatmul.mubr.f32.gmra.mrb[0].mxu0 %v3435
        %v3437 = vpop.f32.mrb[0].mxu0
        %v3438 = vadd.f32 %v3060, %v3437
        %v3439 = vpop.f32.mrb[0].mxu0
        %3440 = vmatprep.mubr.f32.mxu0 0.0
        %v3441 = vand.u32 %v862, 4294901760
        %3442 = vmatmul.mubr.f32.gmra.mrb[0].mxu0 %v3441
        %v3443 = vpop.f32.mrb[0].mxu0
        %v3444 = vadd.f32 %v3066, %v3443
        %v3445 = vpop.f32.mrb[0].mxu0
        %3446 = vmatprep.mubr.f32.mxu0 0.0
        %v3447 = vand.u32 %v865, 4294901760
        %3448 = vmatmul.mubr.f32.gmra.mrb[0].mxu0 %v3447
        %v3449 = vpop.f32.mrb[0].mxu0
        %v3450 = vadd.f32 %v3072, %v3449
        %v3451 = vpop.f32.mrb[0].mxu0
        %3452 = vmatprep.mubr.f32.mxu0 0.0
        %v3453 = vand.u32 %v868, 4294901760
        %3454 = vmatmul.mubr.f32.gmra.mrb[0].mxu0 %v3453
        %v3455 = vpop.f32.mrb[0].mxu0
        %v3456 = vadd.f32 %v3078, %v3455
        %v3457 = vpop.f32.mrb[0].mxu0
        %3458 = vmatprep.mubr.f32.mxu0 0.0
        %v3459 = vand.u32 %v871, 4294901760
        %3460 = vmatmul.mubr.f32.gmra.mrb[0].mxu0 %v3459
        %v3461 = vpop.f32.mrb[0].mxu0
        %v3462 = vadd.f32 %v3084, %v3461
        %v3463 = vpop.f32.mrb[0].mxu0
        %3464 = vmatprep.mubr.f32.mxu0 0.0
        %v3465 = vand.u32 %v874, 4294901760
        %3466 = vmatmul.mubr.f32.gmra.mrb[0].mxu0 %v3465
        %v3467 = vpop.f32.mrb[0].mxu0
        %v3468 = vadd.f32 %v3090, %v3467
        %v3469 = vpop.f32.mrb[0].mxu0
        %3470 = vmatprep.mubr.f32.mxu0 0.0
        %v3471 = vand.u32 %v877, 4294901760
        %3472 = vmatmul.mubr.f32.gmra.mrb[0].mxu0 %v3471
        %v3473 = vpop.f32.mrb[0].mxu0
        %v3474 = vadd.f32 %v3096, %v3473
        %v3475 = vpop.f32.mrb[0].mxu0
        %3476 = vmatprep.mubr.f32.mxu0 0.0
        %v3477 = vand.u32 %v880, 4294901760
        %3478 = vmatmul.mubr.f32.gmra.mrb[0].mxu0 %v3477
        %v3479 = vpop.f32.mrb[0].mxu0
        %v3480 = vadd.f32 %v3102, %v3479
        %v3481 = vpop.f32.mrb[0].mxu0
        %3482 = vmatprep.mubr.f32.mxu0 0.0
        %v3483 = vand.u32 %v883, 4294901760
        %3484 = vmatmul.mubr.f32.gmra.mrb[0].mxu0 %v3483
        %v3485 = vpop.f32.mrb[0].mxu0
        %v3486 = vadd.f32 %v3108, %v3485
        %v3487 = vpop.f32.mrb[0].mxu0
        %3488 = vmatprep.mubr.f32.mxu0 0.0
        %v3489 = vand.u32 %v886, 4294901760
        %3490 = vmatmul.mubr.f32.gmra.mrb[0].mxu0 %v3489
        %v3491 = vpop.f32.mrb[0].mxu0
        %v3492 = vadd.f32 %v3114, %v3491
        %v3493 = vpop.f32.mrb[0].mxu0
        %3494 = vmatprep.mubr.f32.mxu0 0.0
        %v3495 = vand.u32 %v889, 4294901760
        %3496 = vmatmul.mubr.f32.gmra.mrb[0].mxu0 %v3495
        %v3497 = vpop.f32.mrb[0].mxu0
        %v3498 = vadd.f32 %v3120, %v3497
        %v3499 = vpop.f32.mrb[0].mxu0
        %3500 = vmatprep.mubr.f32.mxu0 0.0
        %v3501 = vand.u32 %v892, 4294901760
        %3502 = vmatmul.mubr.f32.gmra.mrb[0].mxu0 %v3501
        %v3503 = vpop.f32.mrb[0].mxu0
        %v3504 = vadd.f32 %v3126, %v3503
        %v3505 = vpop.f32.mrb[0].mxu0
        %3506 = vmatprep.mubr.f32.mxu0 0.0
        %v3507 = vand.u32 %v895, 4294901760
        %3508 = vmatmul.mubr.f32.gmra.mrb[0].mxu0 %v3507
        %v3509 = vpop.f32.mrb[0].mxu0
        %v3510 = vadd.f32 %v3132, %v3509
        %v3511 = vpop.f32.mrb[0].mxu0
        %3512 = vmatprep.mubr.f32.mxu0 0.0
        %v3513 = vand.u32 %v898, 4294901760
        %3514 = vmatmul.mubr.f32.gmra.mrb[0].mxu0 %v3513
        %v3515 = vpop.f32.mrb[0].mxu0
        %v3516 = vadd.f32 %v3138, %v3515
        %v3517 = vpop.f32.mrb[0].mxu0
        %3518 = vmatprep.mubr.f32.mxu0 0.0
        %v3519 = vand.u32 %v901, 4294901760
        %3520 = vmatmul.mubr.f32.gmra.mrb[0].mxu0 %v3519
        %v3521 = vpop.f32.mrb[0].mxu0
        %v3522 = vadd.f32 %v3144, %v3521
        %v3523 = vpop.f32.mrb[0].mxu0
        %3524 = vmatprep.mubr.f32.mxu0 0.0
        %v3525 = vand.u32 %v904, 4294901760
        %3526 = vmatmul.mubr.f32.gmra.mrb[0].mxu0 %v3525
        %v3527 = vpop.f32.mrb[0].mxu0
        %v3528 = vadd.f32 %v3150, %v3527
        %v3529 = vpop.f32.mrb[0].mxu0
        %3530 = vmatprep.mubr.f32.mxu0 0.0
        %v3531 = vand.u32 %v907, 4294901760
        %3532 = vmatmul.mubr.f32.gmra.mrb[0].mxu0 %v3531
        %v3533 = vpop.f32.mrb[0].mxu0
        %v3534 = vadd.f32 %v3156, %v3533
        %v3535 = vpop.f32.mrb[0].mxu0
        %3536 = vmatprep.mubr.f32.mxu0 0.0
        %v3537 = vand.u32 %v910, 4294901760
        %3538 = vmatmul.mubr.f32.gmra.mrb[0].mxu0 %v3537
        %v3539 = vpop.f32.mrb[0].mxu0
        %v3540 = vadd.f32 %v3162, %v3539
        %v3541 = vpop.f32.mrb[0].mxu0
        %3542 = vmatprep.mubr.f32.mxu0 0.0
        %v3543 = vand.u32 %v913, 4294901760
        %3544 = vmatmul.mubr.f32.gmra.mrb[0].mxu0 %v3543
        %v3545 = vpop.f32.mrb[0].mxu0
        %v3546 = vadd.f32 %v3168, %v3545
        %v3547 = vpop.f32.mrb[0].mxu0
        %3548 = vmatprep.mubr.f32.mxu0 0.0
        %v3549 = vand.u32 %v916, 4294901760
        %3550 = vmatmul.mubr.f32.gmra.mrb[0].mxu0 %v3549
        %v3551 = vpop.f32.mrb[0].mxu0
        %v3552 = vadd.f32 %v3174, %v3551
        %v3553 = vpop.f32.mrb[0].mxu0
        %3554 = vmatprep.mubr.f32.mxu0 0.0
        %v3555 = vand.u32 %v919, 4294901760
        %3556 = vmatmul.mubr.f32.gmra.mrb[0].mxu0 %v3555
        %v3557 = vpop.f32.mrb[0].mxu0
        %v3558 = vadd.f32 %v3180, %v3557
        %v3559 = vpop.f32.mrb[0].mxu0
        %3560 = vmatprep.mubr.f32.mxu0 0.0
        %v3561 = vand.u32 %v922, 4294901760
        %3562 = vmatmul.mubr.f32.gmra.mrb[0].mxu0 %v3561
        %v3563 = vpop.f32.mrb[0].mxu0
        %v3564 = vadd.f32 %v3186, %v3563
        %v3565 = vpop.f32.mrb[0].mxu0
        %3566 = vdwg.mxu0
        %v3567 = vld [vmem:[%s4] sm:$0xff]
        %v3568 = vld [vmem:[%s4 + $0x8] sm:$0xff]
        %v3569 = vld [vmem:[%s4 + $0x10] sm:$0xff]
        %v3570 = vld [vmem:[%s4 + $0x18] sm:$0xff]
        %v3571 = vld [vmem:[%s4 + $0x20] sm:$0xff]
        %v3572 = vld [vmem:[%s4 + $0x28] sm:$0xff]
        %v3573 = vld [vmem:[%s4 + $0x30] sm:$0xff]
        %v3574 = vld [vmem:[%s4 + $0x38] sm:$0xff]
        %v3575 = vld [vmem:[%s4 + $0x40] sm:$0xff]
        %v3576 = vld [vmem:[%s4 + $0x48] sm:$0xff]
        %v3577 = vld [vmem:[%s4 + $0x50] sm:$0xff]
        %v3578 = vld [vmem:[%s4 + $0x58] sm:$0xff]
        %v3579 = vld [vmem:[%s4 + $0x60] sm:$0xff]
        %v3580 = vld [vmem:[%s4 + $0x68] sm:$0xff]
        %v3581 = vld [vmem:[%s4 + $0x70] sm:$0xff]
        %v3582 = vld [vmem:[%s4 + $0x78] sm:$0xff]
        %v3583 = vld [vmem:[%s4 + $0x80] sm:$0xff]
        %v3584 = vld [vmem:[%s4 + $0x88] sm:$0xff]
        %v3585 = vld [vmem:[%s4 + $0x90] sm:$0xff]
        %v3586 = vld [vmem:[%s4 + $0x98] sm:$0xff]
        %v3587 = vld [vmem:[%s4 + $0xa0] sm:$0xff]
        %v3588 = vld [vmem:[%s4 + $0xa8] sm:$0xff]
        %v3589 = vld [vmem:[%s4 + $0xb0] sm:$0xff]
        %v3590 = vld [vmem:[%s4 + $0xb8] sm:$0xff]
        %v3591 = vld [vmem:[%s4 + $0xc0] sm:$0xff]
        %v3592 = vld [vmem:[%s4 + $0xc8] sm:$0xff]
        %v3593 = vld [vmem:[%s4 + $0xd0] sm:$0xff]
        %v3594 = vld [vmem:[%s4 + $0xd8] sm:$0xff]
        %v3595 = vld [vmem:[%s4 + $0xe0] sm:$0xff]
        %v3596 = vld [vmem:[%s4 + $0xe8] sm:$0xff]
        %v3597 = vld [vmem:[%s4 + $0xf0] sm:$0xff]
        %v3598 = vld [vmem:[%s4 + $0xf8] sm:$0xff]
        %v3599 = vld [vmem:[%s4 + $0x100] sm:$0xff]
        %v3600 = vld [vmem:[%s4 + $0x108] sm:$0xff]
        %v3601 = vld [vmem:[%s4 + $0x110] sm:$0xff]
        %v3602 = vld [vmem:[%s4 + $0x118] sm:$0xff]
        %v3603 = vld [vmem:[%s4 + $0x120] sm:$0xff]
        %v3604 = vld [vmem:[%s4 + $0x128] sm:$0xff]
        %v3605 = vld [vmem:[%s4 + $0x130] sm:$0xff]
        %v3606 = vld [vmem:[%s4 + $0x138] sm:$0xff]
        %v3607 = vld [vmem:[%s4 + $0x140] sm:$0xff]
        %v3608 = vld [vmem:[%s4 + $0x148] sm:$0xff]
        %v3609 = vld [vmem:[%s4 + $0x150] sm:$0xff]
        %v3610 = vld [vmem:[%s4 + $0x158] sm:$0xff]
        %v3611 = vld [vmem:[%s4 + $0x160] sm:$0xff]
        %v3612 = vld [vmem:[%s4 + $0x168] sm:$0xff]
        %v3613 = vld [vmem:[%s4 + $0x170] sm:$0xff]
        %v3614 = vld [vmem:[%s4 + $0x178] sm:$0xff]
        %v3615 = vld [vmem:[%s4 + $0x180] sm:$0xff]
        %v3616 = vld [vmem:[%s4 + $0x188] sm:$0xff]
        %v3617 = vld [vmem:[%s4 + $0x190] sm:$0xff]
        %v3618 = vld [vmem:[%s4 + $0x198] sm:$0xff]
        %3620 = vset.pattern.permute.xlu0 0
        %3621 = vperm.xlu0 %3620, %v3567
        %v3622 = vpop.permute.xlu0 %3621
        %3625 = vset.pattern.permute.xlu0 0
        %3626 = vperm.xlu0 %3625, %v3568
        %v3627 = vpop.permute.xlu0 %3626
        %3630 = vset.pattern.permute.xlu0 0
        %3631 = vperm.xlu0 %3630, %v3569
        %v3632 = vpop.permute.xlu0 %3631
        %3635 = vset.pattern.permute.xlu0 0
        %3636 = vperm.xlu0 %3635, %v3570
        %v3637 = vpop.permute.xlu0 %3636
        %3640 = vset.pattern.permute.xlu0 0
        %3641 = vperm.xlu0 %3640, %v3571
        %v3642 = vpop.permute.xlu0 %3641
        %3645 = vset.pattern.permute.xlu0 0
        %3646 = vperm.xlu0 %3645, %v3572
        %v3647 = vpop.permute.xlu0 %3646
        %3650 = vset.pattern.permute.xlu0 0
        %3651 = vperm.xlu0 %3650, %v3573
        %v3652 = vpop.permute.xlu0 %3651
        %3655 = vset.pattern.permute.xlu0 0
        %3656 = vperm.xlu0 %3655, %v3574
        %v3657 = vpop.permute.xlu0 %3656
        %3660 = vset.pattern.permute.xlu0 0
        %3661 = vperm.xlu0 %3660, %v3575
        %v3662 = vpop.permute.xlu0 %3661
        %3665 = vset.pattern.permute.xlu0 0
        %3666 = vperm.xlu0 %3665, %v3576
        %v3667 = vpop.permute.xlu0 %3666
        %3670 = vset.pattern.permute.xlu0 0
        %3671 = vperm.xlu0 %3670, %v3577
        %v3672 = vpop.permute.xlu0 %3671
        %3675 = vset.pattern.permute.xlu0 0
        %3676 = vperm.xlu0 %3675, %v3578
        %v3677 = vpop.permute.xlu0 %3676
        %3680 = vset.pattern.permute.xlu0 0
        %3681 = vperm.xlu0 %3680, %v3579
        %v3682 = vpop.permute.xlu0 %3681
        %3685 = vset.pattern.permute.xlu0 0
        %3686 = vperm.xlu0 %3685, %v3580
        %v3687 = vpop.permute.xlu0 %3686
        %3690 = vset.pattern.permute.xlu0 0
        %3691 = vperm.xlu0 %3690, %v3581
        %v3692 = vpop.permute.xlu0 %3691
        %3695 = vset.pattern.permute.xlu0 0
        %3696 = vperm.xlu0 %3695, %v3582
        %v3697 = vpop.permute.xlu0 %3696
        %3700 = vset.pattern.permute.xlu0 0
        %3701 = vperm.xlu0 %3700, %v3583
        %v3702 = vpop.permute.xlu0 %3701
        %3705 = vset.pattern.permute.xlu0 0
        %3706 = vperm.xlu0 %3705, %v3584
        %v3707 = vpop.permute.xlu0 %3706
        %3710 = vset.pattern.permute.xlu0 0
        %3711 = vperm.xlu0 %3710, %v3585
        %v3712 = vpop.permute.xlu0 %3711
        %3715 = vset.pattern.permute.xlu0 0
        %3716 = vperm.xlu0 %3715, %v3586
        %v3717 = vpop.permute.xlu0 %3716
        %3720 = vset.pattern.permute.xlu0 0
        %3721 = vperm.xlu0 %3720, %v3587
        %v3722 = vpop.permute.xlu0 %3721
        %3725 = vset.pattern.permute.xlu0 0
        %3726 = vperm.xlu0 %3725, %v3588
        %v3727 = vpop.permute.xlu0 %3726
        %3730 = vset.pattern.permute.xlu0 0
        %3731 = vperm.xlu0 %3730, %v3589
        %v3732 = vpop.permute.xlu0 %3731
        %3735 = vset.pattern.permute.xlu0 0
        %3736 = vperm.xlu0 %3735, %v3590
        %v3737 = vpop.permute.xlu0 %3736
        %3740 = vset.pattern.permute.xlu0 0
        %3741 = vperm.xlu0 %3740, %v3591
        %v3742 = vpop.permute.xlu0 %3741
        %3745 = vset.pattern.permute.xlu0 0
        %3746 = vperm.xlu0 %3745, %v3592
        %v3747 = vpop.permute.xlu0 %3746
        %3750 = vset.pattern.permute.xlu0 0
        %3751 = vperm.xlu0 %3750, %v3593
        %v3752 = vpop.permute.xlu0 %3751
        %3755 = vset.pattern.permute.xlu0 0
        %3756 = vperm.xlu0 %3755, %v3594
        %v3757 = vpop.permute.xlu0 %3756
        %3760 = vset.pattern.permute.xlu0 0
        %3761 = vperm.xlu0 %3760, %v3595
        %v3762 = vpop.permute.xlu0 %3761
        %3765 = vset.pattern.permute.xlu0 0
        %3766 = vperm.xlu0 %3765, %v3596
        %v3767 = vpop.permute.xlu0 %3766
        %3770 = vset.pattern.permute.xlu0 0
        %3771 = vperm.xlu0 %3770, %v3597
        %v3772 = vpop.permute.xlu0 %3771
        %3775 = vset.pattern.permute.xlu0 0
        %3776 = vperm.xlu0 %3775, %v3598
        %v3777 = vpop.permute.xlu0 %3776
        %3780 = vset.pattern.permute.xlu0 0
        %3781 = vperm.xlu0 %3780, %v3599
        %v3782 = vpop.permute.xlu0 %3781
        %3785 = vset.pattern.permute.xlu0 0
        %3786 = vperm.xlu0 %3785, %v3600
        %v3787 = vpop.permute.xlu0 %3786
        %3790 = vset.pattern.permute.xlu0 0
        %3791 = vperm.xlu0 %3790, %v3601
        %v3792 = vpop.permute.xlu0 %3791
        %3795 = vset.pattern.permute.xlu0 0
        %3796 = vperm.xlu0 %3795, %v3602
        %v3797 = vpop.permute.xlu0 %3796
        %3800 = vset.pattern.permute.xlu0 0
        %3801 = vperm.xlu0 %3800, %v3603
        %v3802 = vpop.permute.xlu0 %3801
        %3805 = vset.pattern.permute.xlu0 0
        %3806 = vperm.xlu0 %3805, %v3604
        %v3807 = vpop.permute.xlu0 %3806
        %3810 = vset.pattern.permute.xlu0 0
        %3811 = vperm.xlu0 %3810, %v3605
        %v3812 = vpop.permute.xlu0 %3811
        %3815 = vset.pattern.permute.xlu0 0
        %3816 = vperm.xlu0 %3815, %v3606
        %v3817 = vpop.permute.xlu0 %3816
        %3820 = vset.pattern.permute.xlu0 0
        %3821 = vperm.xlu0 %3820, %v3607
        %v3822 = vpop.permute.xlu0 %3821
        %3825 = vset.pattern.permute.xlu0 0
        %3826 = vperm.xlu0 %3825, %v3608
        %v3827 = vpop.permute.xlu0 %3826
        %3830 = vset.pattern.permute.xlu0 0
        %3831 = vperm.xlu0 %3830, %v3609
        %v3832 = vpop.permute.xlu0 %3831
        %3835 = vset.pattern.permute.xlu0 0
        %3836 = vperm.xlu0 %3835, %v3610
        %v3837 = vpop.permute.xlu0 %3836
        %3840 = vset.pattern.permute.xlu0 0
        %3841 = vperm.xlu0 %3840, %v3611
        %v3842 = vpop.permute.xlu0 %3841
        %3845 = vset.pattern.permute.xlu0 0
        %3846 = vperm.xlu0 %3845, %v3612
        %v3847 = vpop.permute.xlu0 %3846
        %3850 = vset.pattern.permute.xlu0 0
        %3851 = vperm.xlu0 %3850, %v3613
        %v3852 = vpop.permute.xlu0 %3851
        %3855 = vset.pattern.permute.xlu0 0
        %3856 = vperm.xlu0 %3855, %v3614
        %v3857 = vpop.permute.xlu0 %3856
        %3860 = vset.pattern.permute.xlu0 0
        %3861 = vperm.xlu0 %3860, %v3615
        %v3862 = vpop.permute.xlu0 %3861
        %3865 = vset.pattern.permute.xlu0 0
        %3866 = vperm.xlu0 %3865, %v3616
        %v3867 = vpop.permute.xlu0 %3866
        %3870 = vset.pattern.permute.xlu0 0
        %3871 = vperm.xlu0 %3870, %v3617
        %v3872 = vpop.permute.xlu0 %3871
        %3875 = vset.pattern.permute.xlu0 0
        %3876 = vperm.xlu0 %3875, %v3618
        %v3877 = vpop.permute.xlu0 %3876
        %v3879 = vadd.f32 %v3258, %v3622
        %v3880 = vadd.f32 %v3264, %v3627
        %v3881 = vadd.f32 %v3270, %v3632
        %v3882 = vadd.f32 %v3276, %v3637
        %v3883 = vadd.f32 %v3282, %v3642
        %v3884 = vadd.f32 %v3288, %v3647
        %v3885 = vadd.f32 %v3294, %v3652
        %v3886 = vadd.f32 %v3300, %v3657
        %v3887 = vadd.f32 %v3306, %v3662
        %v3888 = vadd.f32 %v3312, %v3667
        %v3889 = vadd.f32 %v3318, %v3672
        %v3890 = vadd.f32 %v3324, %v3677
        %v3891 = vadd.f32 %v3330, %v3682
        %v3892 = vadd.f32 %v3336, %v3687
        %v3893 = vadd.f32 %v3342, %v3692
        %v3894 = vadd.f32 %v3348, %v3697
        %v3895 = vadd.f32 %v3354, %v3702
        %v3896 = vadd.f32 %v3360, %v3707
        %v3897 = vadd.f32 %v3366, %v3712
        %v3898 = vadd.f32 %v3372, %v3717
        %v3899 = vadd.f32 %v3378, %v3722
        %v3900 = vadd.f32 %v3384, %v3727
        %v3901 = vadd.f32 %v3390, %v3732
        %v3902 = vadd.f32 %v3396, %v3737
        %v3903 = vadd.f32 %v3402, %v3742
        %v3904 = vadd.f32 %v3408, %v3747
        %v3905 = vadd.f32 %v3414, %v3752
        %v3906 = vadd.f32 %v3420, %v3757
        %v3907 = vadd.f32 %v3426, %v3762
        %v3908 = vadd.f32 %v3432, %v3767
        %v3909 = vadd.f32 %v3438, %v3772
        %v3910 = vadd.f32 %v3444, %v3777
        %v3911 = vadd.f32 %v3450, %v3782
        %v3912 = vadd.f32 %v3456, %v3787
        %v3913 = vadd.f32 %v3462, %v3792
        %v3914 = vadd.f32 %v3468, %v3797
        %v3915 = vadd.f32 %v3474, %v3802
        %v3916 = vadd.f32 %v3480, %v3807
        %v3917 = vadd.f32 %v3486, %v3812
        %v3918 = vadd.f32 %v3492, %v3817
        %v3919 = vadd.f32 %v3498, %v3822
        %v3920 = vadd.f32 %v3504, %v3827
        %v3921 = vadd.f32 %v3510, %v3832
        %v3922 = vadd.f32 %v3516, %v3837
        %v3923 = vadd.f32 %v3522, %v3842
        %v3924 = vadd.f32 %v3528, %v3847
        %v3925 = vadd.f32 %v3534, %v3852
        %v3926 = vadd.f32 %v3540, %v3857
        %v3927 = vadd.f32 %v3546, %v3862
        %v3928 = vadd.f32 %v3552, %v3867
        %v3929 = vadd.f32 %v3558, %v3872
        %v3930 = vadd.f32 %v3564, %v3877
        %v3931 = vtanh.pop %v3879
        %v3932 = vtanh.pop %v3880
        %v3933 = vtanh.pop %v3881
        %v3934 = vtanh.pop %v3882
        %v3935 = vld [vmem:[%s5] sm:$0xff]
        %v3936 = vld [vmem:[%s5 + $0x8] sm:$0xff]
        %v3937 = vld [vmem:[%s5 + $0x10] sm:$0xff]
        %v3938 = vld [vmem:[%s5 + $0x18] sm:$0xff]
        %v3939 = vld [vmem:[%s5 + $0x20] sm:$0xff]
        %v3940 = vld [vmem:[%s5 + $0x28] sm:$0xff]
        %v3941 = vld [vmem:[%s5 + $0x30] sm:$0xff]
        %v3942 = vld [vmem:[%s5 + $0x38] sm:$0xff]
        %v3943 = vld [vmem:[%s5 + $0x40] sm:$0xff]
        %v3944 = vld [vmem:[%s5 + $0x48] sm:$0xff]
        %v3945 = vld [vmem:[%s5 + $0x50] sm:$0xff]
        %v3946 = vld [vmem:[%s5 + $0x58] sm:$0xff]
        %vm3947 = vcmask 261120
        %v3949 = vsel %vm3947, %v3935, 0
        %v3952 = vsel %vm3947, %v3936, 0
        %v3955 = vsel %vm3947, %v3937, 0
        %v3958 = vsel %vm3947, %v3938, 0
        %v3961 = vsel %vm3947, %v3939, 0
        %v3964 = vsel %vm3947, %v3940, 0
        %v3967 = vsel %vm3947, %v3941, 0
        %v3970 = vsel %vm3947, %v3942, 0
        %v3973 = vsel %vm3947, %v3943, 0
        %v3976 = vsel %vm3947, %v3944, 0
        %v3979 = vsel %vm3947, %v3945, 0
        %v3982 = vsel %vm3947, %v3946, 0
        %3984 = vmatprep.subr.mxu0 0.0
        %v3985 = vand.u32 %v3931, 4294901760
        %3986 = vmatpush1.msra.mxu0 %v3985
        %3987 = vmatprep.subr.mxu0 0.0
        %v3988 = vand.u32 %v3932, 4294901760
        %3989 = vmatpush1.msra.mxu0 %v3988
        %3990 = vmatprep.subr.mxu0 0.0
        %v3991 = vand.u32 %v3933, 4294901760
        %3992 = vmatpush1.msra.mxu0 %v3991
        %3993 = vmatprep.subr.mxu0 0.0
        %v3994 = vand.u32 %v3934, 4294901760
        %3995 = vmatpush1.msra.mxu0 %v3994
        %3996 = vmatprep.subr.mxu0 0.0
        %3997 = vmatpush1.msra.mxu0 0.0
        %3998 = vmatprep.subr.mxu0 0.0
        %3999 = vmatpush1.msra.mxu0 0.0
        %4000 = vmatprep.subr.mxu0 0.0
        %4001 = vmatpush1.msra.mxu0 0.0
        %4002 = vmatprep.subr.mxu0 0.0
        %4003 = vmatpush1.msra.mxu0 0.0
        %4004 = vmatprep.subr.mxu0 0.0
        %4005 = vmatpush1.msra.mxu0 0.0
        %4006 = vmatprep.subr.mxu0 0.0
        %4007 = vmatpush1.msra.mxu0 0.0
        %4008 = vmatprep.subr.mxu0 0.0
        %4009 = vmatpush1.msra.mxu0 0.0
        %4010 = vmatprep.subr.mxu0 0.0
        %4011 = vmatpush1.msra.mxu0 0.0
        %4012 = vmatprep.subr.mxu0 0.0
        %4013 = vmatpush1.msra.mxu0 0.0
        %4014 = vmatprep.subr.mxu0 0.0
        %4015 = vmatpush1.msra.mxu0 0.0
        %4016 = vmatprep.subr.mxu0 0.0
        %4017 = vmatpush1.msra.mxu0 0.0
        %4018 = vmatprep.subr.mxu0 0.0
        %4019 = vmatpush1.msra.mxu0 0.0
        %4020 = vmatprep.subr.mxu0 0.0
        %4021 = vmatpush1.msra.mxu0 0.0
        %4022 = vmatprep.subr.mxu0 0.0
        %4023 = vmatpush1.msra.mxu0 0.0
        %4024 = vmatprep.subr.mxu0 0.0
        %4025 = vmatpush1.msra.mxu0 0.0
        %4026 = vmatprep.subr.mxu0 0.0
        %4027 = vmatpush1.msra.mxu0 0.0
        %4028 = vmatprep.subr.mxu0 0.0
        %4029 = vmatpush1.msra.mxu0 0.0
        %4030 = vmatprep.subr.mxu0 0.0
        %4031 = vmatpush1.msra.mxu0 0.0
        %4032 = vmatprep.subr.mxu0 0.0
        %4033 = vmatpush1.msra.mxu0 0.0
        %4034 = vmatprep.subr.mxu0 0.0
        %4035 = vmatpush1.msra.mxu0 0.0
        %4036 = vmatprep.subr.mxu0 0.0
        %4037 = vmatpush1.msra.mxu0 0.0
        %4038 = vmatprep.subr.mxu0 0.0
        %4039 = vmatpush1.msra.mxu0 0.0
        %4040 = vmatprep.subr.mxu0 0.0
        %4041 = vmatpush1.msra.mxu0 0.0
        %4042 = vmatprep.subr.mxu0 0.0
        %4043 = vmatpush1.msra.mxu0 0.0
        %4044 = vmatprep.subr.mxu0 0.0
        %4045 = vmatpush1.msra.mxu0 0.0
        %4046 = vmatprep.subr.mxu0 0.0
        %4047 = vmatpush1.msra.mxu0 0.0
        %4048 = vmatprep.subr.mxu0 0.0
        %4049 = vmatpush1.msra.mxu0 0.0
        %4050 = vmatprep.subr.mxu0 0.0
        %4051 = vmatpush1.msra.mxu0 0.0
        %4052 = vmatprep.mubr.f32.mxu0 0.0
        %v4053 = vand.u32 %v3949, 4294901760
        %v4054 = vsub.f32 %v3949, %v4053
        %v4055 = vand.u32 %v4054, 4294901760
        %v4056 = vsub.f32 %v4054, %v4055
        %v4057 = vand.u32 %v4056, 4294901760
        %4058 = vmatmul.mubr.f32.gmra.mrb[0].mxu0 %v4057
        %v4059 = vpop.f32.mrb[0].mxu0
        %v4060 = vadd.f32 0.0, %v4059
        %v4061 = vpop.f32.mrb[0].mxu0
        %4062 = vmatprep.mubr.f32.mxu0 0.0
        %v4063 = vand.u32 %v3952, 4294901760
        %v4064 = vsub.f32 %v3952, %v4063
        %v4065 = vand.u32 %v4064, 4294901760
        %v4066 = vsub.f32 %v4064, %v4065
        %v4067 = vand.u32 %v4066, 4294901760
        %4068 = vmatmul.mubr.f32.gmra.mrb[0].mxu0 %v4067
        %v4069 = vpop.f32.mrb[0].mxu0
        %v4070 = vadd.f32 0.0, %v4069
        %v4071 = vpop.f32.mrb[0].mxu0
        %4072 = vmatprep.mubr.f32.mxu0 0.0
        %v4073 = vand.u32 %v3955, 4294901760
        %v4074 = vsub.f32 %v3955, %v4073
        %v4075 = vand.u32 %v4074, 4294901760
        %v4076 = vsub.f32 %v4074, %v4075
        %v4077 = vand.u32 %v4076, 4294901760
        %4078 = vmatmul.mubr.f32.gmra.mrb[0].mxu0 %v4077
        %v4079 = vpop.f32.mrb[0].mxu0
        %v4080 = vadd.f32 0.0, %v4079
        %v4081 = vpop.f32.mrb[0].mxu0
        %4082 = vmatprep.mubr.f32.mxu0 0.0
        %v4083 = vand.u32 %v3958, 4294901760
        %v4084 = vsub.f32 %v3958, %v4083
        %v4085 = vand.u32 %v4084, 4294901760
        %v4086 = vsub.f32 %v4084, %v4085
        %v4087 = vand.u32 %v4086, 4294901760
        %4088 = vmatmul.mubr.f32.gmra.mrb[0].mxu0 %v4087
        %v4089 = vpop.f32.mrb[0].mxu0
        %v4090 = vadd.f32 0.0, %v4089
        %v4091 = vpop.f32.mrb[0].mxu0
        %4092 = vmatprep.mubr.f32.mxu0 0.0
        %v4093 = vand.u32 %v3961, 4294901760
        %v4094 = vsub.f32 %v3961, %v4093
        %v4095 = vand.u32 %v4094, 4294901760
        %v4096 = vsub.f32 %v4094, %v4095
        %v4097 = vand.u32 %v4096, 4294901760
        %4098 = vmatmul.mubr.f32.gmra.mrb[0].mxu0 %v4097
        %v4099 = vpop.f32.mrb[0].mxu0
        %v4100 = vadd.f32 0.0, %v4099
        %v4101 = vpop.f32.mrb[0].mxu0
        %4102 = vmatprep.mubr.f32.mxu0 0.0
        %v4103 = vand.u32 %v3964, 4294901760
        %v4104 = vsub.f32 %v3964, %v4103
        %v4105 = vand.u32 %v4104, 4294901760
        %v4106 = vsub.f32 %v4104, %v4105
        %v4107 = vand.u32 %v4106, 4294901760
        %4108 = vmatmul.mubr.f32.gmra.mrb[0].mxu0 %v4107
        %v4109 = vpop.f32.mrb[0].mxu0
        %v4110 = vadd.f32 0.0, %v4109
        %v4111 = vpop.f32.mrb[0].mxu0
        %4112 = vmatprep.mubr.f32.mxu0 0.0
        %v4113 = vand.u32 %v3967, 4294901760
        %v4114 = vsub.f32 %v3967, %v4113
        %v4115 = vand.u32 %v4114, 4294901760
        %v4116 = vsub.f32 %v4114, %v4115
        %v4117 = vand.u32 %v4116, 4294901760
        %4118 = vmatmul.mubr.f32.gmra.mrb[0].mxu0 %v4117
        %v4119 = vpop.f32.mrb[0].mxu0
        %v4120 = vadd.f32 0.0, %v4119
        %v4121 = vpop.f32.mrb[0].mxu0
        %4122 = vmatprep.mubr.f32.mxu0 0.0
        %v4123 = vand.u32 %v3970, 4294901760
        %v4124 = vsub.f32 %v3970, %v4123
        %v4125 = vand.u32 %v4124, 4294901760
        %v4126 = vsub.f32 %v4124, %v4125
        %v4127 = vand.u32 %v4126, 4294901760
        %4128 = vmatmul.mubr.f32.gmra.mrb[0].mxu0 %v4127
        %v4129 = vpop.f32.mrb[0].mxu0
        %v4130 = vadd.f32 0.0, %v4129
        %v4131 = vpop.f32.mrb[0].mxu0
        %4132 = vmatprep.mubr.f32.mxu0 0.0
        %v4133 = vand.u32 %v3973, 4294901760
        %v4134 = vsub.f32 %v3973, %v4133
        %v4135 = vand.u32 %v4134, 4294901760
        %v4136 = vsub.f32 %v4134, %v4135
        %v4137 = vand.u32 %v4136, 4294901760
        %4138 = vmatmul.mubr.f32.gmra.mrb[0].mxu0 %v4137
        %v4139 = vpop.f32.mrb[0].mxu0
        %v4140 = vadd.f32 0.0, %v4139
        %v4141 = vpop.f32.mrb[0].mxu0
        %4142 = vmatprep.mubr.f32.mxu0 0.0
        %v4143 = vand.u32 %v3976, 4294901760
        %v4144 = vsub.f32 %v3976, %v4143
        %v4145 = vand.u32 %v4144, 4294901760
        %v4146 = vsub.f32 %v4144, %v4145
        %v4147 = vand.u32 %v4146, 4294901760
        %4148 = vmatmul.mubr.f32.gmra.mrb[0].mxu0 %v4147
        %v4149 = vpop.f32.mrb[0].mxu0
        %v4150 = vadd.f32 0.0, %v4149
        %v4151 = vpop.f32.mrb[0].mxu0
        %4152 = vmatprep.mubr.f32.mxu0 0.0
        %v4153 = vand.u32 %v3979, 4294901760
        %v4154 = vsub.f32 %v3979, %v4153
        %v4155 = vand.u32 %v4154, 4294901760
        %v4156 = vsub.f32 %v4154, %v4155
        %v4157 = vand.u32 %v4156, 4294901760
        %4158 = vmatmul.mubr.f32.gmra.mrb[0].mxu0 %v4157
        %v4159 = vpop.f32.mrb[0].mxu0
        %v4160 = vadd.f32 0.0, %v4159
        %v4161 = vpop.f32.mrb[0].mxu0
        %4162 = vmatprep.mubr.f32.mxu0 0.0
        %v4163 = vand.u32 %v3982, 4294901760
        %v4164 = vsub.f32 %v3982, %v4163
        %v4165 = vand.u32 %v4164, 4294901760
        %v4166 = vsub.f32 %v4164, %v4165
        %v4167 = vand.u32 %v4166, 4294901760
        %4168 = vmatmul.mubr.f32.gmra.mrb[0].mxu0 %v4167
        %v4169 = vpop.f32.mrb[0].mxu0
        %v4170 = vadd.f32 0.0, %v4169
        %v4171 = vpop.f32.mrb[0].mxu0
        %4172 = vdwg.mxu0
        %4173 = vmatprep.subr.mxu0 0.0
        %v4174 = vand.u32 %v3931, 4294901760
        %v4175 = vsub.f32 %v3931, %v4174
        %v4176 = vand.u32 %v4175, 4294901760
        %v4177 = vsub.f32 %v4175, %v4176
        %v4178 = vand.u32 %v4177, 4294901760
        %4179 = vmatpush1.msra.mxu0 %v4178
        %4180 = vmatprep.subr.mxu0 0.0
        %v4181 = vand.u32 %v3932, 4294901760
        %v4182 = vsub.f32 %v3932, %v4181
        %v4183 = vand.u32 %v4182, 4294901760
        %v4184 = vsub.f32 %v4182, %v4183
        %v4185 = vand.u32 %v4184, 4294901760
        %4186 = vmatpush1.msra.mxu0 %v4185
        %4187 = vmatprep.subr.mxu0 0.0
        %v4188 = vand.u32 %v3933, 4294901760
        %v4189 = vsub.f32 %v3933, %v4188
        %v4190 = vand.u32 %v4189, 4294901760
        %v4191 = vsub.f32 %v4189, %v4190
        %v4192 = vand.u32 %v4191, 4294901760
        %4193 = vmatpush1.msra.mxu0 %v4192
        %4194 = vmatprep.subr.mxu0 0.0
        %v4195 = vand.u32 %v3934, 4294901760
        %v4196 = vsub.f32 %v3934, %v4195
        %v4197 = vand.u32 %v4196, 4294901760
        %v4198 = vsub.f32 %v4196, %v4197
        %v4199 = vand.u32 %v4198, 4294901760
        %4200 = vmatpush1.msra.mxu0 %v4199
        %4201 = vmatprep.subr.mxu0 0.0
        %4202 = vmatpush1.msra.mxu0 0.0
        %4203 = vmatprep.subr.mxu0 0.0
        %4204 = vmatpush1.msra.mxu0 0.0
        %4205 = vmatprep.subr.mxu0 0.0
        %4206 = vmatpush1.msra.mxu0 0.0
        %4207 = vmatprep.subr.mxu0 0.0
        %4208 = vmatpush1.msra.mxu0 0.0
        %4209 = vmatprep.subr.mxu0 0.0
        %4210 = vmatpush1.msra.mxu0 0.0
        %4211 = vmatprep.subr.mxu0 0.0
        %4212 = vmatpush1.msra.mxu0 0.0
        %4213 = vmatprep.subr.mxu0 0.0
        %4214 = vmatpush1.msra.mxu0 0.0
        %4215 = vmatprep.subr.mxu0 0.0
        %4216 = vmatpush1.msra.mxu0 0.0
        %4217 = vmatprep.subr.mxu0 0.0
        %4218 = vmatpush1.msra.mxu0 0.0
        %4219 = vmatprep.subr.mxu0 0.0
        %4220 = vmatpush1.msra.mxu0 0.0
        %4221 = vmatprep.subr.mxu0 0.0
        %4222 = vmatpush1.msra.mxu0 0.0
        %4223 = vmatprep.subr.mxu0 0.0
        %4224 = vmatpush1.msra.mxu0 0.0
        %4225 = vmatprep.subr.mxu0 0.0
        %4226 = vmatpush1.msra.mxu0 0.0
        %4227 = vmatprep.subr.mxu0 0.0
        %4228 = vmatpush1.msra.mxu0 0.0
        %4229 = vmatprep.subr.mxu0 0.0
        %4230 = vmatpush1.msra.mxu0 0.0
        %4231 = vmatprep.subr.mxu0 0.0
        %4232 = vmatpush1.msra.mxu0 0.0
        %4233 = vmatprep.subr.mxu0 0.0
        %4234 = vmatpush1.msra.mxu0 0.0
        %4235 = vmatprep.subr.mxu0 0.0
        %4236 = vmatpush1.msra.mxu0 0.0
        %4237 = vmatprep.subr.mxu0 0.0
        %4238 = vmatpush1.msra.mxu0 0.0
        %4239 = vmatprep.subr.mxu0 0.0
        %4240 = vmatpush1.msra.mxu0 0.0
        %4241 = vmatprep.subr.mxu0 0.0
        %4242 = vmatpush1.msra.mxu0 0.0
        %4243 = vmatprep.subr.mxu0 0.0
        %4244 = vmatpush1.msra.mxu0 0.0
        %4245 = vmatprep.subr.mxu0 0.0
        %4246 = vmatpush1.msra.mxu0 0.0
        %4247 = vmatprep.subr.mxu0 0.0
        %4248 = vmatpush1.msra.mxu0 0.0
        %4249 = vmatprep.subr.mxu0 0.0
        %4250 = vmatpush1.msra.mxu0 0.0
        %4251 = vmatprep.subr.mxu0 0.0
        %4252 = vmatpush1.msra.mxu0 0.0
        %4253 = vmatprep.subr.mxu0 0.0
        %4254 = vmatpush1.msra.mxu0 0.0
        %4255 = vmatprep.subr.mxu0 0.0
        %4256 = vmatpush1.msra.mxu0 0.0
        %4257 = vmatprep.mubr.f32.mxu0 0.0
        %v4258 = vand.u32 %v3949, 4294901760
        %4259 = vmatmul.mubr.f32.gmra.mrb[0].mxu0 %v4258
        %v4260 = vpop.f32.mrb[0].mxu0
        %v4261 = vadd.f32 %v4060, %v4260
        %v4262 = vpop.f32.mrb[0].mxu0
        %4263 = vmatprep.mubr.f32.mxu0 0.0
        %v4264 = vand.u32 %v3952, 4294901760
        %4265 = vmatmul.mubr.f32.gmra.mrb[0].mxu0 %v4264
        %v4266 = vpop.f32.mrb[0].mxu0
        %v4267 = vadd.f32 %v4070, %v4266
        %v4268 = vpop.f32.mrb[0].mxu0
        %4269 = vmatprep.mubr.f32.mxu0 0.0
        %v4270 = vand.u32 %v3955, 4294901760
        %4271 = vmatmul.mubr.f32.gmra.mrb[0].mxu0 %v4270
        %v4272 = vpop.f32.mrb[0].mxu0
        %v4273 = vadd.f32 %v4080, %v4272
        %v4274 = vpop.f32.mrb[0].mxu0
        %4275 = vmatprep.mubr.f32.mxu0 0.0
        %v4276 = vand.u32 %v3958, 4294901760
        %4277 = vmatmul.mubr.f32.gmra.mrb[0].mxu0 %v4276
        %v4278 = vpop.f32.mrb[0].mxu0
        %v4279 = vadd.f32 %v4090, %v4278
        %v4280 = vpop.f32.mrb[0].mxu0
        %4281 = vmatprep.mubr.f32.mxu0 0.0
        %v4282 = vand.u32 %v3961, 4294901760
        %4283 = vmatmul.mubr.f32.gmra.mrb[0].mxu0 %v4282
        %v4284 = vpop.f32.mrb[0].mxu0
        %v4285 = vadd.f32 %v4100, %v4284
        %v4286 = vpop.f32.mrb[0].mxu0
        %4287 = vmatprep.mubr.f32.mxu0 0.0
        %v4288 = vand.u32 %v3964, 4294901760
        %4289 = vmatmul.mubr.f32.gmra.mrb[0].mxu0 %v4288
        %v4290 = vpop.f32.mrb[0].mxu0
        %v4291 = vadd.f32 %v4110, %v4290
        %v4292 = vpop.f32.mrb[0].mxu0
        %4293 = vmatprep.mubr.f32.mxu0 0.0
        %v4294 = vand.u32 %v3967, 4294901760
        %4295 = vmatmul.mubr.f32.gmra.mrb[0].mxu0 %v4294
        %v4296 = vpop.f32.mrb[0].mxu0
        %v4297 = vadd.f32 %v4120, %v4296
        %v4298 = vpop.f32.mrb[0].mxu0
        %4299 = vmatprep.mubr.f32.mxu0 0.0
        %v4300 = vand.u32 %v3970, 4294901760
        %4301 = vmatmul.mubr.f32.gmra.mrb[0].mxu0 %v4300
        %v4302 = vpop.f32.mrb[0].mxu0
        %v4303 = vadd.f32 %v4130, %v4302
        %v4304 = vpop.f32.mrb[0].mxu0
        %4305 = vmatprep.mubr.f32.mxu0 0.0
        %v4306 = vand.u32 %v3973, 4294901760
        %4307 = vmatmul.mubr.f32.gmra.mrb[0].mxu0 %v4306
        %v4308 = vpop.f32.mrb[0].mxu0
        %v4309 = vadd.f32 %v4140, %v4308
        %v4310 = vpop.f32.mrb[0].mxu0
        %4311 = vmatprep.mubr.f32.mxu0 0.0
        %v4312 = vand.u32 %v3976, 4294901760
        %4313 = vmatmul.mubr.f32.gmra.mrb[0].mxu0 %v4312
        %v4314 = vpop.f32.mrb[0].mxu0
        %v4315 = vadd.f32 %v4150, %v4314
        %v4316 = vpop.f32.mrb[0].mxu0
        %4317 = vmatprep.mubr.f32.mxu0 0.0
        %v4318 = vand.u32 %v3979, 4294901760
        %4319 = vmatmul.mubr.f32.gmra.mrb[0].mxu0 %v4318
        %v4320 = vpop.f32.mrb[0].mxu0
        %v4321 = vadd.f32 %v4160, %v4320
        %v4322 = vpop.f32.mrb[0].mxu0
        %4323 = vmatprep.mubr.f32.mxu0 0.0
        %v4324 = vand.u32 %v3982, 4294901760
        %4325 = vmatmul.mubr.f32.gmra.mrb[0].mxu0 %v4324
        %v4326 = vpop.f32.mrb[0].mxu0
        %v4327 = vadd.f32 %v4170, %v4326
        %v4328 = vpop.f32.mrb[0].mxu0
        %4329 = vdwg.mxu0
        %4330 = vmatprep.subr.mxu0 0.0
        %v4331 = vand.u32 %v3931, 4294901760
        %v4332 = vsub.f32 %v3931, %v4331
        %4333 = vmatpush1.msra.mxu0 %v4332
        %4334 = vmatprep.subr.mxu0 0.0
        %v4335 = vand.u32 %v3932, 4294901760
        %v4336 = vsub.f32 %v3932, %v4335
        %4337 = vmatpush1.msra.mxu0 %v4336
        %4338 = vmatprep.subr.mxu0 0.0
        %v4339 = vand.u32 %v3933, 4294901760
        %v4340 = vsub.f32 %v3933, %v4339
        %4341 = vmatpush1.msra.mxu0 %v4340
        %4342 = vmatprep.subr.mxu0 0.0
        %v4343 = vand.u32 %v3934, 4294901760
        %v4344 = vsub.f32 %v3934, %v4343
        %4345 = vmatpush1.msra.mxu0 %v4344
        %4346 = vmatprep.subr.mxu0 0.0
        %4347 = vmatpush1.msra.mxu0 0.0
        %4348 = vmatprep.subr.mxu0 0.0
        %4349 = vmatpush1.msra.mxu0 0.0
        %4350 = vmatprep.subr.mxu0 0.0
        %4351 = vmatpush1.msra.mxu0 0.0
        %4352 = vmatprep.subr.mxu0 0.0
        %4353 = vmatpush1.msra.mxu0 0.0
        %4354 = vmatprep.subr.mxu0 0.0
        %4355 = vmatpush1.msra.mxu0 0.0
        %4356 = vmatprep.subr.mxu0 0.0
        %4357 = vmatpush1.msra.mxu0 0.0
        %4358 = vmatprep.subr.mxu0 0.0
        %4359 = vmatpush1.msra.mxu0 0.0
        %4360 = vmatprep.subr.mxu0 0.0
        %4361 = vmatpush1.msra.mxu0 0.0
        %4362 = vmatprep.subr.mxu0 0.0
        %4363 = vmatpush1.msra.mxu0 0.0
        %4364 = vmatprep.subr.mxu0 0.0
        %4365 = vmatpush1.msra.mxu0 0.0
        %4366 = vmatprep.subr.mxu0 0.0
        %4367 = vmatpush1.msra.mxu0 0.0
        %4368 = vmatprep.subr.mxu0 0.0
        %4369 = vmatpush1.msra.mxu0 0.0
        %4370 = vmatprep.subr.mxu0 0.0
        %4371 = vmatpush1.msra.mxu0 0.0
        %4372 = vmatprep.subr.mxu0 0.0
        %4373 = vmatpush1.msra.mxu0 0.0
        %4374 = vmatprep.subr.mxu0 0.0
        %4375 = vmatpush1.msra.mxu0 0.0
        %4376 = vmatprep.subr.mxu0 0.0
        %4377 = vmatpush1.msra.mxu0 0.0
        %4378 = vmatprep.subr.mxu0 0.0
        %4379 = vmatpush1.msra.mxu0 0.0
        %4380 = vmatprep.subr.mxu0 0.0
        %4381 = vmatpush1.msra.mxu0 0.0
        %4382 = vmatprep.subr.mxu0 0.0
        %4383 = vmatpush1.msra.mxu0 0.0
        %4384 = vmatprep.subr.mxu0 0.0
        %4385 = vmatpush1.msra.mxu0 0.0
        %4386 = vmatprep.subr.mxu0 0.0
        %4387 = vmatpush1.msra.mxu0 0.0
        %4388 = vmatprep.subr.mxu0 0.0
        %4389 = vmatpush1.msra.mxu0 0.0
        %4390 = vmatprep.subr.mxu0 0.0
        %4391 = vmatpush1.msra.mxu0 0.0
        %4392 = vmatprep.subr.mxu0 0.0
        %4393 = vmatpush1.msra.mxu0 0.0
        %4394 = vmatprep.subr.mxu0 0.0
        %4395 = vmatpush1.msra.mxu0 0.0
        %4396 = vmatprep.subr.mxu0 0.0
        %4397 = vmatpush1.msra.mxu0 0.0
        %4398 = vmatprep.subr.mxu0 0.0
        %4399 = vmatpush1.msra.mxu0 0.0
        %4400 = vmatprep.subr.mxu0 0.0
        %4401 = vmatpush1.msra.mxu0 0.0
        %4402 = vmatprep.mubr.f32.mxu0 0.0
        %v4403 = vand.u32 %v3949, 4294901760
        %v4404 = vsub.f32 %v3949, %v4403
        %4405 = vmatmul.mubr.f32.gmra.mrb[0].mxu0 %v4404
        %v4406 = vpop.f32.mrb[0].mxu0
        %v4407 = vadd.f32 %v4261, %v4406
        %v4408 = vpop.f32.mrb[0].mxu0
        %4409 = vmatprep.mubr.f32.mxu0 0.0
        %v4410 = vand.u32 %v3952, 4294901760
        %v4411 = vsub.f32 %v3952, %v4410
        %4412 = vmatmul.mubr.f32.gmra.mrb[0].mxu0 %v4411
        %v4413 = vpop.f32.mrb[0].mxu0
        %v4414 = vadd.f32 %v4267, %v4413
        %v4415 = vpop.f32.mrb[0].mxu0
        %4416 = vmatprep.mubr.f32.mxu0 0.0
        %v4417 = vand.u32 %v3955, 4294901760
        %v4418 = vsub.f32 %v3955, %v4417
        %4419 = vmatmul.mubr.f32.gmra.mrb[0].mxu0 %v4418
        %v4420 = vpop.f32.mrb[0].mxu0
        %v4421 = vadd.f32 %v4273, %v4420
        %v4422 = vpop.f32.mrb[0].mxu0
        %4423 = vmatprep.mubr.f32.mxu0 0.0
        %v4424 = vand.u32 %v3958, 4294901760
        %v4425 = vsub.f32 %v3958, %v4424
        %4426 = vmatmul.mubr.f32.gmra.mrb[0].mxu0 %v4425
        %v4427 = vpop.f32.mrb[0].mxu0
        %v4428 = vadd.f32 %v4279, %v4427
        %v4429 = vpop.f32.mrb[0].mxu0
        %4430 = vmatprep.mubr.f32.mxu0 0.0
        %v4431 = vand.u32 %v3961, 4294901760
        %v4432 = vsub.f32 %v3961, %v4431
        %4433 = vmatmul.mubr.f32.gmra.mrb[0].mxu0 %v4432
        %v4434 = vpop.f32.mrb[0].mxu0
        %v4435 = vadd.f32 %v4285, %v4434
        %v4436 = vpop.f32.mrb[0].mxu0
        %4437 = vmatprep.mubr.f32.mxu0 0.0
        %v4438 = vand.u32 %v3964, 4294901760
        %v4439 = vsub.f32 %v3964, %v4438
        %4440 = vmatmul.mubr.f32.gmra.mrb[0].mxu0 %v4439
        %v4441 = vpop.f32.mrb[0].mxu0
        %v4442 = vadd.f32 %v4291, %v4441
        %v4443 = vpop.f32.mrb[0].mxu0
        %4444 = vmatprep.mubr.f32.mxu0 0.0
        %v4445 = vand.u32 %v3967, 4294901760
        %v4446 = vsub.f32 %v3967, %v4445
        %4447 = vmatmul.mubr.f32.gmra.mrb[0].mxu0 %v4446
        %v4448 = vpop.f32.mrb[0].mxu0
        %v4449 = vadd.f32 %v4297, %v4448
        %v4450 = vpop.f32.mrb[0].mxu0
        %4451 = vmatprep.mubr.f32.mxu0 0.0
        %v4452 = vand.u32 %v3970, 4294901760
        %v4453 = vsub.f32 %v3970, %v4452
        %4454 = vmatmul.mubr.f32.gmra.mrb[0].mxu0 %v4453
        %v4455 = vpop.f32.mrb[0].mxu0
        %v4456 = vadd.f32 %v4303, %v4455
        %v4457 = vpop.f32.mrb[0].mxu0
        %4458 = vmatprep.mubr.f32.mxu0 0.0
        %v4459 = vand.u32 %v3973, 4294901760
        %v4460 = vsub.f32 %v3973, %v4459
        %4461 = vmatmul.mubr.f32.gmra.mrb[0].mxu0 %v4460
        %v4462 = vpop.f32.mrb[0].mxu0
        %v4463 = vadd.f32 %v4309, %v4462
        %v4464 = vpop.f32.mrb[0].mxu0
        %4465 = vmatprep.mubr.f32.mxu0 0.0
        %v4466 = vand.u32 %v3976, 4294901760
        %v4467 = vsub.f32 %v3976, %v4466
        %4468 = vmatmul.mubr.f32.gmra.mrb[0].mxu0 %v4467
        %v4469 = vpop.f32.mrb[0].mxu0
        %v4470 = vadd.f32 %v4315, %v4469
        %v4471 = vpop.f32.mrb[0].mxu0
        %4472 = vmatprep.mubr.f32.mxu0 0.0
        %v4473 = vand.u32 %v3979, 4294901760
        %v4474 = vsub.f32 %v3979, %v4473
        %4475 = vmatmul.mubr.f32.gmra.mrb[0].mxu0 %v4474
        %v4476 = vpop.f32.mrb[0].mxu0
        %v4477 = vadd.f32 %v4321, %v4476
        %v4478 = vpop.f32.mrb[0].mxu0
        %4479 = vmatprep.mubr.f32.mxu0 0.0
        %v4480 = vand.u32 %v3982, 4294901760
        %v4481 = vsub.f32 %v3982, %v4480
        %4482 = vmatmul.mubr.f32.gmra.mrb[0].mxu0 %v4481
        %v4483 = vpop.f32.mrb[0].mxu0
        %v4484 = vadd.f32 %v4327, %v4483
        %v4485 = vpop.f32.mrb[0].mxu0
        %4486 = vdwg.mxu0
        %4487 = vmatprep.subr.mxu0 0.0
        %v4488 = vand.u32 %v3931, 4294901760
        %4489 = vmatpush1.msra.mxu0 %v4488
        %4490 = vmatprep.subr.mxu0 0.0
        %v4491 = vand.u32 %v3932, 4294901760
        %4492 = vmatpush1.msra.mxu0 %v4491
        %4493 = vmatprep.subr.mxu0 0.0
        %v4494 = vand.u32 %v3933, 4294901760
        %4495 = vmatpush1.msra.mxu0 %v4494
        %4496 = vmatprep.subr.mxu0 0.0
        %v4497 = vand.u32 %v3934, 4294901760
        %4498 = vmatpush1.msra.mxu0 %v4497
        %4499 = vmatprep.subr.mxu0 0.0
        %4500 = vmatpush1.msra.mxu0 0.0
        %4501 = vmatprep.subr.mxu0 0.0
        %4502 = vmatpush1.msra.mxu0 0.0
        %4503 = vmatprep.subr.mxu0 0.0
        %4504 = vmatpush1.msra.mxu0 0.0
        %4505 = vmatprep.subr.mxu0 0.0
        %4506 = vmatpush1.msra.mxu0 0.0
        %4507 = vmatprep.subr.mxu0 0.0
        %4508 = vmatpush1.msra.mxu0 0.0
        %4509 = vmatprep.subr.mxu0 0.0
        %4510 = vmatpush1.msra.mxu0 0.0
        %4511 = vmatprep.subr.mxu0 0.0
        %4512 = vmatpush1.msra.mxu0 0.0
        %4513 = vmatprep.subr.mxu0 0.0
        %4514 = vmatpush1.msra.mxu0 0.0
        %4515 = vmatprep.subr.mxu0 0.0
        %4516 = vmatpush1.msra.mxu0 0.0
        %4517 = vmatprep.subr.mxu0 0.0
        %4518 = vmatpush1.msra.mxu0 0.0
        %4519 = vmatprep.subr.mxu0 0.0
        %4520 = vmatpush1.msra.mxu0 0.0
        %4521 = vmatprep.subr.mxu0 0.0
        %4522 = vmatpush1.msra.mxu0 0.0
        %4523 = vmatprep.subr.mxu0 0.0
        %4524 = vmatpush1.msra.mxu0 0.0
        %4525 = vmatprep.subr.mxu0 0.0
        %4526 = vmatpush1.msra.mxu0 0.0
        %4527 = vmatprep.subr.mxu0 0.0
        %4528 = vmatpush1.msra.mxu0 0.0
        %4529 = vmatprep.subr.mxu0 0.0
        %4530 = vmatpush1.msra.mxu0 0.0
        %4531 = vmatprep.subr.mxu0 0.0
        %4532 = vmatpush1.msra.mxu0 0.0
        %4533 = vmatprep.subr.mxu0 0.0
        %4534 = vmatpush1.msra.mxu0 0.0
        %4535 = vmatprep.subr.mxu0 0.0
        %4536 = vmatpush1.msra.mxu0 0.0
        %4537 = vmatprep.subr.mxu0 0.0
        %4538 = vmatpush1.msra.mxu0 0.0
        %4539 = vmatprep.subr.mxu0 0.0
        %4540 = vmatpush1.msra.mxu0 0.0
        %4541 = vmatprep.subr.mxu0 0.0
        %4542 = vmatpush1.msra.mxu0 0.0
        %4543 = vmatprep.subr.mxu0 0.0
        %4544 = vmatpush1.msra.mxu0 0.0
        %4545 = vmatprep.subr.mxu0 0.0
        %4546 = vmatpush1.msra.mxu0 0.0
        %4547 = vmatprep.subr.mxu0 0.0
        %4548 = vmatpush1.msra.mxu0 0.0
        %4549 = vmatprep.subr.mxu0 0.0
        %4550 = vmatpush1.msra.mxu0 0.0
        %4551 = vmatprep.subr.mxu0 0.0
        %4552 = vmatpush1.msra.mxu0 0.0
        %4553 = vmatprep.subr.mxu0 0.0
        %4554 = vmatpush1.msra.mxu0 0.0
        %4555 = vmatprep.mubr.f32.mxu0 0.0
        %v4556 = vand.u32 %v3949, 4294901760
        %v4557 = vsub.f32 %v3949, %v4556
        %v4558 = vand.u32 %v4557, 4294901760
        %4559 = vmatmul.mubr.f32.gmra.mrb[0].mxu0 %v4558
        %v4560 = vpop.f32.mrb[0].mxu0
        %v4561 = vadd.f32 %v4407, %v4560
        %v4562 = vpop.f32.mrb[0].mxu0
        %4563 = vmatprep.mubr.f32.mxu0 0.0
        %v4564 = vand.u32 %v3952, 4294901760
        %v4565 = vsub.f32 %v3952, %v4564
        %v4566 = vand.u32 %v4565, 4294901760
        %4567 = vmatmul.mubr.f32.gmra.mrb[0].mxu0 %v4566
        %v4568 = vpop.f32.mrb[0].mxu0
        %v4569 = vadd.f32 %v4414, %v4568
        %v4570 = vpop.f32.mrb[0].mxu0
        %4571 = vmatprep.mubr.f32.mxu0 0.0
        %v4572 = vand.u32 %v3955, 4294901760
        %v4573 = vsub.f32 %v3955, %v4572
        %v4574 = vand.u32 %v4573, 4294901760
        %4575 = vmatmul.mubr.f32.gmra.mrb[0].mxu0 %v4574
        %v4576 = vpop.f32.mrb[0].mxu0
        %v4577 = vadd.f32 %v4421, %v4576
        %v4578 = vpop.f32.mrb[0].mxu0
        %4579 = vmatprep.mubr.f32.mxu0 0.0
        %v4580 = vand.u32 %v3958, 4294901760
        %v4581 = vsub.f32 %v3958, %v4580
        %v4582 = vand.u32 %v4581, 4294901760
        %4583 = vmatmul.mubr.f32.gmra.mrb[0].mxu0 %v4582
        %v4584 = vpop.f32.mrb[0].mxu0
        %v4585 = vadd.f32 %v4428, %v4584
        %v4586 = vpop.f32.mrb[0].mxu0
        %4587 = vmatprep.mubr.f32.mxu0 0.0
        %v4588 = vand.u32 %v3961, 4294901760
        %v4589 = vsub.f32 %v3961, %v4588
        %v4590 = vand.u32 %v4589, 4294901760
        %4591 = vmatmul.mubr.f32.gmra.mrb[0].mxu0 %v4590
        %v4592 = vpop.f32.mrb[0].mxu0
        %v4593 = vadd.f32 %v4435, %v4592
        %v4594 = vpop.f32.mrb[0].mxu0
        %4595 = vmatprep.mubr.f32.mxu0 0.0
        %v4596 = vand.u32 %v3964, 4294901760
        %v4597 = vsub.f32 %v3964, %v4596
        %v4598 = vand.u32 %v4597, 4294901760
        %4599 = vmatmul.mubr.f32.gmra.mrb[0].mxu0 %v4598
        %v4600 = vpop.f32.mrb[0].mxu0
        %v4601 = vadd.f32 %v4442, %v4600
        %v4602 = vpop.f32.mrb[0].mxu0
        %4603 = vmatprep.mubr.f32.mxu0 0.0
        %v4604 = vand.u32 %v3967, 4294901760
        %v4605 = vsub.f32 %v3967, %v4604
        %v4606 = vand.u32 %v4605, 4294901760
        %4607 = vmatmul.mubr.f32.gmra.mrb[0].mxu0 %v4606
        %v4608 = vpop.f32.mrb[0].mxu0
        %v4609 = vadd.f32 %v4449, %v4608
        %v4610 = vpop.f32.mrb[0].mxu0
        %4611 = vmatprep.mubr.f32.mxu0 0.0
        %v4612 = vand.u32 %v3970, 4294901760
        %v4613 = vsub.f32 %v3970, %v4612
        %v4614 = vand.u32 %v4613, 4294901760
        %4615 = vmatmul.mubr.f32.gmra.mrb[0].mxu0 %v4614
        %v4616 = vpop.f32.mrb[0].mxu0
        %v4617 = vadd.f32 %v4456, %v4616
        %v4618 = vpop.f32.mrb[0].mxu0
        %4619 = vmatprep.mubr.f32.mxu0 0.0
        %v4620 = vand.u32 %v3973, 4294901760
        %v4621 = vsub.f32 %v3973, %v4620
        %v4622 = vand.u32 %v4621, 4294901760
        %4623 = vmatmul.mubr.f32.gmra.mrb[0].mxu0 %v4622
        %v4624 = vpop.f32.mrb[0].mxu0
        %v4625 = vadd.f32 %v4463, %v4624
        %v4626 = vpop.f32.mrb[0].mxu0
        %4627 = vmatprep.mubr.f32.mxu0 0.0
        %v4628 = vand.u32 %v3976, 4294901760
        %v4629 = vsub.f32 %v3976, %v4628
        %v4630 = vand.u32 %v4629, 4294901760
        %4631 = vmatmul.mubr.f32.gmra.mrb[0].mxu0 %v4630
        %v4632 = vpop.f32.mrb[0].mxu0
        %v4633 = vadd.f32 %v4470, %v4632
        %v4634 = vpop.f32.mrb[0].mxu0
        %4635 = vmatprep.mubr.f32.mxu0 0.0
        %v4636 = vand.u32 %v3979, 4294901760
        %v4637 = vsub.f32 %v3979, %v4636
        %v4638 = vand.u32 %v4637, 4294901760
        %4639 = vmatmul.mubr.f32.gmra.mrb[0].mxu0 %v4638
        %v4640 = vpop.f32.mrb[0].mxu0
        %v4641 = vadd.f32 %v4477, %v4640
        %v4642 = vpop.f32.mrb[0].mxu0
        %4643 = vmatprep.mubr.f32.mxu0 0.0
        %v4644 = vand.u32 %v3982, 4294901760
        %v4645 = vsub.f32 %v3982, %v4644
        %v4646 = vand.u32 %v4645, 4294901760
        %4647 = vmatmul.mubr.f32.gmra.mrb[0].mxu0 %v4646
        %v4648 = vpop.f32.mrb[0].mxu0
        %v4649 = vadd.f32 %v4484, %v4648
        %v4650 = vpop.f32.mrb[0].mxu0
        %4651 = vdwg.mxu0
        %4652 = vmatprep.subr.mxu0 0.0
        %v4653 = vand.u32 %v3931, 4294901760
        %v4654 = vsub.f32 %v3931, %v4653
        %v4655 = vand.u32 %v4654, 4294901760
        %4656 = vmatpush1.msra.mxu0 %v4655
        %4657 = vmatprep.subr.mxu0 0.0
        %v4658 = vand.u32 %v3932, 4294901760
        %v4659 = vsub.f32 %v3932, %v4658
        %v4660 = vand.u32 %v4659, 4294901760
        %4661 = vmatpush1.msra.mxu0 %v4660
        %4662 = vmatprep.subr.mxu0 0.0
        %v4663 = vand.u32 %v3933, 4294901760
        %v4664 = vsub.f32 %v3933, %v4663
        %v4665 = vand.u32 %v4664, 4294901760
        %4666 = vmatpush1.msra.mxu0 %v4665
        %4667 = vmatprep.subr.mxu0 0.0
        %v4668 = vand.u32 %v3934, 4294901760
        %v4669 = vsub.f32 %v3934, %v4668
        %v4670 = vand.u32 %v4669, 4294901760
        %4671 = vmatpush1.msra.mxu0 %v4670
        %4672 = vmatprep.subr.mxu0 0.0
        %4673 = vmatpush1.msra.mxu0 0.0
        %4674 = vmatprep.subr.mxu0 0.0
        %4675 = vmatpush1.msra.mxu0 0.0
        %4676 = vmatprep.subr.mxu0 0.0
        %4677 = vmatpush1.msra.mxu0 0.0
        %4678 = vmatprep.subr.mxu0 0.0
        %4679 = vmatpush1.msra.mxu0 0.0
        %4680 = vmatprep.subr.mxu0 0.0
        %4681 = vmatpush1.msra.mxu0 0.0
        %4682 = vmatprep.subr.mxu0 0.0
        %4683 = vmatpush1.msra.mxu0 0.0
        %4684 = vmatprep.subr.mxu0 0.0
        %4685 = vmatpush1.msra.mxu0 0.0
        %4686 = vmatprep.subr.mxu0 0.0
        %4687 = vmatpush1.msra.mxu0 0.0
        %4688 = vmatprep.subr.mxu0 0.0
        %4689 = vmatpush1.msra.mxu0 0.0
        %4690 = vmatprep.subr.mxu0 0.0
        %4691 = vmatpush1.msra.mxu0 0.0
        %4692 = vmatprep.subr.mxu0 0.0
        %4693 = vmatpush1.msra.mxu0 0.0
        %4694 = vmatprep.subr.mxu0 0.0
        %4695 = vmatpush1.msra.mxu0 0.0
        %4696 = vmatprep.subr.mxu0 0.0
        %4697 = vmatpush1.msra.mxu0 0.0
        %4698 = vmatprep.subr.mxu0 0.0
        %4699 = vmatpush1.msra.mxu0 0.0
        %4700 = vmatprep.subr.mxu0 0.0
        %4701 = vmatpush1.msra.mxu0 0.0
        %4702 = vmatprep.subr.mxu0 0.0
        %4703 = vmatpush1.msra.mxu0 0.0
        %4704 = vmatprep.subr.mxu0 0.0
        %4705 = vmatpush1.msra.mxu0 0.0
        %4706 = vmatprep.subr.mxu0 0.0
        %4707 = vmatpush1.msra.mxu0 0.0
        %4708 = vmatprep.subr.mxu0 0.0
        %4709 = vmatpush1.msra.mxu0 0.0
        %4710 = vmatprep.subr.mxu0 0.0
        %4711 = vmatpush1.msra.mxu0 0.0
        %4712 = vmatprep.subr.mxu0 0.0
        %4713 = vmatpush1.msra.mxu0 0.0
        %4714 = vmatprep.subr.mxu0 0.0
        %4715 = vmatpush1.msra.mxu0 0.0
        %4716 = vmatprep.subr.mxu0 0.0
        %4717 = vmatpush1.msra.mxu0 0.0
        %4718 = vmatprep.subr.mxu0 0.0
        %4719 = vmatpush1.msra.mxu0 0.0
        %4720 = vmatprep.subr.mxu0 0.0
        %4721 = vmatpush1.msra.mxu0 0.0
        %4722 = vmatprep.subr.mxu0 0.0
        %4723 = vmatpush1.msra.mxu0 0.0
        %4724 = vmatprep.subr.mxu0 0.0
        %4725 = vmatpush1.msra.mxu0 0.0
        %4726 = vmatprep.subr.mxu0 0.0
        %4727 = vmatpush1.msra.mxu0 0.0
        %4728 = vmatprep.mubr.f32.mxu0 0.0
        %v4729 = vand.u32 %v3949, 4294901760
        %4730 = vmatmul.mubr.f32.gmra.mrb[0].mxu0 %v4729
        %v4731 = vpop.f32.mrb[0].mxu0
        %v4732 = vadd.f32 %v4561, %v4731
        %v4733 = vpop.f32.mrb[0].mxu0
        %4734 = vmatprep.mubr.f32.mxu0 0.0
        %v4735 = vand.u32 %v3952, 4294901760
        %4736 = vmatmul.mubr.f32.gmra.mrb[0].mxu0 %v4735
        %v4737 = vpop.f32.mrb[0].mxu0
        %v4738 = vadd.f32 %v4569, %v4737
        %v4739 = vpop.f32.mrb[0].mxu0
        %4740 = vmatprep.mubr.f32.mxu0 0.0
        %v4741 = vand.u32 %v3955, 4294901760
        %4742 = vmatmul.mubr.f32.gmra.mrb[0].mxu0 %v4741
        %v4743 = vpop.f32.mrb[0].mxu0
        %v4744 = vadd.f32 %v4577, %v4743
        %v4745 = vpop.f32.mrb[0].mxu0
        %4746 = vmatprep.mubr.f32.mxu0 0.0
        %v4747 = vand.u32 %v3958, 4294901760
        %4748 = vmatmul.mubr.f32.gmra.mrb[0].mxu0 %v4747
        %v4749 = vpop.f32.mrb[0].mxu0
        %v4750 = vadd.f32 %v4585, %v4749
        %v4751 = vpop.f32.mrb[0].mxu0
        %4752 = vmatprep.mubr.f32.mxu0 0.0
        %v4753 = vand.u32 %v3961, 4294901760
        %4754 = vmatmul.mubr.f32.gmra.mrb[0].mxu0 %v4753
        %v4755 = vpop.f32.mrb[0].mxu0
        %v4756 = vadd.f32 %v4593, %v4755
        %v4757 = vpop.f32.mrb[0].mxu0
        %4758 = vmatprep.mubr.f32.mxu0 0.0
        %v4759 = vand.u32 %v3964, 4294901760
        %4760 = vmatmul.mubr.f32.gmra.mrb[0].mxu0 %v4759
        %v4761 = vpop.f32.mrb[0].mxu0
        %v4762 = vadd.f32 %v4601, %v4761
        %v4763 = vpop.f32.mrb[0].mxu0
        %4764 = vmatprep.mubr.f32.mxu0 0.0
        %v4765 = vand.u32 %v3967, 4294901760
        %4766 = vmatmul.mubr.f32.gmra.mrb[0].mxu0 %v4765
        %v4767 = vpop.f32.mrb[0].mxu0
        %v4768 = vadd.f32 %v4609, %v4767
        %v4769 = vpop.f32.mrb[0].mxu0
        %4770 = vmatprep.mubr.f32.mxu0 0.0
        %v4771 = vand.u32 %v3970, 4294901760
        %4772 = vmatmul.mubr.f32.gmra.mrb[0].mxu0 %v4771
        %v4773 = vpop.f32.mrb[0].mxu0
        %v4774 = vadd.f32 %v4617, %v4773
        %v4775 = vpop.f32.mrb[0].mxu0
        %4776 = vmatprep.mubr.f32.mxu0 0.0
        %v4777 = vand.u32 %v3973, 4294901760
        %4778 = vmatmul.mubr.f32.gmra.mrb[0].mxu0 %v4777
        %v4779 = vpop.f32.mrb[0].mxu0
        %v4780 = vadd.f32 %v4625, %v4779
        %v4781 = vpop.f32.mrb[0].mxu0
        %4782 = vmatprep.mubr.f32.mxu0 0.0
        %v4783 = vand.u32 %v3976, 4294901760
        %4784 = vmatmul.mubr.f32.gmra.mrb[0].mxu0 %v4783
        %v4785 = vpop.f32.mrb[0].mxu0
        %v4786 = vadd.f32 %v4633, %v4785
        %v4787 = vpop.f32.mrb[0].mxu0
        %4788 = vmatprep.mubr.f32.mxu0 0.0
        %v4789 = vand.u32 %v3979, 4294901760
        %4790 = vmatmul.mubr.f32.gmra.mrb[0].mxu0 %v4789
        %v4791 = vpop.f32.mrb[0].mxu0
        %v4792 = vadd.f32 %v4641, %v4791
        %v4793 = vpop.f32.mrb[0].mxu0
        %4794 = vmatprep.mubr.f32.mxu0 0.0
        %v4795 = vand.u32 %v3982, 4294901760
        %4796 = vmatmul.mubr.f32.gmra.mrb[0].mxu0 %v4795
        %v4797 = vpop.f32.mrb[0].mxu0
        %v4798 = vadd.f32 %v4649, %v4797
        %v4799 = vpop.f32.mrb[0].mxu0
        %4800 = vdwg.mxu0
        %4801 = vmatprep.subr.mxu0 0.0
        %v4802 = vand.u32 %v3931, 4294901760
        %4803 = vmatpush1.msra.mxu0 %v4802
        %4804 = vmatprep.subr.mxu0 0.0
        %v4805 = vand.u32 %v3932, 4294901760
        %4806 = vmatpush1.msra.mxu0 %v4805
        %4807 = vmatprep.subr.mxu0 0.0
        %v4808 = vand.u32 %v3933, 4294901760
        %4809 = vmatpush1.msra.mxu0 %v4808
        %4810 = vmatprep.subr.mxu0 0.0
        %v4811 = vand.u32 %v3934, 4294901760
        %4812 = vmatpush1.msra.mxu0 %v4811
        %4813 = vmatprep.subr.mxu0 0.0
        %4814 = vmatpush1.msra.mxu0 0.0
        %4815 = vmatprep.subr.mxu0 0.0
        %4816 = vmatpush1.msra.mxu0 0.0
        %4817 = vmatprep.subr.mxu0 0.0
        %4818 = vmatpush1.msra.mxu0 0.0
        %4819 = vmatprep.subr.mxu0 0.0
        %4820 = vmatpush1.msra.mxu0 0.0
        %4821 = vmatprep.subr.mxu0 0.0
        %4822 = vmatpush1.msra.mxu0 0.0
        %4823 = vmatprep.subr.mxu0 0.0
        %4824 = vmatpush1.msra.mxu0 0.0
        %4825 = vmatprep.subr.mxu0 0.0
        %4826 = vmatpush1.msra.mxu0 0.0
        %4827 = vmatprep.subr.mxu0 0.0
        %4828 = vmatpush1.msra.mxu0 0.0
        %4829 = vmatprep.subr.mxu0 0.0
        %4830 = vmatpush1.msra.mxu0 0.0
        %4831 = vmatprep.subr.mxu0 0.0
        %4832 = vmatpush1.msra.mxu0 0.0
        %4833 = vmatprep.subr.mxu0 0.0
        %4834 = vmatpush1.msra.mxu0 0.0
        %4835 = vmatprep.subr.mxu0 0.0
        %4836 = vmatpush1.msra.mxu0 0.0
        %4837 = vmatprep.subr.mxu0 0.0
        %4838 = vmatpush1.msra.mxu0 0.0
        %4839 = vmatprep.subr.mxu0 0.0
        %4840 = vmatpush1.msra.mxu0 0.0
        %4841 = vmatprep.subr.mxu0 0.0
        %4842 = vmatpush1.msra.mxu0 0.0
        %4843 = vmatprep.subr.mxu0 0.0
        %4844 = vmatpush1.msra.mxu0 0.0
        %4845 = vmatprep.subr.mxu0 0.0
        %4846 = vmatpush1.msra.mxu0 0.0
        %4847 = vmatprep.subr.mxu0 0.0
        %4848 = vmatpush1.msra.mxu0 0.0
        %4849 = vmatprep.subr.mxu0 0.0
        %4850 = vmatpush1.msra.mxu0 0.0
        %4851 = vmatprep.subr.mxu0 0.0
        %4852 = vmatpush1.msra.mxu0 0.0
        %4853 = vmatprep.subr.mxu0 0.0
        %4854 = vmatpush1.msra.mxu0 0.0
        %4855 = vmatprep.subr.mxu0 0.0
        %4856 = vmatpush1.msra.mxu0 0.0
        %4857 = vmatprep.subr.mxu0 0.0
        %4858 = vmatpush1.msra.mxu0 0.0
        %4859 = vmatprep.subr.mxu0 0.0
        %4860 = vmatpush1.msra.mxu0 0.0
        %4861 = vmatprep.subr.mxu0 0.0
        %4862 = vmatpush1.msra.mxu0 0.0
        %4863 = vmatprep.subr.mxu0 0.0
        %4864 = vmatpush1.msra.mxu0 0.0
        %4865 = vmatprep.subr.mxu0 0.0
        %4866 = vmatpush1.msra.mxu0 0.0
        %4867 = vmatprep.subr.mxu0 0.0
        %4868 = vmatpush1.msra.mxu0 0.0
        %4869 = vmatprep.mubr.f32.mxu0 0.0
        %v4870 = vand.u32 %v3949, 4294901760
        %4871 = vmatmul.mubr.f32.gmra.mrb[0].mxu0 %v4870
        %v4872 = vpop.f32.mrb[0].mxu0
        %v4873 = vadd.f32 %v4732, %v4872
        %v4874 = vpop.f32.mrb[0].mxu0
        %4875 = vmatprep.mubr.f32.mxu0 0.0
        %v4876 = vand.u32 %v3952, 4294901760
        %4877 = vmatmul.mubr.f32.gmra.mrb[0].mxu0 %v4876
        %v4878 = vpop.f32.mrb[0].mxu0
        %v4879 = vadd.f32 %v4738, %v4878
        %v4880 = vpop.f32.mrb[0].mxu0
        %4881 = vmatprep.mubr.f32.mxu0 0.0
        %v4882 = vand.u32 %v3955, 4294901760
        %4883 = vmatmul.mubr.f32.gmra.mrb[0].mxu0 %v4882
        %v4884 = vpop.f32.mrb[0].mxu0
        %v4885 = vadd.f32 %v4744, %v4884
        %v4886 = vpop.f32.mrb[0].mxu0
        %4887 = vmatprep.mubr.f32.mxu0 0.0
        %v4888 = vand.u32 %v3958, 4294901760
        %4889 = vmatmul.mubr.f32.gmra.mrb[0].mxu0 %v4888
        %v4890 = vpop.f32.mrb[0].mxu0
        %v4891 = vadd.f32 %v4750, %v4890
        %v4892 = vpop.f32.mrb[0].mxu0
        %4893 = vmatprep.mubr.f32.mxu0 0.0
        %v4894 = vand.u32 %v3961, 4294901760
        %4895 = vmatmul.mubr.f32.gmra.mrb[0].mxu0 %v4894
        %v4896 = vpop.f32.mrb[0].mxu0
        %v4897 = vadd.f32 %v4756, %v4896
        %v4898 = vpop.f32.mrb[0].mxu0
        %4899 = vmatprep.mubr.f32.mxu0 0.0
        %v4900 = vand.u32 %v3964, 4294901760
        %4901 = vmatmul.mubr.f32.gmra.mrb[0].mxu0 %v4900
        %v4902 = vpop.f32.mrb[0].mxu0
        %v4903 = vadd.f32 %v4762, %v4902
        %v4904 = vpop.f32.mrb[0].mxu0
        %4905 = vmatprep.mubr.f32.mxu0 0.0
        %v4906 = vand.u32 %v3967, 4294901760
        %4907 = vmatmul.mubr.f32.gmra.mrb[0].mxu0 %v4906
        %v4908 = vpop.f32.mrb[0].mxu0
        %v4909 = vadd.f32 %v4768, %v4908
        %v4910 = vpop.f32.mrb[0].mxu0
        %4911 = vmatprep.mubr.f32.mxu0 0.0
        %v4912 = vand.u32 %v3970, 4294901760
        %4913 = vmatmul.mubr.f32.gmra.mrb[0].mxu0 %v4912
        %v4914 = vpop.f32.mrb[0].mxu0
        %v4915 = vadd.f32 %v4774, %v4914
        %v4916 = vpop.f32.mrb[0].mxu0
        %4917 = vmatprep.mubr.f32.mxu0 0.0
        %v4918 = vand.u32 %v3973, 4294901760
        %4919 = vmatmul.mubr.f32.gmra.mrb[0].mxu0 %v4918
        %v4920 = vpop.f32.mrb[0].mxu0
        %v4921 = vadd.f32 %v4780, %v4920
        %v4922 = vpop.f32.mrb[0].mxu0
        %4923 = vmatprep.mubr.f32.mxu0 0.0
        %v4924 = vand.u32 %v3976, 4294901760
        %4925 = vmatmul.mubr.f32.gmra.mrb[0].mxu0 %v4924
        %v4926 = vpop.f32.mrb[0].mxu0
        %v4927 = vadd.f32 %v4786, %v4926
        %v4928 = vpop.f32.mrb[0].mxu0
        %4929 = vmatprep.mubr.f32.mxu0 0.0
        %v4930 = vand.u32 %v3979, 4294901760
        %4931 = vmatmul.mubr.f32.gmra.mrb[0].mxu0 %v4930
        %v4932 = vpop.f32.mrb[0].mxu0
        %v4933 = vadd.f32 %v4792, %v4932
        %v4934 = vpop.f32.mrb[0].mxu0
        %4935 = vmatprep.mubr.f32.mxu0 0.0
        %v4936 = vand.u32 %v3982, 4294901760
        %4937 = vmatmul.mubr.f32.gmra.mrb[0].mxu0 %v4936
        %v4938 = vpop.f32.mrb[0].mxu0
        %v4939 = vadd.f32 %v4798, %v4938
        %v4940 = vpop.f32.mrb[0].mxu0
        %4941 = vdwg.mxu0
        %v4942 = vadd.f32 %v3883, %v4873
        %v4943 = vadd.f32 %v3884, %v4879
        %v4944 = vadd.f32 %v3885, %v4885
        %v4945 = vadd.f32 %v3886, %v4891
        %v4946 = vtanh.pop %v4942
        %v4947 = vtanh.pop %v4943
        %v4948 = vtanh.pop %v4944
        %v4949 = vtanh.pop %v4945
        %v4950 = vadd.f32 %v3887, %v4897
        %v4951 = vadd.f32 %v3888, %v4903
        %v4952 = vadd.f32 %v3889, %v4909
        %v4953 = vadd.f32 %v3890, %v4915
        %v4954 = vtanh.pop %v4950
        %v4955 = vtanh.pop %v4951
        %v4956 = vtanh.pop %v4952
        %v4957 = vtanh.pop %v4953
        %v4958 = vadd.f32 %v3891, %v4921
        %v4959 = vadd.f32 %v3892, %v4927
        %v4960 = vadd.f32 %v3893, %v4933
        %v4961 = vadd.f32 %v3894, %v4939
        %v4962 = vtanh.pop %v4958
        %v4963 = vtanh.pop %v4959
        %v4964 = vtanh.pop %v4960
        %v4965 = vtanh.pop %v4961
        %v4966 = vld [vmem:[%s6] sm:$0xff]
        %v4967 = vld [vmem:[%s6 + $0x8] sm:$0xff]
        %v4968 = vld [vmem:[%s6 + $0x10] sm:$0xff]
        %v4969 = vld [vmem:[%s6 + $0x18] sm:$0xff]
        %v4970 = vmul.f32 %v3931, %v4962
        %v4971 = vmul.f32 %v3932, %v4963
        %v4972 = vmul.f32 %v3933, %v4964
        %v4973 = vmul.f32 %v3934, %v4965
        %v4975 = vsel %vm3947, %v4966, 0
        %v4978 = vsel %vm3947, %v4967, 0
        %v4981 = vsel %vm3947, %v4968, 0
        %v4984 = vsel %vm3947, %v4969, 0
        %4986 = vmatprep.subr.mxu0 0.0
        %v4987 = vand.u32 %v4970, 4294901760
        %4988 = vmatpush1.msra.mxu0 %v4987
        %4989 = vmatprep.subr.mxu0 0.0
        %v4990 = vand.u32 %v4971, 4294901760
        %4991 = vmatpush1.msra.mxu0 %v4990
        %4992 = vmatprep.subr.mxu0 0.0
        %v4993 = vand.u32 %v4972, 4294901760
        %4994 = vmatpush1.msra.mxu0 %v4993
        %4995 = vmatprep.subr.mxu0 0.0
        %v4996 = vand.u32 %v4973, 4294901760
        %4997 = vmatpush1.msra.mxu0 %v4996
        %4998 = vmatprep.subr.mxu0 0.0
        %4999 = vmatpush1.msra.mxu0 0.0
        %5000 = vmatprep.subr.mxu0 0.0
        %5001 = vmatpush1.msra.mxu0 0.0
        %5002 = vmatprep.subr.mxu0 0.0
        %5003 = vmatpush1.msra.mxu0 0.0
        %5004 = vmatprep.subr.mxu0 0.0
        %5005 = vmatpush1.msra.mxu0 0.0
        %5006 = vmatprep.subr.mxu0 0.0
        %5007 = vmatpush1.msra.mxu0 0.0
        %5008 = vmatprep.subr.mxu0 0.0
        %5009 = vmatpush1.msra.mxu0 0.0
        %5010 = vmatprep.subr.mxu0 0.0
        %5011 = vmatpush1.msra.mxu0 0.0
        %5012 = vmatprep.subr.mxu0 0.0
        %5013 = vmatpush1.msra.mxu0 0.0
        %5014 = vmatprep.subr.mxu0 0.0
        %5015 = vmatpush1.msra.mxu0 0.0
        %5016 = vmatprep.subr.mxu0 0.0
        %5017 = vmatpush1.msra.mxu0 0.0
        %5018 = vmatprep.subr.mxu0 0.0
        %5019 = vmatpush1.msra.mxu0 0.0
        %5020 = vmatprep.subr.mxu0 0.0
        %5021 = vmatpush1.msra.mxu0 0.0
        %5022 = vmatprep.subr.mxu0 0.0
        %5023 = vmatpush1.msra.mxu0 0.0
        %5024 = vmatprep.subr.mxu0 0.0
        %5025 = vmatpush1.msra.mxu0 0.0
        %5026 = vmatprep.subr.mxu0 0.0
        %5027 = vmatpush1.msra.mxu0 0.0
        %5028 = vmatprep.subr.mxu0 0.0
        %5029 = vmatpush1.msra.mxu0 0.0
        %5030 = vmatprep.subr.mxu0 0.0
        %5031 = vmatpush1.msra.mxu0 0.0
        %5032 = vmatprep.subr.mxu0 0.0
        %5033 = vmatpush1.msra.mxu0 0.0
        %5034 = vmatprep.subr.mxu0 0.0
        %5035 = vmatpush1.msra.mxu0 0.0
        %5036 = vmatprep.subr.mxu0 0.0
        %5037 = vmatpush1.msra.mxu0 0.0
        %5038 = vmatprep.subr.mxu0 0.0
        %5039 = vmatpush1.msra.mxu0 0.0
        %5040 = vmatprep.subr.mxu0 0.0
        %5041 = vmatpush1.msra.mxu0 0.0
        %5042 = vmatprep.subr.mxu0 0.0
        %5043 = vmatpush1.msra.mxu0 0.0
        %5044 = vmatprep.subr.mxu0 0.0
        %5045 = vmatpush1.msra.mxu0 0.0
        %5046 = vmatprep.subr.mxu0 0.0
        %5047 = vmatpush1.msra.mxu0 0.0
        %5048 = vmatprep.subr.mxu0 0.0
        %5049 = vmatpush1.msra.mxu0 0.0
        %5050 = vmatprep.subr.mxu0 0.0
        %5051 = vmatpush1.msra.mxu0 0.0
        %5052 = vmatprep.subr.mxu0 0.0
        %5053 = vmatpush1.msra.mxu0 0.0
        %5054 = vmatprep.mubr.f32.mxu0 0.0
        %v5055 = vand.u32 %v4975, 4294901760
        %v5056 = vsub.f32 %v4975, %v5055
        %v5057 = vand.u32 %v5056, 4294901760
        %v5058 = vsub.f32 %v5056, %v5057
        %v5059 = vand.u32 %v5058, 4294901760
        %5060 = vmatmul.mubr.f32.gmra.mrb[0].mxu0 %v5059
        %v5061 = vpop.f32.mrb[0].mxu0
        %v5062 = vadd.f32 0.0, %v5061
        %v5063 = vpop.f32.mrb[0].mxu0
        %5064 = vmatprep.mubr.f32.mxu0 0.0
        %v5065 = vand.u32 %v4978, 4294901760
        %v5066 = vsub.f32 %v4978, %v5065
        %v5067 = vand.u32 %v5066, 4294901760
        %v5068 = vsub.f32 %v5066, %v5067
        %v5069 = vand.u32 %v5068, 4294901760
        %5070 = vmatmul.mubr.f32.gmra.mrb[0].mxu0 %v5069
        %v5071 = vpop.f32.mrb[0].mxu0
        %v5072 = vadd.f32 0.0, %v5071
        %v5073 = vpop.f32.mrb[0].mxu0
        %5074 = vmatprep.mubr.f32.mxu0 0.0
        %v5075 = vand.u32 %v4981, 4294901760
        %v5076 = vsub.f32 %v4981, %v5075
        %v5077 = vand.u32 %v5076, 4294901760
        %v5078 = vsub.f32 %v5076, %v5077
        %v5079 = vand.u32 %v5078, 4294901760
        %5080 = vmatmul.mubr.f32.gmra.mrb[0].mxu0 %v5079
        %v5081 = vpop.f32.mrb[0].mxu0
        %v5082 = vadd.f32 0.0, %v5081
        %v5083 = vpop.f32.mrb[0].mxu0
        %5084 = vmatprep.mubr.f32.mxu0 0.0
        %v5085 = vand.u32 %v4984, 4294901760
        %v5086 = vsub.f32 %v4984, %v5085
        %v5087 = vand.u32 %v5086, 4294901760
        %v5088 = vsub.f32 %v5086, %v5087
        %v5089 = vand.u32 %v5088, 4294901760
        %5090 = vmatmul.mubr.f32.gmra.mrb[0].mxu0 %v5089
        %v5091 = vpop.f32.mrb[0].mxu0
        %v5092 = vadd.f32 0.0, %v5091
        %v5093 = vpop.f32.mrb[0].mxu0
        %5094 = vdwg.mxu0
        %5095 = vmatprep.subr.mxu0 0.0
        %v5096 = vand.u32 %v4970, 4294901760
        %v5097 = vsub.f32 %v4970, %v5096
        %v5098 = vand.u32 %v5097, 4294901760
        %v5099 = vsub.f32 %v5097, %v5098
        %v5100 = vand.u32 %v5099, 4294901760
        %5101 = vmatpush1.msra.mxu0 %v5100
        %5102 = vmatprep.subr.mxu0 0.0
        %v5103 = vand.u32 %v4971, 4294901760
        %v5104 = vsub.f32 %v4971, %v5103
        %v5105 = vand.u32 %v5104, 4294901760
        %v5106 = vsub.f32 %v5104, %v5105
        %v5107 = vand.u32 %v5106, 4294901760
        %5108 = vmatpush1.msra.mxu0 %v5107
        %5109 = vmatprep.subr.mxu0 0.0
        %v5110 = vand.u32 %v4972, 4294901760
        %v5111 = vsub.f32 %v4972, %v5110
        %v5112 = vand.u32 %v5111, 4294901760
        %v5113 = vsub.f32 %v5111, %v5112
        %v5114 = vand.u32 %v5113, 4294901760
        %5115 = vmatpush1.msra.mxu0 %v5114
        %5116 = vmatprep.subr.mxu0 0.0
        %v5117 = vand.u32 %v4973, 4294901760
        %v5118 = vsub.f32 %v4973, %v5117
        %v5119 = vand.u32 %v5118, 4294901760
        %v5120 = vsub.f32 %v5118, %v5119
        %v5121 = vand.u32 %v5120, 4294901760
        %5122 = vmatpush1.msra.mxu0 %v5121
        %5123 = vmatprep.subr.mxu0 0.0
        %5124 = vmatpush1.msra.mxu0 0.0
        %5125 = vmatprep.subr.mxu0 0.0
        %5126 = vmatpush1.msra.mxu0 0.0
        %5127 = vmatprep.subr.mxu0 0.0
        %5128 = vmatpush1.msra.mxu0 0.0
        %5129 = vmatprep.subr.mxu0 0.0
        %5130 = vmatpush1.msra.mxu0 0.0
        %5131 = vmatprep.subr.mxu0 0.0
        %5132 = vmatpush1.msra.mxu0 0.0
        %5133 = vmatprep.subr.mxu0 0.0
        %5134 = vmatpush1.msra.mxu0 0.0
        %5135 = vmatprep.subr.mxu0 0.0
        %5136 = vmatpush1.msra.mxu0 0.0
        %5137 = vmatprep.subr.mxu0 0.0
        %5138 = vmatpush1.msra.mxu0 0.0
        %5139 = vmatprep.subr.mxu0 0.0
        %5140 = vmatpush1.msra.mxu0 0.0
        %5141 = vmatprep.subr.mxu0 0.0
        %5142 = vmatpush1.msra.mxu0 0.0
        %5143 = vmatprep.subr.mxu0 0.0
        %5144 = vmatpush1.msra.mxu0 0.0
        %5145 = vmatprep.subr.mxu0 0.0
        %5146 = vmatpush1.msra.mxu0 0.0
        %5147 = vmatprep.subr.mxu0 0.0
        %5148 = vmatpush1.msra.mxu0 0.0
        %5149 = vmatprep.subr.mxu0 0.0
        %5150 = vmatpush1.msra.mxu0 0.0
        %5151 = vmatprep.subr.mxu0 0.0
        %5152 = vmatpush1.msra.mxu0 0.0
        %5153 = vmatprep.subr.mxu0 0.0
        %5154 = vmatpush1.msra.mxu0 0.0
        %5155 = vmatprep.subr.mxu0 0.0
        %5156 = vmatpush1.msra.mxu0 0.0
        %5157 = vmatprep.subr.mxu0 0.0
        %5158 = vmatpush1.msra.mxu0 0.0
        %5159 = vmatprep.subr.mxu0 0.0
        %5160 = vmatpush1.msra.mxu0 0.0
        %5161 = vmatprep.subr.mxu0 0.0
        %5162 = vmatpush1.msra.mxu0 0.0
        %5163 = vmatprep.subr.mxu0 0.0
        %5164 = vmatpush1.msra.mxu0 0.0
        %5165 = vmatprep.subr.mxu0 0.0
        %5166 = vmatpush1.msra.mxu0 0.0
        %5167 = vmatprep.subr.mxu0 0.0
        %5168 = vmatpush1.msra.mxu0 0.0
        %5169 = vmatprep.subr.mxu0 0.0
        %5170 = vmatpush1.msra.mxu0 0.0
        %5171 = vmatprep.subr.mxu0 0.0
        %5172 = vmatpush1.msra.mxu0 0.0
        %5173 = vmatprep.subr.mxu0 0.0
        %5174 = vmatpush1.msra.mxu0 0.0
        %5175 = vmatprep.subr.mxu0 0.0
        %5176 = vmatpush1.msra.mxu0 0.0
        %5177 = vmatprep.subr.mxu0 0.0
        %5178 = vmatpush1.msra.mxu0 0.0
        %5179 = vmatprep.mubr.f32.mxu0 0.0
        %v5180 = vand.u32 %v4975, 4294901760
        %5181 = vmatmul.mubr.f32.gmra.mrb[0].mxu0 %v5180
        %v5182 = vpop.f32.mrb[0].mxu0
        %v5183 = vadd.f32 %v5062, %v5182
        %v5184 = vpop.f32.mrb[0].mxu0
        %5185 = vmatprep.mubr.f32.mxu0 0.0
        %v5186 = vand.u32 %v4978, 4294901760
        %5187 = vmatmul.mubr.f32.gmra.mrb[0].mxu0 %v5186
        %v5188 = vpop.f32.mrb[0].mxu0
        %v5189 = vadd.f32 %v5072, %v5188
        %v5190 = vpop.f32.mrb[0].mxu0
        %5191 = vmatprep.mubr.f32.mxu0 0.0
        %v5192 = vand.u32 %v4981, 4294901760
        %5193 = vmatmul.mubr.f32.gmra.mrb[0].mxu0 %v5192
        %v5194 = vpop.f32.mrb[0].mxu0
        %v5195 = vadd.f32 %v5082, %v5194
        %v5196 = vpop.f32.mrb[0].mxu0
        %5197 = vmatprep.mubr.f32.mxu0 0.0
        %v5198 = vand.u32 %v4984, 4294901760
        %5199 = vmatmul.mubr.f32.gmra.mrb[0].mxu0 %v5198
        %v5200 = vpop.f32.mrb[0].mxu0
        %v5201 = vadd.f32 %v5092, %v5200
        %v5202 = vpop.f32.mrb[0].mxu0
        %5203 = vdwg.mxu0
        %5204 = vmatprep.subr.mxu0 0.0
        %v5205 = vand.u32 %v4970, 4294901760
        %v5206 = vsub.f32 %v4970, %v5205
        %5207 = vmatpush1.msra.mxu0 %v5206
        %5208 = vmatprep.subr.mxu0 0.0
        %v5209 = vand.u32 %v4971, 4294901760
        %v5210 = vsub.f32 %v4971, %v5209
        %5211 = vmatpush1.msra.mxu0 %v5210
        %5212 = vmatprep.subr.mxu0 0.0
        %v5213 = vand.u32 %v4972, 4294901760
        %v5214 = vsub.f32 %v4972, %v5213
        %5215 = vmatpush1.msra.mxu0 %v5214
        %5216 = vmatprep.subr.mxu0 0.0
        %v5217 = vand.u32 %v4973, 4294901760
        %v5218 = vsub.f32 %v4973, %v5217
        %5219 = vmatpush1.msra.mxu0 %v5218
        %5220 = vmatprep.subr.mxu0 0.0
        %5221 = vmatpush1.msra.mxu0 0.0
        %5222 = vmatprep.subr.mxu0 0.0
        %5223 = vmatpush1.msra.mxu0 0.0
        %5224 = vmatprep.subr.mxu0 0.0
        %5225 = vmatpush1.msra.mxu0 0.0
        %5226 = vmatprep.subr.mxu0 0.0
        %5227 = vmatpush1.msra.mxu0 0.0
        %5228 = vmatprep.subr.mxu0 0.0
        %5229 = vmatpush1.msra.mxu0 0.0
        %5230 = vmatprep.subr.mxu0 0.0
        %5231 = vmatpush1.msra.mxu0 0.0
        %5232 = vmatprep.subr.mxu0 0.0
        %5233 = vmatpush1.msra.mxu0 0.0
        %5234 = vmatprep.subr.mxu0 0.0
        %5235 = vmatpush1.msra.mxu0 0.0
        %5236 = vmatprep.subr.mxu0 0.0
        %5237 = vmatpush1.msra.mxu0 0.0
        %5238 = vmatprep.subr.mxu0 0.0
        %5239 = vmatpush1.msra.mxu0 0.0
        %5240 = vmatprep.subr.mxu0 0.0
        %5241 = vmatpush1.msra.mxu0 0.0
        %5242 = vmatprep.subr.mxu0 0.0
        %5243 = vmatpush1.msra.mxu0 0.0
        %5244 = vmatprep.subr.mxu0 0.0
        %5245 = vmatpush1.msra.mxu0 0.0
        %5246 = vmatprep.subr.mxu0 0.0
        %5247 = vmatpush1.msra.mxu0 0.0
        %5248 = vmatprep.subr.mxu0 0.0
        %5249 = vmatpush1.msra.mxu0 0.0
        %5250 = vmatprep.subr.mxu0 0.0
        %5251 = vmatpush1.msra.mxu0 0.0
        %5252 = vmatprep.subr.mxu0 0.0
        %5253 = vmatpush1.msra.mxu0 0.0
        %5254 = vmatprep.subr.mxu0 0.0
        %5255 = vmatpush1.msra.mxu0 0.0
        %5256 = vmatprep.subr.mxu0 0.0
        %5257 = vmatpush1.msra.mxu0 0.0
        %5258 = vmatprep.subr.mxu0 0.0
        %5259 = vmatpush1.msra.mxu0 0.0
        %5260 = vmatprep.subr.mxu0 0.0
        %5261 = vmatpush1.msra.mxu0 0.0
        %5262 = vmatprep.subr.mxu0 0.0
        %5263 = vmatpush1.msra.mxu0 0.0
        %5264 = vmatprep.subr.mxu0 0.0
        %5265 = vmatpush1.msra.mxu0 0.0
        %5266 = vmatprep.subr.mxu0 0.0
        %5267 = vmatpush1.msra.mxu0 0.0
        %5268 = vmatprep.subr.mxu0 0.0
        %5269 = vmatpush1.msra.mxu0 0.0
        %5270 = vmatprep.subr.mxu0 0.0
        %5271 = vmatpush1.msra.mxu0 0.0
        %5272 = vmatprep.subr.mxu0 0.0
        %5273 = vmatpush1.msra.mxu0 0.0
        %5274 = vmatprep.subr.mxu0 0.0
        %5275 = vmatpush1.msra.mxu0 0.0
        %5276 = vmatprep.mubr.f32.mxu0 0.0
        %v5277 = vand.u32 %v4975, 4294901760
        %v5278 = vsub.f32 %v4975, %v5277
        %5279 = vmatmul.mubr.f32.gmra.mrb[0].mxu0 %v5278
        %v5280 = vpop.f32.mrb[0].mxu0
        %v5281 = vadd.f32 %v5183, %v5280
        %v5282 = vpop.f32.mrb[0].mxu0
        %5283 = vmatprep.mubr.f32.mxu0 0.0
        %v5284 = vand.u32 %v4978, 4294901760
        %v5285 = vsub.f32 %v4978, %v5284
        %5286 = vmatmul.mubr.f32.gmra.mrb[0].mxu0 %v5285
        %v5287 = vpop.f32.mrb[0].mxu0
        %v5288 = vadd.f32 %v5189, %v5287
        %v5289 = vpop.f32.mrb[0].mxu0
        %5290 = vmatprep.mubr.f32.mxu0 0.0
        %v5291 = vand.u32 %v4981, 4294901760
        %v5292 = vsub.f32 %v4981, %v5291
        %5293 = vmatmul.mubr.f32.gmra.mrb[0].mxu0 %v5292
        %v5294 = vpop.f32.mrb[0].mxu0
        %v5295 = vadd.f32 %v5195, %v5294
        %v5296 = vpop.f32.mrb[0].mxu0
        %5297 = vmatprep.mubr.f32.mxu0 0.0
        %v5298 = vand.u32 %v4984, 4294901760
        %v5299 = vsub.f32 %v4984, %v5298
        %5300 = vmatmul.mubr.f32.gmra.mrb[0].mxu0 %v5299
        %v5301 = vpop.f32.mrb[0].mxu0
        %v5302 = vadd.f32 %v5201, %v5301
        %v5303 = vpop.f32.mrb[0].mxu0
        %5304 = vdwg.mxu0
        %5305 = vmatprep.subr.mxu0 0.0
        %v5306 = vand.u32 %v4970, 4294901760
        %5307 = vmatpush1.msra.mxu0 %v5306
        %5308 = vmatprep.subr.mxu0 0.0
        %v5309 = vand.u32 %v4971, 4294901760
        %5310 = vmatpush1.msra.mxu0 %v5309
        %5311 = vmatprep.subr.mxu0 0.0
        %v5312 = vand.u32 %v4972, 4294901760
        %5313 = vmatpush1.msra.mxu0 %v5312
        %5314 = vmatprep.subr.mxu0 0.0
        %v5315 = vand.u32 %v4973, 4294901760
        %5316 = vmatpush1.msra.mxu0 %v5315
        %5317 = vmatprep.subr.mxu0 0.0
        %5318 = vmatpush1.msra.mxu0 0.0
        %5319 = vmatprep.subr.mxu0 0.0
        %5320 = vmatpush1.msra.mxu0 0.0
        %5321 = vmatprep.subr.mxu0 0.0
        %5322 = vmatpush1.msra.mxu0 0.0
        %5323 = vmatprep.subr.mxu0 0.0
        %5324 = vmatpush1.msra.mxu0 0.0
        %5325 = vmatprep.subr.mxu0 0.0
        %5326 = vmatpush1.msra.mxu0 0.0
        %5327 = vmatprep.subr.mxu0 0.0
        %5328 = vmatpush1.msra.mxu0 0.0
        %5329 = vmatprep.subr.mxu0 0.0
        %5330 = vmatpush1.msra.mxu0 0.0
        %5331 = vmatprep.subr.mxu0 0.0
        %5332 = vmatpush1.msra.mxu0 0.0
        %5333 = vmatprep.subr.mxu0 0.0
        %5334 = vmatpush1.msra.mxu0 0.0
        %5335 = vmatprep.subr.mxu0 0.0
        %5336 = vmatpush1.msra.mxu0 0.0
        %5337 = vmatprep.subr.mxu0 0.0
        %5338 = vmatpush1.msra.mxu0 0.0
        %5339 = vmatprep.subr.mxu0 0.0
        %5340 = vmatpush1.msra.mxu0 0.0
        %5341 = vmatprep.subr.mxu0 0.0
        %5342 = vmatpush1.msra.mxu0 0.0
        %5343 = vmatprep.subr.mxu0 0.0
        %5344 = vmatpush1.msra.mxu0 0.0
        %5345 = vmatprep.subr.mxu0 0.0
        %5346 = vmatpush1.msra.mxu0 0.0
        %5347 = vmatprep.subr.mxu0 0.0
        %5348 = vmatpush1.msra.mxu0 0.0
        %5349 = vmatprep.subr.mxu0 0.0
        %5350 = vmatpush1.msra.mxu0 0.0
        %5351 = vmatprep.subr.mxu0 0.0
        %5352 = vmatpush1.msra.mxu0 0.0
        %5353 = vmatprep.subr.mxu0 0.0
        %5354 = vmatpush1.msra.mxu0 0.0
        %5355 = vmatprep.subr.mxu0 0.0
        %5356 = vmatpush1.msra.mxu0 0.0
        %5357 = vmatprep.subr.mxu0 0.0
        %5358 = vmatpush1.msra.mxu0 0.0
        %5359 = vmatprep.subr.mxu0 0.0
        %5360 = vmatpush1.msra.mxu0 0.0
        %5361 = vmatprep.subr.mxu0 0.0
        %5362 = vmatpush1.msra.mxu0 0.0
        %5363 = vmatprep.subr.mxu0 0.0
        %5364 = vmatpush1.msra.mxu0 0.0
        %5365 = vmatprep.subr.mxu0 0.0
        %5366 = vmatpush1.msra.mxu0 0.0
        %5367 = vmatprep.subr.mxu0 0.0
        %5368 = vmatpush1.msra.mxu0 0.0
        %5369 = vmatprep.subr.mxu0 0.0
        %5370 = vmatpush1.msra.mxu0 0.0
        %5371 = vmatprep.subr.mxu0 0.0
        %5372 = vmatpush1.msra.mxu0 0.0
        %5373 = vmatprep.mubr.f32.mxu0 0.0
        %v5374 = vand.u32 %v4975, 4294901760
        %v5375 = vsub.f32 %v4975, %v5374
        %v5376 = vand.u32 %v5375, 4294901760
        %5377 = vmatmul.mubr.f32.gmra.mrb[0].mxu0 %v5376
        %v5378 = vpop.f32.mrb[0].mxu0
        %v5379 = vadd.f32 %v5281, %v5378
        %v5380 = vpop.f32.mrb[0].mxu0
        %5381 = vmatprep.mubr.f32.mxu0 0.0
        %v5382 = vand.u32 %v4978, 4294901760
        %v5383 = vsub.f32 %v4978, %v5382
        %v5384 = vand.u32 %v5383, 4294901760
        %5385 = vmatmul.mubr.f32.gmra.mrb[0].mxu0 %v5384
        %v5386 = vpop.f32.mrb[0].mxu0
        %v5387 = vadd.f32 %v5288, %v5386
        %v5388 = vpop.f32.mrb[0].mxu0
        %5389 = vmatprep.mubr.f32.mxu0 0.0
        %v5390 = vand.u32 %v4981, 4294901760
        %v5391 = vsub.f32 %v4981, %v5390
        %v5392 = vand.u32 %v5391, 4294901760
        %5393 = vmatmul.mubr.f32.gmra.mrb[0].mxu0 %v5392
        %v5394 = vpop.f32.mrb[0].mxu0
        %v5395 = vadd.f32 %v5295, %v5394
        %v5396 = vpop.f32.mrb[0].mxu0
        %5397 = vmatprep.mubr.f32.mxu0 0.0
        %v5398 = vand.u32 %v4984, 4294901760
        %v5399 = vsub.f32 %v4984, %v5398
        %v5400 = vand.u32 %v5399, 4294901760
        %5401 = vmatmul.mubr.f32.gmra.mrb[0].mxu0 %v5400
        %v5402 = vpop.f32.mrb[0].mxu0
        %v5403 = vadd.f32 %v5302, %v5402
        %v5404 = vpop.f32.mrb[0].mxu0
        %5405 = vdwg.mxu0
        %5406 = vmatprep.subr.mxu0 0.0
        %v5407 = vand.u32 %v4970, 4294901760
        %v5408 = vsub.f32 %v4970, %v5407
        %v5409 = vand.u32 %v5408, 4294901760
        %5410 = vmatpush1.msra.mxu0 %v5409
        %5411 = vmatprep.subr.mxu0 0.0
        %v5412 = vand.u32 %v4971, 4294901760
        %v5413 = vsub.f32 %v4971, %v5412
        %v5414 = vand.u32 %v5413, 4294901760
        %5415 = vmatpush1.msra.mxu0 %v5414
        %5416 = vmatprep.subr.mxu0 0.0
        %v5417 = vand.u32 %v4972, 4294901760
        %v5418 = vsub.f32 %v4972, %v5417
        %v5419 = vand.u32 %v5418, 4294901760
        %5420 = vmatpush1.msra.mxu0 %v5419
        %5421 = vmatprep.subr.mxu0 0.0
        %v5422 = vand.u32 %v4973, 4294901760
        %v5423 = vsub.f32 %v4973, %v5422
        %v5424 = vand.u32 %v5423, 4294901760
        %5425 = vmatpush1.msra.mxu0 %v5424
        %5426 = vmatprep.subr.mxu0 0.0
        %5427 = vmatpush1.msra.mxu0 0.0
        %5428 = vmatprep.subr.mxu0 0.0
        %5429 = vmatpush1.msra.mxu0 0.0
        %5430 = vmatprep.subr.mxu0 0.0
        %5431 = vmatpush1.msra.mxu0 0.0
        %5432 = vmatprep.subr.mxu0 0.0
        %5433 = vmatpush1.msra.mxu0 0.0
        %5434 = vmatprep.subr.mxu0 0.0
        %5435 = vmatpush1.msra.mxu0 0.0
        %5436 = vmatprep.subr.mxu0 0.0
        %5437 = vmatpush1.msra.mxu0 0.0
        %5438 = vmatprep.subr.mxu0 0.0
        %5439 = vmatpush1.msra.mxu0 0.0
        %5440 = vmatprep.subr.mxu0 0.0
        %5441 = vmatpush1.msra.mxu0 0.0
        %5442 = vmatprep.subr.mxu0 0.0
        %5443 = vmatpush1.msra.mxu0 0.0
        %5444 = vmatprep.subr.mxu0 0.0
        %5445 = vmatpush1.msra.mxu0 0.0
        %5446 = vmatprep.subr.mxu0 0.0
        %5447 = vmatpush1.msra.mxu0 0.0
        %5448 = vmatprep.subr.mxu0 0.0
        %5449 = vmatpush1.msra.mxu0 0.0
        %5450 = vmatprep.subr.mxu0 0.0
        %5451 = vmatpush1.msra.mxu0 0.0
        %5452 = vmatprep.subr.mxu0 0.0
        %5453 = vmatpush1.msra.mxu0 0.0
        %5454 = vmatprep.subr.mxu0 0.0
        %5455 = vmatpush1.msra.mxu0 0.0
        %5456 = vmatprep.subr.mxu0 0.0
        %5457 = vmatpush1.msra.mxu0 0.0
        %5458 = vmatprep.subr.mxu0 0.0
        %5459 = vmatpush1.msra.mxu0 0.0
        %5460 = vmatprep.subr.mxu0 0.0
        %5461 = vmatpush1.msra.mxu0 0.0
        %5462 = vmatprep.subr.mxu0 0.0
        %5463 = vmatpush1.msra.mxu0 0.0
        %5464 = vmatprep.subr.mxu0 0.0
        %5465 = vmatpush1.msra.mxu0 0.0
        %5466 = vmatprep.subr.mxu0 0.0
        %5467 = vmatpush1.msra.mxu0 0.0
        %5468 = vmatprep.subr.mxu0 0.0
        %5469 = vmatpush1.msra.mxu0 0.0
        %5470 = vmatprep.subr.mxu0 0.0
        %5471 = vmatpush1.msra.mxu0 0.0
        %5472 = vmatprep.subr.mxu0 0.0
        %5473 = vmatpush1.msra.mxu0 0.0
        %5474 = vmatprep.subr.mxu0 0.0
        %5475 = vmatpush1.msra.mxu0 0.0
        %5476 = vmatprep.subr.mxu0 0.0
        %5477 = vmatpush1.msra.mxu0 0.0
        %5478 = vmatprep.subr.mxu0 0.0
        %5479 = vmatpush1.msra.mxu0 0.0
        %5480 = vmatprep.subr.mxu0 0.0
        %5481 = vmatpush1.msra.mxu0 0.0
        %5482 = vmatprep.mubr.f32.mxu0 0.0
        %v5483 = vand.u32 %v4975, 4294901760
        %5484 = vmatmul.mubr.f32.gmra.mrb[0].mxu0 %v5483
        %v5485 = vpop.f32.mrb[0].mxu0
        %v5486 = vadd.f32 %v5379, %v5485
        %v5487 = vpop.f32.mrb[0].mxu0
        %5488 = vmatprep.mubr.f32.mxu0 0.0
        %v5489 = vand.u32 %v4978, 4294901760
        %5490 = vmatmul.mubr.f32.gmra.mrb[0].mxu0 %v5489
        %v5491 = vpop.f32.mrb[0].mxu0
        %v5492 = vadd.f32 %v5387, %v5491
        %v5493 = vpop.f32.mrb[0].mxu0
        %5494 = vmatprep.mubr.f32.mxu0 0.0
        %v5495 = vand.u32 %v4981, 4294901760
        %5496 = vmatmul.mubr.f32.gmra.mrb[0].mxu0 %v5495
        %v5497 = vpop.f32.mrb[0].mxu0
        %v5498 = vadd.f32 %v5395, %v5497
        %v5499 = vpop.f32.mrb[0].mxu0
        %5500 = vmatprep.mubr.f32.mxu0 0.0
        %v5501 = vand.u32 %v4984, 4294901760
        %5502 = vmatmul.mubr.f32.gmra.mrb[0].mxu0 %v5501
        %v5503 = vpop.f32.mrb[0].mxu0
        %v5504 = vadd.f32 %v5403, %v5503
        %v5505 = vpop.f32.mrb[0].mxu0
        %5506 = vdwg.mxu0
        %5507 = vmatprep.subr.mxu0 0.0
        %v5508 = vand.u32 %v4970, 4294901760
        %5509 = vmatpush1.msra.mxu0 %v5508
        %5510 = vmatprep.subr.mxu0 0.0
        %v5511 = vand.u32 %v4971, 4294901760
        %5512 = vmatpush1.msra.mxu0 %v5511
        %5513 = vmatprep.subr.mxu0 0.0
        %v5514 = vand.u32 %v4972, 4294901760
        %5515 = vmatpush1.msra.mxu0 %v5514
        %5516 = vmatprep.subr.mxu0 0.0
        %v5517 = vand.u32 %v4973, 4294901760
        %5518 = vmatpush1.msra.mxu0 %v5517
        %5519 = vmatprep.subr.mxu0 0.0
        %5520 = vmatpush1.msra.mxu0 0.0
        %5521 = vmatprep.subr.mxu0 0.0
        %5522 = vmatpush1.msra.mxu0 0.0
        %5523 = vmatprep.subr.mxu0 0.0
        %5524 = vmatpush1.msra.mxu0 0.0
        %5525 = vmatprep.subr.mxu0 0.0
        %5526 = vmatpush1.msra.mxu0 0.0
        %5527 = vmatprep.subr.mxu0 0.0
        %5528 = vmatpush1.msra.mxu0 0.0
        %5529 = vmatprep.subr.mxu0 0.0
        %5530 = vmatpush1.msra.mxu0 0.0
        %5531 = vmatprep.subr.mxu0 0.0
        %5532 = vmatpush1.msra.mxu0 0.0
        %5533 = vmatprep.subr.mxu0 0.0
        %5534 = vmatpush1.msra.mxu0 0.0
        %5535 = vmatprep.subr.mxu0 0.0
        %5536 = vmatpush1.msra.mxu0 0.0
        %5537 = vmatprep.subr.mxu0 0.0
        %5538 = vmatpush1.msra.mxu0 0.0
        %5539 = vmatprep.subr.mxu0 0.0
        %5540 = vmatpush1.msra.mxu0 0.0
        %5541 = vmatprep.subr.mxu0 0.0
        %5542 = vmatpush1.msra.mxu0 0.0
        %5543 = vmatprep.subr.mxu0 0.0
        %5544 = vmatpush1.msra.mxu0 0.0
        %5545 = vmatprep.subr.mxu0 0.0
        %5546 = vmatpush1.msra.mxu0 0.0
        %5547 = vmatprep.subr.mxu0 0.0
        %5548 = vmatpush1.msra.mxu0 0.0
        %5549 = vmatprep.subr.mxu0 0.0
        %5550 = vmatpush1.msra.mxu0 0.0
        %5551 = vmatprep.subr.mxu0 0.0
        %5552 = vmatpush1.msra.mxu0 0.0
        %5553 = vmatprep.subr.mxu0 0.0
        %5554 = vmatpush1.msra.mxu0 0.0
        %5555 = vmatprep.subr.mxu0 0.0
        %5556 = vmatpush1.msra.mxu0 0.0
        %5557 = vmatprep.subr.mxu0 0.0
        %5558 = vmatpush1.msra.mxu0 0.0
        %5559 = vmatprep.subr.mxu0 0.0
        %5560 = vmatpush1.msra.mxu0 0.0
        %5561 = vmatprep.subr.mxu0 0.0
        %5562 = vmatpush1.msra.mxu0 0.0
        %5563 = vmatprep.subr.mxu0 0.0
        %5564 = vmatpush1.msra.mxu0 0.0
        %5565 = vmatprep.subr.mxu0 0.0
        %5566 = vmatpush1.msra.mxu0 0.0
        %5567 = vmatprep.subr.mxu0 0.0
        %5568 = vmatpush1.msra.mxu0 0.0
        %5569 = vmatprep.subr.mxu0 0.0
        %5570 = vmatpush1.msra.mxu0 0.0
        %5571 = vmatprep.subr.mxu0 0.0
        %5572 = vmatpush1.msra.mxu0 0.0
        %5573 = vmatprep.subr.mxu0 0.0
        %5574 = vmatpush1.msra.mxu0 0.0
        %5575 = vmatprep.mubr.f32.mxu0 0.0
        %v5576 = vand.u32 %v4975, 4294901760
        %5577 = vmatmul.mubr.f32.gmra.mrb[0].mxu0 %v5576
        %v5578 = vpop.f32.mrb[0].mxu0
        %v5579 = vadd.f32 %v5486, %v5578
        %v5580 = vpop.f32.mrb[0].mxu0
        %5581 = vmatprep.mubr.f32.mxu0 0.0
        %v5582 = vand.u32 %v4978, 4294901760
        %5583 = vmatmul.mubr.f32.gmra.mrb[0].mxu0 %v5582
        %v5584 = vpop.f32.mrb[0].mxu0
        %v5585 = vadd.f32 %v5492, %v5584
        %v5586 = vpop.f32.mrb[0].mxu0
        %5587 = vmatprep.mubr.f32.mxu0 0.0
        %v5588 = vand.u32 %v4981, 4294901760
        %5589 = vmatmul.mubr.f32.gmra.mrb[0].mxu0 %v5588
        %v5590 = vpop.f32.mrb[0].mxu0
        %v5591 = vadd.f32 %v5498, %v5590
        %v5592 = vpop.f32.mrb[0].mxu0
        %5593 = vmatprep.mubr.f32.mxu0 0.0
        %v5594 = vand.u32 %v4984, 4294901760
        %5595 = vmatmul.mubr.f32.gmra.mrb[0].mxu0 %v5594
        %v5596 = vpop.f32.mrb[0].mxu0
        %v5597 = vadd.f32 %v5504, %v5596
        %v5598 = vpop.f32.mrb[0].mxu0
        %5599 = vdwg.mxu0
        %v5600 = vadd.f32 %v3895, %v5579
        %v5601 = vadd.f32 %v3896, %v5585
        %v5602 = vadd.f32 %v3897, %v5591
        %v5603 = vadd.f32 %v3898, %v5597
        %v5604 = vtanh.pop %v5600
        %v5605 = vtanh.pop %v5601
        %v5606 = vtanh.pop %v5602
        %v5607 = vtanh.pop %v5603
        %v5608 = vsub.f32 1.0, %v4954
        %v5609 = vsub.f32 1.0, %v4955
        %v5610 = vsub.f32 1.0, %v4956
        %v5611 = vsub.f32 1.0, %v4957
        %v5612 = vmul.f32 %v5608, %v5604
        %v5613 = vmul.f32 %v5609, %v5605
        %v5614 = vmul.f32 %v5610, %v5606
        %v5615 = vmul.f32 %v5611, %v5607
        %v5616 = vmul.f32 %v4946, %v3931
        %v5617 = vmul.f32 %v4947, %v3932
        %v5618 = vmul.f32 %v4948, %v3933
        %v5619 = vmul.f32 %v4949, %v3934
        %v5620 = vadd.f32 %v5612, %v5616
        %v5621 = vadd.f32 %v5613, %v5617
        %v5622 = vadd.f32 %v5614, %v5618
        %v5623 = vadd.f32 %v5615, %v5619
        %s5624 = scalar_lea.vmem %s5, 96
        %v5625 = vld [vmem:[%s5624] sm:$0xff]
        %v5626 = vld [vmem:[%s5624 + $0x8] sm:$0xff]
        %v5627 = vld [vmem:[%s5624 + $0x10] sm:$0xff]
        %v5628 = vld [vmem:[%s5624 + $0x18] sm:$0xff]
        %v5629 = vld [vmem:[%s5624 + $0x20] sm:$0xff]
        %v5630 = vld [vmem:[%s5624 + $0x28] sm:$0xff]
        %v5631 = vld [vmem:[%s5624 + $0x30] sm:$0xff]
        %v5632 = vld [vmem:[%s5624 + $0x38] sm:$0xff]
        %v5633 = vld [vmem:[%s5624 + $0x40] sm:$0xff]
        %v5634 = vld [vmem:[%s5624 + $0x48] sm:$0xff]
        %v5635 = vld [vmem:[%s5624 + $0x50] sm:$0xff]
        %v5636 = vld [vmem:[%s5624 + $0x58] sm:$0xff]
        %v5638 = vsel %vm3947, %v5625, 0
        %v5641 = vsel %vm3947, %v5626, 0
        %v5644 = vsel %vm3947, %v5627, 0
        %v5647 = vsel %vm3947, %v5628, 0
        %v5650 = vsel %vm3947, %v5629, 0
        %v5653 = vsel %vm3947, %v5630, 0
        %v5656 = vsel %vm3947, %v5631, 0
        %v5659 = vsel %vm3947, %v5632, 0
        %v5662 = vsel %vm3947, %v5633, 0
        %v5665 = vsel %vm3947, %v5634, 0
        %v5668 = vsel %vm3947, %v5635, 0
        %v5671 = vsel %vm3947, %v5636, 0
        %5673 = vmatprep.subr.mxu0 0.0
        %v5674 = vand.u32 %v5620, 4294901760
        %5675 = vmatpush1.msra.mxu0 %v5674
        %5676 = vmatprep.subr.mxu0 0.0
        %v5677 = vand.u32 %v5621, 4294901760
        %5678 = vmatpush1.msra.mxu0 %v5677
        %5679 = vmatprep.subr.mxu0 0.0
        %v5680 = vand.u32 %v5622, 4294901760
        %5681 = vmatpush1.msra.mxu0 %v5680
        %5682 = vmatprep.subr.mxu0 0.0
        %v5683 = vand.u32 %v5623, 4294901760
        %5684 = vmatpush1.msra.mxu0 %v5683
        %5685 = vmatprep.subr.mxu0 0.0
        %5686 = vmatpush1.msra.mxu0 0.0
        %5687 = vmatprep.subr.mxu0 0.0
        %5688 = vmatpush1.msra.mxu0 0.0
        %5689 = vmatprep.subr.mxu0 0.0
        %5690 = vmatpush1.msra.mxu0 0.0
        %5691 = vmatprep.subr.mxu0 0.0
        %5692 = vmatpush1.msra.mxu0 0.0
        %5693 = vmatprep.subr.mxu0 0.0
        %5694 = vmatpush1.msra.mxu0 0.0
        %5695 = vmatprep.subr.mxu0 0.0
        %5696 = vmatpush1.msra.mxu0 0.0
        %5697 = vmatprep.subr.mxu0 0.0
        %5698 = vmatpush1.msra.mxu0 0.0
        %5699 = vmatprep.subr.mxu0 0.0
        %5700 = vmatpush1.msra.mxu0 0.0
        %5701 = vmatprep.subr.mxu0 0.0
        %5702 = vmatpush1.msra.mxu0 0.0
        %5703 = vmatprep.subr.mxu0 0.0
        %5704 = vmatpush1.msra.mxu0 0.0
        %5705 = vmatprep.subr.mxu0 0.0
        %5706 = vmatpush1.msra.mxu0 0.0
        %5707 = vmatprep.subr.mxu0 0.0
        %5708 = vmatpush1.msra.mxu0 0.0
        %5709 = vmatprep.subr.mxu0 0.0
        %5710 = vmatpush1.msra.mxu0 0.0
        %5711 = vmatprep.subr.mxu0 0.0
        %5712 = vmatpush1.msra.mxu0 0.0
        %5713 = vmatprep.subr.mxu0 0.0
        %5714 = vmatpush1.msra.mxu0 0.0
        %5715 = vmatprep.subr.mxu0 0.0
        %5716 = vmatpush1.msra.mxu0 0.0
        %5717 = vmatprep.subr.mxu0 0.0
        %5718 = vmatpush1.msra.mxu0 0.0
        %5719 = vmatprep.subr.mxu0 0.0
        %5720 = vmatpush1.msra.mxu0 0.0
        %5721 = vmatprep.subr.mxu0 0.0
        %5722 = vmatpush1.msra.mxu0 0.0
        %5723 = vmatprep.subr.mxu0 0.0
        %5724 = vmatpush1.msra.mxu0 0.0
        %5725 = vmatprep.subr.mxu0 0.0
        %5726 = vmatpush1.msra.mxu0 0.0
        %5727 = vmatprep.subr.mxu0 0.0
        %5728 = vmatpush1.msra.mxu0 0.0
        %5729 = vmatprep.subr.mxu0 0.0
        %5730 = vmatpush1.msra.mxu0 0.0
        %5731 = vmatprep.subr.mxu0 0.0
        %5732 = vmatpush1.msra.mxu0 0.0
        %5733 = vmatprep.subr.mxu0 0.0
        %5734 = vmatpush1.msra.mxu0 0.0
        %5735 = vmatprep.subr.mxu0 0.0
        %5736 = vmatpush1.msra.mxu0 0.0
        %5737 = vmatprep.subr.mxu0 0.0
        %5738 = vmatpush1.msra.mxu0 0.0
        %5739 = vmatprep.subr.mxu0 0.0
        %5740 = vmatpush1.msra.mxu0 0.0
        %5741 = vmatprep.mubr.f32.mxu0 0.0
        %v5742 = vand.u32 %v5638, 4294901760
        %v5743 = vsub.f32 %v5638, %v5742
        %v5744 = vand.u32 %v5743, 4294901760
        %v5745 = vsub.f32 %v5743, %v5744
        %v5746 = vand.u32 %v5745, 4294901760
        %5747 = vmatmul.mubr.f32.gmra.mrb[0].mxu0 %v5746
        %v5748 = vpop.f32.mrb[0].mxu0
        %v5749 = vadd.f32 0.0, %v5748
        %v5750 = vpop.f32.mrb[0].mxu0
        %5751 = vmatprep.mubr.f32.mxu0 0.0
        %v5752 = vand.u32 %v5641, 4294901760
        %v5753 = vsub.f32 %v5641, %v5752
        %v5754 = vand.u32 %v5753, 4294901760
        %v5755 = vsub.f32 %v5753, %v5754
        %v5756 = vand.u32 %v5755, 4294901760
        %5757 = vmatmul.mubr.f32.gmra.mrb[0].mxu0 %v5756
        %v5758 = vpop.f32.mrb[0].mxu0
        %v5759 = vadd.f32 0.0, %v5758
        %v5760 = vpop.f32.mrb[0].mxu0
        %5761 = vmatprep.mubr.f32.mxu0 0.0
        %v5762 = vand.u32 %v5644, 4294901760
        %v5763 = vsub.f32 %v5644, %v5762
        %v5764 = vand.u32 %v5763, 4294901760
        %v5765 = vsub.f32 %v5763, %v5764
        %v5766 = vand.u32 %v5765, 4294901760
        %5767 = vmatmul.mubr.f32.gmra.mrb[0].mxu0 %v5766
        %v5768 = vpop.f32.mrb[0].mxu0
        %v5769 = vadd.f32 0.0, %v5768
        %v5770 = vpop.f32.mrb[0].mxu0
        %5771 = vmatprep.mubr.f32.mxu0 0.0
        %v5772 = vand.u32 %v5647, 4294901760
        %v5773 = vsub.f32 %v5647, %v5772
        %v5774 = vand.u32 %v5773, 4294901760
        %v5775 = vsub.f32 %v5773, %v5774
        %v5776 = vand.u32 %v5775, 4294901760
        %5777 = vmatmul.mubr.f32.gmra.mrb[0].mxu0 %v5776
        %v5778 = vpop.f32.mrb[0].mxu0
        %v5779 = vadd.f32 0.0, %v5778
        %v5780 = vpop.f32.mrb[0].mxu0
        %5781 = vmatprep.mubr.f32.mxu0 0.0
        %v5782 = vand.u32 %v5650, 4294901760
        %v5783 = vsub.f32 %v5650, %v5782
        %v5784 = vand.u32 %v5783, 4294901760
        %v5785 = vsub.f32 %v5783, %v5784
        %v5786 = vand.u32 %v5785, 4294901760
        %5787 = vmatmul.mubr.f32.gmra.mrb[0].mxu0 %v5786
        %v5788 = vpop.f32.mrb[0].mxu0
        %v5789 = vadd.f32 0.0, %v5788
        %v5790 = vpop.f32.mrb[0].mxu0
        %5791 = vmatprep.mubr.f32.mxu0 0.0
        %v5792 = vand.u32 %v5653, 4294901760
        %v5793 = vsub.f32 %v5653, %v5792
        %v5794 = vand.u32 %v5793, 4294901760
        %v5795 = vsub.f32 %v5793, %v5794
        %v5796 = vand.u32 %v5795, 4294901760
        %5797 = vmatmul.mubr.f32.gmra.mrb[0].mxu0 %v5796
        %v5798 = vpop.f32.mrb[0].mxu0
        %v5799 = vadd.f32 0.0, %v5798
        %v5800 = vpop.f32.mrb[0].mxu0
        %5801 = vmatprep.mubr.f32.mxu0 0.0
        %v5802 = vand.u32 %v5656, 4294901760
        %v5803 = vsub.f32 %v5656, %v5802
        %v5804 = vand.u32 %v5803, 4294901760
        %v5805 = vsub.f32 %v5803, %v5804
        %v5806 = vand.u32 %v5805, 4294901760
        %5807 = vmatmul.mubr.f32.gmra.mrb[0].mxu0 %v5806
        %v5808 = vpop.f32.mrb[0].mxu0
        %v5809 = vadd.f32 0.0, %v5808
        %v5810 = vpop.f32.mrb[0].mxu0
        %5811 = vmatprep.mubr.f32.mxu0 0.0
        %v5812 = vand.u32 %v5659, 4294901760
        %v5813 = vsub.f32 %v5659, %v5812
        %v5814 = vand.u32 %v5813, 4294901760
        %v5815 = vsub.f32 %v5813, %v5814
        %v5816 = vand.u32 %v5815, 4294901760
        %5817 = vmatmul.mubr.f32.gmra.mrb[0].mxu0 %v5816
        %v5818 = vpop.f32.mrb[0].mxu0
        %v5819 = vadd.f32 0.0, %v5818
        %v5820 = vpop.f32.mrb[0].mxu0
        %5821 = vmatprep.mubr.f32.mxu0 0.0
        %v5822 = vand.u32 %v5662, 4294901760
        %v5823 = vsub.f32 %v5662, %v5822
        %v5824 = vand.u32 %v5823, 4294901760
        %v5825 = vsub.f32 %v5823, %v5824
        %v5826 = vand.u32 %v5825, 4294901760
        %5827 = vmatmul.mubr.f32.gmra.mrb[0].mxu0 %v5826
        %v5828 = vpop.f32.mrb[0].mxu0
        %v5829 = vadd.f32 0.0, %v5828
        %v5830 = vpop.f32.mrb[0].mxu0
        %5831 = vmatprep.mubr.f32.mxu0 0.0
        %v5832 = vand.u32 %v5665, 4294901760
        %v5833 = vsub.f32 %v5665, %v5832
        %v5834 = vand.u32 %v5833, 4294901760
        %v5835 = vsub.f32 %v5833, %v5834
        %v5836 = vand.u32 %v5835, 4294901760
        %5837 = vmatmul.mubr.f32.gmra.mrb[0].mxu0 %v5836
        %v5838 = vpop.f32.mrb[0].mxu0
        %v5839 = vadd.f32 0.0, %v5838
        %v5840 = vpop.f32.mrb[0].mxu0
        %5841 = vmatprep.mubr.f32.mxu0 0.0
        %v5842 = vand.u32 %v5668, 4294901760
        %v5843 = vsub.f32 %v5668, %v5842
        %v5844 = vand.u32 %v5843, 4294901760
        %v5845 = vsub.f32 %v5843, %v5844
        %v5846 = vand.u32 %v5845, 4294901760
        %5847 = vmatmul.mubr.f32.gmra.mrb[0].mxu0 %v5846
        %v5848 = vpop.f32.mrb[0].mxu0
        %v5849 = vadd.f32 0.0, %v5848
        %v5850 = vpop.f32.mrb[0].mxu0
        %5851 = vmatprep.mubr.f32.mxu0 0.0
        %v5852 = vand.u32 %v5671, 4294901760
        %v5853 = vsub.f32 %v5671, %v5852
        %v5854 = vand.u32 %v5853, 4294901760
        %v5855 = vsub.f32 %v5853, %v5854
        %v5856 = vand.u32 %v5855, 4294901760
        %5857 = vmatmul.mubr.f32.gmra.mrb[0].mxu0 %v5856
        %v5858 = vpop.f32.mrb[0].mxu0
        %v5859 = vadd.f32 0.0, %v5858
        %v5860 = vpop.f32.mrb[0].mxu0
        %5861 = vdwg.mxu0
        %5862 = vmatprep.subr.mxu0 0.0
        %v5863 = vand.u32 %v5620, 4294901760
        %v5864 = vsub.f32 %v5620, %v5863
        %v5865 = vand.u32 %v5864, 4294901760
        %v5866 = vsub.f32 %v5864, %v5865
        %v5867 = vand.u32 %v5866, 4294901760
        %5868 = vmatpush1.msra.mxu0 %v5867
        %5869 = vmatprep.subr.mxu0 0.0
        %v5870 = vand.u32 %v5621, 4294901760
        %v5871 = vsub.f32 %v5621, %v5870
        %v5872 = vand.u32 %v5871, 4294901760
        %v5873 = vsub.f32 %v5871, %v5872
        %v5874 = vand.u32 %v5873, 4294901760
        %5875 = vmatpush1.msra.mxu0 %v5874
        %5876 = vmatprep.subr.mxu0 0.0
        %v5877 = vand.u32 %v5622, 4294901760
        %v5878 = vsub.f32 %v5622, %v5877
        %v5879 = vand.u32 %v5878, 4294901760
        %v5880 = vsub.f32 %v5878, %v5879
        %v5881 = vand.u32 %v5880, 4294901760
        %5882 = vmatpush1.msra.mxu0 %v5881
        %5883 = vmatprep.subr.mxu0 0.0
        %v5884 = vand.u32 %v5623, 4294901760
        %v5885 = vsub.f32 %v5623, %v5884
        %v5886 = vand.u32 %v5885, 4294901760
        %v5887 = vsub.f32 %v5885, %v5886
        %v5888 = vand.u32 %v5887, 4294901760
        %5889 = vmatpush1.msra.mxu0 %v5888
        %5890 = vmatprep.subr.mxu0 0.0
        %5891 = vmatpush1.msra.mxu0 0.0
        %5892 = vmatprep.subr.mxu0 0.0
        %5893 = vmatpush1.msra.mxu0 0.0
        %5894 = vmatprep.subr.mxu0 0.0
        %5895 = vmatpush1.msra.mxu0 0.0
        %5896 = vmatprep.subr.mxu0 0.0
        %5897 = vmatpush1.msra.mxu0 0.0
        %5898 = vmatprep.subr.mxu0 0.0
        %5899 = vmatpush1.msra.mxu0 0.0
        %5900 = vmatprep.subr.mxu0 0.0
        %5901 = vmatpush1.msra.mxu0 0.0
        %5902 = vmatprep.subr.mxu0 0.0
        %5903 = vmatpush1.msra.mxu0 0.0
        %5904 = vmatprep.subr.mxu0 0.0
        %5905 = vmatpush1.msra.mxu0 0.0
        %5906 = vmatprep.subr.mxu0 0.0
        %5907 = vmatpush1.msra.mxu0 0.0
        %5908 = vmatprep.subr.mxu0 0.0
        %5909 = vmatpush1.msra.mxu0 0.0
        %5910 = vmatprep.subr.mxu0 0.0
        %5911 = vmatpush1.msra.mxu0 0.0
        %5912 = vmatprep.subr.mxu0 0.0
        %5913 = vmatpush1.msra.mxu0 0.0
        %5914 = vmatprep.subr.mxu0 0.0
        %5915 = vmatpush1.msra.mxu0 0.0
        %5916 = vmatprep.subr.mxu0 0.0
        %5917 = vmatpush1.msra.mxu0 0.0
        %5918 = vmatprep.subr.mxu0 0.0
        %5919 = vmatpush1.msra.mxu0 0.0
        %5920 = vmatprep.subr.mxu0 0.0
        %5921 = vmatpush1.msra.mxu0 0.0
        %5922 = vmatprep.subr.mxu0 0.0
        %5923 = vmatpush1.msra.mxu0 0.0
        %5924 = vmatprep.subr.mxu0 0.0
        %5925 = vmatpush1.msra.mxu0 0.0
        %5926 = vmatprep.subr.mxu0 0.0
        %5927 = vmatpush1.msra.mxu0 0.0
        %5928 = vmatprep.subr.mxu0 0.0
        %5929 = vmatpush1.msra.mxu0 0.0
        %5930 = vmatprep.subr.mxu0 0.0
        %5931 = vmatpush1.msra.mxu0 0.0
        %5932 = vmatprep.subr.mxu0 0.0
        %5933 = vmatpush1.msra.mxu0 0.0
        %5934 = vmatprep.subr.mxu0 0.0
        %5935 = vmatpush1.msra.mxu0 0.0
        %5936 = vmatprep.subr.mxu0 0.0
        %5937 = vmatpush1.msra.mxu0 0.0
        %5938 = vmatprep.subr.mxu0 0.0
        %5939 = vmatpush1.msra.mxu0 0.0
        %5940 = vmatprep.subr.mxu0 0.0
        %5941 = vmatpush1.msra.mxu0 0.0
        %5942 = vmatprep.subr.mxu0 0.0
        %5943 = vmatpush1.msra.mxu0 0.0
        %5944 = vmatprep.subr.mxu0 0.0
        %5945 = vmatpush1.msra.mxu0 0.0
        %5946 = vmatprep.mubr.f32.mxu0 0.0
        %v5947 = vand.u32 %v5638, 4294901760
        %5948 = vmatmul.mubr.f32.gmra.mrb[0].mxu0 %v5947
        %v5949 = vpop.f32.mrb[0].mxu0
        %v5950 = vadd.f32 %v5749, %v5949
        %v5951 = vpop.f32.mrb[0].mxu0
        %5952 = vmatprep.mubr.f32.mxu0 0.0
        %v5953 = vand.u32 %v5641, 4294901760
        %5954 = vmatmul.mubr.f32.gmra.mrb[0].mxu0 %v5953
        %v5955 = vpop.f32.mrb[0].mxu0
        %v5956 = vadd.f32 %v5759, %v5955
        %v5957 = vpop.f32.mrb[0].mxu0
        %5958 = vmatprep.mubr.f32.mxu0 0.0
        %v5959 = vand.u32 %v5644, 4294901760
        %5960 = vmatmul.mubr.f32.gmra.mrb[0].mxu0 %v5959
        %v5961 = vpop.f32.mrb[0].mxu0
        %v5962 = vadd.f32 %v5769, %v5961
        %v5963 = vpop.f32.mrb[0].mxu0
        %5964 = vmatprep.mubr.f32.mxu0 0.0
        %v5965 = vand.u32 %v5647, 4294901760
        %5966 = vmatmul.mubr.f32.gmra.mrb[0].mxu0 %v5965
        %v5967 = vpop.f32.mrb[0].mxu0
        %v5968 = vadd.f32 %v5779, %v5967
        %v5969 = vpop.f32.mrb[0].mxu0
        %5970 = vmatprep.mubr.f32.mxu0 0.0
        %v5971 = vand.u32 %v5650, 4294901760
        %5972 = vmatmul.mubr.f32.gmra.mrb[0].mxu0 %v5971
        %v5973 = vpop.f32.mrb[0].mxu0
        %v5974 = vadd.f32 %v5789, %v5973
        %v5975 = vpop.f32.mrb[0].mxu0
        %5976 = vmatprep.mubr.f32.mxu0 0.0
        %v5977 = vand.u32 %v5653, 4294901760
        %5978 = vmatmul.mubr.f32.gmra.mrb[0].mxu0 %v5977
        %v5979 = vpop.f32.mrb[0].mxu0
        %v5980 = vadd.f32 %v5799, %v5979
        %v5981 = vpop.f32.mrb[0].mxu0
        %5982 = vmatprep.mubr.f32.mxu0 0.0
        %v5983 = vand.u32 %v5656, 4294901760
        %5984 = vmatmul.mubr.f32.gmra.mrb[0].mxu0 %v5983
        %v5985 = vpop.f32.mrb[0].mxu0
        %v5986 = vadd.f32 %v5809, %v5985
        %v5987 = vpop.f32.mrb[0].mxu0
        %5988 = vmatprep.mubr.f32.mxu0 0.0
        %v5989 = vand.u32 %v5659, 4294901760
        %5990 = vmatmul.mubr.f32.gmra.mrb[0].mxu0 %v5989
        %v5991 = vpop.f32.mrb[0].mxu0
        %v5992 = vadd.f32 %v5819, %v5991
        %v5993 = vpop.f32.mrb[0].mxu0
        %5994 = vmatprep.mubr.f32.mxu0 0.0
        %v5995 = vand.u32 %v5662, 4294901760
        %5996 = vmatmul.mubr.f32.gmra.mrb[0].mxu0 %v5995
        %v5997 = vpop.f32.mrb[0].mxu0
        %v5998 = vadd.f32 %v5829, %v5997
        %v5999 = vpop.f32.mrb[0].mxu0
        %6000 = vmatprep.mubr.f32.mxu0 0.0
        %v6001 = vand.u32 %v5665, 4294901760
        %6002 = vmatmul.mubr.f32.gmra.mrb[0].mxu0 %v6001
        %v6003 = vpop.f32.mrb[0].mxu0
        %v6004 = vadd.f32 %v5839, %v6003
        %v6005 = vpop.f32.mrb[0].mxu0
        %6006 = vmatprep.mubr.f32.mxu0 0.0
        %v6007 = vand.u32 %v5668, 4294901760
        %6008 = vmatmul.mubr.f32.gmra.mrb[0].mxu0 %v6007
        %v6009 = vpop.f32.mrb[0].mxu0
        %v6010 = vadd.f32 %v5849, %v6009
        %v6011 = vpop.f32.mrb[0].mxu0
        %6012 = vmatprep.mubr.f32.mxu0 0.0
        %v6013 = vand.u32 %v5671, 4294901760
        %6014 = vmatmul.mubr.f32.gmra.mrb[0].mxu0 %v6013
        %v6015 = vpop.f32.mrb[0].mxu0
        %v6016 = vadd.f32 %v5859, %v6015
        %v6017 = vpop.f32.mrb[0].mxu0
        %6018 = vdwg.mxu0
        %6019 = vmatprep.subr.mxu0 0.0
        %v6020 = vand.u32 %v5620, 4294901760
        %v6021 = vsub.f32 %v5620, %v6020
        %6022 = vmatpush1.msra.mxu0 %v6021
        %6023 = vmatprep.subr.mxu0 0.0
        %v6024 = vand.u32 %v5621, 4294901760
        %v6025 = vsub.f32 %v5621, %v6024
        %6026 = vmatpush1.msra.mxu0 %v6025
        %6027 = vmatprep.subr.mxu0 0.0
        %v6028 = vand.u32 %v5622, 4294901760
        %v6029 = vsub.f32 %v5622, %v6028
        %6030 = vmatpush1.msra.mxu0 %v6029
        %6031 = vmatprep.subr.mxu0 0.0
        %v6032 = vand.u32 %v5623, 4294901760
        %v6033 = vsub.f32 %v5623, %v6032
        %6034 = vmatpush1.msra.mxu0 %v6033
        %6035 = vmatprep.subr.mxu0 0.0
        %6036 = vmatpush1.msra.mxu0 0.0
        %6037 = vmatprep.subr.mxu0 0.0
        %6038 = vmatpush1.msra.mxu0 0.0
        %6039 = vmatprep.subr.mxu0 0.0
        %6040 = vmatpush1.msra.mxu0 0.0
        %6041 = vmatprep.subr.mxu0 0.0
        %6042 = vmatpush1.msra.mxu0 0.0
        %6043 = vmatprep.subr.mxu0 0.0
        %6044 = vmatpush1.msra.mxu0 0.0
        %6045 = vmatprep.subr.mxu0 0.0
        %6046 = vmatpush1.msra.mxu0 0.0
        %6047 = vmatprep.subr.mxu0 0.0
        %6048 = vmatpush1.msra.mxu0 0.0
        %6049 = vmatprep.subr.mxu0 0.0
        %6050 = vmatpush1.msra.mxu0 0.0
        %6051 = vmatprep.subr.mxu0 0.0
        %6052 = vmatpush1.msra.mxu0 0.0
        %6053 = vmatprep.subr.mxu0 0.0
        %6054 = vmatpush1.msra.mxu0 0.0
        %6055 = vmatprep.subr.mxu0 0.0
        %6056 = vmatpush1.msra.mxu0 0.0
        %6057 = vmatprep.subr.mxu0 0.0
        %6058 = vmatpush1.msra.mxu0 0.0
        %6059 = vmatprep.subr.mxu0 0.0
        %6060 = vmatpush1.msra.mxu0 0.0
        %6061 = vmatprep.subr.mxu0 0.0
        %6062 = vmatpush1.msra.mxu0 0.0
        %6063 = vmatprep.subr.mxu0 0.0
        %6064 = vmatpush1.msra.mxu0 0.0
        %6065 = vmatprep.subr.mxu0 0.0
        %6066 = vmatpush1.msra.mxu0 0.0
        %6067 = vmatprep.subr.mxu0 0.0
        %6068 = vmatpush1.msra.mxu0 0.0
        %6069 = vmatprep.subr.mxu0 0.0
        %6070 = vmatpush1.msra.mxu0 0.0
        %6071 = vmatprep.subr.mxu0 0.0
        %6072 = vmatpush1.msra.mxu0 0.0
        %6073 = vmatprep.subr.mxu0 0.0
        %6074 = vmatpush1.msra.mxu0 0.0
        %6075 = vmatprep.subr.mxu0 0.0
        %6076 = vmatpush1.msra.mxu0 0.0
        %6077 = vmatprep.subr.mxu0 0.0
        %6078 = vmatpush1.msra.mxu0 0.0
        %6079 = vmatprep.subr.mxu0 0.0
        %6080 = vmatpush1.msra.mxu0 0.0
        %6081 = vmatprep.subr.mxu0 0.0
        %6082 = vmatpush1.msra.mxu0 0.0
        %6083 = vmatprep.subr.mxu0 0.0
        %6084 = vmatpush1.msra.mxu0 0.0
        %6085 = vmatprep.subr.mxu0 0.0
        %6086 = vmatpush1.msra.mxu0 0.0
        %6087 = vmatprep.subr.mxu0 0.0
        %6088 = vmatpush1.msra.mxu0 0.0
        %6089 = vmatprep.subr.mxu0 0.0
        %6090 = vmatpush1.msra.mxu0 0.0
        %6091 = vmatprep.mubr.f32.mxu0 0.0
        %v6092 = vand.u32 %v5638, 4294901760
        %v6093 = vsub.f32 %v5638, %v6092
        %6094 = vmatmul.mubr.f32.gmra.mrb[0].mxu0 %v6093
        %v6095 = vpop.f32.mrb[0].mxu0
        %v6096 = vadd.f32 %v5950, %v6095
        %v6097 = vpop.f32.mrb[0].mxu0
        %6098 = vmatprep.mubr.f32.mxu0 0.0
        %v6099 = vand.u32 %v5641, 4294901760
        %v6100 = vsub.f32 %v5641, %v6099
        %6101 = vmatmul.mubr.f32.gmra.mrb[0].mxu0 %v6100
        %v6102 = vpop.f32.mrb[0].mxu0
        %v6103 = vadd.f32 %v5956, %v6102
        %v6104 = vpop.f32.mrb[0].mxu0
        %6105 = vmatprep.mubr.f32.mxu0 0.0
        %v6106 = vand.u32 %v5644, 4294901760
        %v6107 = vsub.f32 %v5644, %v6106
        %6108 = vmatmul.mubr.f32.gmra.mrb[0].mxu0 %v6107
        %v6109 = vpop.f32.mrb[0].mxu0
        %v6110 = vadd.f32 %v5962, %v6109
        %v6111 = vpop.f32.mrb[0].mxu0
        %6112 = vmatprep.mubr.f32.mxu0 0.0
        %v6113 = vand.u32 %v5647, 4294901760
        %v6114 = vsub.f32 %v5647, %v6113
        %6115 = vmatmul.mubr.f32.gmra.mrb[0].mxu0 %v6114
        %v6116 = vpop.f32.mrb[0].mxu0
        %v6117 = vadd.f32 %v5968, %v6116
        %v6118 = vpop.f32.mrb[0].mxu0
        %6119 = vmatprep.mubr.f32.mxu0 0.0
        %v6120 = vand.u32 %v5650, 4294901760
        %v6121 = vsub.f32 %v5650, %v6120
        %6122 = vmatmul.mubr.f32.gmra.mrb[0].mxu0 %v6121
        %v6123 = vpop.f32.mrb[0].mxu0
        %v6124 = vadd.f32 %v5974, %v6123
        %v6125 = vpop.f32.mrb[0].mxu0
        %6126 = vmatprep.mubr.f32.mxu0 0.0
        %v6127 = vand.u32 %v5653, 4294901760
        %v6128 = vsub.f32 %v5653, %v6127
        %6129 = vmatmul.mubr.f32.gmra.mrb[0].mxu0 %v6128
        %v6130 = vpop.f32.mrb[0].mxu0
        %v6131 = vadd.f32 %v5980, %v6130
        %v6132 = vpop.f32.mrb[0].mxu0
        %6133 = vmatprep.mubr.f32.mxu0 0.0
        %v6134 = vand.u32 %v5656, 4294901760
        %v6135 = vsub.f32 %v5656, %v6134
        %6136 = vmatmul.mubr.f32.gmra.mrb[0].mxu0 %v6135
        %v6137 = vpop.f32.mrb[0].mxu0
        %v6138 = vadd.f32 %v5986, %v6137
        %v6139 = vpop.f32.mrb[0].mxu0
        %6140 = vmatprep.mubr.f32.mxu0 0.0
        %v6141 = vand.u32 %v5659, 4294901760
        %v6142 = vsub.f32 %v5659, %v6141
        %6143 = vmatmul.mubr.f32.gmra.mrb[0].mxu0 %v6142
        %v6144 = vpop.f32.mrb[0].mxu0
        %v6145 = vadd.f32 %v5992, %v6144
        %v6146 = vpop.f32.mrb[0].mxu0
        %6147 = vmatprep.mubr.f32.mxu0 0.0
        %v6148 = vand.u32 %v5662, 4294901760
        %v6149 = vsub.f32 %v5662, %v6148
        %6150 = vmatmul.mubr.f32.gmra.mrb[0].mxu0 %v6149
        %v6151 = vpop.f32.mrb[0].mxu0
        %v6152 = vadd.f32 %v5998, %v6151
        %v6153 = vpop.f32.mrb[0].mxu0
        %6154 = vmatprep.mubr.f32.mxu0 0.0
        %v6155 = vand.u32 %v5665, 4294901760
        %v6156 = vsub.f32 %v5665, %v6155
        %6157 = vmatmul.mubr.f32.gmra.mrb[0].mxu0 %v6156
        %v6158 = vpop.f32.mrb[0].mxu0
        %v6159 = vadd.f32 %v6004, %v6158
        %v6160 = vpop.f32.mrb[0].mxu0
        %6161 = vmatprep.mubr.f32.mxu0 0.0
        %v6162 = vand.u32 %v5668, 4294901760
        %v6163 = vsub.f32 %v5668, %v6162
        %6164 = vmatmul.mubr.f32.gmra.mrb[0].mxu0 %v6163
        %v6165 = vpop.f32.mrb[0].mxu0
        %v6166 = vadd.f32 %v6010, %v6165
        %v6167 = vpop.f32.mrb[0].mxu0
        %6168 = vmatprep.mubr.f32.mxu0 0.0
        %v6169 = vand.u32 %v5671, 4294901760
        %v6170 = vsub.f32 %v5671, %v6169
        %6171 = vmatmul.mubr.f32.gmra.mrb[0].mxu0 %v6170
        %v6172 = vpop.f32.mrb[0].mxu0
        %v6173 = vadd.f32 %v6016, %v6172
        %v6174 = vpop.f32.mrb[0].mxu0
        %6175 = vdwg.mxu0
        %6176 = vmatprep.subr.mxu0 0.0
        %v6177 = vand.u32 %v5620, 4294901760
        %6178 = vmatpush1.msra.mxu0 %v6177
        %6179 = vmatprep.subr.mxu0 0.0
        %v6180 = vand.u32 %v5621, 4294901760
        %6181 = vmatpush1.msra.mxu0 %v6180
        %6182 = vmatprep.subr.mxu0 0.0
        %v6183 = vand.u32 %v5622, 4294901760
        %6184 = vmatpush1.msra.mxu0 %v6183
        %6185 = vmatprep.subr.mxu0 0.0
        %v6186 = vand.u32 %v5623, 4294901760
        %6187 = vmatpush1.msra.mxu0 %v6186
        %6188 = vmatprep.subr.mxu0 0.0
        %6189 = vmatpush1.msra.mxu0 0.0
        %6190 = vmatprep.subr.mxu0 0.0
        %6191 = vmatpush1.msra.mxu0 0.0
        %6192 = vmatprep.subr.mxu0 0.0
        %6193 = vmatpush1.msra.mxu0 0.0
        %6194 = vmatprep.subr.mxu0 0.0
        %6195 = vmatpush1.msra.mxu0 0.0
        %6196 = vmatprep.subr.mxu0 0.0
        %6197 = vmatpush1.msra.mxu0 0.0
        %6198 = vmatprep.subr.mxu0 0.0
        %6199 = vmatpush1.msra.mxu0 0.0
        %6200 = vmatprep.subr.mxu0 0.0
        %6201 = vmatpush1.msra.mxu0 0.0
        %6202 = vmatprep.subr.mxu0 0.0
        %6203 = vmatpush1.msra.mxu0 0.0
        %6204 = vmatprep.subr.mxu0 0.0
        %6205 = vmatpush1.msra.mxu0 0.0
        %6206 = vmatprep.subr.mxu0 0.0
        %6207 = vmatpush1.msra.mxu0 0.0
        %6208 = vmatprep.subr.mxu0 0.0
        %6209 = vmatpush1.msra.mxu0 0.0
        %6210 = vmatprep.subr.mxu0 0.0
        %6211 = vmatpush1.msra.mxu0 0.0
        %6212 = vmatprep.subr.mxu0 0.0
        %6213 = vmatpush1.msra.mxu0 0.0
        %6214 = vmatprep.subr.mxu0 0.0
        %6215 = vmatpush1.msra.mxu0 0.0
        %6216 = vmatprep.subr.mxu0 0.0
        %6217 = vmatpush1.msra.mxu0 0.0
        %6218 = vmatprep.subr.mxu0 0.0
        %6219 = vmatpush1.msra.mxu0 0.0
        %6220 = vmatprep.subr.mxu0 0.0
        %6221 = vmatpush1.msra.mxu0 0.0
        %6222 = vmatprep.subr.mxu0 0.0
        %6223 = vmatpush1.msra.mxu0 0.0
        %6224 = vmatprep.subr.mxu0 0.0
        %6225 = vmatpush1.msra.mxu0 0.0
        %6226 = vmatprep.subr.mxu0 0.0
        %6227 = vmatpush1.msra.mxu0 0.0
        %6228 = vmatprep.subr.mxu0 0.0
        %6229 = vmatpush1.msra.mxu0 0.0
        %6230 = vmatprep.subr.mxu0 0.0
        %6231 = vmatpush1.msra.mxu0 0.0
        %6232 = vmatprep.subr.mxu0 0.0
        %6233 = vmatpush1.msra.mxu0 0.0
        %6234 = vmatprep.subr.mxu0 0.0
        %6235 = vmatpush1.msra.mxu0 0.0
        %6236 = vmatprep.subr.mxu0 0.0
        %6237 = vmatpush1.msra.mxu0 0.0
        %6238 = vmatprep.subr.mxu0 0.0
        %6239 = vmatpush1.msra.mxu0 0.0
        %6240 = vmatprep.subr.mxu0 0.0
        %6241 = vmatpush1.msra.mxu0 0.0
        %6242 = vmatprep.subr.mxu0 0.0
        %6243 = vmatpush1.msra.mxu0 0.0
        %6244 = vmatprep.mubr.f32.mxu0 0.0
        %v6245 = vand.u32 %v5638, 4294901760
        %v6246 = vsub.f32 %v5638, %v6245
        %v6247 = vand.u32 %v6246, 4294901760
        %6248 = vmatmul.mubr.f32.gmra.mrb[0].mxu0 %v6247
        %v6249 = vpop.f32.mrb[0].mxu0
        %v6250 = vadd.f32 %v6096, %v6249
        %v6251 = vpop.f32.mrb[0].mxu0
        %6252 = vmatprep.mubr.f32.mxu0 0.0
        %v6253 = vand.u32 %v5641, 4294901760
        %v6254 = vsub.f32 %v5641, %v6253
        %v6255 = vand.u32 %v6254, 4294901760
        %6256 = vmatmul.mubr.f32.gmra.mrb[0].mxu0 %v6255
        %v6257 = vpop.f32.mrb[0].mxu0
        %v6258 = vadd.f32 %v6103, %v6257
        %v6259 = vpop.f32.mrb[0].mxu0
        %6260 = vmatprep.mubr.f32.mxu0 0.0
        %v6261 = vand.u32 %v5644, 4294901760
        %v6262 = vsub.f32 %v5644, %v6261
        %v6263 = vand.u32 %v6262, 4294901760
        %6264 = vmatmul.mubr.f32.gmra.mrb[0].mxu0 %v6263
        %v6265 = vpop.f32.mrb[0].mxu0
        %v6266 = vadd.f32 %v6110, %v6265
        %v6267 = vpop.f32.mrb[0].mxu0
        %6268 = vmatprep.mubr.f32.mxu0 0.0
        %v6269 = vand.u32 %v5647, 4294901760
        %v6270 = vsub.f32 %v5647, %v6269
        %v6271 = vand.u32 %v6270, 4294901760
        %6272 = vmatmul.mubr.f32.gmra.mrb[0].mxu0 %v6271
        %v6273 = vpop.f32.mrb[0].mxu0
        %v6274 = vadd.f32 %v6117, %v6273
        %v6275 = vpop.f32.mrb[0].mxu0
        %6276 = vmatprep.mubr.f32.mxu0 0.0
        %v6277 = vand.u32 %v5650, 4294901760
        %v6278 = vsub.f32 %v5650, %v6277
        %v6279 = vand.u32 %v6278, 4294901760
        %6280 = vmatmul.mubr.f32.gmra.mrb[0].mxu0 %v6279
        %v6281 = vpop.f32.mrb[0].mxu0
        %v6282 = vadd.f32 %v6124, %v6281
        %v6283 = vpop.f32.mrb[0].mxu0
        %6284 = vmatprep.mubr.f32.mxu0 0.0
        %v6285 = vand.u32 %v5653, 4294901760
        %v6286 = vsub.f32 %v5653, %v6285
        %v6287 = vand.u32 %v6286, 4294901760
        %6288 = vmatmul.mubr.f32.gmra.mrb[0].mxu0 %v6287
        %v6289 = vpop.f32.mrb[0].mxu0
        %v6290 = vadd.f32 %v6131, %v6289
        %v6291 = vpop.f32.mrb[0].mxu0
        %6292 = vmatprep.mubr.f32.mxu0 0.0
        %v6293 = vand.u32 %v5656, 4294901760
        %v6294 = vsub.f32 %v5656, %v6293
        %v6295 = vand.u32 %v6294, 4294901760
        %6296 = vmatmul.mubr.f32.gmra.mrb[0].mxu0 %v6295
        %v6297 = vpop.f32.mrb[0].mxu0
        %v6298 = vadd.f32 %v6138, %v6297
        %v6299 = vpop.f32.mrb[0].mxu0
        %6300 = vmatprep.mubr.f32.mxu0 0.0
        %v6301 = vand.u32 %v5659, 4294901760
        %v6302 = vsub.f32 %v5659, %v6301
        %v6303 = vand.u32 %v6302, 4294901760
        %6304 = vmatmul.mubr.f32.gmra.mrb[0].mxu0 %v6303
        %v6305 = vpop.f32.mrb[0].mxu0
        %v6306 = vadd.f32 %v6145, %v6305
        %v6307 = vpop.f32.mrb[0].mxu0
        %6308 = vmatprep.mubr.f32.mxu0 0.0
        %v6309 = vand.u32 %v5662, 4294901760
        %v6310 = vsub.f32 %v5662, %v6309
        %v6311 = vand.u32 %v6310, 4294901760
        %6312 = vmatmul.mubr.f32.gmra.mrb[0].mxu0 %v6311
        %v6313 = vpop.f32.mrb[0].mxu0
        %v6314 = vadd.f32 %v6152, %v6313
        %v6315 = vpop.f32.mrb[0].mxu0
        %6316 = vmatprep.mubr.f32.mxu0 0.0
        %v6317 = vand.u32 %v5665, 4294901760
        %v6318 = vsub.f32 %v5665, %v6317
        %v6319 = vand.u32 %v6318, 4294901760
        %6320 = vmatmul.mubr.f32.gmra.mrb[0].mxu0 %v6319
        %v6321 = vpop.f32.mrb[0].mxu0
        %v6322 = vadd.f32 %v6159, %v6321
        %v6323 = vpop.f32.mrb[0].mxu0
        %6324 = vmatprep.mubr.f32.mxu0 0.0
        %v6325 = vand.u32 %v5668, 4294901760
        %v6326 = vsub.f32 %v5668, %v6325
        %v6327 = vand.u32 %v6326, 4294901760
        %6328 = vmatmul.mubr.f32.gmra.mrb[0].mxu0 %v6327
        %v6329 = vpop.f32.mrb[0].mxu0
        %v6330 = vadd.f32 %v6166, %v6329
        %v6331 = vpop.f32.mrb[0].mxu0
        %6332 = vmatprep.mubr.f32.mxu0 0.0
        %v6333 = vand.u32 %v5671, 4294901760
        %v6334 = vsub.f32 %v5671, %v6333
        %v6335 = vand.u32 %v6334, 4294901760
        %6336 = vmatmul.mubr.f32.gmra.mrb[0].mxu0 %v6335
        %v6337 = vpop.f32.mrb[0].mxu0
        %v6338 = vadd.f32 %v6173, %v6337
        %v6339 = vpop.f32.mrb[0].mxu0
        %6340 = vdwg.mxu0
        %6341 = vmatprep.subr.mxu0 0.0
        %v6342 = vand.u32 %v5620, 4294901760
        %v6343 = vsub.f32 %v5620, %v6342
        %v6344 = vand.u32 %v6343, 4294901760
        %6345 = vmatpush1.msra.mxu0 %v6344
        %6346 = vmatprep.subr.mxu0 0.0
        %v6347 = vand.u32 %v5621, 4294901760
        %v6348 = vsub.f32 %v5621, %v6347
        %v6349 = vand.u32 %v6348, 4294901760
        %6350 = vmatpush1.msra.mxu0 %v6349
        %6351 = vmatprep.subr.mxu0 0.0
        %v6352 = vand.u32 %v5622, 4294901760
        %v6353 = vsub.f32 %v5622, %v6352
        %v6354 = vand.u32 %v6353, 4294901760
        %6355 = vmatpush1.msra.mxu0 %v6354
        %6356 = vmatprep.subr.mxu0 0.0
        %v6357 = vand.u32 %v5623, 4294901760
        %v6358 = vsub.f32 %v5623, %v6357
        %v6359 = vand.u32 %v6358, 4294901760
        %6360 = vmatpush1.msra.mxu0 %v6359
        %6361 = vmatprep.subr.mxu0 0.0
        %6362 = vmatpush1.msra.mxu0 0.0
        %6363 = vmatprep.subr.mxu0 0.0
        %6364 = vmatpush1.msra.mxu0 0.0
        %6365 = vmatprep.subr.mxu0 0.0
        %6366 = vmatpush1.msra.mxu0 0.0
        %6367 = vmatprep.subr.mxu0 0.0
        %6368 = vmatpush1.msra.mxu0 0.0
        %6369 = vmatprep.subr.mxu0 0.0
        %6370 = vmatpush1.msra.mxu0 0.0
        %6371 = vmatprep.subr.mxu0 0.0
        %6372 = vmatpush1.msra.mxu0 0.0
        %6373 = vmatprep.subr.mxu0 0.0
        %6374 = vmatpush1.msra.mxu0 0.0
        %6375 = vmatprep.subr.mxu0 0.0
        %6376 = vmatpush1.msra.mxu0 0.0
        %6377 = vmatprep.subr.mxu0 0.0
        %6378 = vmatpush1.msra.mxu0 0.0
        %6379 = vmatprep.subr.mxu0 0.0
        %6380 = vmatpush1.msra.mxu0 0.0
        %6381 = vmatprep.subr.mxu0 0.0
        %6382 = vmatpush1.msra.mxu0 0.0
        %6383 = vmatprep.subr.mxu0 0.0
        %6384 = vmatpush1.msra.mxu0 0.0
        %6385 = vmatprep.subr.mxu0 0.0
        %6386 = vmatpush1.msra.mxu0 0.0
        %6387 = vmatprep.subr.mxu0 0.0
        %6388 = vmatpush1.msra.mxu0 0.0
        %6389 = vmatprep.subr.mxu0 0.0
        %6390 = vmatpush1.msra.mxu0 0.0
        %6391 = vmatprep.subr.mxu0 0.0
        %6392 = vmatpush1.msra.mxu0 0.0
        %6393 = vmatprep.subr.mxu0 0.0
        %6394 = vmatpush1.msra.mxu0 0.0
        %6395 = vmatprep.subr.mxu0 0.0
        %6396 = vmatpush1.msra.mxu0 0.0
        %6397 = vmatprep.subr.mxu0 0.0
        %6398 = vmatpush1.msra.mxu0 0.0
        %6399 = vmatprep.subr.mxu0 0.0
        %6400 = vmatpush1.msra.mxu0 0.0
        %6401 = vmatprep.subr.mxu0 0.0
        %6402 = vmatpush1.msra.mxu0 0.0
        %6403 = vmatprep.subr.mxu0 0.0
        %6404 = vmatpush1.msra.mxu0 0.0
        %6405 = vmatprep.subr.mxu0 0.0
        %6406 = vmatpush1.msra.mxu0 0.0
        %6407 = vmatprep.subr.mxu0 0.0
        %6408 = vmatpush1.msra.mxu0 0.0
        %6409 = vmatprep.subr.mxu0 0.0
        %6410 = vmatpush1.msra.mxu0 0.0
        %6411 = vmatprep.subr.mxu0 0.0
        %6412 = vmatpush1.msra.mxu0 0.0
        %6413 = vmatprep.subr.mxu0 0.0
        %6414 = vmatpush1.msra.mxu0 0.0
        %6415 = vmatprep.subr.mxu0 0.0
        %6416 = vmatpush1.msra.mxu0 0.0
        %6417 = vmatprep.mubr.f32.mxu0 0.0
        %v6418 = vand.u32 %v5638, 4294901760
        %6419 = vmatmul.mubr.f32.gmra.mrb[0].mxu0 %v6418
        %v6420 = vpop.f32.mrb[0].mxu0
        %v6421 = vadd.f32 %v6250, %v6420
        %v6422 = vpop.f32.mrb[0].mxu0
        %6423 = vmatprep.mubr.f32.mxu0 0.0
        %v6424 = vand.u32 %v5641, 4294901760
        %6425 = vmatmul.mubr.f32.gmra.mrb[0].mxu0 %v6424
        %v6426 = vpop.f32.mrb[0].mxu0
        %v6427 = vadd.f32 %v6258, %v6426
        %v6428 = vpop.f32.mrb[0].mxu0
        %6429 = vmatprep.mubr.f32.mxu0 0.0
        %v6430 = vand.u32 %v5644, 4294901760
        %6431 = vmatmul.mubr.f32.gmra.mrb[0].mxu0 %v6430
        %v6432 = vpop.f32.mrb[0].mxu0
        %v6433 = vadd.f32 %v6266, %v6432
        %v6434 = vpop.f32.mrb[0].mxu0
        %6435 = vmatprep.mubr.f32.mxu0 0.0
        %v6436 = vand.u32 %v5647, 4294901760
        %6437 = vmatmul.mubr.f32.gmra.mrb[0].mxu0 %v6436
        %v6438 = vpop.f32.mrb[0].mxu0
        %v6439 = vadd.f32 %v6274, %v6438
        %v6440 = vpop.f32.mrb[0].mxu0
        %6441 = vmatprep.mubr.f32.mxu0 0.0
        %v6442 = vand.u32 %v5650, 4294901760
        %6443 = vmatmul.mubr.f32.gmra.mrb[0].mxu0 %v6442
        %v6444 = vpop.f32.mrb[0].mxu0
        %v6445 = vadd.f32 %v6282, %v6444
        %v6446 = vpop.f32.mrb[0].mxu0
        %6447 = vmatprep.mubr.f32.mxu0 0.0
        %v6448 = vand.u32 %v5653, 4294901760
        %6449 = vmatmul.mubr.f32.gmra.mrb[0].mxu0 %v6448
        %v6450 = vpop.f32.mrb[0].mxu0
        %v6451 = vadd.f32 %v6290, %v6450
        %v6452 = vpop.f32.mrb[0].mxu0
        %6453 = vmatprep.mubr.f32.mxu0 0.0
        %v6454 = vand.u32 %v5656, 4294901760
        %6455 = vmatmul.mubr.f32.gmra.mrb[0].mxu0 %v6454
        %v6456 = vpop.f32.mrb[0].mxu0
        %v6457 = vadd.f32 %v6298, %v6456
        %v6458 = vpop.f32.mrb[0].mxu0
        %6459 = vmatprep.mubr.f32.mxu0 0.0
        %v6460 = vand.u32 %v5659, 4294901760
        %6461 = vmatmul.mubr.f32.gmra.mrb[0].mxu0 %v6460
        %v6462 = vpop.f32.mrb[0].mxu0
        %v6463 = vadd.f32 %v6306, %v6462
        %v6464 = vpop.f32.mrb[0].mxu0
        %6465 = vmatprep.mubr.f32.mxu0 0.0
        %v6466 = vand.u32 %v5662, 4294901760
        %6467 = vmatmul.mubr.f32.gmra.mrb[0].mxu0 %v6466
        %v6468 = vpop.f32.mrb[0].mxu0
        %v6469 = vadd.f32 %v6314, %v6468
        %v6470 = vpop.f32.mrb[0].mxu0
        %6471 = vmatprep.mubr.f32.mxu0 0.0
        %v6472 = vand.u32 %v5665, 4294901760
        %6473 = vmatmul.mubr.f32.gmra.mrb[0].mxu0 %v6472
        %v6474 = vpop.f32.mrb[0].mxu0
        %v6475 = vadd.f32 %v6322, %v6474
        %v6476 = vpop.f32.mrb[0].mxu0
        %6477 = vmatprep.mubr.f32.mxu0 0.0
        %v6478 = vand.u32 %v5668, 4294901760
        %6479 = vmatmul.mubr.f32.gmra.mrb[0].mxu0 %v6478
        %v6480 = vpop.f32.mrb[0].mxu0
        %v6481 = vadd.f32 %v6330, %v6480
        %v6482 = vpop.f32.mrb[0].mxu0
        %6483 = vmatprep.mubr.f32.mxu0 0.0
        %v6484 = vand.u32 %v5671, 4294901760
        %6485 = vmatmul.mubr.f32.gmra.mrb[0].mxu0 %v6484
        %v6486 = vpop.f32.mrb[0].mxu0
        %v6487 = vadd.f32 %v6338, %v6486
        %v6488 = vpop.f32.mrb[0].mxu0
        %6489 = vdwg.mxu0
        %6490 = vmatprep.subr.mxu0 0.0
        %v6491 = vand.u32 %v5620, 4294901760
        %6492 = vmatpush1.msra.mxu0 %v6491
        %6493 = vmatprep.subr.mxu0 0.0
        %v6494 = vand.u32 %v5621, 4294901760
        %6495 = vmatpush1.msra.mxu0 %v6494
        %6496 = vmatprep.subr.mxu0 0.0
        %v6497 = vand.u32 %v5622, 4294901760
        %6498 = vmatpush1.msra.mxu0 %v6497
        %6499 = vmatprep.subr.mxu0 0.0
        %v6500 = vand.u32 %v5623, 4294901760
        %6501 = vmatpush1.msra.mxu0 %v6500
        %6502 = vmatprep.subr.mxu0 0.0
        %6503 = vmatpush1.msra.mxu0 0.0
        %6504 = vmatprep.subr.mxu0 0.0
        %6505 = vmatpush1.msra.mxu0 0.0
        %6506 = vmatprep.subr.mxu0 0.0
        %6507 = vmatpush1.msra.mxu0 0.0
        %6508 = vmatprep.subr.mxu0 0.0
        %6509 = vmatpush1.msra.mxu0 0.0
        %6510 = vmatprep.subr.mxu0 0.0
        %6511 = vmatpush1.msra.mxu0 0.0
        %6512 = vmatprep.subr.mxu0 0.0
        %6513 = vmatpush1.msra.mxu0 0.0
        %6514 = vmatprep.subr.mxu0 0.0
        %6515 = vmatpush1.msra.mxu0 0.0
        %6516 = vmatprep.subr.mxu0 0.0
        %6517 = vmatpush1.msra.mxu0 0.0
        %6518 = vmatprep.subr.mxu0 0.0
        %6519 = vmatpush1.msra.mxu0 0.0
        %6520 = vmatprep.subr.mxu0 0.0
        %6521 = vmatpush1.msra.mxu0 0.0
        %6522 = vmatprep.subr.mxu0 0.0
        %6523 = vmatpush1.msra.mxu0 0.0
        %6524 = vmatprep.subr.mxu0 0.0
        %6525 = vmatpush1.msra.mxu0 0.0
        %6526 = vmatprep.subr.mxu0 0.0
        %6527 = vmatpush1.msra.mxu0 0.0
        %6528 = vmatprep.subr.mxu0 0.0
        %6529 = vmatpush1.msra.mxu0 0.0
        %6530 = vmatprep.subr.mxu0 0.0
        %6531 = vmatpush1.msra.mxu0 0.0
        %6532 = vmatprep.subr.mxu0 0.0
        %6533 = vmatpush1.msra.mxu0 0.0
        %6534 = vmatprep.subr.mxu0 0.0
        %6535 = vmatpush1.msra.mxu0 0.0
        %6536 = vmatprep.subr.mxu0 0.0
        %6537 = vmatpush1.msra.mxu0 0.0
        %6538 = vmatprep.subr.mxu0 0.0
        %6539 = vmatpush1.msra.mxu0 0.0
        %6540 = vmatprep.subr.mxu0 0.0
        %6541 = vmatpush1.msra.mxu0 0.0
        %6542 = vmatprep.subr.mxu0 0.0
        %6543 = vmatpush1.msra.mxu0 0.0
        %6544 = vmatprep.subr.mxu0 0.0
        %6545 = vmatpush1.msra.mxu0 0.0
        %6546 = vmatprep.subr.mxu0 0.0
        %6547 = vmatpush1.msra.mxu0 0.0
        %6548 = vmatprep.subr.mxu0 0.0
        %6549 = vmatpush1.msra.mxu0 0.0
        %6550 = vmatprep.subr.mxu0 0.0
        %6551 = vmatpush1.msra.mxu0 0.0
        %6552 = vmatprep.subr.mxu0 0.0
        %6553 = vmatpush1.msra.mxu0 0.0
        %6554 = vmatprep.subr.mxu0 0.0
        %6555 = vmatpush1.msra.mxu0 0.0
        %6556 = vmatprep.subr.mxu0 0.0
        %6557 = vmatpush1.msra.mxu0 0.0
        %6558 = vmatprep.mubr.f32.mxu0 0.0
        %v6559 = vand.u32 %v5638, 4294901760
        %6560 = vmatmul.mubr.f32.gmra.mrb[0].mxu0 %v6559
        %v6561 = vpop.f32.mrb[0].mxu0
        %v6562 = vadd.f32 %v6421, %v6561
        %v6563 = vpop.f32.mrb[0].mxu0
        %6564 = vmatprep.mubr.f32.mxu0 0.0
        %v6565 = vand.u32 %v5641, 4294901760
        %6566 = vmatmul.mubr.f32.gmra.mrb[0].mxu0 %v6565
        %v6567 = vpop.f32.mrb[0].mxu0
        %v6568 = vadd.f32 %v6427, %v6567
        %v6569 = vpop.f32.mrb[0].mxu0
        %6570 = vmatprep.mubr.f32.mxu0 0.0
        %v6571 = vand.u32 %v5644, 4294901760
        %6572 = vmatmul.mubr.f32.gmra.mrb[0].mxu0 %v6571
        %v6573 = vpop.f32.mrb[0].mxu0
        %v6574 = vadd.f32 %v6433, %v6573
        %v6575 = vpop.f32.mrb[0].mxu0
        %6576 = vmatprep.mubr.f32.mxu0 0.0
        %v6577 = vand.u32 %v5647, 4294901760
        %6578 = vmatmul.mubr.f32.gmra.mrb[0].mxu0 %v6577
        %v6579 = vpop.f32.mrb[0].mxu0
        %v6580 = vadd.f32 %v6439, %v6579
        %v6581 = vpop.f32.mrb[0].mxu0
        %6582 = vmatprep.mubr.f32.mxu0 0.0
        %v6583 = vand.u32 %v5650, 4294901760
        %6584 = vmatmul.mubr.f32.gmra.mrb[0].mxu0 %v6583
        %v6585 = vpop.f32.mrb[0].mxu0
        %v6586 = vadd.f32 %v6445, %v6585
        %v6587 = vpop.f32.mrb[0].mxu0
        %6588 = vmatprep.mubr.f32.mxu0 0.0
        %v6589 = vand.u32 %v5653, 4294901760
        %6590 = vmatmul.mubr.f32.gmra.mrb[0].mxu0 %v6589
        %v6591 = vpop.f32.mrb[0].mxu0
        %v6592 = vadd.f32 %v6451, %v6591
        %v6593 = vpop.f32.mrb[0].mxu0
        %6594 = vmatprep.mubr.f32.mxu0 0.0
        %v6595 = vand.u32 %v5656, 4294901760
        %6596 = vmatmul.mubr.f32.gmra.mrb[0].mxu0 %v6595
        %v6597 = vpop.f32.mrb[0].mxu0
        %v6598 = vadd.f32 %v6457, %v6597
        %v6599 = vpop.f32.mrb[0].mxu0
        %6600 = vmatprep.mubr.f32.mxu0 0.0
        %v6601 = vand.u32 %v5659, 4294901760
        %6602 = vmatmul.mubr.f32.gmra.mrb[0].mxu0 %v6601
        %v6603 = vpop.f32.mrb[0].mxu0
        %v6604 = vadd.f32 %v6463, %v6603
        %v6605 = vpop.f32.mrb[0].mxu0
        %6606 = vmatprep.mubr.f32.mxu0 0.0
        %v6607 = vand.u32 %v5662, 4294901760
        %6608 = vmatmul.mubr.f32.gmra.mrb[0].mxu0 %v6607
        %v6609 = vpop.f32.mrb[0].mxu0
        %v6610 = vadd.f32 %v6469, %v6609
        %v6611 = vpop.f32.mrb[0].mxu0
        %6612 = vmatprep.mubr.f32.mxu0 0.0
        %v6613 = vand.u32 %v5665, 4294901760
        %6614 = vmatmul.mubr.f32.gmra.mrb[0].mxu0 %v6613
        %v6615 = vpop.f32.mrb[0].mxu0
        %v6616 = vadd.f32 %v6475, %v6615
        %v6617 = vpop.f32.mrb[0].mxu0
        %6618 = vmatprep.mubr.f32.mxu0 0.0
        %v6619 = vand.u32 %v5668, 4294901760
        %6620 = vmatmul.mubr.f32.gmra.mrb[0].mxu0 %v6619
        %v6621 = vpop.f32.mrb[0].mxu0
        %v6622 = vadd.f32 %v6481, %v6621
        %v6623 = vpop.f32.mrb[0].mxu0
        %6624 = vmatprep.mubr.f32.mxu0 0.0
        %v6625 = vand.u32 %v5671, 4294901760
        %6626 = vmatmul.mubr.f32.gmra.mrb[0].mxu0 %v6625
        %v6627 = vpop.f32.mrb[0].mxu0
        %v6628 = vadd.f32 %v6487, %v6627
        %v6629 = vpop.f32.mrb[0].mxu0
        %6630 = vdwg.mxu0
        %v6631 = vadd.f32 %v3899, %v6562
        %v6632 = vadd.f32 %v3900, %v6568
        %v6633 = vadd.f32 %v3901, %v6574
        %v6634 = vadd.f32 %v3902, %v6580
        %v6635 = vtanh.pop %v6631
        %v6636 = vtanh.pop %v6632
        %v6637 = vtanh.pop %v6633
        %v6638 = vtanh.pop %v6634
        %v6639 = vadd.f32 %v3903, %v6586
        %v6640 = vadd.f32 %v3904, %v6592
        %v6641 = vadd.f32 %v3905, %v6598
        %v6642 = vadd.f32 %v3906, %v6604
        %v6643 = vtanh.pop %v6639
        %v6644 = vtanh.pop %v6640
        %v6645 = vtanh.pop %v6641
        %v6646 = vtanh.pop %v6642
        %v6647 = vadd.f32 %v3907, %v6610
        %v6648 = vadd.f32 %v3908, %v6616
        %v6649 = vadd.f32 %v3909, %v6622
        %v6650 = vadd.f32 %v3910, %v6628
        %v6651 = vtanh.pop %v6647
        %v6652 = vtanh.pop %v6648
        %v6653 = vtanh.pop %v6649
        %v6654 = vtanh.pop %v6650
        %s6655 = scalar_lea.vmem %s6, 32
        %v6656 = vld [vmem:[%s6655] sm:$0xff]
        %v6657 = vld [vmem:[%s6655 + $0x8] sm:$0xff]
        %v6658 = vld [vmem:[%s6655 + $0x10] sm:$0xff]
        %v6659 = vld [vmem:[%s6655 + $0x18] sm:$0xff]
        %v6660 = vmul.f32 %v5620, %v6651
        %v6661 = vmul.f32 %v5621, %v6652
        %v6662 = vmul.f32 %v5622, %v6653
        %v6663 = vmul.f32 %v5623, %v6654
        %v6665 = vsel %vm3947, %v6656, 0
        %v6668 = vsel %vm3947, %v6657, 0
        %v6671 = vsel %vm3947, %v6658, 0
        %v6674 = vsel %vm3947, %v6659, 0
        %6676 = vmatprep.subr.mxu0 0.0
        %v6677 = vand.u32 %v6660, 4294901760
        %6678 = vmatpush1.msra.mxu0 %v6677
        %6679 = vmatprep.subr.mxu0 0.0
        %v6680 = vand.u32 %v6661, 4294901760
        %6681 = vmatpush1.msra.mxu0 %v6680
        %6682 = vmatprep.subr.mxu0 0.0
        %v6683 = vand.u32 %v6662, 4294901760
        %6684 = vmatpush1.msra.mxu0 %v6683
        %6685 = vmatprep.subr.mxu0 0.0
        %v6686 = vand.u32 %v6663, 4294901760
        %6687 = vmatpush1.msra.mxu0 %v6686
        %6688 = vmatprep.subr.mxu0 0.0
        %6689 = vmatpush1.msra.mxu0 0.0
        %6690 = vmatprep.subr.mxu0 0.0
        %6691 = vmatpush1.msra.mxu0 0.0
        %6692 = vmatprep.subr.mxu0 0.0
        %6693 = vmatpush1.msra.mxu0 0.0
        %6694 = vmatprep.subr.mxu0 0.0
        %6695 = vmatpush1.msra.mxu0 0.0
        %6696 = vmatprep.subr.mxu0 0.0
        %6697 = vmatpush1.msra.mxu0 0.0
        %6698 = vmatprep.subr.mxu0 0.0
        %6699 = vmatpush1.msra.mxu0 0.0
        %6700 = vmatprep.subr.mxu0 0.0
        %6701 = vmatpush1.msra.mxu0 0.0
        %6702 = vmatprep.subr.mxu0 0.0
        %6703 = vmatpush1.msra.mxu0 0.0
        %6704 = vmatprep.subr.mxu0 0.0
        %6705 = vmatpush1.msra.mxu0 0.0
        %6706 = vmatprep.subr.mxu0 0.0
        %6707 = vmatpush1.msra.mxu0 0.0
        %6708 = vmatprep.subr.mxu0 0.0
        %6709 = vmatpush1.msra.mxu0 0.0
        %6710 = vmatprep.subr.mxu0 0.0
        %6711 = vmatpush1.msra.mxu0 0.0
        %6712 = vmatprep.subr.mxu0 0.0
        %6713 = vmatpush1.msra.mxu0 0.0
        %6714 = vmatprep.subr.mxu0 0.0
        %6715 = vmatpush1.msra.mxu0 0.0
        %6716 = vmatprep.subr.mxu0 0.0
        %6717 = vmatpush1.msra.mxu0 0.0
        %6718 = vmatprep.subr.mxu0 0.0
        %6719 = vmatpush1.msra.mxu0 0.0
        %6720 = vmatprep.subr.mxu0 0.0
        %6721 = vmatpush1.msra.mxu0 0.0
        %6722 = vmatprep.subr.mxu0 0.0
        %6723 = vmatpush1.msra.mxu0 0.0
        %6724 = vmatprep.subr.mxu0 0.0
        %6725 = vmatpush1.msra.mxu0 0.0
        %6726 = vmatprep.subr.mxu0 0.0
        %6727 = vmatpush1.msra.mxu0 0.0
        %6728 = vmatprep.subr.mxu0 0.0
        %6729 = vmatpush1.msra.mxu0 0.0
        %6730 = vmatprep.subr.mxu0 0.0
        %6731 = vmatpush1.msra.mxu0 0.0
        %6732 = vmatprep.subr.mxu0 0.0
        %6733 = vmatpush1.msra.mxu0 0.0
        %6734 = vmatprep.subr.mxu0 0.0
        %6735 = vmatpush1.msra.mxu0 0.0
        %6736 = vmatprep.subr.mxu0 0.0
        %6737 = vmatpush1.msra.mxu0 0.0
        %6738 = vmatprep.subr.mxu0 0.0
        %6739 = vmatpush1.msra.mxu0 0.0
        %6740 = vmatprep.subr.mxu0 0.0
        %6741 = vmatpush1.msra.mxu0 0.0
        %6742 = vmatprep.subr.mxu0 0.0
        %6743 = vmatpush1.msra.mxu0 0.0
        %6744 = vmatprep.mubr.f32.mxu0 0.0
        %v6745 = vand.u32 %v6665, 4294901760
        %v6746 = vsub.f32 %v6665, %v6745
        %v6747 = vand.u32 %v6746, 4294901760
        %v6748 = vsub.f32 %v6746, %v6747
        %v6749 = vand.u32 %v6748, 4294901760
        %6750 = vmatmul.mubr.f32.gmra.mrb[0].mxu0 %v6749
        %v6751 = vpop.f32.mrb[0].mxu0
        %v6752 = vadd.f32 0.0, %v6751
        %v6753 = vpop.f32.mrb[0].mxu0
        %6754 = vmatprep.mubr.f32.mxu0 0.0
        %v6755 = vand.u32 %v6668, 4294901760
        %v6756 = vsub.f32 %v6668, %v6755
        %v6757 = vand.u32 %v6756, 4294901760
        %v6758 = vsub.f32 %v6756, %v6757
        %v6759 = vand.u32 %v6758, 4294901760
        %6760 = vmatmul.mubr.f32.gmra.mrb[0].mxu0 %v6759
        %v6761 = vpop.f32.mrb[0].mxu0
        %v6762 = vadd.f32 0.0, %v6761
        %v6763 = vpop.f32.mrb[0].mxu0
        %6764 = vmatprep.mubr.f32.mxu0 0.0
        %v6765 = vand.u32 %v6671, 4294901760
        %v6766 = vsub.f32 %v6671, %v6765
        %v6767 = vand.u32 %v6766, 4294901760
        %v6768 = vsub.f32 %v6766, %v6767
        %v6769 = vand.u32 %v6768, 4294901760
        %6770 = vmatmul.mubr.f32.gmra.mrb[0].mxu0 %v6769
        %v6771 = vpop.f32.mrb[0].mxu0
        %v6772 = vadd.f32 0.0, %v6771
        %v6773 = vpop.f32.mrb[0].mxu0
        %6774 = vmatprep.mubr.f32.mxu0 0.0
        %v6775 = vand.u32 %v6674, 4294901760
        %v6776 = vsub.f32 %v6674, %v6775
        %v6777 = vand.u32 %v6776, 4294901760
        %v6778 = vsub.f32 %v6776, %v6777
        %v6779 = vand.u32 %v6778, 4294901760
        %6780 = vmatmul.mubr.f32.gmra.mrb[0].mxu0 %v6779
        %v6781 = vpop.f32.mrb[0].mxu0
        %v6782 = vadd.f32 0.0, %v6781
        %v6783 = vpop.f32.mrb[0].mxu0
        %6784 = vdwg.mxu0
        %6785 = vmatprep.subr.mxu0 0.0
        %v6786 = vand.u32 %v6660, 4294901760
        %v6787 = vsub.f32 %v6660, %v6786
        %v6788 = vand.u32 %v6787, 4294901760
        %v6789 = vsub.f32 %v6787, %v6788
        %v6790 = vand.u32 %v6789, 4294901760
        %6791 = vmatpush1.msra.mxu0 %v6790
        %6792 = vmatprep.subr.mxu0 0.0
        %v6793 = vand.u32 %v6661, 4294901760
        %v6794 = vsub.f32 %v6661, %v6793
        %v6795 = vand.u32 %v6794, 4294901760
        %v6796 = vsub.f32 %v6794, %v6795
        %v6797 = vand.u32 %v6796, 4294901760
        %6798 = vmatpush1.msra.mxu0 %v6797
        %6799 = vmatprep.subr.mxu0 0.0
        %v6800 = vand.u32 %v6662, 4294901760
        %v6801 = vsub.f32 %v6662, %v6800
        %v6802 = vand.u32 %v6801, 4294901760
        %v6803 = vsub.f32 %v6801, %v6802
        %v6804 = vand.u32 %v6803, 4294901760
        %6805 = vmatpush1.msra.mxu0 %v6804
        %6806 = vmatprep.subr.mxu0 0.0
        %v6807 = vand.u32 %v6663, 4294901760
        %v6808 = vsub.f32 %v6663, %v6807
        %v6809 = vand.u32 %v6808, 4294901760
        %v6810 = vsub.f32 %v6808, %v6809
        %v6811 = vand.u32 %v6810, 4294901760
        %6812 = vmatpush1.msra.mxu0 %v6811
        %6813 = vmatprep.subr.mxu0 0.0
        %6814 = vmatpush1.msra.mxu0 0.0
        %6815 = vmatprep.subr.mxu0 0.0
        %6816 = vmatpush1.msra.mxu0 0.0
        %6817 = vmatprep.subr.mxu0 0.0
        %6818 = vmatpush1.msra.mxu0 0.0
        %6819 = vmatprep.subr.mxu0 0.0
        %6820 = vmatpush1.msra.mxu0 0.0
        %6821 = vmatprep.subr.mxu0 0.0
        %6822 = vmatpush1.msra.mxu0 0.0
        %6823 = vmatprep.subr.mxu0 0.0
        %6824 = vmatpush1.msra.mxu0 0.0
        %6825 = vmatprep.subr.mxu0 0.0
        %6826 = vmatpush1.msra.mxu0 0.0
        %6827 = vmatprep.subr.mxu0 0.0
        %6828 = vmatpush1.msra.mxu0 0.0
        %6829 = vmatprep.subr.mxu0 0.0
        %6830 = vmatpush1.msra.mxu0 0.0
        %6831 = vmatprep.subr.mxu0 0.0
        %6832 = vmatpush1.msra.mxu0 0.0
        %6833 = vmatprep.subr.mxu0 0.0
        %6834 = vmatpush1.msra.mxu0 0.0
        %6835 = vmatprep.subr.mxu0 0.0
        %6836 = vmatpush1.msra.mxu0 0.0
        %6837 = vmatprep.subr.mxu0 0.0
        %6838 = vmatpush1.msra.mxu0 0.0
        %6839 = vmatprep.subr.mxu0 0.0
        %6840 = vmatpush1.msra.mxu0 0.0
        %6841 = vmatprep.subr.mxu0 0.0
        %6842 = vmatpush1.msra.mxu0 0.0
        %6843 = vmatprep.subr.mxu0 0.0
        %6844 = vmatpush1.msra.mxu0 0.0
        %6845 = vmatprep.subr.mxu0 0.0
        %6846 = vmatpush1.msra.mxu0 0.0
        %6847 = vmatprep.subr.mxu0 0.0
        %6848 = vmatpush1.msra.mxu0 0.0
        %6849 = vmatprep.subr.mxu0 0.0
        %6850 = vmatpush1.msra.mxu0 0.0
        %6851 = vmatprep.subr.mxu0 0.0
        %6852 = vmatpush1.msra.mxu0 0.0
        %6853 = vmatprep.subr.mxu0 0.0
        %6854 = vmatpush1.msra.mxu0 0.0
        %6855 = vmatprep.subr.mxu0 0.0
        %6856 = vmatpush1.msra.mxu0 0.0
        %6857 = vmatprep.subr.mxu0 0.0
        %6858 = vmatpush1.msra.mxu0 0.0
        %6859 = vmatprep.subr.mxu0 0.0
        %6860 = vmatpush1.msra.mxu0 0.0
        %6861 = vmatprep.subr.mxu0 0.0
        %6862 = vmatpush1.msra.mxu0 0.0
        %6863 = vmatprep.subr.mxu0 0.0
        %6864 = vmatpush1.msra.mxu0 0.0
        %6865 = vmatprep.subr.mxu0 0.0
        %6866 = vmatpush1.msra.mxu0 0.0
        %6867 = vmatprep.subr.mxu0 0.0
        %6868 = vmatpush1.msra.mxu0 0.0
        %6869 = vmatprep.mubr.f32.mxu0 0.0
        %v6870 = vand.u32 %v6665, 4294901760
        %6871 = vmatmul.mubr.f32.gmra.mrb[0].mxu0 %v6870
        %v6872 = vpop.f32.mrb[0].mxu0
        %v6873 = vadd.f32 %v6752, %v6872
        %v6874 = vpop.f32.mrb[0].mxu0
        %6875 = vmatprep.mubr.f32.mxu0 0.0
        %v6876 = vand.u32 %v6668, 4294901760
        %6877 = vmatmul.mubr.f32.gmra.mrb[0].mxu0 %v6876
        %v6878 = vpop.f32.mrb[0].mxu0
        %v6879 = vadd.f32 %v6762, %v6878
        %v6880 = vpop.f32.mrb[0].mxu0
        %6881 = vmatprep.mubr.f32.mxu0 0.0
        %v6882 = vand.u32 %v6671, 4294901760
        %6883 = vmatmul.mubr.f32.gmra.mrb[0].mxu0 %v6882
        %v6884 = vpop.f32.mrb[0].mxu0
        %v6885 = vadd.f32 %v6772, %v6884
        %v6886 = vpop.f32.mrb[0].mxu0
        %6887 = vmatprep.mubr.f32.mxu0 0.0
        %v6888 = vand.u32 %v6674, 4294901760
        %6889 = vmatmul.mubr.f32.gmra.mrb[0].mxu0 %v6888
        %v6890 = vpop.f32.mrb[0].mxu0
        %v6891 = vadd.f32 %v6782, %v6890
        %v6892 = vpop.f32.mrb[0].mxu0
        %6893 = vdwg.mxu0
        %6894 = vmatprep.subr.mxu0 0.0
        %v6895 = vand.u32 %v6660, 4294901760
        %v6896 = vsub.f32 %v6660, %v6895
        %6897 = vmatpush1.msra.mxu0 %v6896
        %6898 = vmatprep.subr.mxu0 0.0
        %v6899 = vand.u32 %v6661, 4294901760
        %v6900 = vsub.f32 %v6661, %v6899
        %6901 = vmatpush1.msra.mxu0 %v6900
        %6902 = vmatprep.subr.mxu0 0.0
        %v6903 = vand.u32 %v6662, 4294901760
        %v6904 = vsub.f32 %v6662, %v6903
        %6905 = vmatpush1.msra.mxu0 %v6904
        %6906 = vmatprep.subr.mxu0 0.0
        %v6907 = vand.u32 %v6663, 4294901760
        %v6908 = vsub.f32 %v6663, %v6907
        %6909 = vmatpush1.msra.mxu0 %v6908
        %6910 = vmatprep.subr.mxu0 0.0
        %6911 = vmatpush1.msra.mxu0 0.0
        %6912 = vmatprep.subr.mxu0 0.0
        %6913 = vmatpush1.msra.mxu0 0.0
        %6914 = vmatprep.subr.mxu0 0.0
        %6915 = vmatpush1.msra.mxu0 0.0
        %6916 = vmatprep.subr.mxu0 0.0
        %6917 = vmatpush1.msra.mxu0 0.0
        %6918 = vmatprep.subr.mxu0 0.0
        %6919 = vmatpush1.msra.mxu0 0.0
        %6920 = vmatprep.subr.mxu0 0.0
        %6921 = vmatpush1.msra.mxu0 0.0
        %6922 = vmatprep.subr.mxu0 0.0
        %6923 = vmatpush1.msra.mxu0 0.0
        %6924 = vmatprep.subr.mxu0 0.0
        %6925 = vmatpush1.msra.mxu0 0.0
        %6926 = vmatprep.subr.mxu0 0.0
        %6927 = vmatpush1.msra.mxu0 0.0
        %6928 = vmatprep.subr.mxu0 0.0
        %6929 = vmatpush1.msra.mxu0 0.0
        %6930 = vmatprep.subr.mxu0 0.0
        %6931 = vmatpush1.msra.mxu0 0.0
        %6932 = vmatprep.subr.mxu0 0.0
        %6933 = vmatpush1.msra.mxu0 0.0
        %6934 = vmatprep.subr.mxu0 0.0
        %6935 = vmatpush1.msra.mxu0 0.0
        %6936 = vmatprep.subr.mxu0 0.0
        %6937 = vmatpush1.msra.mxu0 0.0
        %6938 = vmatprep.subr.mxu0 0.0
        %6939 = vmatpush1.msra.mxu0 0.0
        %6940 = vmatprep.subr.mxu0 0.0
        %6941 = vmatpush1.msra.mxu0 0.0
        %6942 = vmatprep.subr.mxu0 0.0
        %6943 = vmatpush1.msra.mxu0 0.0
        %6944 = vmatprep.subr.mxu0 0.0
        %6945 = vmatpush1.msra.mxu0 0.0
        %6946 = vmatprep.subr.mxu0 0.0
        %6947 = vmatpush1.msra.mxu0 0.0
        %6948 = vmatprep.subr.mxu0 0.0
        %6949 = vmatpush1.msra.mxu0 0.0
        %6950 = vmatprep.subr.mxu0 0.0
        %6951 = vmatpush1.msra.mxu0 0.0
        %6952 = vmatprep.subr.mxu0 0.0
        %6953 = vmatpush1.msra.mxu0 0.0
        %6954 = vmatprep.subr.mxu0 0.0
        %6955 = vmatpush1.msra.mxu0 0.0
        %6956 = vmatprep.subr.mxu0 0.0
        %6957 = vmatpush1.msra.mxu0 0.0
        %6958 = vmatprep.subr.mxu0 0.0
        %6959 = vmatpush1.msra.mxu0 0.0
        %6960 = vmatprep.subr.mxu0 0.0
        %6961 = vmatpush1.msra.mxu0 0.0
        %6962 = vmatprep.subr.mxu0 0.0
        %6963 = vmatpush1.msra.mxu0 0.0
        %6964 = vmatprep.subr.mxu0 0.0
        %6965 = vmatpush1.msra.mxu0 0.0
        %6966 = vmatprep.mubr.f32.mxu0 0.0
        %v6967 = vand.u32 %v6665, 4294901760
        %v6968 = vsub.f32 %v6665, %v6967
        %6969 = vmatmul.mubr.f32.gmra.mrb[0].mxu0 %v6968
        %v6970 = vpop.f32.mrb[0].mxu0
        %v6971 = vadd.f32 %v6873, %v6970
        %v6972 = vpop.f32.mrb[0].mxu0
        %6973 = vmatprep.mubr.f32.mxu0 0.0
        %v6974 = vand.u32 %v6668, 4294901760
        %v6975 = vsub.f32 %v6668, %v6974
        %6976 = vmatmul.mubr.f32.gmra.mrb[0].mxu0 %v6975
        %v6977 = vpop.f32.mrb[0].mxu0
        %v6978 = vadd.f32 %v6879, %v6977
        %v6979 = vpop.f32.mrb[0].mxu0
        %6980 = vmatprep.mubr.f32.mxu0 0.0
        %v6981 = vand.u32 %v6671, 4294901760
        %v6982 = vsub.f32 %v6671, %v6981
        %6983 = vmatmul.mubr.f32.gmra.mrb[0].mxu0 %v6982
        %v6984 = vpop.f32.mrb[0].mxu0
        %v6985 = vadd.f32 %v6885, %v6984
        %v6986 = vpop.f32.mrb[0].mxu0
        %6987 = vmatprep.mubr.f32.mxu0 0.0
        %v6988 = vand.u32 %v6674, 4294901760
        %v6989 = vsub.f32 %v6674, %v6988
        %6990 = vmatmul.mubr.f32.gmra.mrb[0].mxu0 %v6989
        %v6991 = vpop.f32.mrb[0].mxu0
        %v6992 = vadd.f32 %v6891, %v6991
        %v6993 = vpop.f32.mrb[0].mxu0
        %6994 = vdwg.mxu0
        %6995 = vmatprep.subr.mxu0 0.0
        %v6996 = vand.u32 %v6660, 4294901760
        %6997 = vmatpush1.msra.mxu0 %v6996
        %6998 = vmatprep.subr.mxu0 0.0
        %v6999 = vand.u32 %v6661, 4294901760
        %7000 = vmatpush1.msra.mxu0 %v6999
        %7001 = vmatprep.subr.mxu0 0.0
        %v7002 = vand.u32 %v6662, 4294901760
        %7003 = vmatpush1.msra.mxu0 %v7002
        %7004 = vmatprep.subr.mxu0 0.0
        %v7005 = vand.u32 %v6663, 4294901760
        %7006 = vmatpush1.msra.mxu0 %v7005
        %7007 = vmatprep.subr.mxu0 0.0
        %7008 = vmatpush1.msra.mxu0 0.0
        %7009 = vmatprep.subr.mxu0 0.0
        %7010 = vmatpush1.msra.mxu0 0.0
        %7011 = vmatprep.subr.mxu0 0.0
        %7012 = vmatpush1.msra.mxu0 0.0
        %7013 = vmatprep.subr.mxu0 0.0
        %7014 = vmatpush1.msra.mxu0 0.0
        %7015 = vmatprep.subr.mxu0 0.0
        %7016 = vmatpush1.msra.mxu0 0.0
        %7017 = vmatprep.subr.mxu0 0.0
        %7018 = vmatpush1.msra.mxu0 0.0
        %7019 = vmatprep.subr.mxu0 0.0
        %7020 = vmatpush1.msra.mxu0 0.0
        %7021 = vmatprep.subr.mxu0 0.0
        %7022 = vmatpush1.msra.mxu0 0.0
        %7023 = vmatprep.subr.mxu0 0.0
        %7024 = vmatpush1.msra.mxu0 0.0
        %7025 = vmatprep.subr.mxu0 0.0
        %7026 = vmatpush1.msra.mxu0 0.0
        %7027 = vmatprep.subr.mxu0 0.0
        %7028 = vmatpush1.msra.mxu0 0.0
        %7029 = vmatprep.subr.mxu0 0.0
        %7030 = vmatpush1.msra.mxu0 0.0
        %7031 = vmatprep.subr.mxu0 0.0
        %7032 = vmatpush1.msra.mxu0 0.0
        %7033 = vmatprep.subr.mxu0 0.0
        %7034 = vmatpush1.msra.mxu0 0.0
        %7035 = vmatprep.subr.mxu0 0.0
        %7036 = vmatpush1.msra.mxu0 0.0
        %7037 = vmatprep.subr.mxu0 0.0
        %7038 = vmatpush1.msra.mxu0 0.0
        %7039 = vmatprep.subr.mxu0 0.0
        %7040 = vmatpush1.msra.mxu0 0.0
        %7041 = vmatprep.subr.mxu0 0.0
        %7042 = vmatpush1.msra.mxu0 0.0
        %7043 = vmatprep.subr.mxu0 0.0
        %7044 = vmatpush1.msra.mxu0 0.0
        %7045 = vmatprep.subr.mxu0 0.0
        %7046 = vmatpush1.msra.mxu0 0.0
        %7047 = vmatprep.subr.mxu0 0.0
        %7048 = vmatpush1.msra.mxu0 0.0
        %7049 = vmatprep.subr.mxu0 0.0
        %7050 = vmatpush1.msra.mxu0 0.0
        %7051 = vmatprep.subr.mxu0 0.0
        %7052 = vmatpush1.msra.mxu0 0.0
        %7053 = vmatprep.subr.mxu0 0.0
        %7054 = vmatpush1.msra.mxu0 0.0
        %7055 = vmatprep.subr.mxu0 0.0
        %7056 = vmatpush1.msra.mxu0 0.0
        %7057 = vmatprep.subr.mxu0 0.0
        %7058 = vmatpush1.msra.mxu0 0.0
        %7059 = vmatprep.subr.mxu0 0.0
        %7060 = vmatpush1.msra.mxu0 0.0
        %7061 = vmatprep.subr.mxu0 0.0
        %7062 = vmatpush1.msra.mxu0 0.0
        %7063 = vmatprep.mubr.f32.mxu0 0.0
        %v7064 = vand.u32 %v6665, 4294901760
        %v7065 = vsub.f32 %v6665, %v7064
        %v7066 = vand.u32 %v7065, 4294901760
        %7067 = vmatmul.mubr.f32.gmra.mrb[0].mxu0 %v7066
        %v7068 = vpop.f32.mrb[0].mxu0
        %v7069 = vadd.f32 %v6971, %v7068
        %v7070 = vpop.f32.mrb[0].mxu0
        %7071 = vmatprep.mubr.f32.mxu0 0.0
        %v7072 = vand.u32 %v6668, 4294901760
        %v7073 = vsub.f32 %v6668, %v7072
        %v7074 = vand.u32 %v7073, 4294901760
        %7075 = vmatmul.mubr.f32.gmra.mrb[0].mxu0 %v7074
        %v7076 = vpop.f32.mrb[0].mxu0
        %v7077 = vadd.f32 %v6978, %v7076
        %v7078 = vpop.f32.mrb[0].mxu0
        %7079 = vmatprep.mubr.f32.mxu0 0.0
        %v7080 = vand.u32 %v6671, 4294901760
        %v7081 = vsub.f32 %v6671, %v7080
        %v7082 = vand.u32 %v7081, 4294901760
        %7083 = vmatmul.mubr.f32.gmra.mrb[0].mxu0 %v7082
        %v7084 = vpop.f32.mrb[0].mxu0
        %v7085 = vadd.f32 %v6985, %v7084
        %v7086 = vpop.f32.mrb[0].mxu0
        %7087 = vmatprep.mubr.f32.mxu0 0.0
        %v7088 = vand.u32 %v6674, 4294901760
        %v7089 = vsub.f32 %v6674, %v7088
        %v7090 = vand.u32 %v7089, 4294901760
        %7091 = vmatmul.mubr.f32.gmra.mrb[0].mxu0 %v7090
        %v7092 = vpop.f32.mrb[0].mxu0
        %v7093 = vadd.f32 %v6992, %v7092
        %v7094 = vpop.f32.mrb[0].mxu0
        %7095 = vdwg.mxu0
        %7096 = vmatprep.subr.mxu0 0.0
        %v7097 = vand.u32 %v6660, 4294901760
        %v7098 = vsub.f32 %v6660, %v7097
        %v7099 = vand.u32 %v7098, 4294901760
        %7100 = vmatpush1.msra.mxu0 %v7099
        %7101 = vmatprep.subr.mxu0 0.0
        %v7102 = vand.u32 %v6661, 4294901760
        %v7103 = vsub.f32 %v6661, %v7102
        %v7104 = vand.u32 %v7103, 4294901760
        %7105 = vmatpush1.msra.mxu0 %v7104
        %7106 = vmatprep.subr.mxu0 0.0
        %v7107 = vand.u32 %v6662, 4294901760
        %v7108 = vsub.f32 %v6662, %v7107
        %v7109 = vand.u32 %v7108, 4294901760
        %7110 = vmatpush1.msra.mxu0 %v7109
        %7111 = vmatprep.subr.mxu0 0.0
        %v7112 = vand.u32 %v6663, 4294901760
        %v7113 = vsub.f32 %v6663, %v7112
        %v7114 = vand.u32 %v7113, 4294901760
        %7115 = vmatpush1.msra.mxu0 %v7114
        %7116 = vmatprep.subr.mxu0 0.0
        %7117 = vmatpush1.msra.mxu0 0.0
        %7118 = vmatprep.subr.mxu0 0.0
        %7119 = vmatpush1.msra.mxu0 0.0
        %7120 = vmatprep.subr.mxu0 0.0
        %7121 = vmatpush1.msra.mxu0 0.0
        %7122 = vmatprep.subr.mxu0 0.0
        %7123 = vmatpush1.msra.mxu0 0.0
        %7124 = vmatprep.subr.mxu0 0.0
        %7125 = vmatpush1.msra.mxu0 0.0
        %7126 = vmatprep.subr.mxu0 0.0
        %7127 = vmatpush1.msra.mxu0 0.0
        %7128 = vmatprep.subr.mxu0 0.0
        %7129 = vmatpush1.msra.mxu0 0.0
        %7130 = vmatprep.subr.mxu0 0.0
        %7131 = vmatpush1.msra.mxu0 0.0
        %7132 = vmatprep.subr.mxu0 0.0
        %7133 = vmatpush1.msra.mxu0 0.0
        %7134 = vmatprep.subr.mxu0 0.0
        %7135 = vmatpush1.msra.mxu0 0.0
        %7136 = vmatprep.subr.mxu0 0.0
        %7137 = vmatpush1.msra.mxu0 0.0
        %7138 = vmatprep.subr.mxu0 0.0
        %7139 = vmatpush1.msra.mxu0 0.0
        %7140 = vmatprep.subr.mxu0 0.0
        %7141 = vmatpush1.msra.mxu0 0.0
        %7142 = vmatprep.subr.mxu0 0.0
        %7143 = vmatpush1.msra.mxu0 0.0
        %7144 = vmatprep.subr.mxu0 0.0
        %7145 = vmatpush1.msra.mxu0 0.0
        %7146 = vmatprep.subr.mxu0 0.0
        %7147 = vmatpush1.msra.mxu0 0.0
        %7148 = vmatprep.subr.mxu0 0.0
        %7149 = vmatpush1.msra.mxu0 0.0
        %7150 = vmatprep.subr.mxu0 0.0
        %7151 = vmatpush1.msra.mxu0 0.0
        %7152 = vmatprep.subr.mxu0 0.0
        %7153 = vmatpush1.msra.mxu0 0.0
        %7154 = vmatprep.subr.mxu0 0.0
        %7155 = vmatpush1.msra.mxu0 0.0
        %7156 = vmatprep.subr.mxu0 0.0
        %7157 = vmatpush1.msra.mxu0 0.0
        %7158 = vmatprep.subr.mxu0 0.0
        %7159 = vmatpush1.msra.mxu0 0.0
        %7160 = vmatprep.subr.mxu0 0.0
        %7161 = vmatpush1.msra.mxu0 0.0
        %7162 = vmatprep.subr.mxu0 0.0
        %7163 = vmatpush1.msra.mxu0 0.0
        %7164 = vmatprep.subr.mxu0 0.0
        %7165 = vmatpush1.msra.mxu0 0.0
        %7166 = vmatprep.subr.mxu0 0.0
        %7167 = vmatpush1.msra.mxu0 0.0
        %7168 = vmatprep.subr.mxu0 0.0
        %7169 = vmatpush1.msra.mxu0 0.0
        %7170 = vmatprep.subr.mxu0 0.0
        %7171 = vmatpush1.msra.mxu0 0.0
        %7172 = vmatprep.mubr.f32.mxu0 0.0
        %v7173 = vand.u32 %v6665, 4294901760
        %7174 = vmatmul.mubr.f32.gmra.mrb[0].mxu0 %v7173
        %v7175 = vpop.f32.mrb[0].mxu0
        %v7176 = vadd.f32 %v7069, %v7175
        %v7177 = vpop.f32.mrb[0].mxu0
        %7178 = vmatprep.mubr.f32.mxu0 0.0
        %v7179 = vand.u32 %v6668, 4294901760
        %7180 = vmatmul.mubr.f32.gmra.mrb[0].mxu0 %v7179
        %v7181 = vpop.f32.mrb[0].mxu0
        %v7182 = vadd.f32 %v7077, %v7181
        %v7183 = vpop.f32.mrb[0].mxu0
        %7184 = vmatprep.mubr.f32.mxu0 0.0
        %v7185 = vand.u32 %v6671, 4294901760
        %7186 = vmatmul.mubr.f32.gmra.mrb[0].mxu0 %v7185
        %v7187 = vpop.f32.mrb[0].mxu0
        %v7188 = vadd.f32 %v7085, %v7187
        %v7189 = vpop.f32.mrb[0].mxu0
        %7190 = vmatprep.mubr.f32.mxu0 0.0
        %v7191 = vand.u32 %v6674, 4294901760
        %7192 = vmatmul.mubr.f32.gmra.mrb[0].mxu0 %v7191
        %v7193 = vpop.f32.mrb[0].mxu0
        %v7194 = vadd.f32 %v7093, %v7193
        %v7195 = vpop.f32.mrb[0].mxu0
        %7196 = vdwg.mxu0
        %7197 = vmatprep.subr.mxu0 0.0
        %v7198 = vand.u32 %v6660, 4294901760
        %7199 = vmatpush1.msra.mxu0 %v7198
        %7200 = vmatprep.subr.mxu0 0.0
        %v7201 = vand.u32 %v6661, 4294901760
        %7202 = vmatpush1.msra.mxu0 %v7201
        %7203 = vmatprep.subr.mxu0 0.0
        %v7204 = vand.u32 %v6662, 4294901760
        %7205 = vmatpush1.msra.mxu0 %v7204
        %7206 = vmatprep.subr.mxu0 0.0
        %v7207 = vand.u32 %v6663, 4294901760
        %7208 = vmatpush1.msra.mxu0 %v7207
        %7209 = vmatprep.subr.mxu0 0.0
        %7210 = vmatpush1.msra.mxu0 0.0
        %7211 = vmatprep.subr.mxu0 0.0
        %7212 = vmatpush1.msra.mxu0 0.0
        %7213 = vmatprep.subr.mxu0 0.0
        %7214 = vmatpush1.msra.mxu0 0.0
        %7215 = vmatprep.subr.mxu0 0.0
        %7216 = vmatpush1.msra.mxu0 0.0
        %7217 = vmatprep.subr.mxu0 0.0
        %7218 = vmatpush1.msra.mxu0 0.0
        %7219 = vmatprep.subr.mxu0 0.0
        %7220 = vmatpush1.msra.mxu0 0.0
        %7221 = vmatprep.subr.mxu0 0.0
        %7222 = vmatpush1.msra.mxu0 0.0
        %7223 = vmatprep.subr.mxu0 0.0
        %7224 = vmatpush1.msra.mxu0 0.0
        %7225 = vmatprep.subr.mxu0 0.0
        %7226 = vmatpush1.msra.mxu0 0.0
        %7227 = vmatprep.subr.mxu0 0.0
        %7228 = vmatpush1.msra.mxu0 0.0
        %7229 = vmatprep.subr.mxu0 0.0
        %7230 = vmatpush1.msra.mxu0 0.0
        %7231 = vmatprep.subr.mxu0 0.0
        %7232 = vmatpush1.msra.mxu0 0.0
        %7233 = vmatprep.subr.mxu0 0.0
        %7234 = vmatpush1.msra.mxu0 0.0
        %7235 = vmatprep.subr.mxu0 0.0
        %7236 = vmatpush1.msra.mxu0 0.0
        %7237 = vmatprep.subr.mxu0 0.0
        %7238 = vmatpush1.msra.mxu0 0.0
        %7239 = vmatprep.subr.mxu0 0.0
        %7240 = vmatpush1.msra.mxu0 0.0
        %7241 = vmatprep.subr.mxu0 0.0
        %7242 = vmatpush1.msra.mxu0 0.0
        %7243 = vmatprep.subr.mxu0 0.0
        %7244 = vmatpush1.msra.mxu0 0.0
        %7245 = vmatprep.subr.mxu0 0.0
        %7246 = vmatpush1.msra.mxu0 0.0
        %7247 = vmatprep.subr.mxu0 0.0
        %7248 = vmatpush1.msra.mxu0 0.0
        %7249 = vmatprep.subr.mxu0 0.0
        %7250 = vmatpush1.msra.mxu0 0.0
        %7251 = vmatprep.subr.mxu0 0.0
        %7252 = vmatpush1.msra.mxu0 0.0
        %7253 = vmatprep.subr.mxu0 0.0
        %7254 = vmatpush1.msra.mxu0 0.0
        %7255 = vmatprep.subr.mxu0 0.0
        %7256 = vmatpush1.msra.mxu0 0.0
        %7257 = vmatprep.subr.mxu0 0.0
        %7258 = vmatpush1.msra.mxu0 0.0
        %7259 = vmatprep.subr.mxu0 0.0
        %7260 = vmatpush1.msra.mxu0 0.0
        %7261 = vmatprep.subr.mxu0 0.0
        %7262 = vmatpush1.msra.mxu0 0.0
        %7263 = vmatprep.subr.mxu0 0.0
        %7264 = vmatpush1.msra.mxu0 0.0
        %7265 = vmatprep.mubr.f32.mxu0 0.0
        %v7266 = vand.u32 %v6665, 4294901760
        %7267 = vmatmul.mubr.f32.gmra.mrb[0].mxu0 %v7266
        %v7268 = vpop.f32.mrb[0].mxu0
        %v7269 = vadd.f32 %v7176, %v7268
        %v7270 = vpop.f32.mrb[0].mxu0
        %7271 = vmatprep.mubr.f32.mxu0 0.0
        %v7272 = vand.u32 %v6668, 4294901760
        %7273 = vmatmul.mubr.f32.gmra.mrb[0].mxu0 %v7272
        %v7274 = vpop.f32.mrb[0].mxu0
        %v7275 = vadd.f32 %v7182, %v7274
        %v7276 = vpop.f32.mrb[0].mxu0
        %7277 = vmatprep.mubr.f32.mxu0 0.0
        %v7278 = vand.u32 %v6671, 4294901760
        %7279 = vmatmul.mubr.f32.gmra.mrb[0].mxu0 %v7278
        %v7280 = vpop.f32.mrb[0].mxu0
        %v7281 = vadd.f32 %v7188, %v7280
        %v7282 = vpop.f32.mrb[0].mxu0
        %7283 = vmatprep.mubr.f32.mxu0 0.0
        %v7284 = vand.u32 %v6674, 4294901760
        %7285 = vmatmul.mubr.f32.gmra.mrb[0].mxu0 %v7284
        %v7286 = vpop.f32.mrb[0].mxu0
        %v7287 = vadd.f32 %v7194, %v7286
        %v7288 = vpop.f32.mrb[0].mxu0
        %7289 = vdwg.mxu0
        %v7290 = vadd.f32 %v3911, %v7269
        %v7291 = vadd.f32 %v3912, %v7275
        %v7292 = vadd.f32 %v3913, %v7281
        %v7293 = vadd.f32 %v3914, %v7287
        %v7294 = vtanh.pop %v7290
        %v7295 = vtanh.pop %v7291
        %v7296 = vtanh.pop %v7292
        %v7297 = vtanh.pop %v7293
        %v7298 = vsub.f32 1.0, %v6643
        %v7299 = vsub.f32 1.0, %v6644
        %v7300 = vsub.f32 1.0, %v6645
        %v7301 = vsub.f32 1.0, %v6646
        %v7302 = vmul.f32 %v7298, %v7294
        %v7303 = vmul.f32 %v7299, %v7295
        %v7304 = vmul.f32 %v7300, %v7296
        %v7305 = vmul.f32 %v7301, %v7297
        %v7306 = vmul.f32 %v6635, %v5620
        %v7307 = vmul.f32 %v6636, %v5621
        %v7308 = vmul.f32 %v6637, %v5622
        %v7309 = vmul.f32 %v6638, %v5623
        %v7310 = vadd.f32 %v7302, %v7306
        %v7311 = vadd.f32 %v7303, %v7307
        %v7312 = vadd.f32 %v7304, %v7308
        %v7313 = vadd.f32 %v7305, %v7309
        %s7314 = scalar_lea.vmem %s5, 192
        %v7315 = vld [vmem:[%s7314] sm:$0xff]
        %v7316 = vld [vmem:[%s7314 + $0x8] sm:$0xff]
        %v7317 = vld [vmem:[%s7314 + $0x10] sm:$0xff]
        %v7318 = vld [vmem:[%s7314 + $0x18] sm:$0xff]
        %v7319 = vld [vmem:[%s7314 + $0x20] sm:$0xff]
        %v7320 = vld [vmem:[%s7314 + $0x28] sm:$0xff]
        %v7321 = vld [vmem:[%s7314 + $0x30] sm:$0xff]
        %v7322 = vld [vmem:[%s7314 + $0x38] sm:$0xff]
        %v7323 = vld [vmem:[%s7314 + $0x40] sm:$0xff]
        %v7324 = vld [vmem:[%s7314 + $0x48] sm:$0xff]
        %v7325 = vld [vmem:[%s7314 + $0x50] sm:$0xff]
        %v7326 = vld [vmem:[%s7314 + $0x58] sm:$0xff]
        %v7328 = vsel %vm3947, %v7315, 0
        %v7331 = vsel %vm3947, %v7316, 0
        %v7334 = vsel %vm3947, %v7317, 0
        %v7337 = vsel %vm3947, %v7318, 0
        %v7340 = vsel %vm3947, %v7319, 0
        %v7343 = vsel %vm3947, %v7320, 0
        %v7346 = vsel %vm3947, %v7321, 0
        %v7349 = vsel %vm3947, %v7322, 0
        %v7352 = vsel %vm3947, %v7323, 0
        %v7355 = vsel %vm3947, %v7324, 0
        %v7358 = vsel %vm3947, %v7325, 0
        %v7361 = vsel %vm3947, %v7326, 0
        %7363 = vmatprep.subr.mxu0 0.0
        %v7364 = vand.u32 %v7310, 4294901760
        %7365 = vmatpush1.msra.mxu0 %v7364
        %7366 = vmatprep.subr.mxu0 0.0
        %v7367 = vand.u32 %v7311, 4294901760
        %7368 = vmatpush1.msra.mxu0 %v7367
        %7369 = vmatprep.subr.mxu0 0.0
        %v7370 = vand.u32 %v7312, 4294901760
        %7371 = vmatpush1.msra.mxu0 %v7370
        %7372 = vmatprep.subr.mxu0 0.0
        %v7373 = vand.u32 %v7313, 4294901760
        %7374 = vmatpush1.msra.mxu0 %v7373
        %7375 = vmatprep.subr.mxu0 0.0
        %7376 = vmatpush1.msra.mxu0 0.0
        %7377 = vmatprep.subr.mxu0 0.0
        %7378 = vmatpush1.msra.mxu0 0.0
        %7379 = vmatprep.subr.mxu0 0.0
        %7380 = vmatpush1.msra.mxu0 0.0
        %7381 = vmatprep.subr.mxu0 0.0
        %7382 = vmatpush1.msra.mxu0 0.0
        %7383 = vmatprep.subr.mxu0 0.0
        %7384 = vmatpush1.msra.mxu0 0.0
        %7385 = vmatprep.subr.mxu0 0.0
        %7386 = vmatpush1.msra.mxu0 0.0
        %7387 = vmatprep.subr.mxu0 0.0
        %7388 = vmatpush1.msra.mxu0 0.0
        %7389 = vmatprep.subr.mxu0 0.0
        %7390 = vmatpush1.msra.mxu0 0.0
        %7391 = vmatprep.subr.mxu0 0.0
        %7392 = vmatpush1.msra.mxu0 0.0
        %7393 = vmatprep.subr.mxu0 0.0
        %7394 = vmatpush1.msra.mxu0 0.0
        %7395 = vmatprep.subr.mxu0 0.0
        %7396 = vmatpush1.msra.mxu0 0.0
        %7397 = vmatprep.subr.mxu0 0.0
        %7398 = vmatpush1.msra.mxu0 0.0
        %7399 = vmatprep.subr.mxu0 0.0
        %7400 = vmatpush1.msra.mxu0 0.0
        %7401 = vmatprep.subr.mxu0 0.0
        %7402 = vmatpush1.msra.mxu0 0.0
        %7403 = vmatprep.subr.mxu0 0.0
        %7404 = vmatpush1.msra.mxu0 0.0
        %7405 = vmatprep.subr.mxu0 0.0
        %7406 = vmatpush1.msra.mxu0 0.0
        %7407 = vmatprep.subr.mxu0 0.0
        %7408 = vmatpush1.msra.mxu0 0.0
        %7409 = vmatprep.subr.mxu0 0.0
        %7410 = vmatpush1.msra.mxu0 0.0
        %7411 = vmatprep.subr.mxu0 0.0
        %7412 = vmatpush1.msra.mxu0 0.0
        %7413 = vmatprep.subr.mxu0 0.0
        %7414 = vmatpush1.msra.mxu0 0.0
        %7415 = vmatprep.subr.mxu0 0.0
        %7416 = vmatpush1.msra.mxu0 0.0
        %7417 = vmatprep.subr.mxu0 0.0
        %7418 = vmatpush1.msra.mxu0 0.0
        %7419 = vmatprep.subr.mxu0 0.0
        %7420 = vmatpush1.msra.mxu0 0.0
        %7421 = vmatprep.subr.mxu0 0.0
        %7422 = vmatpush1.msra.mxu0 0.0
        %7423 = vmatprep.subr.mxu0 0.0
        %7424 = vmatpush1.msra.mxu0 0.0
        %7425 = vmatprep.subr.mxu0 0.0
        %7426 = vmatpush1.msra.mxu0 0.0
        %7427 = vmatprep.subr.mxu0 0.0
        %7428 = vmatpush1.msra.mxu0 0.0
        %7429 = vmatprep.subr.mxu0 0.0
        %7430 = vmatpush1.msra.mxu0 0.0
        %7431 = vmatprep.mubr.f32.mxu0 0.0
        %v7432 = vand.u32 %v7328, 4294901760
        %v7433 = vsub.f32 %v7328, %v7432
        %v7434 = vand.u32 %v7433, 4294901760
        %v7435 = vsub.f32 %v7433, %v7434
        %v7436 = vand.u32 %v7435, 4294901760
        %7437 = vmatmul.mubr.f32.gmra.mrb[0].mxu0 %v7436
        %v7438 = vpop.f32.mrb[0].mxu0
        %v7439 = vadd.f32 0.0, %v7438
        %v7440 = vpop.f32.mrb[0].mxu0
        %7441 = vmatprep.mubr.f32.mxu0 0.0
        %v7442 = vand.u32 %v7331, 4294901760
        %v7443 = vsub.f32 %v7331, %v7442
        %v7444 = vand.u32 %v7443, 4294901760
        %v7445 = vsub.f32 %v7443, %v7444
        %v7446 = vand.u32 %v7445, 4294901760
        %7447 = vmatmul.mubr.f32.gmra.mrb[0].mxu0 %v7446
        %v7448 = vpop.f32.mrb[0].mxu0
        %v7449 = vadd.f32 0.0, %v7448
        %v7450 = vpop.f32.mrb[0].mxu0
        %7451 = vmatprep.mubr.f32.mxu0 0.0
        %v7452 = vand.u32 %v7334, 4294901760
        %v7453 = vsub.f32 %v7334, %v7452
        %v7454 = vand.u32 %v7453, 4294901760
        %v7455 = vsub.f32 %v7453, %v7454
        %v7456 = vand.u32 %v7455, 4294901760
        %7457 = vmatmul.mubr.f32.gmra.mrb[0].mxu0 %v7456
        %v7458 = vpop.f32.mrb[0].mxu0
        %v7459 = vadd.f32 0.0, %v7458
        %v7460 = vpop.f32.mrb[0].mxu0
        %7461 = vmatprep.mubr.f32.mxu0 0.0
        %v7462 = vand.u32 %v7337, 4294901760
        %v7463 = vsub.f32 %v7337, %v7462
        %v7464 = vand.u32 %v7463, 4294901760
        %v7465 = vsub.f32 %v7463, %v7464
        %v7466 = vand.u32 %v7465, 4294901760
        %7467 = vmatmul.mubr.f32.gmra.mrb[0].mxu0 %v7466
        %v7468 = vpop.f32.mrb[0].mxu0
        %v7469 = vadd.f32 0.0, %v7468
        %v7470 = vpop.f32.mrb[0].mxu0
        %7471 = vmatprep.mubr.f32.mxu0 0.0
        %v7472 = vand.u32 %v7340, 4294901760
        %v7473 = vsub.f32 %v7340, %v7472
        %v7474 = vand.u32 %v7473, 4294901760
        %v7475 = vsub.f32 %v7473, %v7474
        %v7476 = vand.u32 %v7475, 4294901760
        %7477 = vmatmul.mubr.f32.gmra.mrb[0].mxu0 %v7476
        %v7478 = vpop.f32.mrb[0].mxu0
        %v7479 = vadd.f32 0.0, %v7478
        %v7480 = vpop.f32.mrb[0].mxu0
        %7481 = vmatprep.mubr.f32.mxu0 0.0
        %v7482 = vand.u32 %v7343, 4294901760
        %v7483 = vsub.f32 %v7343, %v7482
        %v7484 = vand.u32 %v7483, 4294901760
        %v7485 = vsub.f32 %v7483, %v7484
        %v7486 = vand.u32 %v7485, 4294901760
        %7487 = vmatmul.mubr.f32.gmra.mrb[0].mxu0 %v7486
        %v7488 = vpop.f32.mrb[0].mxu0
        %v7489 = vadd.f32 0.0, %v7488
        %v7490 = vpop.f32.mrb[0].mxu0
        %7491 = vmatprep.mubr.f32.mxu0 0.0
        %v7492 = vand.u32 %v7346, 4294901760
        %v7493 = vsub.f32 %v7346, %v7492
        %v7494 = vand.u32 %v7493, 4294901760
        %v7495 = vsub.f32 %v7493, %v7494
        %v7496 = vand.u32 %v7495, 4294901760
        %7497 = vmatmul.mubr.f32.gmra.mrb[0].mxu0 %v7496
        %v7498 = vpop.f32.mrb[0].mxu0
        %v7499 = vadd.f32 0.0, %v7498
        %v7500 = vpop.f32.mrb[0].mxu0
        %7501 = vmatprep.mubr.f32.mxu0 0.0
        %v7502 = vand.u32 %v7349, 4294901760
        %v7503 = vsub.f32 %v7349, %v7502
        %v7504 = vand.u32 %v7503, 4294901760
        %v7505 = vsub.f32 %v7503, %v7504
        %v7506 = vand.u32 %v7505, 4294901760
        %7507 = vmatmul.mubr.f32.gmra.mrb[0].mxu0 %v7506
        %v7508 = vpop.f32.mrb[0].mxu0
        %v7509 = vadd.f32 0.0, %v7508
        %v7510 = vpop.f32.mrb[0].mxu0
        %7511 = vmatprep.mubr.f32.mxu0 0.0
        %v7512 = vand.u32 %v7352, 4294901760
        %v7513 = vsub.f32 %v7352, %v7512
        %v7514 = vand.u32 %v7513, 4294901760
        %v7515 = vsub.f32 %v7513, %v7514
        %v7516 = vand.u32 %v7515, 4294901760
        %7517 = vmatmul.mubr.f32.gmra.mrb[0].mxu0 %v7516
        %v7518 = vpop.f32.mrb[0].mxu0
        %v7519 = vadd.f32 0.0, %v7518
        %v7520 = vpop.f32.mrb[0].mxu0
        %7521 = vmatprep.mubr.f32.mxu0 0.0
        %v7522 = vand.u32 %v7355, 4294901760
        %v7523 = vsub.f32 %v7355, %v7522
        %v7524 = vand.u32 %v7523, 4294901760
        %v7525 = vsub.f32 %v7523, %v7524
        %v7526 = vand.u32 %v7525, 4294901760
        %7527 = vmatmul.mubr.f32.gmra.mrb[0].mxu0 %v7526
        %v7528 = vpop.f32.mrb[0].mxu0
        %v7529 = vadd.f32 0.0, %v7528
        %v7530 = vpop.f32.mrb[0].mxu0
        %7531 = vmatprep.mubr.f32.mxu0 0.0
        %v7532 = vand.u32 %v7358, 4294901760
        %v7533 = vsub.f32 %v7358, %v7532
        %v7534 = vand.u32 %v7533, 4294901760
        %v7535 = vsub.f32 %v7533, %v7534
        %v7536 = vand.u32 %v7535, 4294901760
        %7537 = vmatmul.mubr.f32.gmra.mrb[0].mxu0 %v7536
        %v7538 = vpop.f32.mrb[0].mxu0
        %v7539 = vadd.f32 0.0, %v7538
        %v7540 = vpop.f32.mrb[0].mxu0
        %7541 = vmatprep.mubr.f32.mxu0 0.0
        %v7542 = vand.u32 %v7361, 4294901760
        %v7543 = vsub.f32 %v7361, %v7542
        %v7544 = vand.u32 %v7543, 4294901760
        %v7545 = vsub.f32 %v7543, %v7544
        %v7546 = vand.u32 %v7545, 4294901760
        %7547 = vmatmul.mubr.f32.gmra.mrb[0].mxu0 %v7546
        %v7548 = vpop.f32.mrb[0].mxu0
        %v7549 = vadd.f32 0.0, %v7548
        %v7550 = vpop.f32.mrb[0].mxu0
        %7551 = vdwg.mxu0
        %7552 = vmatprep.subr.mxu0 0.0
        %v7553 = vand.u32 %v7310, 4294901760
        %v7554 = vsub.f32 %v7310, %v7553
        %v7555 = vand.u32 %v7554, 4294901760
        %v7556 = vsub.f32 %v7554, %v7555
        %v7557 = vand.u32 %v7556, 4294901760
        %7558 = vmatpush1.msra.mxu0 %v7557
        %7559 = vmatprep.subr.mxu0 0.0
        %v7560 = vand.u32 %v7311, 4294901760
        %v7561 = vsub.f32 %v7311, %v7560
        %v7562 = vand.u32 %v7561, 4294901760
        %v7563 = vsub.f32 %v7561, %v7562
        %v7564 = vand.u32 %v7563, 4294901760
        %7565 = vmatpush1.msra.mxu0 %v7564
        %7566 = vmatprep.subr.mxu0 0.0
        %v7567 = vand.u32 %v7312, 4294901760
        %v7568 = vsub.f32 %v7312, %v7567
        %v7569 = vand.u32 %v7568, 4294901760
        %v7570 = vsub.f32 %v7568, %v7569
        %v7571 = vand.u32 %v7570, 4294901760
        %7572 = vmatpush1.msra.mxu0 %v7571
        %7573 = vmatprep.subr.mxu0 0.0
        %v7574 = vand.u32 %v7313, 4294901760
        %v7575 = vsub.f32 %v7313, %v7574
        %v7576 = vand.u32 %v7575, 4294901760
        %v7577 = vsub.f32 %v7575, %v7576
        %v7578 = vand.u32 %v7577, 4294901760
        %7579 = vmatpush1.msra.mxu0 %v7578
        %7580 = vmatprep.subr.mxu0 0.0
        %7581 = vmatpush1.msra.mxu0 0.0
        %7582 = vmatprep.subr.mxu0 0.0
        %7583 = vmatpush1.msra.mxu0 0.0
        %7584 = vmatprep.subr.mxu0 0.0
        %7585 = vmatpush1.msra.mxu0 0.0
        %7586 = vmatprep.subr.mxu0 0.0
        %7587 = vmatpush1.msra.mxu0 0.0
        %7588 = vmatprep.subr.mxu0 0.0
        %7589 = vmatpush1.msra.mxu0 0.0
        %7590 = vmatprep.subr.mxu0 0.0
        %7591 = vmatpush1.msra.mxu0 0.0
        %7592 = vmatprep.subr.mxu0 0.0
        %7593 = vmatpush1.msra.mxu0 0.0
        %7594 = vmatprep.subr.mxu0 0.0
        %7595 = vmatpush1.msra.mxu0 0.0
        %7596 = vmatprep.subr.mxu0 0.0
        %7597 = vmatpush1.msra.mxu0 0.0
        %7598 = vmatprep.subr.mxu0 0.0
        %7599 = vmatpush1.msra.mxu0 0.0
        %7600 = vmatprep.subr.mxu0 0.0
        %7601 = vmatpush1.msra.mxu0 0.0
        %7602 = vmatprep.subr.mxu0 0.0
        %7603 = vmatpush1.msra.mxu0 0.0
        %7604 = vmatprep.subr.mxu0 0.0
        %7605 = vmatpush1.msra.mxu0 0.0
        %7606 = vmatprep.subr.mxu0 0.0
        %7607 = vmatpush1.msra.mxu0 0.0
        %7608 = vmatprep.subr.mxu0 0.0
        %7609 = vmatpush1.msra.mxu0 0.0
        %7610 = vmatprep.subr.mxu0 0.0
        %7611 = vmatpush1.msra.mxu0 0.0
        %7612 = vmatprep.subr.mxu0 0.0
        %7613 = vmatpush1.msra.mxu0 0.0
        %7614 = vmatprep.subr.mxu0 0.0
        %7615 = vmatpush1.msra.mxu0 0.0
        %7616 = vmatprep.subr.mxu0 0.0
        %7617 = vmatpush1.msra.mxu0 0.0
        %7618 = vmatprep.subr.mxu0 0.0
        %7619 = vmatpush1.msra.mxu0 0.0
        %7620 = vmatprep.subr.mxu0 0.0
        %7621 = vmatpush1.msra.mxu0 0.0
        %7622 = vmatprep.subr.mxu0 0.0
        %7623 = vmatpush1.msra.mxu0 0.0
        %7624 = vmatprep.subr.mxu0 0.0
        %7625 = vmatpush1.msra.mxu0 0.0
        %7626 = vmatprep.subr.mxu0 0.0
        %7627 = vmatpush1.msra.mxu0 0.0
        %7628 = vmatprep.subr.mxu0 0.0
        %7629 = vmatpush1.msra.mxu0 0.0
        %7630 = vmatprep.subr.mxu0 0.0
        %7631 = vmatpush1.msra.mxu0 0.0
        %7632 = vmatprep.subr.mxu0 0.0
        %7633 = vmatpush1.msra.mxu0 0.0
        %7634 = vmatprep.subr.mxu0 0.0
        %7635 = vmatpush1.msra.mxu0 0.0
        %7636 = vmatprep.mubr.f32.mxu0 0.0
        %v7637 = vand.u32 %v7328, 4294901760
        %7638 = vmatmul.mubr.f32.gmra.mrb[0].mxu0 %v7637
        %v7639 = vpop.f32.mrb[0].mxu0
        %v7640 = vadd.f32 %v7439, %v7639
        %v7641 = vpop.f32.mrb[0].mxu0
        %7642 = vmatprep.mubr.f32.mxu0 0.0
        %v7643 = vand.u32 %v7331, 4294901760
        %7644 = vmatmul.mubr.f32.gmra.mrb[0].mxu0 %v7643
        %v7645 = vpop.f32.mrb[0].mxu0
        %v7646 = vadd.f32 %v7449, %v7645
        %v7647 = vpop.f32.mrb[0].mxu0
        %7648 = vmatprep.mubr.f32.mxu0 0.0
        %v7649 = vand.u32 %v7334, 4294901760
        %7650 = vmatmul.mubr.f32.gmra.mrb[0].mxu0 %v7649
        %v7651 = vpop.f32.mrb[0].mxu0
        %v7652 = vadd.f32 %v7459, %v7651
        %v7653 = vpop.f32.mrb[0].mxu0
        %7654 = vmatprep.mubr.f32.mxu0 0.0
        %v7655 = vand.u32 %v7337, 4294901760
        %7656 = vmatmul.mubr.f32.gmra.mrb[0].mxu0 %v7655
        %v7657 = vpop.f32.mrb[0].mxu0
        %v7658 = vadd.f32 %v7469, %v7657
        %v7659 = vpop.f32.mrb[0].mxu0
        %7660 = vmatprep.mubr.f32.mxu0 0.0
        %v7661 = vand.u32 %v7340, 4294901760
        %7662 = vmatmul.mubr.f32.gmra.mrb[0].mxu0 %v7661
        %v7663 = vpop.f32.mrb[0].mxu0
        %v7664 = vadd.f32 %v7479, %v7663
        %v7665 = vpop.f32.mrb[0].mxu0
        %7666 = vmatprep.mubr.f32.mxu0 0.0
        %v7667 = vand.u32 %v7343, 4294901760
        %7668 = vmatmul.mubr.f32.gmra.mrb[0].mxu0 %v7667
        %v7669 = vpop.f32.mrb[0].mxu0
        %v7670 = vadd.f32 %v7489, %v7669
        %v7671 = vpop.f32.mrb[0].mxu0
        %7672 = vmatprep.mubr.f32.mxu0 0.0
        %v7673 = vand.u32 %v7346, 4294901760
        %7674 = vmatmul.mubr.f32.gmra.mrb[0].mxu0 %v7673
        %v7675 = vpop.f32.mrb[0].mxu0
        %v7676 = vadd.f32 %v7499, %v7675
        %v7677 = vpop.f32.mrb[0].mxu0
        %7678 = vmatprep.mubr.f32.mxu0 0.0
        %v7679 = vand.u32 %v7349, 4294901760
        %7680 = vmatmul.mubr.f32.gmra.mrb[0].mxu0 %v7679
        %v7681 = vpop.f32.mrb[0].mxu0
        %v7682 = vadd.f32 %v7509, %v7681
        %v7683 = vpop.f32.mrb[0].mxu0
        %7684 = vmatprep.mubr.f32.mxu0 0.0
        %v7685 = vand.u32 %v7352, 4294901760
        %7686 = vmatmul.mubr.f32.gmra.mrb[0].mxu0 %v7685
        %v7687 = vpop.f32.mrb[0].mxu0
        %v7688 = vadd.f32 %v7519, %v7687
        %v7689 = vpop.f32.mrb[0].mxu0
        %7690 = vmatprep.mubr.f32.mxu0 0.0
        %v7691 = vand.u32 %v7355, 4294901760
        %7692 = vmatmul.mubr.f32.gmra.mrb[0].mxu0 %v7691
        %v7693 = vpop.f32.mrb[0].mxu0
        %v7694 = vadd.f32 %v7529, %v7693
        %v7695 = vpop.f32.mrb[0].mxu0
        %7696 = vmatprep.mubr.f32.mxu0 0.0
        %v7697 = vand.u32 %v7358, 4294901760
        %7698 = vmatmul.mubr.f32.gmra.mrb[0].mxu0 %v7697
        %v7699 = vpop.f32.mrb[0].mxu0
        %v7700 = vadd.f32 %v7539, %v7699
        %v7701 = vpop.f32.mrb[0].mxu0
        %7702 = vmatprep.mubr.f32.mxu0 0.0
        %v7703 = vand.u32 %v7361, 4294901760
        %7704 = vmatmul.mubr.f32.gmra.mrb[0].mxu0 %v7703
        %v7705 = vpop.f32.mrb[0].mxu0
        %v7706 = vadd.f32 %v7549, %v7705
        %v7707 = vpop.f32.mrb[0].mxu0
        %7708 = vdwg.mxu0
        %7709 = vmatprep.subr.mxu0 0.0
        %v7710 = vand.u32 %v7310, 4294901760
        %v7711 = vsub.f32 %v7310, %v7710
        %7712 = vmatpush1.msra.mxu0 %v7711
        %7713 = vmatprep.subr.mxu0 0.0
        %v7714 = vand.u32 %v7311, 4294901760
        %v7715 = vsub.f32 %v7311, %v7714
        %7716 = vmatpush1.msra.mxu0 %v7715
        %7717 = vmatprep.subr.mxu0 0.0
        %v7718 = vand.u32 %v7312, 4294901760
        %v7719 = vsub.f32 %v7312, %v7718
        %7720 = vmatpush1.msra.mxu0 %v7719
        %7721 = vmatprep.subr.mxu0 0.0
        %v7722 = vand.u32 %v7313, 4294901760
        %v7723 = vsub.f32 %v7313, %v7722
        %7724 = vmatpush1.msra.mxu0 %v7723
        %7725 = vmatprep.subr.mxu0 0.0
        %7726 = vmatpush1.msra.mxu0 0.0
        %7727 = vmatprep.subr.mxu0 0.0
        %7728 = vmatpush1.msra.mxu0 0.0
        %7729 = vmatprep.subr.mxu0 0.0
        %7730 = vmatpush1.msra.mxu0 0.0
        %7731 = vmatprep.subr.mxu0 0.0
        %7732 = vmatpush1.msra.mxu0 0.0
        %7733 = vmatprep.subr.mxu0 0.0
        %7734 = vmatpush1.msra.mxu0 0.0
        %7735 = vmatprep.subr.mxu0 0.0
        %7736 = vmatpush1.msra.mxu0 0.0
        %7737 = vmatprep.subr.mxu0 0.0
        %7738 = vmatpush1.msra.mxu0 0.0
        %7739 = vmatprep.subr.mxu0 0.0
        %7740 = vmatpush1.msra.mxu0 0.0
        %7741 = vmatprep.subr.mxu0 0.0
        %7742 = vmatpush1.msra.mxu0 0.0
        %7743 = vmatprep.subr.mxu0 0.0
        %7744 = vmatpush1.msra.mxu0 0.0
        %7745 = vmatprep.subr.mxu0 0.0
        %7746 = vmatpush1.msra.mxu0 0.0
        %7747 = vmatprep.subr.mxu0 0.0
        %7748 = vmatpush1.msra.mxu0 0.0
        %7749 = vmatprep.subr.mxu0 0.0
        %7750 = vmatpush1.msra.mxu0 0.0
        %7751 = vmatprep.subr.mxu0 0.0
        %7752 = vmatpush1.msra.mxu0 0.0
        %7753 = vmatprep.subr.mxu0 0.0
        %7754 = vmatpush1.msra.mxu0 0.0
        %7755 = vmatprep.subr.mxu0 0.0
        %7756 = vmatpush1.msra.mxu0 0.0
        %7757 = vmatprep.subr.mxu0 0.0
        %7758 = vmatpush1.msra.mxu0 0.0
        %7759 = vmatprep.subr.mxu0 0.0
        %7760 = vmatpush1.msra.mxu0 0.0
        %7761 = vmatprep.subr.mxu0 0.0
        %7762 = vmatpush1.msra.mxu0 0.0
        %7763 = vmatprep.subr.mxu0 0.0
        %7764 = vmatpush1.msra.mxu0 0.0
        %7765 = vmatprep.subr.mxu0 0.0
        %7766 = vmatpush1.msra.mxu0 0.0
        %7767 = vmatprep.subr.mxu0 0.0
        %7768 = vmatpush1.msra.mxu0 0.0
        %7769 = vmatprep.subr.mxu0 0.0
        %7770 = vmatpush1.msra.mxu0 0.0
        %7771 = vmatprep.subr.mxu0 0.0
        %7772 = vmatpush1.msra.mxu0 0.0
        %7773 = vmatprep.subr.mxu0 0.0
        %7774 = vmatpush1.msra.mxu0 0.0
        %7775 = vmatprep.subr.mxu0 0.0
        %7776 = vmatpush1.msra.mxu0 0.0
        %7777 = vmatprep.subr.mxu0 0.0
        %7778 = vmatpush1.msra.mxu0 0.0
        %7779 = vmatprep.subr.mxu0 0.0
        %7780 = vmatpush1.msra.mxu0 0.0
        %7781 = vmatprep.mubr.f32.mxu0 0.0
        %v7782 = vand.u32 %v7328, 4294901760
        %v7783 = vsub.f32 %v7328, %v7782
        %7784 = vmatmul.mubr.f32.gmra.mrb[0].mxu0 %v7783
        %v7785 = vpop.f32.mrb[0].mxu0
        %v7786 = vadd.f32 %v7640, %v7785
        %v7787 = vpop.f32.mrb[0].mxu0
        %7788 = vmatprep.mubr.f32.mxu0 0.0
        %v7789 = vand.u32 %v7331, 4294901760
        %v7790 = vsub.f32 %v7331, %v7789
        %7791 = vmatmul.mubr.f32.gmra.mrb[0].mxu0 %v7790
        %v7792 = vpop.f32.mrb[0].mxu0
        %v7793 = vadd.f32 %v7646, %v7792
        %v7794 = vpop.f32.mrb[0].mxu0
        %7795 = vmatprep.mubr.f32.mxu0 0.0
        %v7796 = vand.u32 %v7334, 4294901760
        %v7797 = vsub.f32 %v7334, %v7796
        %7798 = vmatmul.mubr.f32.gmra.mrb[0].mxu0 %v7797
        %v7799 = vpop.f32.mrb[0].mxu0
        %v7800 = vadd.f32 %v7652, %v7799
        %v7801 = vpop.f32.mrb[0].mxu0
        %7802 = vmatprep.mubr.f32.mxu0 0.0
        %v7803 = vand.u32 %v7337, 4294901760
        %v7804 = vsub.f32 %v7337, %v7803
        %7805 = vmatmul.mubr.f32.gmra.mrb[0].mxu0 %v7804
        %v7806 = vpop.f32.mrb[0].mxu0
        %v7807 = vadd.f32 %v7658, %v7806
        %v7808 = vpop.f32.mrb[0].mxu0
        %7809 = vmatprep.mubr.f32.mxu0 0.0
        %v7810 = vand.u32 %v7340, 4294901760
        %v7811 = vsub.f32 %v7340, %v7810
        %7812 = vmatmul.mubr.f32.gmra.mrb[0].mxu0 %v7811
        %v7813 = vpop.f32.mrb[0].mxu0
        %v7814 = vadd.f32 %v7664, %v7813
        %v7815 = vpop.f32.mrb[0].mxu0
        %7816 = vmatprep.mubr.f32.mxu0 0.0
        %v7817 = vand.u32 %v7343, 4294901760
        %v7818 = vsub.f32 %v7343, %v7817
        %7819 = vmatmul.mubr.f32.gmra.mrb[0].mxu0 %v7818
        %v7820 = vpop.f32.mrb[0].mxu0
        %v7821 = vadd.f32 %v7670, %v7820
        %v7822 = vpop.f32.mrb[0].mxu0
        %7823 = vmatprep.mubr.f32.mxu0 0.0
        %v7824 = vand.u32 %v7346, 4294901760
        %v7825 = vsub.f32 %v7346, %v7824
        %7826 = vmatmul.mubr.f32.gmra.mrb[0].mxu0 %v7825
        %v7827 = vpop.f32.mrb[0].mxu0
        %v7828 = vadd.f32 %v7676, %v7827
        %v7829 = vpop.f32.mrb[0].mxu0
        %7830 = vmatprep.mubr.f32.mxu0 0.0
        %v7831 = vand.u32 %v7349, 4294901760
        %v7832 = vsub.f32 %v7349, %v7831
        %7833 = vmatmul.mubr.f32.gmra.mrb[0].mxu0 %v7832
        %v7834 = vpop.f32.mrb[0].mxu0
        %v7835 = vadd.f32 %v7682, %v7834
        %v7836 = vpop.f32.mrb[0].mxu0
        %7837 = vmatprep.mubr.f32.mxu0 0.0
        %v7838 = vand.u32 %v7352, 4294901760
        %v7839 = vsub.f32 %v7352, %v7838
        %7840 = vmatmul.mubr.f32.gmra.mrb[0].mxu0 %v7839
        %v7841 = vpop.f32.mrb[0].mxu0
        %v7842 = vadd.f32 %v7688, %v7841
        %v7843 = vpop.f32.mrb[0].mxu0
        %7844 = vmatprep.mubr.f32.mxu0 0.0
        %v7845 = vand.u32 %v7355, 4294901760
        %v7846 = vsub.f32 %v7355, %v7845
        %7847 = vmatmul.mubr.f32.gmra.mrb[0].mxu0 %v7846
        %v7848 = vpop.f32.mrb[0].mxu0
        %v7849 = vadd.f32 %v7694, %v7848
        %v7850 = vpop.f32.mrb[0].mxu0
        %7851 = vmatprep.mubr.f32.mxu0 0.0
        %v7852 = vand.u32 %v7358, 4294901760
        %v7853 = vsub.f32 %v7358, %v7852
        %7854 = vmatmul.mubr.f32.gmra.mrb[0].mxu0 %v7853
        %v7855 = vpop.f32.mrb[0].mxu0
        %v7856 = vadd.f32 %v7700, %v7855
        %v7857 = vpop.f32.mrb[0].mxu0
        %7858 = vmatprep.mubr.f32.mxu0 0.0
        %v7859 = vand.u32 %v7361, 4294901760
        %v7860 = vsub.f32 %v7361, %v7859
        %7861 = vmatmul.mubr.f32.gmra.mrb[0].mxu0 %v7860
        %v7862 = vpop.f32.mrb[0].mxu0
        %v7863 = vadd.f32 %v7706, %v7862
        %v7864 = vpop.f32.mrb[0].mxu0
        %7865 = vdwg.mxu0
        %7866 = vmatprep.subr.mxu0 0.0
        %v7867 = vand.u32 %v7310, 4294901760
        %7868 = vmatpush1.msra.mxu0 %v7867
        %7869 = vmatprep.subr.mxu0 0.0
        %v7870 = vand.u32 %v7311, 4294901760
        %7871 = vmatpush1.msra.mxu0 %v7870
        %7872 = vmatprep.subr.mxu0 0.0
        %v7873 = vand.u32 %v7312, 4294901760
        %7874 = vmatpush1.msra.mxu0 %v7873
        %7875 = vmatprep.subr.mxu0 0.0
        %v7876 = vand.u32 %v7313, 4294901760
        %7877 = vmatpush1.msra.mxu0 %v7876
        %7878 = vmatprep.subr.mxu0 0.0
        %7879 = vmatpush1.msra.mxu0 0.0
        %7880 = vmatprep.subr.mxu0 0.0
        %7881 = vmatpush1.msra.mxu0 0.0
        %7882 = vmatprep.subr.mxu0 0.0
        %7883 = vmatpush1.msra.mxu0 0.0
        %7884 = vmatprep.subr.mxu0 0.0
        %7885 = vmatpush1.msra.mxu0 0.0
        %7886 = vmatprep.subr.mxu0 0.0
        %7887 = vmatpush1.msra.mxu0 0.0
        %7888 = vmatprep.subr.mxu0 0.0
        %7889 = vmatpush1.msra.mxu0 0.0
        %7890 = vmatprep.subr.mxu0 0.0
        %7891 = vmatpush1.msra.mxu0 0.0
        %7892 = vmatprep.subr.mxu0 0.0
        %7893 = vmatpush1.msra.mxu0 0.0
        %7894 = vmatprep.subr.mxu0 0.0
        %7895 = vmatpush1.msra.mxu0 0.0
        %7896 = vmatprep.subr.mxu0 0.0
        %7897 = vmatpush1.msra.mxu0 0.0
        %7898 = vmatprep.subr.mxu0 0.0
        %7899 = vmatpush1.msra.mxu0 0.0
        %7900 = vmatprep.subr.mxu0 0.0
        %7901 = vmatpush1.msra.mxu0 0.0
        %7902 = vmatprep.subr.mxu0 0.0
        %7903 = vmatpush1.msra.mxu0 0.0
        %7904 = vmatprep.subr.mxu0 0.0
        %7905 = vmatpush1.msra.mxu0 0.0
        %7906 = vmatprep.subr.mxu0 0.0
        %7907 = vmatpush1.msra.mxu0 0.0
        %7908 = vmatprep.subr.mxu0 0.0
        %7909 = vmatpush1.msra.mxu0 0.0
        %7910 = vmatprep.subr.mxu0 0.0
        %7911 = vmatpush1.msra.mxu0 0.0
        %7912 = vmatprep.subr.mxu0 0.0
        %7913 = vmatpush1.msra.mxu0 0.0
        %7914 = vmatprep.subr.mxu0 0.0
        %7915 = vmatpush1.msra.mxu0 0.0
        %7916 = vmatprep.subr.mxu0 0.0
        %7917 = vmatpush1.msra.mxu0 0.0
        %7918 = vmatprep.subr.mxu0 0.0
        %7919 = vmatpush1.msra.mxu0 0.0
        %7920 = vmatprep.subr.mxu0 0.0
        %7921 = vmatpush1.msra.mxu0 0.0
        %7922 = vmatprep.subr.mxu0 0.0
        %7923 = vmatpush1.msra.mxu0 0.0
        %7924 = vmatprep.subr.mxu0 0.0
        %7925 = vmatpush1.msra.mxu0 0.0
        %7926 = vmatprep.subr.mxu0 0.0
        %7927 = vmatpush1.msra.mxu0 0.0
        %7928 = vmatprep.subr.mxu0 0.0
        %7929 = vmatpush1.msra.mxu0 0.0
        %7930 = vmatprep.subr.mxu0 0.0
        %7931 = vmatpush1.msra.mxu0 0.0
        %7932 = vmatprep.subr.mxu0 0.0
        %7933 = vmatpush1.msra.mxu0 0.0
        %7934 = vmatprep.mubr.f32.mxu0 0.0
        %v7935 = vand.u32 %v7328, 4294901760
        %v7936 = vsub.f32 %v7328, %v7935
        %v7937 = vand.u32 %v7936, 4294901760
        %7938 = vmatmul.mubr.f32.gmra.mrb[0].mxu0 %v7937
        %v7939 = vpop.f32.mrb[0].mxu0
        %v7940 = vadd.f32 %v7786, %v7939
        %v7941 = vpop.f32.mrb[0].mxu0
        %7942 = vmatprep.mubr.f32.mxu0 0.0
        %v7943 = vand.u32 %v7331, 4294901760
        %v7944 = vsub.f32 %v7331, %v7943
        %v7945 = vand.u32 %v7944, 4294901760
        %7946 = vmatmul.mubr.f32.gmra.mrb[0].mxu0 %v7945
        %v7947 = vpop.f32.mrb[0].mxu0
        %v7948 = vadd.f32 %v7793, %v7947
        %v7949 = vpop.f32.mrb[0].mxu0
        %7950 = vmatprep.mubr.f32.mxu0 0.0
        %v7951 = vand.u32 %v7334, 4294901760
        %v7952 = vsub.f32 %v7334, %v7951
        %v7953 = vand.u32 %v7952, 4294901760
        %7954 = vmatmul.mubr.f32.gmra.mrb[0].mxu0 %v7953
        %v7955 = vpop.f32.mrb[0].mxu0
        %v7956 = vadd.f32 %v7800, %v7955
        %v7957 = vpop.f32.mrb[0].mxu0
        %7958 = vmatprep.mubr.f32.mxu0 0.0
        %v7959 = vand.u32 %v7337, 4294901760
        %v7960 = vsub.f32 %v7337, %v7959
        %v7961 = vand.u32 %v7960, 4294901760
        %7962 = vmatmul.mubr.f32.gmra.mrb[0].mxu0 %v7961
        %v7963 = vpop.f32.mrb[0].mxu0
        %v7964 = vadd.f32 %v7807, %v7963
        %v7965 = vpop.f32.mrb[0].mxu0
        %7966 = vmatprep.mubr.f32.mxu0 0.0
        %v7967 = vand.u32 %v7340, 4294901760
        %v7968 = vsub.f32 %v7340, %v7967
        %v7969 = vand.u32 %v7968, 4294901760
        %7970 = vmatmul.mubr.f32.gmra.mrb[0].mxu0 %v7969
        %v7971 = vpop.f32.mrb[0].mxu0
        %v7972 = vadd.f32 %v7814, %v7971
        %v7973 = vpop.f32.mrb[0].mxu0
        %7974 = vmatprep.mubr.f32.mxu0 0.0
        %v7975 = vand.u32 %v7343, 4294901760
        %v7976 = vsub.f32 %v7343, %v7975
        %v7977 = vand.u32 %v7976, 4294901760
        %7978 = vmatmul.mubr.f32.gmra.mrb[0].mxu0 %v7977
        %v7979 = vpop.f32.mrb[0].mxu0
        %v7980 = vadd.f32 %v7821, %v7979
        %v7981 = vpop.f32.mrb[0].mxu0
        %7982 = vmatprep.mubr.f32.mxu0 0.0
        %v7983 = vand.u32 %v7346, 4294901760
        %v7984 = vsub.f32 %v7346, %v7983
        %v7985 = vand.u32 %v7984, 4294901760
        %7986 = vmatmul.mubr.f32.gmra.mrb[0].mxu0 %v7985
        %v7987 = vpop.f32.mrb[0].mxu0
        %v7988 = vadd.f32 %v7828, %v7987
        %v7989 = vpop.f32.mrb[0].mxu0
        %7990 = vmatprep.mubr.f32.mxu0 0.0
        %v7991 = vand.u32 %v7349, 4294901760
        %v7992 = vsub.f32 %v7349, %v7991
        %v7993 = vand.u32 %v7992, 4294901760
        %7994 = vmatmul.mubr.f32.gmra.mrb[0].mxu0 %v7993
        %v7995 = vpop.f32.mrb[0].mxu0
        %v7996 = vadd.f32 %v7835, %v7995
        %v7997 = vpop.f32.mrb[0].mxu0
        %7998 = vmatprep.mubr.f32.mxu0 0.0
        %v7999 = vand.u32 %v7352, 4294901760
        %v8000 = vsub.f32 %v7352, %v7999
        %v8001 = vand.u32 %v8000, 4294901760
        %8002 = vmatmul.mubr.f32.gmra.mrb[0].mxu0 %v8001
        %v8003 = vpop.f32.mrb[0].mxu0
        %v8004 = vadd.f32 %v7842, %v8003
        %v8005 = vpop.f32.mrb[0].mxu0
        %8006 = vmatprep.mubr.f32.mxu0 0.0
        %v8007 = vand.u32 %v7355, 4294901760
        %v8008 = vsub.f32 %v7355, %v8007
        %v8009 = vand.u32 %v8008, 4294901760
        %8010 = vmatmul.mubr.f32.gmra.mrb[0].mxu0 %v8009
        %v8011 = vpop.f32.mrb[0].mxu0
        %v8012 = vadd.f32 %v7849, %v8011
        %v8013 = vpop.f32.mrb[0].mxu0
        %8014 = vmatprep.mubr.f32.mxu0 0.0
        %v8015 = vand.u32 %v7358, 4294901760
        %v8016 = vsub.f32 %v7358, %v8015
        %v8017 = vand.u32 %v8016, 4294901760
        %8018 = vmatmul.mubr.f32.gmra.mrb[0].mxu0 %v8017
        %v8019 = vpop.f32.mrb[0].mxu0
        %v8020 = vadd.f32 %v7856, %v8019
        %v8021 = vpop.f32.mrb[0].mxu0
        %8022 = vmatprep.mubr.f32.mxu0 0.0
        %v8023 = vand.u32 %v7361, 4294901760
        %v8024 = vsub.f32 %v7361, %v8023
        %v8025 = vand.u32 %v8024, 4294901760
        %8026 = vmatmul.mubr.f32.gmra.mrb[0].mxu0 %v8025
        %v8027 = vpop.f32.mrb[0].mxu0
        %v8028 = vadd.f32 %v7863, %v8027
        %v8029 = vpop.f32.mrb[0].mxu0
        %8030 = vdwg.mxu0
        %8031 = vmatprep.subr.mxu0 0.0
        %v8032 = vand.u32 %v7310, 4294901760
        %v8033 = vsub.f32 %v7310, %v8032
        %v8034 = vand.u32 %v8033, 4294901760
        %8035 = vmatpush1.msra.mxu0 %v8034
        %8036 = vmatprep.subr.mxu0 0.0
        %v8037 = vand.u32 %v7311, 4294901760
        %v8038 = vsub.f32 %v7311, %v8037
        %v8039 = vand.u32 %v8038, 4294901760
        %8040 = vmatpush1.msra.mxu0 %v8039
        %8041 = vmatprep.subr.mxu0 0.0
        %v8042 = vand.u32 %v7312, 4294901760
        %v8043 = vsub.f32 %v7312, %v8042
        %v8044 = vand.u32 %v8043, 4294901760
        %8045 = vmatpush1.msra.mxu0 %v8044
        %8046 = vmatprep.subr.mxu0 0.0
        %v8047 = vand.u32 %v7313, 4294901760
        %v8048 = vsub.f32 %v7313, %v8047
        %v8049 = vand.u32 %v8048, 4294901760
        %8050 = vmatpush1.msra.mxu0 %v8049
        %8051 = vmatprep.subr.mxu0 0.0
        %8052 = vmatpush1.msra.mxu0 0.0
        %8053 = vmatprep.subr.mxu0 0.0
        %8054 = vmatpush1.msra.mxu0 0.0
        %8055 = vmatprep.subr.mxu0 0.0
        %8056 = vmatpush1.msra.mxu0 0.0
        %8057 = vmatprep.subr.mxu0 0.0
        %8058 = vmatpush1.msra.mxu0 0.0
        %8059 = vmatprep.subr.mxu0 0.0
        %8060 = vmatpush1.msra.mxu0 0.0
        %8061 = vmatprep.subr.mxu0 0.0
        %8062 = vmatpush1.msra.mxu0 0.0
        %8063 = vmatprep.subr.mxu0 0.0
        %8064 = vmatpush1.msra.mxu0 0.0
        %8065 = vmatprep.subr.mxu0 0.0
        %8066 = vmatpush1.msra.mxu0 0.0
        %8067 = vmatprep.subr.mxu0 0.0
        %8068 = vmatpush1.msra.mxu0 0.0
        %8069 = vmatprep.subr.mxu0 0.0
        %8070 = vmatpush1.msra.mxu0 0.0
        %8071 = vmatprep.subr.mxu0 0.0
        %8072 = vmatpush1.msra.mxu0 0.0
        %8073 = vmatprep.subr.mxu0 0.0
        %8074 = vmatpush1.msra.mxu0 0.0
        %8075 = vmatprep.subr.mxu0 0.0
        %8076 = vmatpush1.msra.mxu0 0.0
        %8077 = vmatprep.subr.mxu0 0.0
        %8078 = vmatpush1.msra.mxu0 0.0
        %8079 = vmatprep.subr.mxu0 0.0
        %8080 = vmatpush1.msra.mxu0 0.0
        %8081 = vmatprep.subr.mxu0 0.0
        %8082 = vmatpush1.msra.mxu0 0.0
        %8083 = vmatprep.subr.mxu0 0.0
        %8084 = vmatpush1.msra.mxu0 0.0
        %8085 = vmatprep.subr.mxu0 0.0
        %8086 = vmatpush1.msra.mxu0 0.0
        %8087 = vmatprep.subr.mxu0 0.0
        %8088 = vmatpush1.msra.mxu0 0.0
        %8089 = vmatprep.subr.mxu0 0.0
        %8090 = vmatpush1.msra.mxu0 0.0
        %8091 = vmatprep.subr.mxu0 0.0
        %8092 = vmatpush1.msra.mxu0 0.0
        %8093 = vmatprep.subr.mxu0 0.0
        %8094 = vmatpush1.msra.mxu0 0.0
        %8095 = vmatprep.subr.mxu0 0.0
        %8096 = vmatpush1.msra.mxu0 0.0
        %8097 = vmatprep.subr.mxu0 0.0
        %8098 = vmatpush1.msra.mxu0 0.0
        %8099 = vmatprep.subr.mxu0 0.0
        %8100 = vmatpush1.msra.mxu0 0.0
        %8101 = vmatprep.subr.mxu0 0.0
        %8102 = vmatpush1.msra.mxu0 0.0
        %8103 = vmatprep.subr.mxu0 0.0
        %8104 = vmatpush1.msra.mxu0 0.0
        %8105 = vmatprep.subr.mxu0 0.0
        %8106 = vmatpush1.msra.mxu0 0.0
        %8107 = vmatprep.mubr.f32.mxu0 0.0
        %v8108 = vand.u32 %v7328, 4294901760
        %8109 = vmatmul.mubr.f32.gmra.mrb[0].mxu0 %v8108
        %v8110 = vpop.f32.mrb[0].mxu0
        %v8111 = vadd.f32 %v7940, %v8110
        %v8112 = vpop.f32.mrb[0].mxu0
        %8113 = vmatprep.mubr.f32.mxu0 0.0
        %v8114 = vand.u32 %v7331, 4294901760
        %8115 = vmatmul.mubr.f32.gmra.mrb[0].mxu0 %v8114
        %v8116 = vpop.f32.mrb[0].mxu0
        %v8117 = vadd.f32 %v7948, %v8116
        %v8118 = vpop.f32.mrb[0].mxu0
        %8119 = vmatprep.mubr.f32.mxu0 0.0
        %v8120 = vand.u32 %v7334, 4294901760
        %8121 = vmatmul.mubr.f32.gmra.mrb[0].mxu0 %v8120
        %v8122 = vpop.f32.mrb[0].mxu0
        %v8123 = vadd.f32 %v7956, %v8122
        %v8124 = vpop.f32.mrb[0].mxu0
        %8125 = vmatprep.mubr.f32.mxu0 0.0
        %v8126 = vand.u32 %v7337, 4294901760
        %8127 = vmatmul.mubr.f32.gmra.mrb[0].mxu0 %v8126
        %v8128 = vpop.f32.mrb[0].mxu0
        %v8129 = vadd.f32 %v7964, %v8128
        %v8130 = vpop.f32.mrb[0].mxu0
        %8131 = vmatprep.mubr.f32.mxu0 0.0
        %v8132 = vand.u32 %v7340, 4294901760
        %8133 = vmatmul.mubr.f32.gmra.mrb[0].mxu0 %v8132
        %v8134 = vpop.f32.mrb[0].mxu0
        %v8135 = vadd.f32 %v7972, %v8134
        %v8136 = vpop.f32.mrb[0].mxu0
        %8137 = vmatprep.mubr.f32.mxu0 0.0
        %v8138 = vand.u32 %v7343, 4294901760
        %8139 = vmatmul.mubr.f32.gmra.mrb[0].mxu0 %v8138
        %v8140 = vpop.f32.mrb[0].mxu0
        %v8141 = vadd.f32 %v7980, %v8140
        %v8142 = vpop.f32.mrb[0].mxu0
        %8143 = vmatprep.mubr.f32.mxu0 0.0
        %v8144 = vand.u32 %v7346, 4294901760
        %8145 = vmatmul.mubr.f32.gmra.mrb[0].mxu0 %v8144
        %v8146 = vpop.f32.mrb[0].mxu0
        %v8147 = vadd.f32 %v7988, %v8146
        %v8148 = vpop.f32.mrb[0].mxu0
        %8149 = vmatprep.mubr.f32.mxu0 0.0
        %v8150 = vand.u32 %v7349, 4294901760
        %8151 = vmatmul.mubr.f32.gmra.mrb[0].mxu0 %v8150
        %v8152 = vpop.f32.mrb[0].mxu0
        %v8153 = vadd.f32 %v7996, %v8152
        %v8154 = vpop.f32.mrb[0].mxu0
        %8155 = vmatprep.mubr.f32.mxu0 0.0
        %v8156 = vand.u32 %v7352, 4294901760
        %8157 = vmatmul.mubr.f32.gmra.mrb[0].mxu0 %v8156
        %v8158 = vpop.f32.mrb[0].mxu0
        %v8159 = vadd.f32 %v8004, %v8158
        %v8160 = vpop.f32.mrb[0].mxu0
        %8161 = vmatprep.mubr.f32.mxu0 0.0
        %v8162 = vand.u32 %v7355, 4294901760
        %8163 = vmatmul.mubr.f32.gmra.mrb[0].mxu0 %v8162
        %v8164 = vpop.f32.mrb[0].mxu0
        %v8165 = vadd.f32 %v8012, %v8164
        %v8166 = vpop.f32.mrb[0].mxu0
        %8167 = vmatprep.mubr.f32.mxu0 0.0
        %v8168 = vand.u32 %v7358, 4294901760
        %8169 = vmatmul.mubr.f32.gmra.mrb[0].mxu0 %v8168
        %v8170 = vpop.f32.mrb[0].mxu0
        %v8171 = vadd.f32 %v8020, %v8170
        %v8172 = vpop.f32.mrb[0].mxu0
        %8173 = vmatprep.mubr.f32.mxu0 0.0
        %v8174 = vand.u32 %v7361, 4294901760
        %8175 = vmatmul.mubr.f32.gmra.mrb[0].mxu0 %v8174
        %v8176 = vpop.f32.mrb[0].mxu0
        %v8177 = vadd.f32 %v8028, %v8176
        %v8178 = vpop.f32.mrb[0].mxu0
        %8179 = vdwg.mxu0
        %8180 = vmatprep.subr.mxu0 0.0
        %v8181 = vand.u32 %v7310, 4294901760
        %8182 = vmatpush1.msra.mxu0 %v8181
        %8183 = vmatprep.subr.mxu0 0.0
        %v8184 = vand.u32 %v7311, 4294901760
        %8185 = vmatpush1.msra.mxu0 %v8184
        %8186 = vmatprep.subr.mxu0 0.0
        %v8187 = vand.u32 %v7312, 4294901760
        %8188 = vmatpush1.msra.mxu0 %v8187
        %8189 = vmatprep.subr.mxu0 0.0
        %v8190 = vand.u32 %v7313, 4294901760
        %8191 = vmatpush1.msra.mxu0 %v8190
        %8192 = vmatprep.subr.mxu0 0.0
        %8193 = vmatpush1.msra.mxu0 0.0
        %8194 = vmatprep.subr.mxu0 0.0
        %8195 = vmatpush1.msra.mxu0 0.0
        %8196 = vmatprep.subr.mxu0 0.0
        %8197 = vmatpush1.msra.mxu0 0.0
        %8198 = vmatprep.subr.mxu0 0.0
        %8199 = vmatpush1.msra.mxu0 0.0
        %8200 = vmatprep.subr.mxu0 0.0
        %8201 = vmatpush1.msra.mxu0 0.0
        %8202 = vmatprep.subr.mxu0 0.0
        %8203 = vmatpush1.msra.mxu0 0.0
        %8204 = vmatprep.subr.mxu0 0.0
        %8205 = vmatpush1.msra.mxu0 0.0
        %8206 = vmatprep.subr.mxu0 0.0
        %8207 = vmatpush1.msra.mxu0 0.0
        %8208 = vmatprep.subr.mxu0 0.0
        %8209 = vmatpush1.msra.mxu0 0.0
        %8210 = vmatprep.subr.mxu0 0.0
        %8211 = vmatpush1.msra.mxu0 0.0
        %8212 = vmatprep.subr.mxu0 0.0
        %8213 = vmatpush1.msra.mxu0 0.0
        %8214 = vmatprep.subr.mxu0 0.0
        %8215 = vmatpush1.msra.mxu0 0.0
        %8216 = vmatprep.subr.mxu0 0.0
        %8217 = vmatpush1.msra.mxu0 0.0
        %8218 = vmatprep.subr.mxu0 0.0
        %8219 = vmatpush1.msra.mxu0 0.0
        %8220 = vmatprep.subr.mxu0 0.0
        %8221 = vmatpush1.msra.mxu0 0.0
        %8222 = vmatprep.subr.mxu0 0.0
        %8223 = vmatpush1.msra.mxu0 0.0
        %8224 = vmatprep.subr.mxu0 0.0
        %8225 = vmatpush1.msra.mxu0 0.0
        %8226 = vmatprep.subr.mxu0 0.0
        %8227 = vmatpush1.msra.mxu0 0.0
        %8228 = vmatprep.subr.mxu0 0.0
        %8229 = vmatpush1.msra.mxu0 0.0
        %8230 = vmatprep.subr.mxu0 0.0
        %8231 = vmatpush1.msra.mxu0 0.0
        %8232 = vmatprep.subr.mxu0 0.0
        %8233 = vmatpush1.msra.mxu0 0.0
        %8234 = vmatprep.subr.mxu0 0.0
        %8235 = vmatpush1.msra.mxu0 0.0
        %8236 = vmatprep.subr.mxu0 0.0
        %8237 = vmatpush1.msra.mxu0 0.0
        %8238 = vmatprep.subr.mxu0 0.0
        %8239 = vmatpush1.msra.mxu0 0.0
        %8240 = vmatprep.subr.mxu0 0.0
        %8241 = vmatpush1.msra.mxu0 0.0
        %8242 = vmatprep.subr.mxu0 0.0
        %8243 = vmatpush1.msra.mxu0 0.0
        %8244 = vmatprep.subr.mxu0 0.0
        %8245 = vmatpush1.msra.mxu0 0.0
        %8246 = vmatprep.subr.mxu0 0.0
        %8247 = vmatpush1.msra.mxu0 0.0
        %8248 = vmatprep.mubr.f32.mxu0 0.0
        %v8249 = vand.u32 %v7328, 4294901760
        %8250 = vmatmul.mubr.f32.gmra.mrb[0].mxu0 %v8249
        %v8251 = vpop.f32.mrb[0].mxu0
        %v8252 = vadd.f32 %v8111, %v8251
        %v8253 = vpop.f32.mrb[0].mxu0
        %8254 = vmatprep.mubr.f32.mxu0 0.0
        %v8255 = vand.u32 %v7331, 4294901760
        %8256 = vmatmul.mubr.f32.gmra.mrb[0].mxu0 %v8255
        %v8257 = vpop.f32.mrb[0].mxu0
        %v8258 = vadd.f32 %v8117, %v8257
        %v8259 = vpop.f32.mrb[0].mxu0
        %8260 = vmatprep.mubr.f32.mxu0 0.0
        %v8261 = vand.u32 %v7334, 4294901760
        %8262 = vmatmul.mubr.f32.gmra.mrb[0].mxu0 %v8261
        %v8263 = vpop.f32.mrb[0].mxu0
        %v8264 = vadd.f32 %v8123, %v8263
        %v8265 = vpop.f32.mrb[0].mxu0
        %8266 = vmatprep.mubr.f32.mxu0 0.0
        %v8267 = vand.u32 %v7337, 4294901760
        %8268 = vmatmul.mubr.f32.gmra.mrb[0].mxu0 %v8267
        %v8269 = vpop.f32.mrb[0].mxu0
        %v8270 = vadd.f32 %v8129, %v8269
        %v8271 = vpop.f32.mrb[0].mxu0
        %8272 = vmatprep.mubr.f32.mxu0 0.0
        %v8273 = vand.u32 %v7340, 4294901760
        %8274 = vmatmul.mubr.f32.gmra.mrb[0].mxu0 %v8273
        %v8275 = vpop.f32.mrb[0].mxu0
        %v8276 = vadd.f32 %v8135, %v8275
        %v8277 = vpop.f32.mrb[0].mxu0
        %8278 = vmatprep.mubr.f32.mxu0 0.0
        %v8279 = vand.u32 %v7343, 4294901760
        %8280 = vmatmul.mubr.f32.gmra.mrb[0].mxu0 %v8279
        %v8281 = vpop.f32.mrb[0].mxu0
        %v8282 = vadd.f32 %v8141, %v8281
        %v8283 = vpop.f32.mrb[0].mxu0
        %8284 = vmatprep.mubr.f32.mxu0 0.0
        %v8285 = vand.u32 %v7346, 4294901760
        %8286 = vmatmul.mubr.f32.gmra.mrb[0].mxu0 %v8285
        %v8287 = vpop.f32.mrb[0].mxu0
        %v8288 = vadd.f32 %v8147, %v8287
        %v8289 = vpop.f32.mrb[0].mxu0
        %8290 = vmatprep.mubr.f32.mxu0 0.0
        %v8291 = vand.u32 %v7349, 4294901760
        %8292 = vmatmul.mubr.f32.gmra.mrb[0].mxu0 %v8291
        %v8293 = vpop.f32.mrb[0].mxu0
        %v8294 = vadd.f32 %v8153, %v8293
        %v8295 = vpop.f32.mrb[0].mxu0
        %8296 = vmatprep.mubr.f32.mxu0 0.0
        %v8297 = vand.u32 %v7352, 4294901760
        %8298 = vmatmul.mubr.f32.gmra.mrb[0].mxu0 %v8297
        %v8299 = vpop.f32.mrb[0].mxu0
        %v8300 = vadd.f32 %v8159, %v8299
        %v8301 = vpop.f32.mrb[0].mxu0
        %8302 = vmatprep.mubr.f32.mxu0 0.0
        %v8303 = vand.u32 %v7355, 4294901760
        %8304 = vmatmul.mubr.f32.gmra.mrb[0].mxu0 %v8303
        %v8305 = vpop.f32.mrb[0].mxu0
        %v8306 = vadd.f32 %v8165, %v8305
        %v8307 = vpop.f32.mrb[0].mxu0
        %8308 = vmatprep.mubr.f32.mxu0 0.0
        %v8309 = vand.u32 %v7358, 4294901760
        %8310 = vmatmul.mubr.f32.gmra.mrb[0].mxu0 %v8309
        %v8311 = vpop.f32.mrb[0].mxu0
        %v8312 = vadd.f32 %v8171, %v8311
        %v8313 = vpop.f32.mrb[0].mxu0
        %8314 = vmatprep.mubr.f32.mxu0 0.0
        %v8315 = vand.u32 %v7361, 4294901760
        %8316 = vmatmul.mubr.f32.gmra.mrb[0].mxu0 %v8315
        %v8317 = vpop.f32.mrb[0].mxu0
        %v8318 = vadd.f32 %v8177, %v8317
        %v8319 = vpop.f32.mrb[0].mxu0
        %8320 = vdwg.mxu0
        %v8321 = vadd.f32 %v3915, %v8252
        %v8322 = vadd.f32 %v3916, %v8258
        %v8323 = vadd.f32 %v3917, %v8264
        %v8324 = vadd.f32 %v3918, %v8270
        %v8325 = vtanh.pop %v8321
        %v8326 = vtanh.pop %v8322
        %v8327 = vtanh.pop %v8323
        %v8328 = vtanh.pop %v8324
        %v8329 = vadd.f32 %v3919, %v8276
        %v8330 = vadd.f32 %v3920, %v8282
        %v8331 = vadd.f32 %v3921, %v8288
        %v8332 = vadd.f32 %v3922, %v8294
        %v8333 = vtanh.pop %v8329
        %v8334 = vtanh.pop %v8330
        %v8335 = vtanh.pop %v8331
        %v8336 = vtanh.pop %v8332
        %v8337 = vadd.f32 %v3923, %v8300
        %v8338 = vadd.f32 %v3924, %v8306
        %v8339 = vadd.f32 %v3925, %v8312
        %v8340 = vadd.f32 %v3926, %v8318
        %v8341 = vtanh.pop %v8337
        %v8342 = vtanh.pop %v8338
        %v8343 = vtanh.pop %v8339
        %v8344 = vtanh.pop %v8340
        %s8345 = scalar_lea.vmem %s6, 64
        %v8346 = vld [vmem:[%s8345] sm:$0xff]
        %v8347 = vld [vmem:[%s8345 + $0x8] sm:$0xff]
        %v8348 = vld [vmem:[%s8345 + $0x10] sm:$0xff]
        %v8349 = vld [vmem:[%s8345 + $0x18] sm:$0xff]
        %v8350 = vmul.f32 %v7310, %v8341
        %v8351 = vmul.f32 %v7311, %v8342
        %v8352 = vmul.f32 %v7312, %v8343
        %v8353 = vmul.f32 %v7313, %v8344
        %v8355 = vsel %vm3947, %v8346, 0
        %v8358 = vsel %vm3947, %v8347, 0
        %v8361 = vsel %vm3947, %v8348, 0
        %v8364 = vsel %vm3947, %v8349, 0
        %8366 = vmatprep.subr.mxu0 0.0
        %v8367 = vand.u32 %v8350, 4294901760
        %8368 = vmatpush1.msra.mxu0 %v8367
        %8369 = vmatprep.subr.mxu0 0.0
        %v8370 = vand.u32 %v8351, 4294901760
        %8371 = vmatpush1.msra.mxu0 %v8370
        %8372 = vmatprep.subr.mxu0 0.0
        %v8373 = vand.u32 %v8352, 4294901760
        %8374 = vmatpush1.msra.mxu0 %v8373
        %8375 = vmatprep.subr.mxu0 0.0
        %v8376 = vand.u32 %v8353, 4294901760
        %8377 = vmatpush1.msra.mxu0 %v8376
        %8378 = vmatprep.subr.mxu0 0.0
        %8379 = vmatpush1.msra.mxu0 0.0
        %8380 = vmatprep.subr.mxu0 0.0
        %8381 = vmatpush1.msra.mxu0 0.0
        %8382 = vmatprep.subr.mxu0 0.0
        %8383 = vmatpush1.msra.mxu0 0.0
        %8384 = vmatprep.subr.mxu0 0.0
        %8385 = vmatpush1.msra.mxu0 0.0
        %8386 = vmatprep.subr.mxu0 0.0
        %8387 = vmatpush1.msra.mxu0 0.0
        %8388 = vmatprep.subr.mxu0 0.0
        %8389 = vmatpush1.msra.mxu0 0.0
        %8390 = vmatprep.subr.mxu0 0.0
        %8391 = vmatpush1.msra.mxu0 0.0
        %8392 = vmatprep.subr.mxu0 0.0
        %8393 = vmatpush1.msra.mxu0 0.0
        %8394 = vmatprep.subr.mxu0 0.0
        %8395 = vmatpush1.msra.mxu0 0.0
        %8396 = vmatprep.subr.mxu0 0.0
        %8397 = vmatpush1.msra.mxu0 0.0
        %8398 = vmatprep.subr.mxu0 0.0
        %8399 = vmatpush1.msra.mxu0 0.0
        %8400 = vmatprep.subr.mxu0 0.0
        %8401 = vmatpush1.msra.mxu0 0.0
        %8402 = vmatprep.subr.mxu0 0.0
        %8403 = vmatpush1.msra.mxu0 0.0
        %8404 = vmatprep.subr.mxu0 0.0
        %8405 = vmatpush1.msra.mxu0 0.0
        %8406 = vmatprep.subr.mxu0 0.0
        %8407 = vmatpush1.msra.mxu0 0.0
        %8408 = vmatprep.subr.mxu0 0.0
        %8409 = vmatpush1.msra.mxu0 0.0
        %8410 = vmatprep.subr.mxu0 0.0
        %8411 = vmatpush1.msra.mxu0 0.0
        %8412 = vmatprep.subr.mxu0 0.0
        %8413 = vmatpush1.msra.mxu0 0.0
        %8414 = vmatprep.subr.mxu0 0.0
        %8415 = vmatpush1.msra.mxu0 0.0
        %8416 = vmatprep.subr.mxu0 0.0
        %8417 = vmatpush1.msra.mxu0 0.0
        %8418 = vmatprep.subr.mxu0 0.0
        %8419 = vmatpush1.msra.mxu0 0.0
        %8420 = vmatprep.subr.mxu0 0.0
        %8421 = vmatpush1.msra.mxu0 0.0
        %8422 = vmatprep.subr.mxu0 0.0
        %8423 = vmatpush1.msra.mxu0 0.0
        %8424 = vmatprep.subr.mxu0 0.0
        %8425 = vmatpush1.msra.mxu0 0.0
        %8426 = vmatprep.subr.mxu0 0.0
        %8427 = vmatpush1.msra.mxu0 0.0
        %8428 = vmatprep.subr.mxu0 0.0
        %8429 = vmatpush1.msra.mxu0 0.0
        %8430 = vmatprep.subr.mxu0 0.0
        %8431 = vmatpush1.msra.mxu0 0.0
        %8432 = vmatprep.subr.mxu0 0.0
        %8433 = vmatpush1.msra.mxu0 0.0
        %8434 = vmatprep.mubr.f32.mxu0 0.0
        %v8435 = vand.u32 %v8355, 4294901760
        %v8436 = vsub.f32 %v8355, %v8435
        %v8437 = vand.u32 %v8436, 4294901760
        %v8438 = vsub.f32 %v8436, %v8437
        %v8439 = vand.u32 %v8438, 4294901760
        %8440 = vmatmul.mubr.f32.gmra.mrb[0].mxu0 %v8439
        %v8441 = vpop.f32.mrb[0].mxu0
        %v8442 = vadd.f32 0.0, %v8441
        %v8443 = vpop.f32.mrb[0].mxu0
        %8444 = vmatprep.mubr.f32.mxu0 0.0
        %v8445 = vand.u32 %v8358, 4294901760
        %v8446 = vsub.f32 %v8358, %v8445
        %v8447 = vand.u32 %v8446, 4294901760
        %v8448 = vsub.f32 %v8446, %v8447
        %v8449 = vand.u32 %v8448, 4294901760
        %8450 = vmatmul.mubr.f32.gmra.mrb[0].mxu0 %v8449
        %v8451 = vpop.f32.mrb[0].mxu0
        %v8452 = vadd.f32 0.0, %v8451
        %v8453 = vpop.f32.mrb[0].mxu0
        %8454 = vmatprep.mubr.f32.mxu0 0.0
        %v8455 = vand.u32 %v8361, 4294901760
        %v8456 = vsub.f32 %v8361, %v8455
        %v8457 = vand.u32 %v8456, 4294901760
        %v8458 = vsub.f32 %v8456, %v8457
        %v8459 = vand.u32 %v8458, 4294901760
        %8460 = vmatmul.mubr.f32.gmra.mrb[0].mxu0 %v8459
        %v8461 = vpop.f32.mrb[0].mxu0
        %v8462 = vadd.f32 0.0, %v8461
        %v8463 = vpop.f32.mrb[0].mxu0
        %8464 = vmatprep.mubr.f32.mxu0 0.0
        %v8465 = vand.u32 %v8364, 4294901760
        %v8466 = vsub.f32 %v8364, %v8465
        %v8467 = vand.u32 %v8466, 4294901760
        %v8468 = vsub.f32 %v8466, %v8467
        %v8469 = vand.u32 %v8468, 4294901760
        %8470 = vmatmul.mubr.f32.gmra.mrb[0].mxu0 %v8469
        %v8471 = vpop.f32.mrb[0].mxu0
        %v8472 = vadd.f32 0.0, %v8471
        %v8473 = vpop.f32.mrb[0].mxu0
        %8474 = vdwg.mxu0
        %8475 = vmatprep.subr.mxu0 0.0
        %v8476 = vand.u32 %v8350, 4294901760
        %v8477 = vsub.f32 %v8350, %v8476
        %v8478 = vand.u32 %v8477, 4294901760
        %v8479 = vsub.f32 %v8477, %v8478
        %v8480 = vand.u32 %v8479, 4294901760
        %8481 = vmatpush1.msra.mxu0 %v8480
        %8482 = vmatprep.subr.mxu0 0.0
        %v8483 = vand.u32 %v8351, 4294901760
        %v8484 = vsub.f32 %v8351, %v8483
        %v8485 = vand.u32 %v8484, 4294901760
        %v8486 = vsub.f32 %v8484, %v8485
        %v8487 = vand.u32 %v8486, 4294901760
        %8488 = vmatpush1.msra.mxu0 %v8487
        %8489 = vmatprep.subr.mxu0 0.0
        %v8490 = vand.u32 %v8352, 4294901760
        %v8491 = vsub.f32 %v8352, %v8490
        %v8492 = vand.u32 %v8491, 4294901760
        %v8493 = vsub.f32 %v8491, %v8492
        %v8494 = vand.u32 %v8493, 4294901760
        %8495 = vmatpush1.msra.mxu0 %v8494
        %8496 = vmatprep.subr.mxu0 0.0
        %v8497 = vand.u32 %v8353, 4294901760
        %v8498 = vsub.f32 %v8353, %v8497
        %v8499 = vand.u32 %v8498, 4294901760
        %v8500 = vsub.f32 %v8498, %v8499
        %v8501 = vand.u32 %v8500, 4294901760
        %8502 = vmatpush1.msra.mxu0 %v8501
        %8503 = vmatprep.subr.mxu0 0.0
        %8504 = vmatpush1.msra.mxu0 0.0
        %8505 = vmatprep.subr.mxu0 0.0
        %8506 = vmatpush1.msra.mxu0 0.0
        %8507 = vmatprep.subr.mxu0 0.0
        %8508 = vmatpush1.msra.mxu0 0.0
        %8509 = vmatprep.subr.mxu0 0.0
        %8510 = vmatpush1.msra.mxu0 0.0
        %8511 = vmatprep.subr.mxu0 0.0
        %8512 = vmatpush1.msra.mxu0 0.0
        %8513 = vmatprep.subr.mxu0 0.0
        %8514 = vmatpush1.msra.mxu0 0.0
        %8515 = vmatprep.subr.mxu0 0.0
        %8516 = vmatpush1.msra.mxu0 0.0
        %8517 = vmatprep.subr.mxu0 0.0
        %8518 = vmatpush1.msra.mxu0 0.0
        %8519 = vmatprep.subr.mxu0 0.0
        %8520 = vmatpush1.msra.mxu0 0.0
        %8521 = vmatprep.subr.mxu0 0.0
        %8522 = vmatpush1.msra.mxu0 0.0
        %8523 = vmatprep.subr.mxu0 0.0
        %8524 = vmatpush1.msra.mxu0 0.0
        %8525 = vmatprep.subr.mxu0 0.0
        %8526 = vmatpush1.msra.mxu0 0.0
        %8527 = vmatprep.subr.mxu0 0.0
        %8528 = vmatpush1.msra.mxu0 0.0
        %8529 = vmatprep.subr.mxu0 0.0
        %8530 = vmatpush1.msra.mxu0 0.0
        %8531 = vmatprep.subr.mxu0 0.0
        %8532 = vmatpush1.msra.mxu0 0.0
        %8533 = vmatprep.subr.mxu0 0.0
        %8534 = vmatpush1.msra.mxu0 0.0
        %8535 = vmatprep.subr.mxu0 0.0
        %8536 = vmatpush1.msra.mxu0 0.0
        %8537 = vmatprep.subr.mxu0 0.0
        %8538 = vmatpush1.msra.mxu0 0.0
        %8539 = vmatprep.subr.mxu0 0.0
        %8540 = vmatpush1.msra.mxu0 0.0
        %8541 = vmatprep.subr.mxu0 0.0
        %8542 = vmatpush1.msra.mxu0 0.0
        %8543 = vmatprep.subr.mxu0 0.0
        %8544 = vmatpush1.msra.mxu0 0.0
        %8545 = vmatprep.subr.mxu0 0.0
        %8546 = vmatpush1.msra.mxu0 0.0
        %8547 = vmatprep.subr.mxu0 0.0
        %8548 = vmatpush1.msra.mxu0 0.0
        %8549 = vmatprep.subr.mxu0 0.0
        %8550 = vmatpush1.msra.mxu0 0.0
        %8551 = vmatprep.subr.mxu0 0.0
        %8552 = vmatpush1.msra.mxu0 0.0
        %8553 = vmatprep.subr.mxu0 0.0
        %8554 = vmatpush1.msra.mxu0 0.0
        %8555 = vmatprep.subr.mxu0 0.0
        %8556 = vmatpush1.msra.mxu0 0.0
        %8557 = vmatprep.subr.mxu0 0.0
        %8558 = vmatpush1.msra.mxu0 0.0
        %8559 = vmatprep.mubr.f32.mxu0 0.0
        %v8560 = vand.u32 %v8355, 4294901760
        %8561 = vmatmul.mubr.f32.gmra.mrb[0].mxu0 %v8560
        %v8562 = vpop.f32.mrb[0].mxu0
        %v8563 = vadd.f32 %v8442, %v8562
        %v8564 = vpop.f32.mrb[0].mxu0
        %8565 = vmatprep.mubr.f32.mxu0 0.0
        %v8566 = vand.u32 %v8358, 4294901760
        %8567 = vmatmul.mubr.f32.gmra.mrb[0].mxu0 %v8566
        %v8568 = vpop.f32.mrb[0].mxu0
        %v8569 = vadd.f32 %v8452, %v8568
        %v8570 = vpop.f32.mrb[0].mxu0
        %8571 = vmatprep.mubr.f32.mxu0 0.0
        %v8572 = vand.u32 %v8361, 4294901760
        %8573 = vmatmul.mubr.f32.gmra.mrb[0].mxu0 %v8572
        %v8574 = vpop.f32.mrb[0].mxu0
        %v8575 = vadd.f32 %v8462, %v8574
        %v8576 = vpop.f32.mrb[0].mxu0
        %8577 = vmatprep.mubr.f32.mxu0 0.0
        %v8578 = vand.u32 %v8364, 4294901760
        %8579 = vmatmul.mubr.f32.gmra.mrb[0].mxu0 %v8578
        %v8580 = vpop.f32.mrb[0].mxu0
        %v8581 = vadd.f32 %v8472, %v8580
        %v8582 = vpop.f32.mrb[0].mxu0
        %8583 = vdwg.mxu0
        %8584 = vmatprep.subr.mxu0 0.0
        %v8585 = vand.u32 %v8350, 4294901760
        %v8586 = vsub.f32 %v8350, %v8585
        %8587 = vmatpush1.msra.mxu0 %v8586
        %8588 = vmatprep.subr.mxu0 0.0
        %v8589 = vand.u32 %v8351, 4294901760
        %v8590 = vsub.f32 %v8351, %v8589
        %8591 = vmatpush1.msra.mxu0 %v8590
        %8592 = vmatprep.subr.mxu0 0.0
        %v8593 = vand.u32 %v8352, 4294901760
        %v8594 = vsub.f32 %v8352, %v8593
        %8595 = vmatpush1.msra.mxu0 %v8594
        %8596 = vmatprep.subr.mxu0 0.0
        %v8597 = vand.u32 %v8353, 4294901760
        %v8598 = vsub.f32 %v8353, %v8597
        %8599 = vmatpush1.msra.mxu0 %v8598
        %8600 = vmatprep.subr.mxu0 0.0
        %8601 = vmatpush1.msra.mxu0 0.0
        %8602 = vmatprep.subr.mxu0 0.0
        %8603 = vmatpush1.msra.mxu0 0.0
        %8604 = vmatprep.subr.mxu0 0.0
        %8605 = vmatpush1.msra.mxu0 0.0
        %8606 = vmatprep.subr.mxu0 0.0
        %8607 = vmatpush1.msra.mxu0 0.0
        %8608 = vmatprep.subr.mxu0 0.0
        %8609 = vmatpush1.msra.mxu0 0.0
        %8610 = vmatprep.subr.mxu0 0.0
        %8611 = vmatpush1.msra.mxu0 0.0
        %8612 = vmatprep.subr.mxu0 0.0
        %8613 = vmatpush1.msra.mxu0 0.0
        %8614 = vmatprep.subr.mxu0 0.0
        %8615 = vmatpush1.msra.mxu0 0.0
        %8616 = vmatprep.subr.mxu0 0.0
        %8617 = vmatpush1.msra.mxu0 0.0
        %8618 = vmatprep.subr.mxu0 0.0
        %8619 = vmatpush1.msra.mxu0 0.0
        %8620 = vmatprep.subr.mxu0 0.0
        %8621 = vmatpush1.msra.mxu0 0.0
        %8622 = vmatprep.subr.mxu0 0.0
        %8623 = vmatpush1.msra.mxu0 0.0
        %8624 = vmatprep.subr.mxu0 0.0
        %8625 = vmatpush1.msra.mxu0 0.0
        %8626 = vmatprep.subr.mxu0 0.0
        %8627 = vmatpush1.msra.mxu0 0.0
        %8628 = vmatprep.subr.mxu0 0.0
        %8629 = vmatpush1.msra.mxu0 0.0
        %8630 = vmatprep.subr.mxu0 0.0
        %8631 = vmatpush1.msra.mxu0 0.0
        %8632 = vmatprep.subr.mxu0 0.0
        %8633 = vmatpush1.msra.mxu0 0.0
        %8634 = vmatprep.subr.mxu0 0.0
        %8635 = vmatpush1.msra.mxu0 0.0
        %8636 = vmatprep.subr.mxu0 0.0
        %8637 = vmatpush1.msra.mxu0 0.0
        %8638 = vmatprep.subr.mxu0 0.0
        %8639 = vmatpush1.msra.mxu0 0.0
        %8640 = vmatprep.subr.mxu0 0.0
        %8641 = vmatpush1.msra.mxu0 0.0
        %8642 = vmatprep.subr.mxu0 0.0
        %8643 = vmatpush1.msra.mxu0 0.0
        %8644 = vmatprep.subr.mxu0 0.0
        %8645 = vmatpush1.msra.mxu0 0.0
        %8646 = vmatprep.subr.mxu0 0.0
        %8647 = vmatpush1.msra.mxu0 0.0
        %8648 = vmatprep.subr.mxu0 0.0
        %8649 = vmatpush1.msra.mxu0 0.0
        %8650 = vmatprep.subr.mxu0 0.0
        %8651 = vmatpush1.msra.mxu0 0.0
        %8652 = vmatprep.subr.mxu0 0.0
        %8653 = vmatpush1.msra.mxu0 0.0
        %8654 = vmatprep.subr.mxu0 0.0
        %8655 = vmatpush1.msra.mxu0 0.0
        %8656 = vmatprep.mubr.f32.mxu0 0.0
        %v8657 = vand.u32 %v8355, 4294901760
        %v8658 = vsub.f32 %v8355, %v8657
        %8659 = vmatmul.mubr.f32.gmra.mrb[0].mxu0 %v8658
        %v8660 = vpop.f32.mrb[0].mxu0
        %v8661 = vadd.f32 %v8563, %v8660
        %v8662 = vpop.f32.mrb[0].mxu0
        %8663 = vmatprep.mubr.f32.mxu0 0.0
        %v8664 = vand.u32 %v8358, 4294901760
        %v8665 = vsub.f32 %v8358, %v8664
        %8666 = vmatmul.mubr.f32.gmra.mrb[0].mxu0 %v8665
        %v8667 = vpop.f32.mrb[0].mxu0
        %v8668 = vadd.f32 %v8569, %v8667
        %v8669 = vpop.f32.mrb[0].mxu0
        %8670 = vmatprep.mubr.f32.mxu0 0.0
        %v8671 = vand.u32 %v8361, 4294901760
        %v8672 = vsub.f32 %v8361, %v8671
        %8673 = vmatmul.mubr.f32.gmra.mrb[0].mxu0 %v8672
        %v8674 = vpop.f32.mrb[0].mxu0
        %v8675 = vadd.f32 %v8575, %v8674
        %v8676 = vpop.f32.mrb[0].mxu0
        %8677 = vmatprep.mubr.f32.mxu0 0.0
        %v8678 = vand.u32 %v8364, 4294901760
        %v8679 = vsub.f32 %v8364, %v8678
        %8680 = vmatmul.mubr.f32.gmra.mrb[0].mxu0 %v8679
        %v8681 = vpop.f32.mrb[0].mxu0
        %v8682 = vadd.f32 %v8581, %v8681
        %v8683 = vpop.f32.mrb[0].mxu0
        %8684 = vdwg.mxu0
        %8685 = vmatprep.subr.mxu0 0.0
        %v8686 = vand.u32 %v8350, 4294901760
        %8687 = vmatpush1.msra.mxu0 %v8686
        %8688 = vmatprep.subr.mxu0 0.0
        %v8689 = vand.u32 %v8351, 4294901760
        %8690 = vmatpush1.msra.mxu0 %v8689
        %8691 = vmatprep.subr.mxu0 0.0
        %v8692 = vand.u32 %v8352, 4294901760
        %8693 = vmatpush1.msra.mxu0 %v8692
        %8694 = vmatprep.subr.mxu0 0.0
        %v8695 = vand.u32 %v8353, 4294901760
        %8696 = vmatpush1.msra.mxu0 %v8695
        %8697 = vmatprep.subr.mxu0 0.0
        %8698 = vmatpush1.msra.mxu0 0.0
        %8699 = vmatprep.subr.mxu0 0.0
        %8700 = vmatpush1.msra.mxu0 0.0
        %8701 = vmatprep.subr.mxu0 0.0
        %8702 = vmatpush1.msra.mxu0 0.0
        %8703 = vmatprep.subr.mxu0 0.0
        %8704 = vmatpush1.msra.mxu0 0.0
        %8705 = vmatprep.subr.mxu0 0.0
        %8706 = vmatpush1.msra.mxu0 0.0
        %8707 = vmatprep.subr.mxu0 0.0
        %8708 = vmatpush1.msra.mxu0 0.0
        %8709 = vmatprep.subr.mxu0 0.0
        %8710 = vmatpush1.msra.mxu0 0.0
        %8711 = vmatprep.subr.mxu0 0.0
        %8712 = vmatpush1.msra.mxu0 0.0
        %8713 = vmatprep.subr.mxu0 0.0
        %8714 = vmatpush1.msra.mxu0 0.0
        %8715 = vmatprep.subr.mxu0 0.0
        %8716 = vmatpush1.msra.mxu0 0.0
        %8717 = vmatprep.subr.mxu0 0.0
        %8718 = vmatpush1.msra.mxu0 0.0
        %8719 = vmatprep.subr.mxu0 0.0
        %8720 = vmatpush1.msra.mxu0 0.0
        %8721 = vmatprep.subr.mxu0 0.0
        %8722 = vmatpush1.msra.mxu0 0.0
        %8723 = vmatprep.subr.mxu0 0.0
        %8724 = vmatpush1.msra.mxu0 0.0
        %8725 = vmatprep.subr.mxu0 0.0
        %8726 = vmatpush1.msra.mxu0 0.0
        %8727 = vmatprep.subr.mxu0 0.0
        %8728 = vmatpush1.msra.mxu0 0.0
        %8729 = vmatprep.subr.mxu0 0.0
        %8730 = vmatpush1.msra.mxu0 0.0
        %8731 = vmatprep.subr.mxu0 0.0
        %8732 = vmatpush1.msra.mxu0 0.0
        %8733 = vmatprep.subr.mxu0 0.0
        %8734 = vmatpush1.msra.mxu0 0.0
        %8735 = vmatprep.subr.mxu0 0.0
        %8736 = vmatpush1.msra.mxu0 0.0
        %8737 = vmatprep.subr.mxu0 0.0
        %8738 = vmatpush1.msra.mxu0 0.0
        %8739 = vmatprep.subr.mxu0 0.0
        %8740 = vmatpush1.msra.mxu0 0.0
        %8741 = vmatprep.subr.mxu0 0.0
        %8742 = vmatpush1.msra.mxu0 0.0
        %8743 = vmatprep.subr.mxu0 0.0
        %8744 = vmatpush1.msra.mxu0 0.0
        %8745 = vmatprep.subr.mxu0 0.0
        %8746 = vmatpush1.msra.mxu0 0.0
        %8747 = vmatprep.subr.mxu0 0.0
        %8748 = vmatpush1.msra.mxu0 0.0
        %8749 = vmatprep.subr.mxu0 0.0
        %8750 = vmatpush1.msra.mxu0 0.0
        %8751 = vmatprep.subr.mxu0 0.0
        %8752 = vmatpush1.msra.mxu0 0.0
        %8753 = vmatprep.mubr.f32.mxu0 0.0
        %v8754 = vand.u32 %v8355, 4294901760
        %v8755 = vsub.f32 %v8355, %v8754
        %v8756 = vand.u32 %v8755, 4294901760
        %8757 = vmatmul.mubr.f32.gmra.mrb[0].mxu0 %v8756
        %v8758 = vpop.f32.mrb[0].mxu0
        %v8759 = vadd.f32 %v8661, %v8758
        %v8760 = vpop.f32.mrb[0].mxu0
        %8761 = vmatprep.mubr.f32.mxu0 0.0
        %v8762 = vand.u32 %v8358, 4294901760
        %v8763 = vsub.f32 %v8358, %v8762
        %v8764 = vand.u32 %v8763, 4294901760
        %8765 = vmatmul.mubr.f32.gmra.mrb[0].mxu0 %v8764
        %v8766 = vpop.f32.mrb[0].mxu0
        %v8767 = vadd.f32 %v8668, %v8766
        %v8768 = vpop.f32.mrb[0].mxu0
        %8769 = vmatprep.mubr.f32.mxu0 0.0
        %v8770 = vand.u32 %v8361, 4294901760
        %v8771 = vsub.f32 %v8361, %v8770
        %v8772 = vand.u32 %v8771, 4294901760
        %8773 = vmatmul.mubr.f32.gmra.mrb[0].mxu0 %v8772
        %v8774 = vpop.f32.mrb[0].mxu0
        %v8775 = vadd.f32 %v8675, %v8774
        %v8776 = vpop.f32.mrb[0].mxu0
        %8777 = vmatprep.mubr.f32.mxu0 0.0
        %v8778 = vand.u32 %v8364, 4294901760
        %v8779 = vsub.f32 %v8364, %v8778
        %v8780 = vand.u32 %v8779, 4294901760
        %8781 = vmatmul.mubr.f32.gmra.mrb[0].mxu0 %v8780
        %v8782 = vpop.f32.mrb[0].mxu0
        %v8783 = vadd.f32 %v8682, %v8782
        %v8784 = vpop.f32.mrb[0].mxu0
        %8785 = vdwg.mxu0
        %8786 = vmatprep.subr.mxu0 0.0
        %v8787 = vand.u32 %v8350, 4294901760
        %v8788 = vsub.f32 %v8350, %v8787
        %v8789 = vand.u32 %v8788, 4294901760
        %8790 = vmatpush1.msra.mxu0 %v8789
        %8791 = vmatprep.subr.mxu0 0.0
        %v8792 = vand.u32 %v8351, 4294901760
        %v8793 = vsub.f32 %v8351, %v8792
        %v8794 = vand.u32 %v8793, 4294901760
        %8795 = vmatpush1.msra.mxu0 %v8794
        %8796 = vmatprep.subr.mxu0 0.0
        %v8797 = vand.u32 %v8352, 4294901760
        %v8798 = vsub.f32 %v8352, %v8797
        %v8799 = vand.u32 %v8798, 4294901760
        %8800 = vmatpush1.msra.mxu0 %v8799
        %8801 = vmatprep.subr.mxu0 0.0
        %v8802 = vand.u32 %v8353, 4294901760
        %v8803 = vsub.f32 %v8353, %v8802
        %v8804 = vand.u32 %v8803, 4294901760
        %8805 = vmatpush1.msra.mxu0 %v8804
        %8806 = vmatprep.subr.mxu0 0.0
        %8807 = vmatpush1.msra.mxu0 0.0
        %8808 = vmatprep.subr.mxu0 0.0
        %8809 = vmatpush1.msra.mxu0 0.0
        %8810 = vmatprep.subr.mxu0 0.0
        %8811 = vmatpush1.msra.mxu0 0.0
        %8812 = vmatprep.subr.mxu0 0.0
        %8813 = vmatpush1.msra.mxu0 0.0
        %8814 = vmatprep.subr.mxu0 0.0
        %8815 = vmatpush1.msra.mxu0 0.0
        %8816 = vmatprep.subr.mxu0 0.0
        %8817 = vmatpush1.msra.mxu0 0.0
        %8818 = vmatprep.subr.mxu0 0.0
        %8819 = vmatpush1.msra.mxu0 0.0
        %8820 = vmatprep.subr.mxu0 0.0
        %8821 = vmatpush1.msra.mxu0 0.0
        %8822 = vmatprep.subr.mxu0 0.0
        %8823 = vmatpush1.msra.mxu0 0.0
        %8824 = vmatprep.subr.mxu0 0.0
        %8825 = vmatpush1.msra.mxu0 0.0
        %8826 = vmatprep.subr.mxu0 0.0
        %8827 = vmatpush1.msra.mxu0 0.0
        %8828 = vmatprep.subr.mxu0 0.0
        %8829 = vmatpush1.msra.mxu0 0.0
        %8830 = vmatprep.subr.mxu0 0.0
        %8831 = vmatpush1.msra.mxu0 0.0
        %8832 = vmatprep.subr.mxu0 0.0
        %8833 = vmatpush1.msra.mxu0 0.0
        %8834 = vmatprep.subr.mxu0 0.0
        %8835 = vmatpush1.msra.mxu0 0.0
        %8836 = vmatprep.subr.mxu0 0.0
        %8837 = vmatpush1.msra.mxu0 0.0
        %8838 = vmatprep.subr.mxu0 0.0
        %8839 = vmatpush1.msra.mxu0 0.0
        %8840 = vmatprep.subr.mxu0 0.0
        %8841 = vmatpush1.msra.mxu0 0.0
        %8842 = vmatprep.subr.mxu0 0.0
        %8843 = vmatpush1.msra.mxu0 0.0
        %8844 = vmatprep.subr.mxu0 0.0
        %8845 = vmatpush1.msra.mxu0 0.0
        %8846 = vmatprep.subr.mxu0 0.0
        %8847 = vmatpush1.msra.mxu0 0.0
        %8848 = vmatprep.subr.mxu0 0.0
        %8849 = vmatpush1.msra.mxu0 0.0
        %8850 = vmatprep.subr.mxu0 0.0
        %8851 = vmatpush1.msra.mxu0 0.0
        %8852 = vmatprep.subr.mxu0 0.0
        %8853 = vmatpush1.msra.mxu0 0.0
        %8854 = vmatprep.subr.mxu0 0.0
        %8855 = vmatpush1.msra.mxu0 0.0
        %8856 = vmatprep.subr.mxu0 0.0
        %8857 = vmatpush1.msra.mxu0 0.0
        %8858 = vmatprep.subr.mxu0 0.0
        %8859 = vmatpush1.msra.mxu0 0.0
        %8860 = vmatprep.subr.mxu0 0.0
        %8861 = vmatpush1.msra.mxu0 0.0
        %8862 = vmatprep.mubr.f32.mxu0 0.0
        %v8863 = vand.u32 %v8355, 4294901760
        %8864 = vmatmul.mubr.f32.gmra.mrb[0].mxu0 %v8863
        %v8865 = vpop.f32.mrb[0].mxu0
        %v8866 = vadd.f32 %v8759, %v8865
        %v8867 = vpop.f32.mrb[0].mxu0
        %8868 = vmatprep.mubr.f32.mxu0 0.0
        %v8869 = vand.u32 %v8358, 4294901760
        %8870 = vmatmul.mubr.f32.gmra.mrb[0].mxu0 %v8869
        %v8871 = vpop.f32.mrb[0].mxu0
        %v8872 = vadd.f32 %v8767, %v8871
        %v8873 = vpop.f32.mrb[0].mxu0
        %8874 = vmatprep.mubr.f32.mxu0 0.0
        %v8875 = vand.u32 %v8361, 4294901760
        %8876 = vmatmul.mubr.f32.gmra.mrb[0].mxu0 %v8875
        %v8877 = vpop.f32.mrb[0].mxu0
        %v8878 = vadd.f32 %v8775, %v8877
        %v8879 = vpop.f32.mrb[0].mxu0
        %8880 = vmatprep.mubr.f32.mxu0 0.0
        %v8881 = vand.u32 %v8364, 4294901760
        %8882 = vmatmul.mubr.f32.gmra.mrb[0].mxu0 %v8881
        %v8883 = vpop.f32.mrb[0].mxu0
        %v8884 = vadd.f32 %v8783, %v8883
        %v8885 = vpop.f32.mrb[0].mxu0
        %8886 = vdwg.mxu0
        %8887 = vmatprep.subr.mxu0 0.0
        %v8888 = vand.u32 %v8350, 4294901760
        %8889 = vmatpush1.msra.mxu0 %v8888
        %8890 = vmatprep.subr.mxu0 0.0
        %v8891 = vand.u32 %v8351, 4294901760
        %8892 = vmatpush1.msra.mxu0 %v8891
        %8893 = vmatprep.subr.mxu0 0.0
        %v8894 = vand.u32 %v8352, 4294901760
        %8895 = vmatpush1.msra.mxu0 %v8894
        %8896 = vmatprep.subr.mxu0 0.0
        %v8897 = vand.u32 %v8353, 4294901760
        %8898 = vmatpush1.msra.mxu0 %v8897
        %8899 = vmatprep.subr.mxu0 0.0
        %8900 = vmatpush1.msra.mxu0 0.0
        %8901 = vmatprep.subr.mxu0 0.0
        %8902 = vmatpush1.msra.mxu0 0.0
        %8903 = vmatprep.subr.mxu0 0.0
        %8904 = vmatpush1.msra.mxu0 0.0
        %8905 = vmatprep.subr.mxu0 0.0
        %8906 = vmatpush1.msra.mxu0 0.0
        %8907 = vmatprep.subr.mxu0 0.0
        %8908 = vmatpush1.msra.mxu0 0.0
        %8909 = vmatprep.subr.mxu0 0.0
        %8910 = vmatpush1.msra.mxu0 0.0
        %8911 = vmatprep.subr.mxu0 0.0
        %8912 = vmatpush1.msra.mxu0 0.0
        %8913 = vmatprep.subr.mxu0 0.0
        %8914 = vmatpush1.msra.mxu0 0.0
        %8915 = vmatprep.subr.mxu0 0.0
        %8916 = vmatpush1.msra.mxu0 0.0
        %8917 = vmatprep.subr.mxu0 0.0
        %8918 = vmatpush1.msra.mxu0 0.0
        %8919 = vmatprep.subr.mxu0 0.0
        %8920 = vmatpush1.msra.mxu0 0.0
        %8921 = vmatprep.subr.mxu0 0.0
        %8922 = vmatpush1.msra.mxu0 0.0
        %8923 = vmatprep.subr.mxu0 0.0
        %8924 = vmatpush1.msra.mxu0 0.0
        %8925 = vmatprep.subr.mxu0 0.0
        %8926 = vmatpush1.msra.mxu0 0.0
        %8927 = vmatprep.subr.mxu0 0.0
        %8928 = vmatpush1.msra.mxu0 0.0
        %8929 = vmatprep.subr.mxu0 0.0
        %8930 = vmatpush1.msra.mxu0 0.0
        %8931 = vmatprep.subr.mxu0 0.0
        %8932 = vmatpush1.msra.mxu0 0.0
        %8933 = vmatprep.subr.mxu0 0.0
        %8934 = vmatpush1.msra.mxu0 0.0
        %8935 = vmatprep.subr.mxu0 0.0
        %8936 = vmatpush1.msra.mxu0 0.0
        %8937 = vmatprep.subr.mxu0 0.0
        %8938 = vmatpush1.msra.mxu0 0.0
        %8939 = vmatprep.subr.mxu0 0.0
        %8940 = vmatpush1.msra.mxu0 0.0
        %8941 = vmatprep.subr.mxu0 0.0
        %8942 = vmatpush1.msra.mxu0 0.0
        %8943 = vmatprep.subr.mxu0 0.0
        %8944 = vmatpush1.msra.mxu0 0.0
        %8945 = vmatprep.subr.mxu0 0.0
        %8946 = vmatpush1.msra.mxu0 0.0
        %8947 = vmatprep.subr.mxu0 0.0
        %8948 = vmatpush1.msra.mxu0 0.0
        %8949 = vmatprep.subr.mxu0 0.0
        %8950 = vmatpush1.msra.mxu0 0.0
        %8951 = vmatprep.subr.mxu0 0.0
        %8952 = vmatpush1.msra.mxu0 0.0
        %8953 = vmatprep.subr.mxu0 0.0
        %8954 = vmatpush1.msra.mxu0 0.0
        %8955 = vmatprep.mubr.f32.mxu0 0.0
        %v8956 = vand.u32 %v8355, 4294901760
        %8957 = vmatmul.mubr.f32.gmra.mrb[0].mxu0 %v8956
        %v8958 = vpop.f32.mrb[0].mxu0
        %v8959 = vadd.f32 %v8866, %v8958
        %v8960 = vpop.f32.mrb[0].mxu0
        %8961 = vmatprep.mubr.f32.mxu0 0.0
        %v8962 = vand.u32 %v8358, 4294901760
        %8963 = vmatmul.mubr.f32.gmra.mrb[0].mxu0 %v8962
        %v8964 = vpop.f32.mrb[0].mxu0
        %v8965 = vadd.f32 %v8872, %v8964
        %v8966 = vpop.f32.mrb[0].mxu0
        %8967 = vmatprep.mubr.f32.mxu0 0.0
        %v8968 = vand.u32 %v8361, 4294901760
        %8969 = vmatmul.mubr.f32.gmra.mrb[0].mxu0 %v8968
        %v8970 = vpop.f32.mrb[0].mxu0
        %v8971 = vadd.f32 %v8878, %v8970
        %v8972 = vpop.f32.mrb[0].mxu0
        %8973 = vmatprep.mubr.f32.mxu0 0.0
        %v8974 = vand.u32 %v8364, 4294901760
        %8975 = vmatmul.mubr.f32.gmra.mrb[0].mxu0 %v8974
        %v8976 = vpop.f32.mrb[0].mxu0
        %v8977 = vadd.f32 %v8884, %v8976
        %v8978 = vpop.f32.mrb[0].mxu0
        %8979 = vdwg.mxu0
        %v8980 = vadd.f32 %v3927, %v8959
        %v8981 = vadd.f32 %v3928, %v8965
        %v8982 = vadd.f32 %v3929, %v8971
        %v8983 = vadd.f32 %v3930, %v8977
        %v8984 = vtanh.pop %v8980
        %v8985 = vtanh.pop %v8981
        %v8986 = vtanh.pop %v8982
        %v8987 = vtanh.pop %v8983
        %v8988 = vsub.f32 1.0, %v8333
        %v8989 = vsub.f32 1.0, %v8334
        %v8990 = vsub.f32 1.0, %v8335
        %v8991 = vsub.f32 1.0, %v8336
        %v8992 = vmul.f32 %v8988, %v8984
        %v8993 = vmul.f32 %v8989, %v8985
        %v8994 = vmul.f32 %v8990, %v8986
        %v8995 = vmul.f32 %v8991, %v8987
        %v8996 = vmul.f32 %v8325, %v7310
        %v8997 = vmul.f32 %v8326, %v7311
        %v8998 = vmul.f32 %v8327, %v7312
        %v8999 = vmul.f32 %v8328, %v7313
        %v9000 = vadd.f32 %v8992, %v8996
        %v9001 = vadd.f32 %v8993, %v8997
        %v9002 = vadd.f32 %v8994, %v8998
        %v9003 = vadd.f32 %v8995, %v8999
        %v9004 = vld [vmem:[%s7] sm:$0x1]
        %v9005 = vld [vmem:[#allocation2] sm:$0x1]
        %9007 = vset.pattern.permute.xlu0 0
        %9008 = vperm.xlu0 %9007, %v9005
        %v9009 = vpop.permute.xlu0 %9008
        %v9011 = vlaneseq
        %v9012 = vshrl.u32 %v9011, 7
        %v9013 = vsub.s32 0, %v9012
        %v9014 = vrot.slane %v9009, %v9013
        %v9016 = vsel %vm3947, %v9004, 0
        %9018 = vmatprep.subr.mxu0 0.0
        %v9019 = vand.u32 %v9000, 4294901760
        %9020 = vmatpush1.msra.mxu0 %v9019
        %9021 = vmatprep.subr.mxu0 0.0
        %v9022 = vand.u32 %v9001, 4294901760
        %9023 = vmatpush1.msra.mxu0 %v9022
        %9024 = vmatprep.subr.mxu0 0.0
        %v9025 = vand.u32 %v9002, 4294901760
        %9026 = vmatpush1.msra.mxu0 %v9025
        %9027 = vmatprep.subr.mxu0 0.0
        %v9028 = vand.u32 %v9003, 4294901760
        %9029 = vmatpush1.msra.mxu0 %v9028
        %9030 = vmatprep.subr.mxu0 0.0
        %9031 = vmatpush1.msra.mxu0 0.0
        %9032 = vmatprep.subr.mxu0 0.0
        %9033 = vmatpush1.msra.mxu0 0.0
        %9034 = vmatprep.subr.mxu0 0.0
        %9035 = vmatpush1.msra.mxu0 0.0
        %9036 = vmatprep.subr.mxu0 0.0
        %9037 = vmatpush1.msra.mxu0 0.0
        %9038 = vmatprep.subr.mxu0 0.0
        %9039 = vmatpush1.msra.mxu0 0.0
        %9040 = vmatprep.subr.mxu0 0.0
        %9041 = vmatpush1.msra.mxu0 0.0
        %9042 = vmatprep.subr.mxu0 0.0
        %9043 = vmatpush1.msra.mxu0 0.0
        %9044 = vmatprep.subr.mxu0 0.0
        %9045 = vmatpush1.msra.mxu0 0.0
        %9046 = vmatprep.subr.mxu0 0.0
        %9047 = vmatpush1.msra.mxu0 0.0
        %9048 = vmatprep.subr.mxu0 0.0
        %9049 = vmatpush1.msra.mxu0 0.0
        %9050 = vmatprep.subr.mxu0 0.0
        %9051 = vmatpush1.msra.mxu0 0.0
        %9052 = vmatprep.subr.mxu0 0.0
        %9053 = vmatpush1.msra.mxu0 0.0
        %9054 = vmatprep.subr.mxu0 0.0
        %9055 = vmatpush1.msra.mxu0 0.0
        %9056 = vmatprep.subr.mxu0 0.0
        %9057 = vmatpush1.msra.mxu0 0.0
        %9058 = vmatprep.subr.mxu0 0.0
        %9059 = vmatpush1.msra.mxu0 0.0
        %9060 = vmatprep.subr.mxu0 0.0
        %9061 = vmatpush1.msra.mxu0 0.0
        %9062 = vmatprep.subr.mxu0 0.0
        %9063 = vmatpush1.msra.mxu0 0.0
        %9064 = vmatprep.subr.mxu0 0.0
        %9065 = vmatpush1.msra.mxu0 0.0
        %9066 = vmatprep.subr.mxu0 0.0
        %9067 = vmatpush1.msra.mxu0 0.0
        %9068 = vmatprep.subr.mxu0 0.0
        %9069 = vmatpush1.msra.mxu0 0.0
        %9070 = vmatprep.subr.mxu0 0.0
        %9071 = vmatpush1.msra.mxu0 0.0
        %9072 = vmatprep.subr.mxu0 0.0
        %9073 = vmatpush1.msra.mxu0 0.0
        %9074 = vmatprep.subr.mxu0 0.0
        %9075 = vmatpush1.msra.mxu0 0.0
        %9076 = vmatprep.subr.mxu0 0.0
        %9077 = vmatpush1.msra.mxu0 0.0
        %9078 = vmatprep.subr.mxu0 0.0
        %9079 = vmatpush1.msra.mxu0 0.0
        %9080 = vmatprep.subr.mxu0 0.0
        %9081 = vmatpush1.msra.mxu0 0.0
        %9082 = vmatprep.subr.mxu0 0.0
        %9083 = vmatpush1.msra.mxu0 0.0
        %9084 = vmatprep.subr.mxu0 0.0
        %9085 = vmatpush1.msra.mxu0 0.0
        %9086 = vmatprep.mubr.f32.mxu0 0.0
        %v9087 = vand.u32 %v9016, 4294901760
        %v9088 = vsub.f32 %v9016, %v9087
        %v9089 = vand.u32 %v9088, 4294901760
        %v9090 = vsub.f32 %v9088, %v9089
        %v9091 = vand.u32 %v9090, 4294901760
        %9092 = vmatmul.mubr.f32.gmra.mrb[0].mxu0 %v9091
        %v9093 = vpop.f32.mrb[0].mxu0
        %v9094 = vadd.f32 %v9014, %v9093
        %v9095 = vpop.f32.mrb[0].mxu0
        %9096 = vdwg.mxu0
        %9097 = vmatprep.subr.mxu0 0.0
        %v9098 = vand.u32 %v9000, 4294901760
        %v9099 = vsub.f32 %v9000, %v9098
        %v9100 = vand.u32 %v9099, 4294901760
        %v9101 = vsub.f32 %v9099, %v9100
        %v9102 = vand.u32 %v9101, 4294901760
        %9103 = vmatpush1.msra.mxu0 %v9102
        %9104 = vmatprep.subr.mxu0 0.0
        %v9105 = vand.u32 %v9001, 4294901760
        %v9106 = vsub.f32 %v9001, %v9105
        %v9107 = vand.u32 %v9106, 4294901760
        %v9108 = vsub.f32 %v9106, %v9107
        %v9109 = vand.u32 %v9108, 4294901760
        %9110 = vmatpush1.msra.mxu0 %v9109
        %9111 = vmatprep.subr.mxu0 0.0
        %v9112 = vand.u32 %v9002, 4294901760
        %v9113 = vsub.f32 %v9002, %v9112
        %v9114 = vand.u32 %v9113, 4294901760
        %v9115 = vsub.f32 %v9113, %v9114
        %v9116 = vand.u32 %v9115, 4294901760
        %9117 = vmatpush1.msra.mxu0 %v9116
        %9118 = vmatprep.subr.mxu0 0.0
        %v9119 = vand.u32 %v9003, 4294901760
        %v9120 = vsub.f32 %v9003, %v9119
        %v9121 = vand.u32 %v9120, 4294901760
        %v9122 = vsub.f32 %v9120, %v9121
        %v9123 = vand.u32 %v9122, 4294901760
        %9124 = vmatpush1.msra.mxu0 %v9123
        %9125 = vmatprep.subr.mxu0 0.0
        %9126 = vmatpush1.msra.mxu0 0.0
        %9127 = vmatprep.subr.mxu0 0.0
        %9128 = vmatpush1.msra.mxu0 0.0
        %9129 = vmatprep.subr.mxu0 0.0
        %9130 = vmatpush1.msra.mxu0 0.0
        %9131 = vmatprep.subr.mxu0 0.0
        %9132 = vmatpush1.msra.mxu0 0.0
        %9133 = vmatprep.subr.mxu0 0.0
        %9134 = vmatpush1.msra.mxu0 0.0
        %9135 = vmatprep.subr.mxu0 0.0
        %9136 = vmatpush1.msra.mxu0 0.0
        %9137 = vmatprep.subr.mxu0 0.0
        %9138 = vmatpush1.msra.mxu0 0.0
        %9139 = vmatprep.subr.mxu0 0.0
        %9140 = vmatpush1.msra.mxu0 0.0
        %9141 = vmatprep.subr.mxu0 0.0
        %9142 = vmatpush1.msra.mxu0 0.0
        %9143 = vmatprep.subr.mxu0 0.0
        %9144 = vmatpush1.msra.mxu0 0.0
        %9145 = vmatprep.subr.mxu0 0.0
        %9146 = vmatpush1.msra.mxu0 0.0
        %9147 = vmatprep.subr.mxu0 0.0
        %9148 = vmatpush1.msra.mxu0 0.0
        %9149 = vmatprep.subr.mxu0 0.0
        %9150 = vmatpush1.msra.mxu0 0.0
        %9151 = vmatprep.subr.mxu0 0.0
        %9152 = vmatpush1.msra.mxu0 0.0
        %9153 = vmatprep.subr.mxu0 0.0
        %9154 = vmatpush1.msra.mxu0 0.0
        %9155 = vmatprep.subr.mxu0 0.0
        %9156 = vmatpush1.msra.mxu0 0.0
        %9157 = vmatprep.subr.mxu0 0.0
        %9158 = vmatpush1.msra.mxu0 0.0
        %9159 = vmatprep.subr.mxu0 0.0
        %9160 = vmatpush1.msra.mxu0 0.0
        %9161 = vmatprep.subr.mxu0 0.0
        %9162 = vmatpush1.msra.mxu0 0.0
        %9163 = vmatprep.subr.mxu0 0.0
        %9164 = vmatpush1.msra.mxu0 0.0
        %9165 = vmatprep.subr.mxu0 0.0
        %9166 = vmatpush1.msra.mxu0 0.0
        %9167 = vmatprep.subr.mxu0 0.0
        %9168 = vmatpush1.msra.mxu0 0.0
        %9169 = vmatprep.subr.mxu0 0.0
        %9170 = vmatpush1.msra.mxu0 0.0
        %9171 = vmatprep.subr.mxu0 0.0
        %9172 = vmatpush1.msra.mxu0 0.0
        %9173 = vmatprep.subr.mxu0 0.0
        %9174 = vmatpush1.msra.mxu0 0.0
        %9175 = vmatprep.subr.mxu0 0.0
        %9176 = vmatpush1.msra.mxu0 0.0
        %9177 = vmatprep.subr.mxu0 0.0
        %9178 = vmatpush1.msra.mxu0 0.0
        %9179 = vmatprep.subr.mxu0 0.0
        %9180 = vmatpush1.msra.mxu0 0.0
        %9181 = vmatprep.mubr.f32.mxu0 0.0
        %v9182 = vand.u32 %v9016, 4294901760
        %9183 = vmatmul.mubr.f32.gmra.mrb[0].mxu0 %v9182
        %v9184 = vpop.f32.mrb[0].mxu0
        %v9185 = vadd.f32 %v9094, %v9184
        %v9186 = vpop.f32.mrb[0].mxu0
        %9187 = vdwg.mxu0
        %9188 = vmatprep.subr.mxu0 0.0
        %v9189 = vand.u32 %v9000, 4294901760
        %v9190 = vsub.f32 %v9000, %v9189
        %9191 = vmatpush1.msra.mxu0 %v9190
        %9192 = vmatprep.subr.mxu0 0.0
        %v9193 = vand.u32 %v9001, 4294901760
        %v9194 = vsub.f32 %v9001, %v9193
        %9195 = vmatpush1.msra.mxu0 %v9194
        %9196 = vmatprep.subr.mxu0 0.0
        %v9197 = vand.u32 %v9002, 4294901760
        %v9198 = vsub.f32 %v9002, %v9197
        %9199 = vmatpush1.msra.mxu0 %v9198
        %9200 = vmatprep.subr.mxu0 0.0
        %v9201 = vand.u32 %v9003, 4294901760
        %v9202 = vsub.f32 %v9003, %v9201
        %9203 = vmatpush1.msra.mxu0 %v9202
        %9204 = vmatprep.subr.mxu0 0.0
        %9205 = vmatpush1.msra.mxu0 0.0
        %9206 = vmatprep.subr.mxu0 0.0
        %9207 = vmatpush1.msra.mxu0 0.0
        %9208 = vmatprep.subr.mxu0 0.0
        %9209 = vmatpush1.msra.mxu0 0.0
        %9210 = vmatprep.subr.mxu0 0.0
        %9211 = vmatpush1.msra.mxu0 0.0
        %9212 = vmatprep.subr.mxu0 0.0
        %9213 = vmatpush1.msra.mxu0 0.0
        %9214 = vmatprep.subr.mxu0 0.0
        %9215 = vmatpush1.msra.mxu0 0.0
        %9216 = vmatprep.subr.mxu0 0.0
        %9217 = vmatpush1.msra.mxu0 0.0
        %9218 = vmatprep.subr.mxu0 0.0
        %9219 = vmatpush1.msra.mxu0 0.0
        %9220 = vmatprep.subr.mxu0 0.0
        %9221 = vmatpush1.msra.mxu0 0.0
        %9222 = vmatprep.subr.mxu0 0.0
        %9223 = vmatpush1.msra.mxu0 0.0
        %9224 = vmatprep.subr.mxu0 0.0
        %9225 = vmatpush1.msra.mxu0 0.0
        %9226 = vmatprep.subr.mxu0 0.0
        %9227 = vmatpush1.msra.mxu0 0.0
        %9228 = vmatprep.subr.mxu0 0.0
        %9229 = vmatpush1.msra.mxu0 0.0
        %9230 = vmatprep.subr.mxu0 0.0
        %9231 = vmatpush1.msra.mxu0 0.0
        %9232 = vmatprep.subr.mxu0 0.0
        %9233 = vmatpush1.msra.mxu0 0.0
        %9234 = vmatprep.subr.mxu0 0.0
        %9235 = vmatpush1.msra.mxu0 0.0
        %9236 = vmatprep.subr.mxu0 0.0
        %9237 = vmatpush1.msra.mxu0 0.0
        %9238 = vmatprep.subr.mxu0 0.0
        %9239 = vmatpush1.msra.mxu0 0.0
        %9240 = vmatprep.subr.mxu0 0.0
        %9241 = vmatpush1.msra.mxu0 0.0
        %9242 = vmatprep.subr.mxu0 0.0
        %9243 = vmatpush1.msra.mxu0 0.0
        %9244 = vmatprep.subr.mxu0 0.0
        %9245 = vmatpush1.msra.mxu0 0.0
        %9246 = vmatprep.subr.mxu0 0.0
        %9247 = vmatpush1.msra.mxu0 0.0
        %9248 = vmatprep.subr.mxu0 0.0
        %9249 = vmatpush1.msra.mxu0 0.0
        %9250 = vmatprep.subr.mxu0 0.0
        %9251 = vmatpush1.msra.mxu0 0.0
        %9252 = vmatprep.subr.mxu0 0.0
        %9253 = vmatpush1.msra.mxu0 0.0
        %9254 = vmatprep.subr.mxu0 0.0
        %9255 = vmatpush1.msra.mxu0 0.0
        %9256 = vmatprep.subr.mxu0 0.0
        %9257 = vmatpush1.msra.mxu0 0.0
        %9258 = vmatprep.subr.mxu0 0.0
        %9259 = vmatpush1.msra.mxu0 0.0
        %9260 = vmatprep.mubr.f32.mxu0 0.0
        %v9261 = vand.u32 %v9016, 4294901760
        %v9262 = vsub.f32 %v9016, %v9261
        %9263 = vmatmul.mubr.f32.gmra.mrb[0].mxu0 %v9262
        %v9264 = vpop.f32.mrb[0].mxu0
        %v9265 = vadd.f32 %v9185, %v9264
        %v9266 = vpop.f32.mrb[0].mxu0
        %9267 = vdwg.mxu0
        %9268 = vmatprep.subr.mxu0 0.0
        %v9269 = vand.u32 %v9000, 4294901760
        %9270 = vmatpush1.msra.mxu0 %v9269
        %9271 = vmatprep.subr.mxu0 0.0
        %v9272 = vand.u32 %v9001, 4294901760
        %9273 = vmatpush1.msra.mxu0 %v9272
        %9274 = vmatprep.subr.mxu0 0.0
        %v9275 = vand.u32 %v9002, 4294901760
        %9276 = vmatpush1.msra.mxu0 %v9275
        %9277 = vmatprep.subr.mxu0 0.0
        %v9278 = vand.u32 %v9003, 4294901760
        %9279 = vmatpush1.msra.mxu0 %v9278
        %9280 = vmatprep.subr.mxu0 0.0
        %9281 = vmatpush1.msra.mxu0 0.0
        %9282 = vmatprep.subr.mxu0 0.0
        %9283 = vmatpush1.msra.mxu0 0.0
        %9284 = vmatprep.subr.mxu0 0.0
        %9285 = vmatpush1.msra.mxu0 0.0
        %9286 = vmatprep.subr.mxu0 0.0
        %9287 = vmatpush1.msra.mxu0 0.0
        %9288 = vmatprep.subr.mxu0 0.0
        %9289 = vmatpush1.msra.mxu0 0.0
        %9290 = vmatprep.subr.mxu0 0.0
        %9291 = vmatpush1.msra.mxu0 0.0
        %9292 = vmatprep.subr.mxu0 0.0
        %9293 = vmatpush1.msra.mxu0 0.0
        %9294 = vmatprep.subr.mxu0 0.0
        %9295 = vmatpush1.msra.mxu0 0.0
        %9296 = vmatprep.subr.mxu0 0.0
        %9297 = vmatpush1.msra.mxu0 0.0
        %9298 = vmatprep.subr.mxu0 0.0
        %9299 = vmatpush1.msra.mxu0 0.0
        %9300 = vmatprep.subr.mxu0 0.0
        %9301 = vmatpush1.msra.mxu0 0.0
        %9302 = vmatprep.subr.mxu0 0.0
        %9303 = vmatpush1.msra.mxu0 0.0
        %9304 = vmatprep.subr.mxu0 0.0
        %9305 = vmatpush1.msra.mxu0 0.0
        %9306 = vmatprep.subr.mxu0 0.0
        %9307 = vmatpush1.msra.mxu0 0.0
        %9308 = vmatprep.subr.mxu0 0.0
        %9309 = vmatpush1.msra.mxu0 0.0
        %9310 = vmatprep.subr.mxu0 0.0
        %9311 = vmatpush1.msra.mxu0 0.0
        %9312 = vmatprep.subr.mxu0 0.0
        %9313 = vmatpush1.msra.mxu0 0.0
        %9314 = vmatprep.subr.mxu0 0.0
        %9315 = vmatpush1.msra.mxu0 0.0
        %9316 = vmatprep.subr.mxu0 0.0
        %9317 = vmatpush1.msra.mxu0 0.0
        %9318 = vmatprep.subr.mxu0 0.0
        %9319 = vmatpush1.msra.mxu0 0.0
        %9320 = vmatprep.subr.mxu0 0.0
        %9321 = vmatpush1.msra.mxu0 0.0
        %9322 = vmatprep.subr.mxu0 0.0
        %9323 = vmatpush1.msra.mxu0 0.0
        %9324 = vmatprep.subr.mxu0 0.0
        %9325 = vmatpush1.msra.mxu0 0.0
        %9326 = vmatprep.subr.mxu0 0.0
        %9327 = vmatpush1.msra.mxu0 0.0
        %9328 = vmatprep.subr.mxu0 0.0
        %9329 = vmatpush1.msra.mxu0 0.0
        %9330 = vmatprep.subr.mxu0 0.0
        %9331 = vmatpush1.msra.mxu0 0.0
        %9332 = vmatprep.subr.mxu0 0.0
        %9333 = vmatpush1.msra.mxu0 0.0
        %9334 = vmatprep.subr.mxu0 0.0
        %9335 = vmatpush1.msra.mxu0 0.0
        %9336 = vmatprep.mubr.f32.mxu0 0.0
        %v9337 = vand.u32 %v9016, 4294901760
        %v9338 = vsub.f32 %v9016, %v9337
        %v9339 = vand.u32 %v9338, 4294901760
        %9340 = vmatmul.mubr.f32.gmra.mrb[0].mxu0 %v9339
        %v9341 = vpop.f32.mrb[0].mxu0
        %v9342 = vadd.f32 %v9265, %v9341
        %v9343 = vpop.f32.mrb[0].mxu0
        %9344 = vdwg.mxu0
        %9345 = vmatprep.subr.mxu0 0.0
        %v9346 = vand.u32 %v9000, 4294901760
        %v9347 = vsub.f32 %v9000, %v9346
        %v9348 = vand.u32 %v9347, 4294901760
        %9349 = vmatpush1.msra.mxu0 %v9348
        %9350 = vmatprep.subr.mxu0 0.0
        %v9351 = vand.u32 %v9001, 4294901760
        %v9352 = vsub.f32 %v9001, %v9351
        %v9353 = vand.u32 %v9352, 4294901760
        %9354 = vmatpush1.msra.mxu0 %v9353
        %9355 = vmatprep.subr.mxu0 0.0
        %v9356 = vand.u32 %v9002, 4294901760
        %v9357 = vsub.f32 %v9002, %v9356
        %v9358 = vand.u32 %v9357, 4294901760
        %9359 = vmatpush1.msra.mxu0 %v9358
        %9360 = vmatprep.subr.mxu0 0.0
        %v9361 = vand.u32 %v9003, 4294901760
        %v9362 = vsub.f32 %v9003, %v9361
        %v9363 = vand.u32 %v9362, 4294901760
        %9364 = vmatpush1.msra.mxu0 %v9363
        %9365 = vmatprep.subr.mxu0 0.0
        %9366 = vmatpush1.msra.mxu0 0.0
        %9367 = vmatprep.subr.mxu0 0.0
        %9368 = vmatpush1.msra.mxu0 0.0
        %9369 = vmatprep.subr.mxu0 0.0
        %9370 = vmatpush1.msra.mxu0 0.0
        %9371 = vmatprep.subr.mxu0 0.0
        %9372 = vmatpush1.msra.mxu0 0.0
        %9373 = vmatprep.subr.mxu0 0.0
        %9374 = vmatpush1.msra.mxu0 0.0
        %9375 = vmatprep.subr.mxu0 0.0
        %9376 = vmatpush1.msra.mxu0 0.0
        %9377 = vmatprep.subr.mxu0 0.0
        %9378 = vmatpush1.msra.mxu0 0.0
        %9379 = vmatprep.subr.mxu0 0.0
        %9380 = vmatpush1.msra.mxu0 0.0
        %9381 = vmatprep.subr.mxu0 0.0
        %9382 = vmatpush1.msra.mxu0 0.0
        %9383 = vmatprep.subr.mxu0 0.0
        %9384 = vmatpush1.msra.mxu0 0.0
        %9385 = vmatprep.subr.mxu0 0.0
        %9386 = vmatpush1.msra.mxu0 0.0
        %9387 = vmatprep.subr.mxu0 0.0
        %9388 = vmatpush1.msra.mxu0 0.0
        %9389 = vmatprep.subr.mxu0 0.0
        %9390 = vmatpush1.msra.mxu0 0.0
        %9391 = vmatprep.subr.mxu0 0.0
        %9392 = vmatpush1.msra.mxu0 0.0
        %9393 = vmatprep.subr.mxu0 0.0
        %9394 = vmatpush1.msra.mxu0 0.0
        %9395 = vmatprep.subr.mxu0 0.0
        %9396 = vmatpush1.msra.mxu0 0.0
        %9397 = vmatprep.subr.mxu0 0.0
        %9398 = vmatpush1.msra.mxu0 0.0
        %9399 = vmatprep.subr.mxu0 0.0
        %9400 = vmatpush1.msra.mxu0 0.0
        %9401 = vmatprep.subr.mxu0 0.0
        %9402 = vmatpush1.msra.mxu0 0.0
        %9403 = vmatprep.subr.mxu0 0.0
        %9404 = vmatpush1.msra.mxu0 0.0
        %9405 = vmatprep.subr.mxu0 0.0
        %9406 = vmatpush1.msra.mxu0 0.0
        %9407 = vmatprep.subr.mxu0 0.0
        %9408 = vmatpush1.msra.mxu0 0.0
        %9409 = vmatprep.subr.mxu0 0.0
        %9410 = vmatpush1.msra.mxu0 0.0
        %9411 = vmatprep.subr.mxu0 0.0
        %9412 = vmatpush1.msra.mxu0 0.0
        %9413 = vmatprep.subr.mxu0 0.0
        %9414 = vmatpush1.msra.mxu0 0.0
        %9415 = vmatprep.subr.mxu0 0.0
        %9416 = vmatpush1.msra.mxu0 0.0
        %9417 = vmatprep.subr.mxu0 0.0
        %9418 = vmatpush1.msra.mxu0 0.0
        %9419 = vmatprep.subr.mxu0 0.0
        %9420 = vmatpush1.msra.mxu0 0.0
        %9421 = vmatprep.mubr.f32.mxu0 0.0
        %v9422 = vand.u32 %v9016, 4294901760
        %9423 = vmatmul.mubr.f32.gmra.mrb[0].mxu0 %v9422
        %v9424 = vpop.f32.mrb[0].mxu0
        %v9425 = vadd.f32 %v9342, %v9424
        %v9426 = vpop.f32.mrb[0].mxu0
        %9427 = vdwg.mxu0
        %9428 = vmatprep.subr.mxu0 0.0
        %v9429 = vand.u32 %v9000, 4294901760
        %9430 = vmatpush1.msra.mxu0 %v9429
        %9431 = vmatprep.subr.mxu0 0.0
        %v9432 = vand.u32 %v9001, 4294901760
        %9433 = vmatpush1.msra.mxu0 %v9432
        %9434 = vmatprep.subr.mxu0 0.0
        %v9435 = vand.u32 %v9002, 4294901760
        %9436 = vmatpush1.msra.mxu0 %v9435
        %9437 = vmatprep.subr.mxu0 0.0
        %v9438 = vand.u32 %v9003, 4294901760
        %9439 = vmatpush1.msra.mxu0 %v9438
        %9440 = vmatprep.subr.mxu0 0.0
        %9441 = vmatpush1.msra.mxu0 0.0
        %9442 = vmatprep.subr.mxu0 0.0
        %9443 = vmatpush1.msra.mxu0 0.0
        %9444 = vmatprep.subr.mxu0 0.0
        %9445 = vmatpush1.msra.mxu0 0.0
        %9446 = vmatprep.subr.mxu0 0.0
        %9447 = vmatpush1.msra.mxu0 0.0
        %9448 = vmatprep.subr.mxu0 0.0
        %9449 = vmatpush1.msra.mxu0 0.0
        %9450 = vmatprep.subr.mxu0 0.0
        %9451 = vmatpush1.msra.mxu0 0.0
        %9452 = vmatprep.subr.mxu0 0.0
        %9453 = vmatpush1.msra.mxu0 0.0
        %9454 = vmatprep.subr.mxu0 0.0
        %9455 = vmatpush1.msra.mxu0 0.0
        %9456 = vmatprep.subr.mxu0 0.0
        %9457 = vmatpush1.msra.mxu0 0.0
        %9458 = vmatprep.subr.mxu0 0.0
        %9459 = vmatpush1.msra.mxu0 0.0
        %9460 = vmatprep.subr.mxu0 0.0
        %9461 = vmatpush1.msra.mxu0 0.0
        %9462 = vmatprep.subr.mxu0 0.0
        %9463 = vmatpush1.msra.mxu0 0.0
        %9464 = vmatprep.subr.mxu0 0.0
        %9465 = vmatpush1.msra.mxu0 0.0
        %9466 = vmatprep.subr.mxu0 0.0
        %9467 = vmatpush1.msra.mxu0 0.0
        %9468 = vmatprep.subr.mxu0 0.0
        %9469 = vmatpush1.msra.mxu0 0.0
        %9470 = vmatprep.subr.mxu0 0.0
        %9471 = vmatpush1.msra.mxu0 0.0
        %9472 = vmatprep.subr.mxu0 0.0
        %9473 = vmatpush1.msra.mxu0 0.0
        %9474 = vmatprep.subr.mxu0 0.0
        %9475 = vmatpush1.msra.mxu0 0.0
        %9476 = vmatprep.subr.mxu0 0.0
        %9477 = vmatpush1.msra.mxu0 0.0
        %9478 = vmatprep.subr.mxu0 0.0
        %9479 = vmatpush1.msra.mxu0 0.0
        %9480 = vmatprep.subr.mxu0 0.0
        %9481 = vmatpush1.msra.mxu0 0.0
        %9482 = vmatprep.subr.mxu0 0.0
        %9483 = vmatpush1.msra.mxu0 0.0
        %9484 = vmatprep.subr.mxu0 0.0
        %9485 = vmatpush1.msra.mxu0 0.0
        %9486 = vmatprep.subr.mxu0 0.0
        %9487 = vmatpush1.msra.mxu0 0.0
        %9488 = vmatprep.subr.mxu0 0.0
        %9489 = vmatpush1.msra.mxu0 0.0
        %9490 = vmatprep.subr.mxu0 0.0
        %9491 = vmatpush1.msra.mxu0 0.0
        %9492 = vmatprep.subr.mxu0 0.0
        %9493 = vmatpush1.msra.mxu0 0.0
        %9494 = vmatprep.subr.mxu0 0.0
        %9495 = vmatpush1.msra.mxu0 0.0
        %9496 = vmatprep.mubr.f32.mxu0 0.0
        %v9497 = vand.u32 %v9016, 4294901760
        %9498 = vmatmul.mubr.f32.gmra.mrb[0].mxu0 %v9497
        %v9499 = vpop.f32.mrb[0].mxu0
        %v9500 = vadd.f32 %v9425, %v9499
        %v9501 = vpop.f32.mrb[0].mxu0
        %9502 = vdwg.mxu0
        %9503 = vst [vmem:[%s335] sm:$0x1] %v9500
        %s9504 = sand.u32 %s232, 1
        %s9505 = scalar_lea.sflag [#allocation4], %s9504
        %s9506 = sand.u32 %s232, 1
        %s9507 = scalar_lea.vmem [#allocation3], %s9506
        // Predicated region
        $region57: #{tpu_custom_call.1} parent=55 // pred_check
          %p9508 = pneg %p242
        $region58: #{tpu_custom_call.1} parent=55 // pred_check_branch
          %9510 = sbr.rel (%p9508) target = $region60
        $region59: #{tpu_custom_call.1} parent=55 // pred_region
          %s9512 = ssub.s32 16, 16
          %9513 = vsyncadd %s9505, %s9512
          %s9514 = smul.addr %s25, 16
          %s9515 = scalar_lea.hbm %s9, %s9514
          %s9517 = sshll.u32 %s9507, 4
          %s9518 = int_to_ptr.vmem [resolvable:$true] %s9517
          %9520 = dma.vmem_to_hbm [thread:$0]  %s9518, 16, %s9515, %s9505
        $region60: #{tpu_custom_call.1} parent=55 // pred_fallthru
          _
      $region56: #{tpu_custom_call.1} parent=5 // pred_fallthru
        _
      %p9521 = scmp.le.s32.totalorder 2, %s20
      // Predicated region
      $region61: #{tpu_custom_call.1} parent=5 // pred_check
        %p9522 = pneg %p9521
      $region62: #{tpu_custom_call.1} parent=5 // pred_check_branch
        %9524 = sbr.rel (%p9522) target = $region64
      $region63: #{tpu_custom_call.1} parent=5 // pred_region
        %s9525 = ssub.s32 %s20, 2
        // Predicated region
        $region65: #{tpu_custom_call.1} parent=63 // pred_check
          %p9526 = pneg %p248
        $region66: #{tpu_custom_call.1} parent=63 // pred_check_branch
          %9528 = sbr.rel (%p9526) target = $region68
        $region67: #{tpu_custom_call.1} parent=63 // pred_region
          %s9529 = sand.u32 %s233, 1
          %s9530 = scalar_lea.sflag [#allocation4], %s9529
          %s9531 = sand.u32 %s233, 1
          %s9532 = scalar_lea.vmem [#allocation3], %s9531
          %9533 = dma.done %s9530, 16
        $region68: #{tpu_custom_call.1} parent=63 // pred_fallthru
          _
      $region64: #{tpu_custom_call.1} parent=5 // pred_fallthru
        _
    $region6: #{tpu_custom_call.1} parent=1 // loop_footer
      %s24 = sadd.s32 1, %s20
    $region7: #{tpu_custom_call.1} parent=1 // loop_footer_branch
      %19 = sbr.rel target = $region3
    $region8: #{tpu_custom_call.1} parent=1 // loop_exit
      _
    %9534 = vsyncpa [#allocation4], 1
    %s9535 = scalar_lea.sflag [#allocation4], 1
    %9536 = vsyncpa %s9535, 1

</llo_original>
